<compile_context>
chip_gen: v5e
topology: v5e:2x2
jax: 0.10.0
libtpu: 0.0.40
codegen_flags: <defaults>
</compile_context>

<pallas_src>
import jax
import jax.numpy as jnp
import numpy as np
from jax.experimental import pallas as pl
from jax.experimental.pallas import tpu as pltpu

VMEM_SPEC = pl.BlockSpec(memory_space=pltpu.MemorySpace.VMEM)


def _round_up(x, m):
    return (x + m - 1) // m * m


# ------------------------------ fused kernel ------------------------------- #
def _fused_forward_kernel(lhs_ref, w1_ref, b1_ref,
                          w2_ref, b2_ref,
                          w1h_ref, b1h_ref, g1_ref, be1_ref,
                          w2h_ref, b2h_ref, g2_ref, be2_ref,
                          w3h_ref, b3h_ref, out_ref):
    m = lhs_ref.shape[0]          # n * 16 (16 = conv1 output rows, padded)
    n = m // 16                   # batch

    # ---- conv_1 + relu_1: one big-K MXU matmul (K = 11*256, N = 3*128). ----
    y1 = jnp.dot(lhs_ref[...], w1_ref[...], preferred_element_type=jnp.float32)
    y1 = jnp.maximum(y1 + b1_ref[...], 0.0)                  # (n*16, 384)
    y1 = y1.reshape(n, 16, 384)                              # leading-dim split

    # ---- maxpool_1 (3x3, stride 2) -------------------------------------- #
    # ox direction: the three dx blocks are 128-lane aligned -> full-vreg max.
    yx = jnp.maximum(jnp.maximum(y1[:, :, 0:128], y1[:, :, 128:256]),
                     y1[:, :, 256:384])                      # (n, 16, 128)
    # oy direction: three sublane-shifted views; t[:, r] = max(rows r, r+1, r+2).
    t = jnp.maximum(jnp.maximum(yx[:, 0:9, :], yx[:, 1:10, :]), yx[:, 2:11, :])
    # pooled rows are the even rows 0,2,4,6,8; flatten to (n, 640) features
    # with column layout py*128 + px*8 + c1 (junk lanes are exact zeros and
    # meet all-zero rows of w2d).
    feat = jnp.concatenate([t[:, 2 * py, :] for py in range(5)], axis=-1)

    # ---- conv_2 + relu_2 as one dense matmul (weights densified at prep). --
    y2 = jnp.dot(feat.astype(jnp.bfloat16), w2_ref[...],
                 preferred_element_type=jnp.float32) + b2_ref[...]
    y2 = jnp.maximum(y2, 0.0)                                # (n, 1024)

    # ---- maxpool_5 (2x2, stride 2): non-overlapping -> elementwise max over
    # the four 256-wide (dy, dx) column blocks.  Result cols (h3, w3, c2).
    p2 = jnp.maximum(jnp.maximum(y2[:, 0:256], y2[:, 256:512]),
                     jnp.maximum(y2[:, 512:768], y2[:, 768:1024]))   # (n, 256)

    # ---- outLayer: Linear -> BN(batch stats) -> ReLU (x2), Linear -> Sigmoid
    def bn_relu(h, g, be):
        mean = jnp.mean(h, axis=0, keepdims=True)
        var = jnp.mean(jnp.square(h - mean), axis=0, keepdims=True)  # biased
        hn = (h - mean) * jax.lax.rsqrt(var + 1e-5)
        return jnp.maximum(g * hn + be, 0.0)

    h1 = jnp.dot(p2.astype(jnp.bfloat16), w1h_ref[...],
                 preferred_element_type=jnp.float32) + b1h_ref[...]
    h1 = bn_relu(h1, g1_ref[...], be1_ref[...])
    h2 = jnp.dot(h1.astype(jnp.bfloat16), w2h_ref[...],
                 preferred_element_type=jnp.float32) + b2h_ref[...]
    h2 = bn_relu(h2, g2_ref[...], be2_ref[...])
    h3 = jnp.dot(h2.astype(jnp.bfloat16), w3h_ref[...],
                 preferred_element_type=jnp.float32) + b3h_ref[...]
    out_ref[...] = 1.0 / (1.0 + jnp.exp(-h3))    # exact sigmoid, 128-lane dense


# -------------------------- per-forward JAX glue ---------------------------- #
def classification_forward(x_nchw, prep, n_classes):
    """x_nchw: (N, Cin, 48, 48) float32 -> (N, n_classes) float32."""
    n, cin = x_nchw.shape[0], x_nchw.shape[1]
    kpad = prep["wbig"].shape[0] // 11           # per-kernel-row K block (256)

    # Host-side layout prep only: cast to bf16 first (halves pad/transpose
    # traffic), conv zero-pad (2,2), then 11 strided H slices (one per conv1
    # kernel row) build a kernel-row-only im2col so the whole conv1 is a
    # single, aligned big-K matmul inside the kernel.
    xb = x_nchw.astype(jnp.bfloat16)
    xp = jnp.pad(xb, ((0, 0), (0, 0), (2, 2), (2, 2)))        # (N, C, 52, 52)
    xp = jnp.transpose(xp, (0, 2, 3, 1))                      # (N, 52, 52, C)
    bands = [xp[:, ki:ki + 41:4, :, :] for ki in range(11)]   # (N, 11, 52, C)
    lhs = jnp.stack(bands, axis=2).reshape(n, 11, 11, 52 * cin)
    lhs = jnp.pad(lhs, ((0, 0), (0, 5), (0, 0), (0, kpad - 52 * cin)))
    lhs = lhs.reshape(n * 16, 11 * kpad)                      # (N*16, 2816) bf16

    args = (lhs, prep["wbig"], prep["b1row"], prep["w2d"], prep["b2row"],
            prep["w1h"], prep["b1h"], prep["g1"], prep["be1"],
            prep["w2h"], prep["b2h"], prep["g2"], prep["be2"],
            prep["w3h"], prep["b3h"])

    flops = 2 * n * (16 * 11 * kpad * 384 + 640 * 1024
                     + 256 * 128 + 128 * 128 + 128 * 128)
    bytes_accessed = (sum(int(a.size) * a.dtype.itemsize for a in args)
                      + n * 128 * 4)

    out = pl.pallas_call(
        _fused_forward_kernel,
        out_shape=jax.ShapeDtypeStruct((n, 128), jnp.float32),
        in_specs=[VMEM_SPEC] * len(args),
        out_specs=VMEM_SPEC,
        compiler_params=pltpu.CompilerParams(vmem_limit_bytes=32 * 1024 * 1024),
        cost_estimate=pl.CostEstimate(flops=flops, transcendentals=n * 128,
                                      bytes_accessed=bytes_accessed),
    )(*args)
    return out[:, :n_classes]


# ------------------------ one-time parameter folding ------------------------ #
def prepare_params(params):
    """Fold PyTorch-layout parameters into kernel layouts (single big-K conv1
    matrix, densified conv2, pool-friendly column orders, permuted + padded
    head weights).  Host-side numpy, done once."""
    w1 = np.asarray(params["conv1_w"], np.float32)    # (8, Cin, 11, 11)
    b1 = np.asarray(params["conv1_b"], np.float32)
    cin = w1.shape[1]
    kpad = _round_up(52 * cin, 128)                   # per-kernel-row K block

    # conv1 -> single (11*kpad, 384) matrix.  Row = ki*kpad + wpos*cin + ci
    # (wpos = padded-W position); column = dx*128 + px*8 + co with the conv1
    # output column ox = 2*px + dx, so pool1-ox is a max over 128-lane blocks.
    wbig = np.zeros((11 * kpad, 384), np.float32)
    for ki in range(11):
        for dx in range(3):
            for px in range(5):
                ox = 2 * px + dx
                for kj in range(11):
                    wpos = 4 * ox + kj
                    rw = ki * kpad + wpos * cin + np.arange(cin)
                    cl = dx * 128 + px * 8 + np.arange(8)
                    wbig[rw[:, None], cl[None, :]] = w1[:, :, ki, kj].T
    b1row = np.zeros((1, 384), np.float32)
    for dx in range(3):
        b1row[0, dx * 128:dx * 128 + 40] = np.tile(b1, 5)

    # conv2 (2x2, pad 2, stride 1) -> dense (640, 1024).  Rows follow the
    # pooled-feature layout py*128 + px*8 + c1; cols are pool2-window-block
    # major (dy, dx) then (h3, w3, c2) so pool2 is a 4-block max.
    w2 = np.asarray(params["conv2_w"], np.float32)    # (16, 8, 2, 2)
    b2 = np.asarray(params["conv2_b"], np.float32)
    w2d = np.zeros((640, 1024), np.float32)
    for py in range(5):
        for px in range(5):
            for h2 in range(8):
                kh = py + 2 - h2
                if kh < 0 or kh > 1:
                    continue
                for wp in range(8):
                    kw = px + 2 - wp
                    if kw < 0 or kw > 1:
                        continue
                    blk = (h2 % 2) * 2 + (wp % 2)
                    rw = py * 128 + px * 8 + np.arange(8)
                    cl = blk * 256 + ((h2 // 2) * 4 + (wp // 2)) * 16 + np.arange(16)
                    w2d[rw[:, None], cl[None, :]] = w2[:, :, kh, kw].T
    b2row = np.tile(b2, 64).reshape(1, 1024).astype(np.float32)

    # Head: fold the PyTorch NCHW-flatten order (c2, h3, w3) into fc1's rows
    # (our pool2 column order is (h3, w3, c2)); pad everything - including the
    # final layer's columns - to 128 lanes for a lane-dense output slab.
    wl1 = np.asarray(params["fc1_w"], np.float32)     # (100, 256)
    wl2 = np.asarray(params["fc2_w"], np.float32)     # (50, 100)
    wl3 = np.asarray(params["fc3_w"], np.float32)     # (NC, 50)
    nc = wl3.shape[0]
    perm = np.zeros(256, np.int32)
    for h3 in range(4):
        for w3 in range(4):
            for c2 in range(16):
                perm[(h3 * 4 + w3) * 16 + c2] = c2 * 16 + h3 * 4 + w3
    w1h = np.zeros((256, 128), np.float32); w1h[:, :100] = wl1[:, perm].T
    b1h = np.zeros((1, 128), np.float32); b1h[0, :100] = np.asarray(params["fc1_b"])
    g1 = np.ones((1, 128), np.float32);   g1[0, :100] = np.asarray(params["bn1_g"])
    be1 = np.zeros((1, 128), np.float32); be1[0, :100] = np.asarray(params["bn1_b"])
    w2h = np.zeros((128, 128), np.float32); w2h[:100, :50] = wl2.T
    b2h = np.zeros((1, 128), np.float32); b2h[0, :50] = np.asarray(params["fc2_b"])
    g2 = np.ones((1, 128), np.float32);   g2[0, :50] = np.asarray(params["bn2_g"])
    be2 = np.zeros((1, 128), np.float32); be2[0, :50] = np.asarray(params["bn2_b"])
    w3h = np.zeros((128, 128), np.float32); w3h[:50, :nc] = wl3.T
    b3h = np.zeros((1, 128), np.float32); b3h[0, :nc] = np.asarray(params["fc3_b"])

    f32, bf16 = jnp.float32, jnp.bfloat16
    return {
        "wbig": jnp.asarray(wbig, bf16), "b1row": jnp.asarray(b1row, f32),
        "w2d": jnp.asarray(w2d, bf16), "b2row": jnp.asarray(b2row, f32),
        "w1h": jnp.asarray(w1h, bf16), "b1h": jnp.asarray(b1h, f32),
        "g1": jnp.asarray(g1, f32), "be1": jnp.asarray(be1, f32),
        "w2h": jnp.asarray(w2h, bf16), "b2h": jnp.asarray(b2h, f32),
        "g2": jnp.asarray(g2, f32), "be2": jnp.asarray(be2, f32),
        "w3h": jnp.asarray(w3h, bf16), "b3h": jnp.asarray(b3h, f32),
    }


# -------------------- pure-JAX reference (semantics check) ------------------ #
def reference_forward(x, params):
    y = jax.lax.conv_general_dilated(
        x, params["conv1_w"], window_strides=(4, 4), padding=((2, 2), (2, 2)),
        dimension_numbers=("NCHW", "OIHW", "NCHW"))
    y = jax.nn.relu(y + params["conv1_b"].reshape(1, -1, 1, 1))
    y = jax.lax.reduce_window(y, -jnp.inf, jax.lax.max,
                              (1, 1, 3, 3), (1, 1, 2, 2), "VALID")
    y = jax.lax.conv_general_dilated(
        y, params["conv2_w"], window_strides=(1, 1), padding=((2, 2), (2, 2)),
        dimension_numbers=("NCHW", "OIHW", "NCHW"))
    y = jax.nn.relu(y + params["conv2_b"].reshape(1, -1, 1, 1))
    y = jax.lax.reduce_window(y, -jnp.inf, jax.lax.max,
                              (1, 1, 2, 2), (1, 1, 2, 2), "VALID")
    feat = y.reshape(y.shape[0], -1)                       # NCHW flatten

    def bn_relu(h, g, be):
        mean = jnp.mean(h, axis=0, keepdims=True)
        var = jnp.mean((h - mean) ** 2, axis=0, keepdims=True)
        return jax.nn.relu(g * (h - mean) * jax.lax.rsqrt(var + 1e-5) + be)

    h = feat @ params["fc1_w"].T + params["fc1_b"]
    h = bn_relu(h, params["bn1_g"], params["bn1_b"])
    h = h @ params["fc2_w"].T + params["fc2_b"]
    h = bn_relu(h, params["bn2_g"], params["bn2_b"])
    h = h @ params["fc3_w"].T + params["fc3_b"]
    return jax.nn.sigmoid(h)


# ----------------------------- parameter init ------------------------------- #
def init_params(key, in_channels, n_classes):
    ks = jax.random.split(key, 10)

    def uni(k, shape, fan_in):
        bound = 1.0 / jnp.sqrt(jnp.float32(fan_in))
        return jax.random.uniform(k, shape, jnp.float32, -bound, bound)

    p = {}
    p["conv1_w"] = uni(ks[0], (8, in_channels, 11, 11), in_channels * 121)
    p["conv1_b"] = uni(ks[1], (8,), in_channels * 121)
    p["conv2_w"] = uni(ks[2], (16, 8, 2, 2), 8 * 4)
    p["conv2_b"] = uni(ks[3], (16,), 8 * 4)
    p["fc1_w"] = uni(ks[4], (100, 256), 256)
    p["fc1_b"] = uni(ks[5], (100,), 256)
    p["bn1_g"] = jnp.ones((100,), jnp.float32)
    p["bn1_b"] = jnp.zeros((100,), jnp.float32)
    p["fc2_w"] = uni(ks[6], (50, 100), 100)
    p["fc2_b"] = uni(ks[7], (50,), 100)
    p["bn2_g"] = jnp.ones((50,), jnp.float32)
    p["bn2_b"] = jnp.zeros((50,), jnp.float32)
    p["fc3_w"] = uni(ks[8], (n_classes, 50), 50)
    p["fc3_b"] = uni(ks[9], (n_classes,), 50)
    return p


if __name__ == "__main__":
    key = jax.random.PRNGKey(0)
    kx, kp = jax.random.split(key)
    in_channels, n_classes, batch = 3, 10, 4
    # 48x48 input -> 11x11 (conv1) -> 5x5 (pool1) -> 8x8 (conv2) -> 4x4 (pool2)
    # -> 16*4*4 = 256 features, matching Linear(256, 100).
    x = jax.random.normal(kx, (batch, in_channels, 48, 48), jnp.float32)
    params = init_params(kp, in_channels, n_classes)
    prep = prepare_params(params)

    fwd = jax.jit(classification_forward, static_argnums=(2,))
    out = jax.block_until_ready(fwd(x, prep, n_classes))
    ref = jax.block_until_ready(reference_forward(x, params))

    assert out.shape == (batch, n_classes)
    assert bool(jnp.all(jnp.isfinite(out)))
    assert bool(jnp.all((out >= 0.0) & (out <= 1.0)))           # sigmoid range
    max_diff = float(jnp.max(jnp.abs(out - ref)))               # bf16 matmuls
    assert max_diff < 0.1, max_diff
    print("KERNEL_OK")
</pallas_src>

<mosaic_0001>
module attributes {stable_mosaic.version = 11 : i64} {
  func.func @_fused_forward_kernel(%arg0: memref<64x2816xbf16, #tpu.memory_space<vmem>>, %arg1: memref<2816x384xbf16, #tpu.memory_space<vmem>>, %arg2: memref<1x384xf32, #tpu.memory_space<vmem>>, %arg3: memref<640x1024xbf16, #tpu.memory_space<vmem>>, %arg4: memref<1x1024xf32, #tpu.memory_space<vmem>>, %arg5: memref<256x128xbf16, #tpu.memory_space<vmem>>, %arg6: memref<1x128xf32, #tpu.memory_space<vmem>>, %arg7: memref<1x128xf32, #tpu.memory_space<vmem>>, %arg8: memref<1x128xf32, #tpu.memory_space<vmem>>, %arg9: memref<128x128xbf16, #tpu.memory_space<vmem>>, %arg10: memref<1x128xf32, #tpu.memory_space<vmem>>, %arg11: memref<1x128xf32, #tpu.memory_space<vmem>>, %arg12: memref<1x128xf32, #tpu.memory_space<vmem>>, %arg13: memref<128x128xbf16, #tpu.memory_space<vmem>>, %arg14: memref<1x128xf32, #tpu.memory_space<vmem>>, %arg15: memref<4x128xf32, #tpu.memory_space<vmem>>) attributes {dimension_semantics = [], scalar_prefetch = 0 : i64, scratch_operands = 0 : i64, tpu.core_type = #tpu.core_type<tc>} {
    %c0 = arith.constant 0 : index
    %c0_0 = arith.constant 0 : index
    %0 = vector.load %arg0[%c0, %c0_0] : memref<64x2816xbf16, #tpu.memory_space<vmem>>, vector<64x2816xbf16>
    %c0_1 = arith.constant 0 : index
    %c0_2 = arith.constant 0 : index
    %1 = vector.load %arg1[%c0_1, %c0_2] : memref<2816x384xbf16, #tpu.memory_space<vmem>>, vector<2816x384xbf16>
    %cst = arith.constant dense<0.000000e+00> : vector<64x384xf32>
    %2 = tpu.matmul %0, %1, %cst {dimension_numbers = #tpu.dot_dimension_numbers<[1], [0], [0], [1], [0, 0, 1, 1], [], []>} : vector<64x2816xbf16>, vector<2816x384xbf16>, vector<64x384xf32> -> vector<64x384xf32>
    %c0_3 = arith.constant 0 : index
    %c0_4 = arith.constant 0 : index
    %3 = vector.load %arg2[%c0_3, %c0_4] : memref<1x384xf32, #tpu.memory_space<vmem>>, vector<1x384xf32>
    %4 = vector.broadcast %3 : vector<1x384xf32> to vector<64x384xf32>
    %5 = arith.addf %2, %4 : vector<64x384xf32>
    %cst_5 = arith.constant 0.000000e+00 : f32
    %6 = vector.broadcast %cst_5 : f32 to vector<64x384xf32>
    %7 = arith.maximumf %5, %6 : vector<64x384xf32>
    %8 = vector.shape_cast %7 : vector<64x384xf32> to vector<4x16x384xf32>
    %9 = vector.extract_strided_slice %8 {offsets = [0, 0, 0], sizes = [4, 16, 128], strides = [1, 1, 1]} : vector<4x16x384xf32> to vector<4x16x128xf32>
    %10 = vector.extract_strided_slice %8 {offsets = [0, 0, 128], sizes = [4, 16, 128], strides = [1, 1, 1]} : vector<4x16x384xf32> to vector<4x16x128xf32>
    %11 = arith.maximumf %9, %10 : vector<4x16x128xf32>
    %12 = vector.extract_strided_slice %8 {offsets = [0, 0, 256], sizes = [4, 16, 128], strides = [1, 1, 1]} : vector<4x16x384xf32> to vector<4x16x128xf32>
    %13 = arith.maximumf %11, %12 : vector<4x16x128xf32>
    %14 = vector.extract_strided_slice %13 {offsets = [0, 0, 0], sizes = [4, 9, 128], strides = [1, 1, 1]} : vector<4x16x128xf32> to vector<4x9x128xf32>
    %15 = vector.extract_strided_slice %13 {offsets = [0, 1, 0], sizes = [4, 9, 128], strides = [1, 1, 1]} : vector<4x16x128xf32> to vector<4x9x128xf32>
    %16 = arith.maximumf %14, %15 : vector<4x9x128xf32>
    %17 = vector.extract_strided_slice %13 {offsets = [0, 2, 0], sizes = [4, 9, 128], strides = [1, 1, 1]} : vector<4x16x128xf32> to vector<4x9x128xf32>
    %18 = arith.maximumf %16, %17 : vector<4x9x128xf32>
    %19 = vector.extract_strided_slice %18 {offsets = [0, 0, 0], sizes = [4, 1, 128], strides = [1, 1, 1]} : vector<4x9x128xf32> to vector<4x1x128xf32>
    %20 = vector.shape_cast %19 : vector<4x1x128xf32> to vector<4x128xf32>
    %21 = vector.extract_strided_slice %18 {offsets = [0, 2, 0], sizes = [4, 1, 128], strides = [1, 1, 1]} : vector<4x9x128xf32> to vector<4x1x128xf32>
    %22 = vector.shape_cast %21 : vector<4x1x128xf32> to vector<4x128xf32>
    %23 = vector.extract_strided_slice %18 {offsets = [0, 4, 0], sizes = [4, 1, 128], strides = [1, 1, 1]} : vector<4x9x128xf32> to vector<4x1x128xf32>
    %24 = vector.shape_cast %23 : vector<4x1x128xf32> to vector<4x128xf32>
    %25 = vector.extract_strided_slice %18 {offsets = [0, 6, 0], sizes = [4, 1, 128], strides = [1, 1, 1]} : vector<4x9x128xf32> to vector<4x1x128xf32>
    %26 = vector.shape_cast %25 : vector<4x1x128xf32> to vector<4x128xf32>
    %27 = vector.extract_strided_slice %18 {offsets = [0, 8, 0], sizes = [4, 1, 128], strides = [1, 1, 1]} : vector<4x9x128xf32> to vector<4x1x128xf32>
    %28 = vector.shape_cast %27 : vector<4x1x128xf32> to vector<4x128xf32>
    %29 = tpu.concatenate %20, %22, %24, %26, %28 in 1 : vector<4x128xf32>, vector<4x128xf32>, vector<4x128xf32>, vector<4x128xf32>, vector<4x128xf32> -> vector<4x640xf32>
    %30 = arith.truncf %29 : vector<4x640xf32> to vector<4x640xbf16>
    %c0_6 = arith.constant 0 : index
    %c0_7 = arith.constant 0 : index
    %31 = vector.load %arg3[%c0_6, %c0_7] : memref<640x1024xbf16, #tpu.memory_space<vmem>>, vector<640x1024xbf16>
    %cst_8 = arith.constant dense<0.000000e+00> : vector<4x1024xf32>
    %32 = tpu.matmul %30, %31, %cst_8 {dimension_numbers = #tpu.dot_dimension_numbers<[1], [0], [0], [1], [0, 0, 1, 1], [], []>} : vector<4x640xbf16>, vector<640x1024xbf16>, vector<4x1024xf32> -> vector<4x1024xf32>
    %c0_9 = arith.constant 0 : index
    %c0_10 = arith.constant 0 : index
    %33 = vector.load %arg4[%c0_9, %c0_10] : memref<1x1024xf32, #tpu.memory_space<vmem>>, vector<1x1024xf32>
    %34 = vector.broadcast %33 : vector<1x1024xf32> to vector<4x1024xf32>
    %35 = arith.addf %32, %34 : vector<4x1024xf32>
    %cst_11 = arith.constant 0.000000e+00 : f32
    %36 = vector.broadcast %cst_11 : f32 to vector<4x1024xf32>
    %37 = arith.maximumf %35, %36 : vector<4x1024xf32>
    %38 = vector.extract_strided_slice %37 {offsets = [0, 0], sizes = [4, 256], strides = [1, 1]} : vector<4x1024xf32> to vector<4x256xf32>
    %39 = vector.extract_strided_slice %37 {offsets = [0, 256], sizes = [4, 256], strides = [1, 1]} : vector<4x1024xf32> to vector<4x256xf32>
    %40 = arith.maximumf %38, %39 : vector<4x256xf32>
    %41 = vector.extract_strided_slice %37 {offsets = [0, 512], sizes = [4, 256], strides = [1, 1]} : vector<4x1024xf32> to vector<4x256xf32>
    %42 = vector.extract_strided_slice %37 {offsets = [0, 768], sizes = [4, 256], strides = [1, 1]} : vector<4x1024xf32> to vector<4x256xf32>
    %43 = arith.maximumf %41, %42 : vector<4x256xf32>
    %44 = arith.maximumf %40, %43 : vector<4x256xf32>
    %45 = arith.truncf %44 : vector<4x256xf32> to vector<4x256xbf16>
    %c0_12 = arith.constant 0 : index
    %c0_13 = arith.constant 0 : index
    %46 = vector.load %arg5[%c0_12, %c0_13] : memref<256x128xbf16, #tpu.memory_space<vmem>>, vector<256x128xbf16>
    %cst_14 = arith.constant dense<0.000000e+00> : vector<4x128xf32>
    %47 = tpu.matmul %45, %46, %cst_14 {dimension_numbers = #tpu.dot_dimension_numbers<[1], [0], [0], [1], [0, 0, 1, 1], [], []>} : vector<4x256xbf16>, vector<256x128xbf16>, vector<4x128xf32> -> vector<4x128xf32>
    %c0_15 = arith.constant 0 : index
    %c0_16 = arith.constant 0 : index
    %48 = vector.load %arg6[%c0_15, %c0_16] : memref<1x128xf32, #tpu.memory_space<vmem>>, vector<1x128xf32>
    %49 = vector.broadcast %48 : vector<1x128xf32> to vector<4x128xf32>
    %50 = arith.addf %47, %49 : vector<4x128xf32>
    %c0_17 = arith.constant 0 : index
    %c0_18 = arith.constant 0 : index
    %51 = vector.load %arg7[%c0_17, %c0_18] : memref<1x128xf32, #tpu.memory_space<vmem>>, vector<1x128xf32>
    %c0_19 = arith.constant 0 : index
    %c0_20 = arith.constant 0 : index
    %52 = vector.load %arg8[%c0_19, %c0_20] : memref<1x128xf32, #tpu.memory_space<vmem>>, vector<1x128xf32>
    %cst_21 = arith.constant dense<0.000000e+00> : vector<128xf32>
    %53 = vector.multi_reduction <add>, %50, %cst_21 [0] : vector<4x128xf32> to vector<128xf32>
    %54 = vector.shape_cast %53 : vector<128xf32> to vector<1x128xf32>
    %cst_22 = arith.constant 4.000000e+00 : f32
    %55 = vector.broadcast %cst_22 : f32 to vector<1x128xf32>
    %56 = arith.divf %54, %55 : vector<1x128xf32>
    %57 = vector.broadcast %56 : vector<1x128xf32> to vector<4x128xf32>
    %58 = arith.subf %50, %57 : vector<4x128xf32>
    %59 = arith.mulf %58, %58 : vector<4x128xf32>
    %cst_23 = arith.constant dense<0.000000e+00> : vector<128xf32>
    %60 = vector.multi_reduction <add>, %59, %cst_23 [0] : vector<4x128xf32> to vector<128xf32>
    %61 = vector.shape_cast %60 : vector<128xf32> to vector<1x128xf32>
    %cst_24 = arith.constant 4.000000e+00 : f32
    %62 = vector.broadcast %cst_24 : f32 to vector<1x128xf32>
    %63 = arith.divf %61, %62 : vector<1x128xf32>
    %64 = vector.broadcast %56 : vector<1x128xf32> to vector<4x128xf32>
    %65 = arith.subf %50, %64 : vector<4x128xf32>
    %cst_25 = arith.constant 9.99999974E-6 : f32
    %66 = vector.broadcast %cst_25 : f32 to vector<1x128xf32>
    %67 = arith.addf %63, %66 : vector<1x128xf32>
    %68 = math.rsqrt %67 : vector<1x128xf32>
    %69 = vector.broadcast %68 : vector<1x128xf32> to vector<4x128xf32>
    %70 = arith.mulf %65, %69 : vector<4x128xf32>
    %71 = vector.broadcast %51 : vector<1x128xf32> to vector<4x128xf32>
    %72 = arith.mulf %71, %70 : vector<4x128xf32>
    %73 = vector.broadcast %52 : vector<1x128xf32> to vector<4x128xf32>
    %74 = arith.addf %72, %73 : vector<4x128xf32>
    %cst_26 = arith.constant 0.000000e+00 : f32
    %75 = vector.broadcast %cst_26 : f32 to vector<4x128xf32>
    %76 = arith.maximumf %74, %75 : vector<4x128xf32>
    %77 = arith.truncf %76 : vector<4x128xf32> to vector<4x128xbf16>
    %c0_27 = arith.constant 0 : index
    %c0_28 = arith.constant 0 : index
    %78 = vector.load %arg9[%c0_27, %c0_28] : memref<128x128xbf16, #tpu.memory_space<vmem>>, vector<128x128xbf16>
    %cst_29 = arith.constant dense<0.000000e+00> : vector<4x128xf32>
    %79 = tpu.matmul %77, %78, %cst_29 {dimension_numbers = #tpu.dot_dimension_numbers<[1], [0], [0], [1], [0, 0, 1, 1], [], []>} : vector<4x128xbf16>, vector<128x128xbf16>, vector<4x128xf32> -> vector<4x128xf32>
    %c0_30 = arith.constant 0 : index
    %c0_31 = arith.constant 0 : index
    %80 = vector.load %arg10[%c0_30, %c0_31] : memref<1x128xf32, #tpu.memory_space<vmem>>, vector<1x128xf32>
    %81 = vector.broadcast %80 : vector<1x128xf32> to vector<4x128xf32>
    %82 = arith.addf %79, %81 : vector<4x128xf32>
    %c0_32 = arith.constant 0 : index
    %c0_33 = arith.constant 0 : index
    %83 = vector.load %arg11[%c0_32, %c0_33] : memref<1x128xf32, #tpu.memory_space<vmem>>, vector<1x128xf32>
    %c0_34 = arith.constant 0 : index
    %c0_35 = arith.constant 0 : index
    %84 = vector.load %arg12[%c0_34, %c0_35] : memref<1x128xf32, #tpu.memory_space<vmem>>, vector<1x128xf32>
    %cst_36 = arith.constant dense<0.000000e+00> : vector<128xf32>
    %85 = vector.multi_reduction <add>, %82, %cst_36 [0] : vector<4x128xf32> to vector<128xf32>
    %86 = vector.shape_cast %85 : vector<128xf32> to vector<1x128xf32>
    %cst_37 = arith.constant 4.000000e+00 : f32
    %87 = vector.broadcast %cst_37 : f32 to vector<1x128xf32>
    %88 = arith.divf %86, %87 : vector<1x128xf32>
    %89 = vector.broadcast %88 : vector<1x128xf32> to vector<4x128xf32>
    %90 = arith.subf %82, %89 : vector<4x128xf32>
    %91 = arith.mulf %90, %90 : vector<4x128xf32>
    %cst_38 = arith.constant dense<0.000000e+00> : vector<128xf32>
    %92 = vector.multi_reduction <add>, %91, %cst_38 [0] : vector<4x128xf32> to vector<128xf32>
    %93 = vector.shape_cast %92 : vector<128xf32> to vector<1x128xf32>
    %cst_39 = arith.constant 4.000000e+00 : f32
    %94 = vector.broadcast %cst_39 : f32 to vector<1x128xf32>
    %95 = arith.divf %93, %94 : vector<1x128xf32>
    %96 = vector.broadcast %88 : vector<1x128xf32> to vector<4x128xf32>
    %97 = arith.subf %82, %96 : vector<4x128xf32>
    %cst_40 = arith.constant 9.99999974E-6 : f32
    %98 = vector.broadcast %cst_40 : f32 to vector<1x128xf32>
    %99 = arith.addf %95, %98 : vector<1x128xf32>
    %100 = math.rsqrt %99 : vector<1x128xf32>
    %101 = vector.broadcast %100 : vector<1x128xf32> to vector<4x128xf32>
    %102 = arith.mulf %97, %101 : vector<4x128xf32>
    %103 = vector.broadcast %83 : vector<1x128xf32> to vector<4x128xf32>
    %104 = arith.mulf %103, %102 : vector<4x128xf32>
    %105 = vector.broadcast %84 : vector<1x128xf32> to vector<4x128xf32>
    %106 = arith.addf %104, %105 : vector<4x128xf32>
    %cst_41 = arith.constant 0.000000e+00 : f32
    %107 = vector.broadcast %cst_41 : f32 to vector<4x128xf32>
    %108 = arith.maximumf %106, %107 : vector<4x128xf32>
    %109 = arith.truncf %108 : vector<4x128xf32> to vector<4x128xbf16>
    %c0_42 = arith.constant 0 : index
    %c0_43 = arith.constant 0 : index
    %110 = vector.load %arg13[%c0_42, %c0_43] : memref<128x128xbf16, #tpu.memory_space<vmem>>, vector<128x128xbf16>
    %cst_44 = arith.constant dense<0.000000e+00> : vector<4x128xf32>
    %111 = tpu.matmul %109, %110, %cst_44 {dimension_numbers = #tpu.dot_dimension_numbers<[1], [0], [0], [1], [0, 0, 1, 1], [], []>} : vector<4x128xbf16>, vector<128x128xbf16>, vector<4x128xf32> -> vector<4x128xf32>
    %c0_45 = arith.constant 0 : index
    %c0_46 = arith.constant 0 : index
    %112 = vector.load %arg14[%c0_45, %c0_46] : memref<1x128xf32, #tpu.memory_space<vmem>>, vector<1x128xf32>
    %113 = vector.broadcast %112 : vector<1x128xf32> to vector<4x128xf32>
    %114 = arith.addf %111, %113 : vector<4x128xf32>
    %cst_47 = arith.constant 0.000000e+00 : f32
    %115 = vector.broadcast %cst_47 : f32 to vector<4x128xf32>
    %116 = arith.subf %115, %114 : vector<4x128xf32>
    %117 = math.exp %116 : vector<4x128xf32>
    %cst_48 = arith.constant 1.000000e+00 : f32
    %118 = vector.broadcast %cst_48 : f32 to vector<4x128xf32>
    %119 = arith.addf %118, %117 : vector<4x128xf32>
    %cst_49 = arith.constant 1.000000e+00 : f32
    %120 = vector.broadcast %cst_49 : f32 to vector<4x128xf32>
    %121 = arith.divf %120, %119 : vector<4x128xf32>
    %c0_50 = arith.constant 0 : index
    %c0_51 = arith.constant 0 : index
    %122 = vector.load %arg15[%c0_50, %c0_51] : memref<4x128xf32, #tpu.memory_space<vmem>>, vector<4x128xf32>
    tpu.vector_store %arg15[%c0_50, %c0_51], %121 {strides = array<i32>} : memref<4x128xf32, #tpu.memory_space<vmem>>, vector<4x128xf32>,
    return
  }
}

</mosaic_0001>

<llo_original>
// kernel: classification_forward.1
$region0: #{classification_forward.1}
  #allocation0 [shape = 'u32[]', space=smem, size = 0x4, offset = 0x4, fixed_abs, tag = 'smem constant byte address 0x4 - core index']
  #allocation1 [shape = 'u32[72,128]{1,0:T(1,128)}', space=vmem, size = 0x9000, scoped, tag = 'internal scratch']
  %s0 = inlined_call_operand.vmem [shape: bf16[64,2816], index: 0, kind: input, shape index: {}]
  %s1 = inlined_call_operand.vmem [shape: bf16[2816,384], index: 1, kind: input, shape index: {}]
  %s2 = inlined_call_operand.vmem [shape: f32[1,384], index: 2, kind: input, shape index: {}]
  %s3 = inlined_call_operand.vmem [shape: bf16[640,1024], index: 3, kind: input, shape index: {}]
  %s4 = inlined_call_operand.vmem [shape: f32[1,1024], index: 4, kind: input, shape index: {}]
  %s5 = inlined_call_operand.vmem [shape: bf16[256,128], index: 5, kind: input, shape index: {}]
  %s6 = inlined_call_operand.vmem [shape: f32[1,128], index: 6, kind: input, shape index: {}]
  %s7 = inlined_call_operand.vmem [shape: f32[1,128], index: 7, kind: input, shape index: {}]
  %s8 = inlined_call_operand.vmem [shape: f32[1,128], index: 8, kind: input, shape index: {}]
  %s9 = inlined_call_operand.vmem [shape: bf16[128,128], index: 9, kind: input, shape index: {}]
  %s10 = inlined_call_operand.vmem [shape: f32[1,128], index: 10, kind: input, shape index: {}]
  %s11 = inlined_call_operand.vmem [shape: f32[1,128], index: 11, kind: input, shape index: {}]
  %s12 = inlined_call_operand.vmem [shape: f32[1,128], index: 12, kind: input, shape index: {}]
  %s13 = inlined_call_operand.vmem [shape: bf16[128,128], index: 13, kind: input, shape index: {}]
  %s14 = inlined_call_operand.vmem [shape: f32[1,128], index: 14, kind: input, shape index: {}]
  %s15 = inlined_call_operand.hbm [shape: f32[4,128], index: 15, kind: output, shape index: {}]
  %s16 = sld [smem:[#allocation0]]
  $region70: #{classification_forward.1} parent=0
    _
  %s18 = ssub.s32 1, %s16
  %s19 = scalar_select 0, %s18, %s16
  $region1: #{classification_forward.1} parent=0
    #allocation2 [shape = 'u8[2048]{0}', space=vmem, size = 0x800, scoped, tag = 'output window, operand 0, single buffered']
    #allocation3 [shape = 's32[1]{0}', space=sflag, size = 0x4, scoped, tag = 'scoped memory for classification_forward.1']
    %20 = vsyncpa [#allocation3], 0
    // Predicated region
    $region2: #{classification_forward.1} parent=1 // pred_check
      _
    $region3: #{classification_forward.1} parent=1 // pred_check_branch
      %22 = sbr.rel (0) target = $region5
    $region4: #{classification_forward.1} parent=1 // pred_region
      _
    $region5: #{classification_forward.1} parent=1 // pred_fallthru
      _
    // Predicated region
    $region6: #{classification_forward.1} parent=1 // pred_check
      _
    $region7: #{classification_forward.1} parent=1 // pred_check_branch
      %24 = sbr.rel (0) target = $region9
    $region8: #{classification_forward.1} parent=1 // pred_region
      _
    $region9: #{classification_forward.1} parent=1 // pred_fallthru
      _
    // Predicated region
    $region10: #{classification_forward.1} parent=1 // pred_check
      _
    $region11: #{classification_forward.1} parent=1 // pred_check_branch
      %26 = sbr.rel (0) target = $region13
    $region12: #{classification_forward.1} parent=1 // pred_region
      _
    $region13: #{classification_forward.1} parent=1 // pred_fallthru
      _
    // Predicated region
    $region14: #{classification_forward.1} parent=1 // pred_check
      _
    $region15: #{classification_forward.1} parent=1 // pred_check_branch
      %28 = sbr.rel (0) target = $region17
    $region16: #{classification_forward.1} parent=1 // pred_region
      _
    $region17: #{classification_forward.1} parent=1 // pred_fallthru
      _
    // Predicated region
    $region18: #{classification_forward.1} parent=1 // pred_check
      _
    $region19: #{classification_forward.1} parent=1 // pred_check_branch
      %30 = sbr.rel (0) target = $region21
    $region20: #{classification_forward.1} parent=1 // pred_region
      _
    $region21: #{classification_forward.1} parent=1 // pred_fallthru
      _
    // Predicated region
    $region22: #{classification_forward.1} parent=1 // pred_check
      _
    $region23: #{classification_forward.1} parent=1 // pred_check_branch
      %32 = sbr.rel (0) target = $region25
    $region24: #{classification_forward.1} parent=1 // pred_region
      _
    $region25: #{classification_forward.1} parent=1 // pred_fallthru
      _
    // Predicated region
    $region26: #{classification_forward.1} parent=1 // pred_check
      _
    $region27: #{classification_forward.1} parent=1 // pred_check_branch
      %34 = sbr.rel (0) target = $region29
    $region28: #{classification_forward.1} parent=1 // pred_region
      _
    $region29: #{classification_forward.1} parent=1 // pred_fallthru
      _
    // Predicated region
    $region30: #{classification_forward.1} parent=1 // pred_check
      _
    $region31: #{classification_forward.1} parent=1 // pred_check_branch
      %36 = sbr.rel (0) target = $region33
    $region32: #{classification_forward.1} parent=1 // pred_region
      _
    $region33: #{classification_forward.1} parent=1 // pred_fallthru
      _
    // Predicated region
    $region34: #{classification_forward.1} parent=1 // pred_check
      _
    $region35: #{classification_forward.1} parent=1 // pred_check_branch
      %38 = sbr.rel (0) target = $region37
    $region36: #{classification_forward.1} parent=1 // pred_region
      _
    $region37: #{classification_forward.1} parent=1 // pred_fallthru
      _
    // Predicated region
    $region38: #{classification_forward.1} parent=1 // pred_check
      _
    $region39: #{classification_forward.1} parent=1 // pred_check_branch
      %40 = sbr.rel (0) target = $region41
    $region40: #{classification_forward.1} parent=1 // pred_region
      _
    $region41: #{classification_forward.1} parent=1 // pred_fallthru
      _
    // Predicated region
    $region42: #{classification_forward.1} parent=1 // pred_check
      _
    $region43: #{classification_forward.1} parent=1 // pred_check_branch
      %42 = sbr.rel (0) target = $region45
    $region44: #{classification_forward.1} parent=1 // pred_region
      _
    $region45: #{classification_forward.1} parent=1 // pred_fallthru
      _
    // Predicated region
    $region46: #{classification_forward.1} parent=1 // pred_check
      _
    $region47: #{classification_forward.1} parent=1 // pred_check_branch
      %44 = sbr.rel (0) target = $region49
    $region48: #{classification_forward.1} parent=1 // pred_region
      _
    $region49: #{classification_forward.1} parent=1 // pred_fallthru
      _
    // Predicated region
    $region50: #{classification_forward.1} parent=1 // pred_check
      _
    $region51: #{classification_forward.1} parent=1 // pred_check_branch
      %46 = sbr.rel (0) target = $region53
    $region52: #{classification_forward.1} parent=1 // pred_region
      _
    $region53: #{classification_forward.1} parent=1 // pred_fallthru
      _
    // Predicated region
    $region54: #{classification_forward.1} parent=1 // pred_check
      _
    $region55: #{classification_forward.1} parent=1 // pred_check_branch
      %48 = sbr.rel (0) target = $region57
    $region56: #{classification_forward.1} parent=1 // pred_region
      _
    $region57: #{classification_forward.1} parent=1 // pred_fallthru
      _
    // Predicated region
    $region58: #{classification_forward.1} parent=1 // pred_check
      _
    $region59: #{classification_forward.1} parent=1 // pred_check_branch
      %50 = sbr.rel (0) target = $region61
    $region60: #{classification_forward.1} parent=1 // pred_region
      _
    $region61: #{classification_forward.1} parent=1 // pred_fallthru
      _
    %v51 = vld [vmem:[%s0] sm:$0xff]
    %v52 = vld [vmem:[%s0 + $0x8] sm:$0xff]
    %v53 = vld [vmem:[%s0 + $0x10] sm:$0xff]
    %v54 = vld [vmem:[%s0 + $0x18] sm:$0xff]
    %v55 = vld [vmem:[%s0 + $0x20] sm:$0xff]
    %v56 = vld [vmem:[%s0 + $0x28] sm:$0xff]
    %v57 = vld [vmem:[%s0 + $0x30] sm:$0xff]
    %v58 = vld [vmem:[%s0 + $0x38] sm:$0xff]
    %v59 = vld [vmem:[%s0 + $0x40] sm:$0xff]
    %v60 = vld [vmem:[%s0 + $0x48] sm:$0xff]
    %v61 = vld [vmem:[%s0 + $0x50] sm:$0xff]
    %v62 = vld [vmem:[%s0 + $0x58] sm:$0xff]
    %v63 = vld [vmem:[%s0 + $0x60] sm:$0xff]
    %v64 = vld [vmem:[%s0 + $0x68] sm:$0xff]
    %v65 = vld [vmem:[%s0 + $0x70] sm:$0xff]
    %v66 = vld [vmem:[%s0 + $0x78] sm:$0xff]
    %v67 = vld [vmem:[%s0 + $0x80] sm:$0xff]
    %v68 = vld [vmem:[%s0 + $0x88] sm:$0xff]
    %v69 = vld [vmem:[%s0 + $0x90] sm:$0xff]
    %v70 = vld [vmem:[%s0 + $0x98] sm:$0xff]
    %v71 = vld [vmem:[%s0 + $0xa0] sm:$0xff]
    %v72 = vld [vmem:[%s0 + $0xa8] sm:$0xff]
    %v73 = vld [vmem:[%s0 + $0xb0] sm:$0xff]
    %v74 = vld [vmem:[%s0 + $0xb8] sm:$0xff]
    %v75 = vld [vmem:[%s0 + $0xc0] sm:$0xff]
    %v76 = vld [vmem:[%s0 + $0xc8] sm:$0xff]
    %v77 = vld [vmem:[%s0 + $0xd0] sm:$0xff]
    %v78 = vld [vmem:[%s0 + $0xd8] sm:$0xff]
    %v79 = vld [vmem:[%s0 + $0xe0] sm:$0xff]
    %v80 = vld [vmem:[%s0 + $0xe8] sm:$0xff]
    %v81 = vld [vmem:[%s0 + $0xf0] sm:$0xff]
    %v82 = vld [vmem:[%s0 + $0xf8] sm:$0xff]
    %v83 = vld [vmem:[%s0 + $0x100] sm:$0xff]
    %v84 = vld [vmem:[%s0 + $0x108] sm:$0xff]
    %v85 = vld [vmem:[%s0 + $0x110] sm:$0xff]
    %v86 = vld [vmem:[%s0 + $0x118] sm:$0xff]
    %v87 = vld [vmem:[%s0 + $0x120] sm:$0xff]
    %v88 = vld [vmem:[%s0 + $0x128] sm:$0xff]
    %v89 = vld [vmem:[%s0 + $0x130] sm:$0xff]
    %v90 = vld [vmem:[%s0 + $0x138] sm:$0xff]
    %v91 = vld [vmem:[%s0 + $0x140] sm:$0xff]
    %v92 = vld [vmem:[%s0 + $0x148] sm:$0xff]
    %v93 = vld [vmem:[%s0 + $0x150] sm:$0xff]
    %v94 = vld [vmem:[%s0 + $0x158] sm:$0xff]
    %v95 = vld [vmem:[%s0 + $0x160] sm:$0xff]
    %v96 = vld [vmem:[%s0 + $0x168] sm:$0xff]
    %v97 = vld [vmem:[%s0 + $0x170] sm:$0xff]
    %v98 = vld [vmem:[%s0 + $0x178] sm:$0xff]
    %v99 = vld [vmem:[%s0 + $0x180] sm:$0xff]
    %v100 = vld [vmem:[%s0 + $0x188] sm:$0xff]
    %v101 = vld [vmem:[%s0 + $0x190] sm:$0xff]
    %v102 = vld [vmem:[%s0 + $0x198] sm:$0xff]
    %v103 = vld [vmem:[%s0 + $0x1a0] sm:$0xff]
    %v104 = vld [vmem:[%s0 + $0x1a8] sm:$0xff]
    %v105 = vld [vmem:[%s0 + $0x1b0] sm:$0xff]
    %v106 = vld [vmem:[%s0 + $0x1b8] sm:$0xff]
    %v107 = vld [vmem:[%s0 + $0x1c0] sm:$0xff]
    %v108 = vld [vmem:[%s0 + $0x1c8] sm:$0xff]
    %v109 = vld [vmem:[%s0 + $0x1d0] sm:$0xff]
    %v110 = vld [vmem:[%s0 + $0x1d8] sm:$0xff]
    %v111 = vld [vmem:[%s0 + $0x1e0] sm:$0xff]
    %v112 = vld [vmem:[%s0 + $0x1e8] sm:$0xff]
    %v113 = vld [vmem:[%s0 + $0x1f0] sm:$0xff]
    %v114 = vld [vmem:[%s0 + $0x1f8] sm:$0xff]
    %v115 = vld [vmem:[%s0 + $0x200] sm:$0xff]
    %v116 = vld [vmem:[%s0 + $0x208] sm:$0xff]
    %v117 = vld [vmem:[%s0 + $0x210] sm:$0xff]
    %v118 = vld [vmem:[%s0 + $0x218] sm:$0xff]
    %v119 = vld [vmem:[%s0 + $0x220] sm:$0xff]
    %v120 = vld [vmem:[%s0 + $0x228] sm:$0xff]
    %v121 = vld [vmem:[%s0 + $0x230] sm:$0xff]
    %v122 = vld [vmem:[%s0 + $0x238] sm:$0xff]
    %v123 = vld [vmem:[%s0 + $0x240] sm:$0xff]
    %v124 = vld [vmem:[%s0 + $0x248] sm:$0xff]
    %v125 = vld [vmem:[%s0 + $0x250] sm:$0xff]
    %v126 = vld [vmem:[%s0 + $0x258] sm:$0xff]
    %v127 = vld [vmem:[%s0 + $0x260] sm:$0xff]
    %v128 = vld [vmem:[%s0 + $0x268] sm:$0xff]
    %v129 = vld [vmem:[%s0 + $0x270] sm:$0xff]
    %v130 = vld [vmem:[%s0 + $0x278] sm:$0xff]
    %v131 = vld [vmem:[%s0 + $0x280] sm:$0xff]
    %v132 = vld [vmem:[%s0 + $0x288] sm:$0xff]
    %v133 = vld [vmem:[%s0 + $0x290] sm:$0xff]
    %v134 = vld [vmem:[%s0 + $0x298] sm:$0xff]
    %v135 = vld [vmem:[%s0 + $0x2a0] sm:$0xff]
    %v136 = vld [vmem:[%s0 + $0x2a8] sm:$0xff]
    %v137 = vld [vmem:[%s0 + $0x2b0] sm:$0xff]
    %v138 = vld [vmem:[%s0 + $0x2b8] sm:$0xff]
    %v139 = vld [vmem:[%s1] sm:$0xff]
    %v140 = vld [vmem:[%s1 + $0x8] sm:$0xf]
    %v141 = vld [vmem:[%s1 + $0xc] sm:$0xff]
    %v142 = vld [vmem:[%s1 + $0x14] sm:$0xf]
    %v143 = vld [vmem:[%s1 + $0x18] sm:$0xff]
    %v144 = vld [vmem:[%s1 + $0x20] sm:$0xf]
    %v145 = vld [vmem:[%s1 + $0x24] sm:$0xff]
    %v146 = vld [vmem:[%s1 + $0x2c] sm:$0xf]
    %v147 = vld [vmem:[%s1 + $0x30] sm:$0xff]
    %v148 = vld [vmem:[%s1 + $0x38] sm:$0xf]
    %v149 = vld [vmem:[%s1 + $0x3c] sm:$0xff]
    %v150 = vld [vmem:[%s1 + $0x44] sm:$0xf]
    %v151 = vld [vmem:[%s1 + $0x48] sm:$0xff]
    %v152 = vld [vmem:[%s1 + $0x50] sm:$0xf]
    %v153 = vld [vmem:[%s1 + $0x54] sm:$0xff]
    %v154 = vld [vmem:[%s1 + $0x5c] sm:$0xf]
    %v155 = vld [vmem:[%s1 + $0x60] sm:$0xff]
    %v156 = vld [vmem:[%s1 + $0x68] sm:$0xf]
    %v157 = vld [vmem:[%s1 + $0x6c] sm:$0xff]
    %v158 = vld [vmem:[%s1 + $0x74] sm:$0xf]
    %v159 = vld [vmem:[%s1 + $0x78] sm:$0xff]
    %v160 = vld [vmem:[%s1 + $0x80] sm:$0xf]
    %v161 = vld [vmem:[%s1 + $0x84] sm:$0xff]
    %v162 = vld [vmem:[%s1 + $0x8c] sm:$0xf]
    %v163 = vld [vmem:[%s1 + $0x90] sm:$0xff]
    %v164 = vld [vmem:[%s1 + $0x98] sm:$0xf]
    %v165 = vld [vmem:[%s1 + $0x9c] sm:$0xff]
    %v166 = vld [vmem:[%s1 + $0xa4] sm:$0xf]
    %v167 = vld [vmem:[%s1 + $0xa8] sm:$0xff]
    %v168 = vld [vmem:[%s1 + $0xb0] sm:$0xf]
    %v169 = vld [vmem:[%s1 + $0xb4] sm:$0xff]
    %v170 = vld [vmem:[%s1 + $0xbc] sm:$0xf]
    %v171 = vld [vmem:[%s1 + $0xc0] sm:$0xff]
    %v172 = vld [vmem:[%s1 + $0xc8] sm:$0xf]
    %v173 = vld [vmem:[%s1 + $0xcc] sm:$0xff]
    %v174 = vld [vmem:[%s1 + $0xd4] sm:$0xf]
    %v175 = vld [vmem:[%s1 + $0xd8] sm:$0xff]
    %v176 = vld [vmem:[%s1 + $0xe0] sm:$0xf]
    %v177 = vld [vmem:[%s1 + $0xe4] sm:$0xff]
    %v178 = vld [vmem:[%s1 + $0xec] sm:$0xf]
    %v179 = vld [vmem:[%s1 + $0xf0] sm:$0xff]
    %v180 = vld [vmem:[%s1 + $0xf8] sm:$0xf]
    %v181 = vld [vmem:[%s1 + $0xfc] sm:$0xff]
    %v182 = vld [vmem:[%s1 + $0x104] sm:$0xf]
    %v183 = vld [vmem:[%s1 + $0x108] sm:$0xff]
    %v184 = vld [vmem:[%s1 + $0x110] sm:$0xf]
    %v185 = vld [vmem:[%s1 + $0x114] sm:$0xff]
    %v186 = vld [vmem:[%s1 + $0x11c] sm:$0xf]
    %v187 = vld [vmem:[%s1 + $0x120] sm:$0xff]
    %v188 = vld [vmem:[%s1 + $0x128] sm:$0xf]
    %v189 = vld [vmem:[%s1 + $0x12c] sm:$0xff]
    %v190 = vld [vmem:[%s1 + $0x134] sm:$0xf]
    %v191 = vld [vmem:[%s1 + $0x138] sm:$0xff]
    %v192 = vld [vmem:[%s1 + $0x140] sm:$0xf]
    %v193 = vld [vmem:[%s1 + $0x144] sm:$0xff]
    %v194 = vld [vmem:[%s1 + $0x14c] sm:$0xf]
    %v195 = vld [vmem:[%s1 + $0x150] sm:$0xff]
    %v196 = vld [vmem:[%s1 + $0x158] sm:$0xf]
    %v197 = vld [vmem:[%s1 + $0x15c] sm:$0xff]
    %v198 = vld [vmem:[%s1 + $0x164] sm:$0xf]
    %v199 = vld [vmem:[%s1 + $0x168] sm:$0xff]
    %v200 = vld [vmem:[%s1 + $0x170] sm:$0xf]
    %v201 = vld [vmem:[%s1 + $0x174] sm:$0xff]
    %v202 = vld [vmem:[%s1 + $0x17c] sm:$0xf]
    %v203 = vld [vmem:[%s1 + $0x180] sm:$0xff]
    %v204 = vld [vmem:[%s1 + $0x188] sm:$0xf]
    %v205 = vld [vmem:[%s1 + $0x18c] sm:$0xff]
    %v206 = vld [vmem:[%s1 + $0x194] sm:$0xf]
    %v207 = vld [vmem:[%s1 + $0x198] sm:$0xff]
    %v208 = vld [vmem:[%s1 + $0x1a0] sm:$0xf]
    %v209 = vld [vmem:[%s1 + $0x1a4] sm:$0xff]
    %v210 = vld [vmem:[%s1 + $0x1ac] sm:$0xf]
    %v211 = vld [vmem:[%s1 + $0x1b0] sm:$0xff]
    %v212 = vld [vmem:[%s1 + $0x1b8] sm:$0xf]
    %v213 = vld [vmem:[%s1 + $0x1bc] sm:$0xff]
    %v214 = vld [vmem:[%s1 + $0x1c4] sm:$0xf]
    %v215 = vld [vmem:[%s1 + $0x1c8] sm:$0xff]
    %v216 = vld [vmem:[%s1 + $0x1d0] sm:$0xf]
    %v217 = vld [vmem:[%s1 + $0x1d4] sm:$0xff]
    %v218 = vld [vmem:[%s1 + $0x1dc] sm:$0xf]
    %v219 = vld [vmem:[%s1 + $0x1e0] sm:$0xff]
    %v220 = vld [vmem:[%s1 + $0x1e8] sm:$0xf]
    %v221 = vld [vmem:[%s1 + $0x1ec] sm:$0xff]
    %v222 = vld [vmem:[%s1 + $0x1f4] sm:$0xf]
    %v223 = vld [vmem:[%s1 + $0x1f8] sm:$0xff]
    %v224 = vld [vmem:[%s1 + $0x200] sm:$0xf]
    %v225 = vld [vmem:[%s1 + $0x204] sm:$0xff]
    %v226 = vld [vmem:[%s1 + $0x20c] sm:$0xf]
    %v227 = vld [vmem:[%s1 + $0x210] sm:$0xff]
    %v228 = vld [vmem:[%s1 + $0x218] sm:$0xf]
    %v229 = vld [vmem:[%s1 + $0x21c] sm:$0xff]
    %v230 = vld [vmem:[%s1 + $0x224] sm:$0xf]
    %v231 = vld [vmem:[%s1 + $0x228] sm:$0xff]
    %v232 = vld [vmem:[%s1 + $0x230] sm:$0xf]
    %v233 = vld [vmem:[%s1 + $0x234] sm:$0xff]
    %v234 = vld [vmem:[%s1 + $0x23c] sm:$0xf]
    %v235 = vld [vmem:[%s1 + $0x240] sm:$0xff]
    %v236 = vld [vmem:[%s1 + $0x248] sm:$0xf]
    %v237 = vld [vmem:[%s1 + $0x24c] sm:$0xff]
    %v238 = vld [vmem:[%s1 + $0x254] sm:$0xf]
    %v239 = vld [vmem:[%s1 + $0x258] sm:$0xff]
    %v240 = vld [vmem:[%s1 + $0x260] sm:$0xf]
    %v241 = vld [vmem:[%s1 + $0x264] sm:$0xff]
    %v242 = vld [vmem:[%s1 + $0x26c] sm:$0xf]
    %v243 = vld [vmem:[%s1 + $0x270] sm:$0xff]
    %v244 = vld [vmem:[%s1 + $0x278] sm:$0xf]
    %v245 = vld [vmem:[%s1 + $0x27c] sm:$0xff]
    %v246 = vld [vmem:[%s1 + $0x284] sm:$0xf]
    %v247 = vld [vmem:[%s1 + $0x288] sm:$0xff]
    %v248 = vld [vmem:[%s1 + $0x290] sm:$0xf]
    %v249 = vld [vmem:[%s1 + $0x294] sm:$0xff]
    %v250 = vld [vmem:[%s1 + $0x29c] sm:$0xf]
    %v251 = vld [vmem:[%s1 + $0x2a0] sm:$0xff]
    %v252 = vld [vmem:[%s1 + $0x2a8] sm:$0xf]
    %v253 = vld [vmem:[%s1 + $0x2ac] sm:$0xff]
    %v254 = vld [vmem:[%s1 + $0x2b4] sm:$0xf]
    %v255 = vld [vmem:[%s1 + $0x2b8] sm:$0xff]
    %v256 = vld [vmem:[%s1 + $0x2c0] sm:$0xf]
    %v257 = vld [vmem:[%s1 + $0x2c4] sm:$0xff]
    %v258 = vld [vmem:[%s1 + $0x2cc] sm:$0xf]
    %v259 = vld [vmem:[%s1 + $0x2d0] sm:$0xff]
    %v260 = vld [vmem:[%s1 + $0x2d8] sm:$0xf]
    %v261 = vld [vmem:[%s1 + $0x2dc] sm:$0xff]
    %v262 = vld [vmem:[%s1 + $0x2e4] sm:$0xf]
    %v263 = vld [vmem:[%s1 + $0x2e8] sm:$0xff]
    %v264 = vld [vmem:[%s1 + $0x2f0] sm:$0xf]
    %v265 = vld [vmem:[%s1 + $0x2f4] sm:$0xff]
    %v266 = vld [vmem:[%s1 + $0x2fc] sm:$0xf]
    %v267 = vld [vmem:[%s1 + $0x300] sm:$0xff]
    %v268 = vld [vmem:[%s1 + $0x308] sm:$0xf]
    %v269 = vld [vmem:[%s1 + $0x30c] sm:$0xff]
    %v270 = vld [vmem:[%s1 + $0x314] sm:$0xf]
    %v271 = vld [vmem:[%s1 + $0x318] sm:$0xff]
    %v272 = vld [vmem:[%s1 + $0x320] sm:$0xf]
    %v273 = vld [vmem:[%s1 + $0x324] sm:$0xff]
    %v274 = vld [vmem:[%s1 + $0x32c] sm:$0xf]
    %v275 = vld [vmem:[%s1 + $0x330] sm:$0xff]
    %v276 = vld [vmem:[%s1 + $0x338] sm:$0xf]
    %v277 = vld [vmem:[%s1 + $0x33c] sm:$0xff]
    %v278 = vld [vmem:[%s1 + $0x344] sm:$0xf]
    %v279 = vld [vmem:[%s1 + $0x348] sm:$0xff]
    %v280 = vld [vmem:[%s1 + $0x350] sm:$0xf]
    %v281 = vld [vmem:[%s1 + $0x354] sm:$0xff]
    %v282 = vld [vmem:[%s1 + $0x35c] sm:$0xf]
    %v283 = vld [vmem:[%s1 + $0x360] sm:$0xff]
    %v284 = vld [vmem:[%s1 + $0x368] sm:$0xf]
    %v285 = vld [vmem:[%s1 + $0x36c] sm:$0xff]
    %v286 = vld [vmem:[%s1 + $0x374] sm:$0xf]
    %v287 = vld [vmem:[%s1 + $0x378] sm:$0xff]
    %v288 = vld [vmem:[%s1 + $0x380] sm:$0xf]
    %v289 = vld [vmem:[%s1 + $0x384] sm:$0xff]
    %v290 = vld [vmem:[%s1 + $0x38c] sm:$0xf]
    %v291 = vld [vmem:[%s1 + $0x390] sm:$0xff]
    %v292 = vld [vmem:[%s1 + $0x398] sm:$0xf]
    %v293 = vld [vmem:[%s1 + $0x39c] sm:$0xff]
    %v294 = vld [vmem:[%s1 + $0x3a4] sm:$0xf]
    %v295 = vld [vmem:[%s1 + $0x3a8] sm:$0xff]
    %v296 = vld [vmem:[%s1 + $0x3b0] sm:$0xf]
    %v297 = vld [vmem:[%s1 + $0x3b4] sm:$0xff]
    %v298 = vld [vmem:[%s1 + $0x3bc] sm:$0xf]
    %v299 = vld [vmem:[%s1 + $0x3c0] sm:$0xff]
    %v300 = vld [vmem:[%s1 + $0x3c8] sm:$0xf]
    %v301 = vld [vmem:[%s1 + $0x3cc] sm:$0xff]
    %v302 = vld [vmem:[%s1 + $0x3d4] sm:$0xf]
    %v303 = vld [vmem:[%s1 + $0x3d8] sm:$0xff]
    %v304 = vld [vmem:[%s1 + $0x3e0] sm:$0xf]
    %v305 = vld [vmem:[%s1 + $0x3e4] sm:$0xff]
    %v306 = vld [vmem:[%s1 + $0x3ec] sm:$0xf]
    %v307 = vld [vmem:[%s1 + $0x3f0] sm:$0xff]
    %v308 = vld [vmem:[%s1 + $0x3f8] sm:$0xf]
    %v309 = vld [vmem:[%s1 + $0x3fc] sm:$0xff]
    %v310 = vld [vmem:[%s1 + $0x404] sm:$0xf]
    %v311 = vld [vmem:[%s1 + $0x408] sm:$0xff]
    %v312 = vld [vmem:[%s1 + $0x410] sm:$0xf]
    %v313 = vld [vmem:[%s1 + $0x414] sm:$0xff]
    %v314 = vld [vmem:[%s1 + $0x41c] sm:$0xf]
    %v315 = vld [vmem:[%s1 + $0x420] sm:$0xff]
    %v316 = vld [vmem:[%s1 + $0x428] sm:$0xf]
    %v317 = vld [vmem:[%s1 + $0x42c] sm:$0xff]
    %v318 = vld [vmem:[%s1 + $0x434] sm:$0xf]
    %v319 = vld [vmem:[%s1 + $0x438] sm:$0xff]
    %v320 = vld [vmem:[%s1 + $0x440] sm:$0xf]
    %v321 = vld [vmem:[%s1 + $0x444] sm:$0xff]
    %v322 = vld [vmem:[%s1 + $0x44c] sm:$0xf]
    %v323 = vld [vmem:[%s1 + $0x450] sm:$0xff]
    %v324 = vld [vmem:[%s1 + $0x458] sm:$0xf]
    %v325 = vld [vmem:[%s1 + $0x45c] sm:$0xff]
    %v326 = vld [vmem:[%s1 + $0x464] sm:$0xf]
    %v327 = vld [vmem:[%s1 + $0x468] sm:$0xff]
    %v328 = vld [vmem:[%s1 + $0x470] sm:$0xf]
    %v329 = vld [vmem:[%s1 + $0x474] sm:$0xff]
    %v330 = vld [vmem:[%s1 + $0x47c] sm:$0xf]
    %v331 = vld [vmem:[%s1 + $0x480] sm:$0xff]
    %v332 = vld [vmem:[%s1 + $0x488] sm:$0xf]
    %v333 = vld [vmem:[%s1 + $0x48c] sm:$0xff]
    %v334 = vld [vmem:[%s1 + $0x494] sm:$0xf]
    %v335 = vld [vmem:[%s1 + $0x498] sm:$0xff]
    %v336 = vld [vmem:[%s1 + $0x4a0] sm:$0xf]
    %v337 = vld [vmem:[%s1 + $0x4a4] sm:$0xff]
    %v338 = vld [vmem:[%s1 + $0x4ac] sm:$0xf]
    %v339 = vld [vmem:[%s1 + $0x4b0] sm:$0xff]
    %v340 = vld [vmem:[%s1 + $0x4b8] sm:$0xf]
    %v341 = vld [vmem:[%s1 + $0x4bc] sm:$0xff]
    %v342 = vld [vmem:[%s1 + $0x4c4] sm:$0xf]
    %v343 = vld [vmem:[%s1 + $0x4c8] sm:$0xff]
    %v344 = vld [vmem:[%s1 + $0x4d0] sm:$0xf]
    %v345 = vld [vmem:[%s1 + $0x4d4] sm:$0xff]
    %v346 = vld [vmem:[%s1 + $0x4dc] sm:$0xf]
    %v347 = vld [vmem:[%s1 + $0x4e0] sm:$0xff]
    %v348 = vld [vmem:[%s1 + $0x4e8] sm:$0xf]
    %v349 = vld [vmem:[%s1 + $0x4ec] sm:$0xff]
    %v350 = vld [vmem:[%s1 + $0x4f4] sm:$0xf]
    %v351 = vld [vmem:[%s1 + $0x4f8] sm:$0xff]
    %v352 = vld [vmem:[%s1 + $0x500] sm:$0xf]
    %v353 = vld [vmem:[%s1 + $0x504] sm:$0xff]
    %v354 = vld [vmem:[%s1 + $0x50c] sm:$0xf]
    %v355 = vld [vmem:[%s1 + $0x510] sm:$0xff]
    %v356 = vld [vmem:[%s1 + $0x518] sm:$0xf]
    %v357 = vld [vmem:[%s1 + $0x51c] sm:$0xff]
    %v358 = vld [vmem:[%s1 + $0x524] sm:$0xf]
    %v359 = vld [vmem:[%s1 + $0x528] sm:$0xff]
    %v360 = vld [vmem:[%s1 + $0x530] sm:$0xf]
    %v361 = vld [vmem:[%s1 + $0x534] sm:$0xff]
    %v362 = vld [vmem:[%s1 + $0x53c] sm:$0xf]
    %v363 = vld [vmem:[%s1 + $0x540] sm:$0xff]
    %v364 = vld [vmem:[%s1 + $0x548] sm:$0xf]
    %v365 = vld [vmem:[%s1 + $0x54c] sm:$0xff]
    %v366 = vld [vmem:[%s1 + $0x554] sm:$0xf]
    %v367 = vld [vmem:[%s1 + $0x558] sm:$0xff]
    %v368 = vld [vmem:[%s1 + $0x560] sm:$0xf]
    %v369 = vld [vmem:[%s1 + $0x564] sm:$0xff]
    %v370 = vld [vmem:[%s1 + $0x56c] sm:$0xf]
    %v371 = vld [vmem:[%s1 + $0x570] sm:$0xff]
    %v372 = vld [vmem:[%s1 + $0x578] sm:$0xf]
    %v373 = vld [vmem:[%s1 + $0x57c] sm:$0xff]
    %v374 = vld [vmem:[%s1 + $0x584] sm:$0xf]
    %v375 = vld [vmem:[%s1 + $0x588] sm:$0xff]
    %v376 = vld [vmem:[%s1 + $0x590] sm:$0xf]
    %v377 = vld [vmem:[%s1 + $0x594] sm:$0xff]
    %v378 = vld [vmem:[%s1 + $0x59c] sm:$0xf]
    %v379 = vld [vmem:[%s1 + $0x5a0] sm:$0xff]
    %v380 = vld [vmem:[%s1 + $0x5a8] sm:$0xf]
    %v381 = vld [vmem:[%s1 + $0x5ac] sm:$0xff]
    %v382 = vld [vmem:[%s1 + $0x5b4] sm:$0xf]
    %v383 = vld [vmem:[%s1 + $0x5b8] sm:$0xff]
    %v384 = vld [vmem:[%s1 + $0x5c0] sm:$0xf]
    %v385 = vld [vmem:[%s1 + $0x5c4] sm:$0xff]
    %v386 = vld [vmem:[%s1 + $0x5cc] sm:$0xf]
    %v387 = vld [vmem:[%s1 + $0x5d0] sm:$0xff]
    %v388 = vld [vmem:[%s1 + $0x5d8] sm:$0xf]
    %v389 = vld [vmem:[%s1 + $0x5dc] sm:$0xff]
    %v390 = vld [vmem:[%s1 + $0x5e4] sm:$0xf]
    %v391 = vld [vmem:[%s1 + $0x5e8] sm:$0xff]
    %v392 = vld [vmem:[%s1 + $0x5f0] sm:$0xf]
    %v393 = vld [vmem:[%s1 + $0x5f4] sm:$0xff]
    %v394 = vld [vmem:[%s1 + $0x5fc] sm:$0xf]
    %v395 = vld [vmem:[%s1 + $0x600] sm:$0xff]
    %v396 = vld [vmem:[%s1 + $0x608] sm:$0xf]
    %v397 = vld [vmem:[%s1 + $0x60c] sm:$0xff]
    %v398 = vld [vmem:[%s1 + $0x614] sm:$0xf]
    %v399 = vld [vmem:[%s1 + $0x618] sm:$0xff]
    %v400 = vld [vmem:[%s1 + $0x620] sm:$0xf]
    %v401 = vld [vmem:[%s1 + $0x624] sm:$0xff]
    %v402 = vld [vmem:[%s1 + $0x62c] sm:$0xf]
    %v403 = vld [vmem:[%s1 + $0x630] sm:$0xff]
    %v404 = vld [vmem:[%s1 + $0x638] sm:$0xf]
    %v405 = vld [vmem:[%s1 + $0x63c] sm:$0xff]
    %v406 = vld [vmem:[%s1 + $0x644] sm:$0xf]
    %v407 = vld [vmem:[%s1 + $0x648] sm:$0xff]
    %v408 = vld [vmem:[%s1 + $0x650] sm:$0xf]
    %v409 = vld [vmem:[%s1 + $0x654] sm:$0xff]
    %v410 = vld [vmem:[%s1 + $0x65c] sm:$0xf]
    %v411 = vld [vmem:[%s1 + $0x660] sm:$0xff]
    %v412 = vld [vmem:[%s1 + $0x668] sm:$0xf]
    %v413 = vld [vmem:[%s1 + $0x66c] sm:$0xff]
    %v414 = vld [vmem:[%s1 + $0x674] sm:$0xf]
    %v415 = vld [vmem:[%s1 + $0x678] sm:$0xff]
    %v416 = vld [vmem:[%s1 + $0x680] sm:$0xf]
    %v417 = vld [vmem:[%s1 + $0x684] sm:$0xff]
    %v418 = vld [vmem:[%s1 + $0x68c] sm:$0xf]
    %v419 = vld [vmem:[%s1 + $0x690] sm:$0xff]
    %v420 = vld [vmem:[%s1 + $0x698] sm:$0xf]
    %v421 = vld [vmem:[%s1 + $0x69c] sm:$0xff]
    %v422 = vld [vmem:[%s1 + $0x6a4] sm:$0xf]
    %v423 = vld [vmem:[%s1 + $0x6a8] sm:$0xff]
    %v424 = vld [vmem:[%s1 + $0x6b0] sm:$0xf]
    %v425 = vld [vmem:[%s1 + $0x6b4] sm:$0xff]
    %v426 = vld [vmem:[%s1 + $0x6bc] sm:$0xf]
    %v427 = vld [vmem:[%s1 + $0x6c0] sm:$0xff]
    %v428 = vld [vmem:[%s1 + $0x6c8] sm:$0xf]
    %v429 = vld [vmem:[%s1 + $0x6cc] sm:$0xff]
    %v430 = vld [vmem:[%s1 + $0x6d4] sm:$0xf]
    %v431 = vld [vmem:[%s1 + $0x6d8] sm:$0xff]
    %v432 = vld [vmem:[%s1 + $0x6e0] sm:$0xf]
    %v433 = vld [vmem:[%s1 + $0x6e4] sm:$0xff]
    %v434 = vld [vmem:[%s1 + $0x6ec] sm:$0xf]
    %v435 = vld [vmem:[%s1 + $0x6f0] sm:$0xff]
    %v436 = vld [vmem:[%s1 + $0x6f8] sm:$0xf]
    %v437 = vld [vmem:[%s1 + $0x6fc] sm:$0xff]
    %v438 = vld [vmem:[%s1 + $0x704] sm:$0xf]
    %v439 = vld [vmem:[%s1 + $0x708] sm:$0xff]
    %v440 = vld [vmem:[%s1 + $0x710] sm:$0xf]
    %v441 = vld [vmem:[%s1 + $0x714] sm:$0xff]
    %v442 = vld [vmem:[%s1 + $0x71c] sm:$0xf]
    %v443 = vld [vmem:[%s1 + $0x720] sm:$0xff]
    %v444 = vld [vmem:[%s1 + $0x728] sm:$0xf]
    %v445 = vld [vmem:[%s1 + $0x72c] sm:$0xff]
    %v446 = vld [vmem:[%s1 + $0x734] sm:$0xf]
    %v447 = vld [vmem:[%s1 + $0x738] sm:$0xff]
    %v448 = vld [vmem:[%s1 + $0x740] sm:$0xf]
    %v449 = vld [vmem:[%s1 + $0x744] sm:$0xff]
    %v450 = vld [vmem:[%s1 + $0x74c] sm:$0xf]
    %v451 = vld [vmem:[%s1 + $0x750] sm:$0xff]
    %v452 = vld [vmem:[%s1 + $0x758] sm:$0xf]
    %v453 = vld [vmem:[%s1 + $0x75c] sm:$0xff]
    %v454 = vld [vmem:[%s1 + $0x764] sm:$0xf]
    %v455 = vld [vmem:[%s1 + $0x768] sm:$0xff]
    %v456 = vld [vmem:[%s1 + $0x770] sm:$0xf]
    %v457 = vld [vmem:[%s1 + $0x774] sm:$0xff]
    %v458 = vld [vmem:[%s1 + $0x77c] sm:$0xf]
    %v459 = vld [vmem:[%s1 + $0x780] sm:$0xff]
    %v460 = vld [vmem:[%s1 + $0x788] sm:$0xf]
    %v461 = vld [vmem:[%s1 + $0x78c] sm:$0xff]
    %v462 = vld [vmem:[%s1 + $0x794] sm:$0xf]
    %v463 = vld [vmem:[%s1 + $0x798] sm:$0xff]
    %v464 = vld [vmem:[%s1 + $0x7a0] sm:$0xf]
    %v465 = vld [vmem:[%s1 + $0x7a4] sm:$0xff]
    %v466 = vld [vmem:[%s1 + $0x7ac] sm:$0xf]
    %v467 = vld [vmem:[%s1 + $0x7b0] sm:$0xff]
    %v468 = vld [vmem:[%s1 + $0x7b8] sm:$0xf]
    %v469 = vld [vmem:[%s1 + $0x7bc] sm:$0xff]
    %v470 = vld [vmem:[%s1 + $0x7c4] sm:$0xf]
    %v471 = vld [vmem:[%s1 + $0x7c8] sm:$0xff]
    %v472 = vld [vmem:[%s1 + $0x7d0] sm:$0xf]
    %v473 = vld [vmem:[%s1 + $0x7d4] sm:$0xff]
    %v474 = vld [vmem:[%s1 + $0x7dc] sm:$0xf]
    %v475 = vld [vmem:[%s1 + $0x7e0] sm:$0xff]
    %v476 = vld [vmem:[%s1 + $0x7e8] sm:$0xf]
    %v477 = vld [vmem:[%s1 + $0x7ec] sm:$0xff]
    %v478 = vld [vmem:[%s1 + $0x7f4] sm:$0xf]
    %v479 = vld [vmem:[%s1 + $0x7f8] sm:$0xff]
    %v480 = vld [vmem:[%s1 + $0x800] sm:$0xf]
    %v481 = vld [vmem:[%s1 + $0x804] sm:$0xff]
    %v482 = vld [vmem:[%s1 + $0x80c] sm:$0xf]
    %v483 = vld [vmem:[%s1 + $0x810] sm:$0xff]
    %v484 = vld [vmem:[%s1 + $0x818] sm:$0xf]
    %v485 = vld [vmem:[%s1 + $0x81c] sm:$0xff]
    %v486 = vld [vmem:[%s1 + $0x824] sm:$0xf]
    %v487 = vld [vmem:[%s1 + $0x828] sm:$0xff]
    %v488 = vld [vmem:[%s1 + $0x830] sm:$0xf]
    %v489 = vld [vmem:[%s1 + $0x834] sm:$0xff]
    %v490 = vld [vmem:[%s1 + $0x83c] sm:$0xf]
    %v491 = vld [vmem:[%s1 + $0x840] sm:$0xff]
    %v492 = vld [vmem:[%s1 + $0x848] sm:$0xf]
    %v493 = vld [vmem:[%s1 + $0x84c] sm:$0xff]
    %v494 = vld [vmem:[%s1 + $0x854] sm:$0xf]
    %v495 = vld [vmem:[%s1 + $0x858] sm:$0xff]
    %v496 = vld [vmem:[%s1 + $0x860] sm:$0xf]
    %v497 = vld [vmem:[%s1 + $0x864] sm:$0xff]
    %v498 = vld [vmem:[%s1 + $0x86c] sm:$0xf]
    %v499 = vld [vmem:[%s1 + $0x870] sm:$0xff]
    %v500 = vld [vmem:[%s1 + $0x878] sm:$0xf]
    %v501 = vld [vmem:[%s1 + $0x87c] sm:$0xff]
    %v502 = vld [vmem:[%s1 + $0x884] sm:$0xf]
    %v503 = vld [vmem:[%s1 + $0x888] sm:$0xff]
    %v504 = vld [vmem:[%s1 + $0x890] sm:$0xf]
    %v505 = vld [vmem:[%s1 + $0x894] sm:$0xff]
    %v506 = vld [vmem:[%s1 + $0x89c] sm:$0xf]
    %v507 = vld [vmem:[%s1 + $0x8a0] sm:$0xff]
    %v508 = vld [vmem:[%s1 + $0x8a8] sm:$0xf]
    %v509 = vld [vmem:[%s1 + $0x8ac] sm:$0xff]
    %v510 = vld [vmem:[%s1 + $0x8b4] sm:$0xf]
    %v511 = vld [vmem:[%s1 + $0x8b8] sm:$0xff]
    %v512 = vld [vmem:[%s1 + $0x8c0] sm:$0xf]
    %v513 = vld [vmem:[%s1 + $0x8c4] sm:$0xff]
    %v514 = vld [vmem:[%s1 + $0x8cc] sm:$0xf]
    %v515 = vld [vmem:[%s1 + $0x8d0] sm:$0xff]
    %v516 = vld [vmem:[%s1 + $0x8d8] sm:$0xf]
    %v517 = vld [vmem:[%s1 + $0x8dc] sm:$0xff]
    %v518 = vld [vmem:[%s1 + $0x8e4] sm:$0xf]
    %v519 = vld [vmem:[%s1 + $0x8e8] sm:$0xff]
    %v520 = vld [vmem:[%s1 + $0x8f0] sm:$0xf]
    %v521 = vld [vmem:[%s1 + $0x8f4] sm:$0xff]
    %v522 = vld [vmem:[%s1 + $0x8fc] sm:$0xf]
    %v523 = vld [vmem:[%s1 + $0x900] sm:$0xff]
    %v524 = vld [vmem:[%s1 + $0x908] sm:$0xf]
    %v525 = vld [vmem:[%s1 + $0x90c] sm:$0xff]
    %v526 = vld [vmem:[%s1 + $0x914] sm:$0xf]
    %v527 = vld [vmem:[%s1 + $0x918] sm:$0xff]
    %v528 = vld [vmem:[%s1 + $0x920] sm:$0xf]
    %v529 = vld [vmem:[%s1 + $0x924] sm:$0xff]
    %v530 = vld [vmem:[%s1 + $0x92c] sm:$0xf]
    %v531 = vld [vmem:[%s1 + $0x930] sm:$0xff]
    %v532 = vld [vmem:[%s1 + $0x938] sm:$0xf]
    %v533 = vld [vmem:[%s1 + $0x93c] sm:$0xff]
    %v534 = vld [vmem:[%s1 + $0x944] sm:$0xf]
    %v535 = vld [vmem:[%s1 + $0x948] sm:$0xff]
    %v536 = vld [vmem:[%s1 + $0x950] sm:$0xf]
    %v537 = vld [vmem:[%s1 + $0x954] sm:$0xff]
    %v538 = vld [vmem:[%s1 + $0x95c] sm:$0xf]
    %v539 = vld [vmem:[%s1 + $0x960] sm:$0xff]
    %v540 = vld [vmem:[%s1 + $0x968] sm:$0xf]
    %v541 = vld [vmem:[%s1 + $0x96c] sm:$0xff]
    %v542 = vld [vmem:[%s1 + $0x974] sm:$0xf]
    %v543 = vld [vmem:[%s1 + $0x978] sm:$0xff]
    %v544 = vld [vmem:[%s1 + $0x980] sm:$0xf]
    %v545 = vld [vmem:[%s1 + $0x984] sm:$0xff]
    %v546 = vld [vmem:[%s1 + $0x98c] sm:$0xf]
    %v547 = vld [vmem:[%s1 + $0x990] sm:$0xff]
    %v548 = vld [vmem:[%s1 + $0x998] sm:$0xf]
    %v549 = vld [vmem:[%s1 + $0x99c] sm:$0xff]
    %v550 = vld [vmem:[%s1 + $0x9a4] sm:$0xf]
    %v551 = vld [vmem:[%s1 + $0x9a8] sm:$0xff]
    %v552 = vld [vmem:[%s1 + $0x9b0] sm:$0xf]
    %v553 = vld [vmem:[%s1 + $0x9b4] sm:$0xff]
    %v554 = vld [vmem:[%s1 + $0x9bc] sm:$0xf]
    %v555 = vld [vmem:[%s1 + $0x9c0] sm:$0xff]
    %v556 = vld [vmem:[%s1 + $0x9c8] sm:$0xf]
    %v557 = vld [vmem:[%s1 + $0x9cc] sm:$0xff]
    %v558 = vld [vmem:[%s1 + $0x9d4] sm:$0xf]
    %v559 = vld [vmem:[%s1 + $0x9d8] sm:$0xff]
    %v560 = vld [vmem:[%s1 + $0x9e0] sm:$0xf]
    %v561 = vld [vmem:[%s1 + $0x9e4] sm:$0xff]
    %v562 = vld [vmem:[%s1 + $0x9ec] sm:$0xf]
    %v563 = vld [vmem:[%s1 + $0x9f0] sm:$0xff]
    %v564 = vld [vmem:[%s1 + $0x9f8] sm:$0xf]
    %v565 = vld [vmem:[%s1 + $0x9fc] sm:$0xff]
    %v566 = vld [vmem:[%s1 + $0xa04] sm:$0xf]
    %v567 = vld [vmem:[%s1 + $0xa08] sm:$0xff]
    %v568 = vld [vmem:[%s1 + $0xa10] sm:$0xf]
    %v569 = vld [vmem:[%s1 + $0xa14] sm:$0xff]
    %v570 = vld [vmem:[%s1 + $0xa1c] sm:$0xf]
    %v571 = vld [vmem:[%s1 + $0xa20] sm:$0xff]
    %v572 = vld [vmem:[%s1 + $0xa28] sm:$0xf]
    %v573 = vld [vmem:[%s1 + $0xa2c] sm:$0xff]
    %v574 = vld [vmem:[%s1 + $0xa34] sm:$0xf]
    %v575 = vld [vmem:[%s1 + $0xa38] sm:$0xff]
    %v576 = vld [vmem:[%s1 + $0xa40] sm:$0xf]
    %v577 = vld [vmem:[%s1 + $0xa44] sm:$0xff]
    %v578 = vld [vmem:[%s1 + $0xa4c] sm:$0xf]
    %v579 = vld [vmem:[%s1 + $0xa50] sm:$0xff]
    %v580 = vld [vmem:[%s1 + $0xa58] sm:$0xf]
    %v581 = vld [vmem:[%s1 + $0xa5c] sm:$0xff]
    %v582 = vld [vmem:[%s1 + $0xa64] sm:$0xf]
    %v583 = vld [vmem:[%s1 + $0xa68] sm:$0xff]
    %v584 = vld [vmem:[%s1 + $0xa70] sm:$0xf]
    %v585 = vld [vmem:[%s1 + $0xa74] sm:$0xff]
    %v586 = vld [vmem:[%s1 + $0xa7c] sm:$0xf]
    %v587 = vld [vmem:[%s1 + $0xa80] sm:$0xff]
    %v588 = vld [vmem:[%s1 + $0xa88] sm:$0xf]
    %v589 = vld [vmem:[%s1 + $0xa8c] sm:$0xff]
    %v590 = vld [vmem:[%s1 + $0xa94] sm:$0xf]
    %v591 = vld [vmem:[%s1 + $0xa98] sm:$0xff]
    %v592 = vld [vmem:[%s1 + $0xaa0] sm:$0xf]
    %v593 = vld [vmem:[%s1 + $0xaa4] sm:$0xff]
    %v594 = vld [vmem:[%s1 + $0xaac] sm:$0xf]
    %v595 = vld [vmem:[%s1 + $0xab0] sm:$0xff]
    %v596 = vld [vmem:[%s1 + $0xab8] sm:$0xf]
    %v597 = vld [vmem:[%s1 + $0xabc] sm:$0xff]
    %v598 = vld [vmem:[%s1 + $0xac4] sm:$0xf]
    %v599 = vld [vmem:[%s1 + $0xac8] sm:$0xff]
    %v600 = vld [vmem:[%s1 + $0xad0] sm:$0xf]
    %v601 = vld [vmem:[%s1 + $0xad4] sm:$0xff]
    %v602 = vld [vmem:[%s1 + $0xadc] sm:$0xf]
    %v603 = vld [vmem:[%s1 + $0xae0] sm:$0xff]
    %v604 = vld [vmem:[%s1 + $0xae8] sm:$0xf]
    %v605 = vld [vmem:[%s1 + $0xaec] sm:$0xff]
    %v606 = vld [vmem:[%s1 + $0xaf4] sm:$0xf]
    %v607 = vld [vmem:[%s1 + $0xaf8] sm:$0xff]
    %v608 = vld [vmem:[%s1 + $0xb00] sm:$0xf]
    %v609 = vld [vmem:[%s1 + $0xb04] sm:$0xff]
    %v610 = vld [vmem:[%s1 + $0xb0c] sm:$0xf]
    %v611 = vld [vmem:[%s1 + $0xb10] sm:$0xff]
    %v612 = vld [vmem:[%s1 + $0xb18] sm:$0xf]
    %v613 = vld [vmem:[%s1 + $0xb1c] sm:$0xff]
    %v614 = vld [vmem:[%s1 + $0xb24] sm:$0xf]
    %v615 = vld [vmem:[%s1 + $0xb28] sm:$0xff]
    %v616 = vld [vmem:[%s1 + $0xb30] sm:$0xf]
    %v617 = vld [vmem:[%s1 + $0xb34] sm:$0xff]
    %v618 = vld [vmem:[%s1 + $0xb3c] sm:$0xf]
    %v619 = vld [vmem:[%s1 + $0xb40] sm:$0xff]
    %v620 = vld [vmem:[%s1 + $0xb48] sm:$0xf]
    %v621 = vld [vmem:[%s1 + $0xb4c] sm:$0xff]
    %v622 = vld [vmem:[%s1 + $0xb54] sm:$0xf]
    %v623 = vld [vmem:[%s1 + $0xb58] sm:$0xff]
    %v624 = vld [vmem:[%s1 + $0xb60] sm:$0xf]
    %v625 = vld [vmem:[%s1 + $0xb64] sm:$0xff]
    %v626 = vld [vmem:[%s1 + $0xb6c] sm:$0xf]
    %v627 = vld [vmem:[%s1 + $0xb70] sm:$0xff]
    %v628 = vld [vmem:[%s1 + $0xb78] sm:$0xf]
    %v629 = vld [vmem:[%s1 + $0xb7c] sm:$0xff]
    %v630 = vld [vmem:[%s1 + $0xb84] sm:$0xf]
    %v631 = vld [vmem:[%s1 + $0xb88] sm:$0xff]
    %v632 = vld [vmem:[%s1 + $0xb90] sm:$0xf]
    %v633 = vld [vmem:[%s1 + $0xb94] sm:$0xff]
    %v634 = vld [vmem:[%s1 + $0xb9c] sm:$0xf]
    %v635 = vld [vmem:[%s1 + $0xba0] sm:$0xff]
    %v636 = vld [vmem:[%s1 + $0xba8] sm:$0xf]
    %v637 = vld [vmem:[%s1 + $0xbac] sm:$0xff]
    %v638 = vld [vmem:[%s1 + $0xbb4] sm:$0xf]
    %v639 = vld [vmem:[%s1 + $0xbb8] sm:$0xff]
    %v640 = vld [vmem:[%s1 + $0xbc0] sm:$0xf]
    %v641 = vld [vmem:[%s1 + $0xbc4] sm:$0xff]
    %v642 = vld [vmem:[%s1 + $0xbcc] sm:$0xf]
    %v643 = vld [vmem:[%s1 + $0xbd0] sm:$0xff]
    %v644 = vld [vmem:[%s1 + $0xbd8] sm:$0xf]
    %v645 = vld [vmem:[%s1 + $0xbdc] sm:$0xff]
    %v646 = vld [vmem:[%s1 + $0xbe4] sm:$0xf]
    %v647 = vld [vmem:[%s1 + $0xbe8] sm:$0xff]
    %v648 = vld [vmem:[%s1 + $0xbf0] sm:$0xf]
    %v649 = vld [vmem:[%s1 + $0xbf4] sm:$0xff]
    %v650 = vld [vmem:[%s1 + $0xbfc] sm:$0xf]
    %v651 = vld [vmem:[%s1 + $0xc00] sm:$0xff]
    %v652 = vld [vmem:[%s1 + $0xc08] sm:$0xf]
    %v653 = vld [vmem:[%s1 + $0xc0c] sm:$0xff]
    %v654 = vld [vmem:[%s1 + $0xc14] sm:$0xf]
    %v655 = vld [vmem:[%s1 + $0xc18] sm:$0xff]
    %v656 = vld [vmem:[%s1 + $0xc20] sm:$0xf]
    %v657 = vld [vmem:[%s1 + $0xc24] sm:$0xff]
    %v658 = vld [vmem:[%s1 + $0xc2c] sm:$0xf]
    %v659 = vld [vmem:[%s1 + $0xc30] sm:$0xff]
    %v660 = vld [vmem:[%s1 + $0xc38] sm:$0xf]
    %v661 = vld [vmem:[%s1 + $0xc3c] sm:$0xff]
    %v662 = vld [vmem:[%s1 + $0xc44] sm:$0xf]
    %v663 = vld [vmem:[%s1 + $0xc48] sm:$0xff]
    %v664 = vld [vmem:[%s1 + $0xc50] sm:$0xf]
    %v665 = vld [vmem:[%s1 + $0xc54] sm:$0xff]
    %v666 = vld [vmem:[%s1 + $0xc5c] sm:$0xf]
    %v667 = vld [vmem:[%s1 + $0xc60] sm:$0xff]
    %v668 = vld [vmem:[%s1 + $0xc68] sm:$0xf]
    %v669 = vld [vmem:[%s1 + $0xc6c] sm:$0xff]
    %v670 = vld [vmem:[%s1 + $0xc74] sm:$0xf]
    %v671 = vld [vmem:[%s1 + $0xc78] sm:$0xff]
    %v672 = vld [vmem:[%s1 + $0xc80] sm:$0xf]
    %v673 = vld [vmem:[%s1 + $0xc84] sm:$0xff]
    %v674 = vld [vmem:[%s1 + $0xc8c] sm:$0xf]
    %v675 = vld [vmem:[%s1 + $0xc90] sm:$0xff]
    %v676 = vld [vmem:[%s1 + $0xc98] sm:$0xf]
    %v677 = vld [vmem:[%s1 + $0xc9c] sm:$0xff]
    %v678 = vld [vmem:[%s1 + $0xca4] sm:$0xf]
    %v679 = vld [vmem:[%s1 + $0xca8] sm:$0xff]
    %v680 = vld [vmem:[%s1 + $0xcb0] sm:$0xf]
    %v681 = vld [vmem:[%s1 + $0xcb4] sm:$0xff]
    %v682 = vld [vmem:[%s1 + $0xcbc] sm:$0xf]
    %v683 = vld [vmem:[%s1 + $0xcc0] sm:$0xff]
    %v684 = vld [vmem:[%s1 + $0xcc8] sm:$0xf]
    %v685 = vld [vmem:[%s1 + $0xccc] sm:$0xff]
    %v686 = vld [vmem:[%s1 + $0xcd4] sm:$0xf]
    %v687 = vld [vmem:[%s1 + $0xcd8] sm:$0xff]
    %v688 = vld [vmem:[%s1 + $0xce0] sm:$0xf]
    %v689 = vld [vmem:[%s1 + $0xce4] sm:$0xff]
    %v690 = vld [vmem:[%s1 + $0xcec] sm:$0xf]
    %v691 = vld [vmem:[%s1 + $0xcf0] sm:$0xff]
    %v692 = vld [vmem:[%s1 + $0xcf8] sm:$0xf]
    %v693 = vld [vmem:[%s1 + $0xcfc] sm:$0xff]
    %v694 = vld [vmem:[%s1 + $0xd04] sm:$0xf]
    %v695 = vld [vmem:[%s1 + $0xd08] sm:$0xff]
    %v696 = vld [vmem:[%s1 + $0xd10] sm:$0xf]
    %v697 = vld [vmem:[%s1 + $0xd14] sm:$0xff]
    %v698 = vld [vmem:[%s1 + $0xd1c] sm:$0xf]
    %v699 = vld [vmem:[%s1 + $0xd20] sm:$0xff]
    %v700 = vld [vmem:[%s1 + $0xd28] sm:$0xf]
    %v701 = vld [vmem:[%s1 + $0xd2c] sm:$0xff]
    %v702 = vld [vmem:[%s1 + $0xd34] sm:$0xf]
    %v703 = vld [vmem:[%s1 + $0xd38] sm:$0xff]
    %v704 = vld [vmem:[%s1 + $0xd40] sm:$0xf]
    %v705 = vld [vmem:[%s1 + $0xd44] sm:$0xff]
    %v706 = vld [vmem:[%s1 + $0xd4c] sm:$0xf]
    %v707 = vld [vmem:[%s1 + $0xd50] sm:$0xff]
    %v708 = vld [vmem:[%s1 + $0xd58] sm:$0xf]
    %v709 = vld [vmem:[%s1 + $0xd5c] sm:$0xff]
    %v710 = vld [vmem:[%s1 + $0xd64] sm:$0xf]
    %v711 = vld [vmem:[%s1 + $0xd68] sm:$0xff]
    %v712 = vld [vmem:[%s1 + $0xd70] sm:$0xf]
    %v713 = vld [vmem:[%s1 + $0xd74] sm:$0xff]
    %v714 = vld [vmem:[%s1 + $0xd7c] sm:$0xf]
    %v715 = vld [vmem:[%s1 + $0xd80] sm:$0xff]
    %v716 = vld [vmem:[%s1 + $0xd88] sm:$0xf]
    %v717 = vld [vmem:[%s1 + $0xd8c] sm:$0xff]
    %v718 = vld [vmem:[%s1 + $0xd94] sm:$0xf]
    %v719 = vld [vmem:[%s1 + $0xd98] sm:$0xff]
    %v720 = vld [vmem:[%s1 + $0xda0] sm:$0xf]
    %v721 = vld [vmem:[%s1 + $0xda4] sm:$0xff]
    %v722 = vld [vmem:[%s1 + $0xdac] sm:$0xf]
    %v723 = vld [vmem:[%s1 + $0xdb0] sm:$0xff]
    %v724 = vld [vmem:[%s1 + $0xdb8] sm:$0xf]
    %v725 = vld [vmem:[%s1 + $0xdbc] sm:$0xff]
    %v726 = vld [vmem:[%s1 + $0xdc4] sm:$0xf]
    %v727 = vld [vmem:[%s1 + $0xdc8] sm:$0xff]
    %v728 = vld [vmem:[%s1 + $0xdd0] sm:$0xf]
    %v729 = vld [vmem:[%s1 + $0xdd4] sm:$0xff]
    %v730 = vld [vmem:[%s1 + $0xddc] sm:$0xf]
    %v731 = vld [vmem:[%s1 + $0xde0] sm:$0xff]
    %v732 = vld [vmem:[%s1 + $0xde8] sm:$0xf]
    %v733 = vld [vmem:[%s1 + $0xdec] sm:$0xff]
    %v734 = vld [vmem:[%s1 + $0xdf4] sm:$0xf]
    %v735 = vld [vmem:[%s1 + $0xdf8] sm:$0xff]
    %v736 = vld [vmem:[%s1 + $0xe00] sm:$0xf]
    %v737 = vld [vmem:[%s1 + $0xe04] sm:$0xff]
    %v738 = vld [vmem:[%s1 + $0xe0c] sm:$0xf]
    %v739 = vld [vmem:[%s1 + $0xe10] sm:$0xff]
    %v740 = vld [vmem:[%s1 + $0xe18] sm:$0xf]
    %v741 = vld [vmem:[%s1 + $0xe1c] sm:$0xff]
    %v742 = vld [vmem:[%s1 + $0xe24] sm:$0xf]
    %v743 = vld [vmem:[%s1 + $0xe28] sm:$0xff]
    %v744 = vld [vmem:[%s1 + $0xe30] sm:$0xf]
    %v745 = vld [vmem:[%s1 + $0xe34] sm:$0xff]
    %v746 = vld [vmem:[%s1 + $0xe3c] sm:$0xf]
    %v747 = vld [vmem:[%s1 + $0xe40] sm:$0xff]
    %v748 = vld [vmem:[%s1 + $0xe48] sm:$0xf]
    %v749 = vld [vmem:[%s1 + $0xe4c] sm:$0xff]
    %v750 = vld [vmem:[%s1 + $0xe54] sm:$0xf]
    %v751 = vld [vmem:[%s1 + $0xe58] sm:$0xff]
    %v752 = vld [vmem:[%s1 + $0xe60] sm:$0xf]
    %v753 = vld [vmem:[%s1 + $0xe64] sm:$0xff]
    %v754 = vld [vmem:[%s1 + $0xe6c] sm:$0xf]
    %v755 = vld [vmem:[%s1 + $0xe70] sm:$0xff]
    %v756 = vld [vmem:[%s1 + $0xe78] sm:$0xf]
    %v757 = vld [vmem:[%s1 + $0xe7c] sm:$0xff]
    %v758 = vld [vmem:[%s1 + $0xe84] sm:$0xf]
    %v759 = vld [vmem:[%s1 + $0xe88] sm:$0xff]
    %v760 = vld [vmem:[%s1 + $0xe90] sm:$0xf]
    %v761 = vld [vmem:[%s1 + $0xe94] sm:$0xff]
    %v762 = vld [vmem:[%s1 + $0xe9c] sm:$0xf]
    %v763 = vld [vmem:[%s1 + $0xea0] sm:$0xff]
    %v764 = vld [vmem:[%s1 + $0xea8] sm:$0xf]
    %v765 = vld [vmem:[%s1 + $0xeac] sm:$0xff]
    %v766 = vld [vmem:[%s1 + $0xeb4] sm:$0xf]
    %v767 = vld [vmem:[%s1 + $0xeb8] sm:$0xff]
    %v768 = vld [vmem:[%s1 + $0xec0] sm:$0xf]
    %v769 = vld [vmem:[%s1 + $0xec4] sm:$0xff]
    %v770 = vld [vmem:[%s1 + $0xecc] sm:$0xf]
    %v771 = vld [vmem:[%s1 + $0xed0] sm:$0xff]
    %v772 = vld [vmem:[%s1 + $0xed8] sm:$0xf]
    %v773 = vld [vmem:[%s1 + $0xedc] sm:$0xff]
    %v774 = vld [vmem:[%s1 + $0xee4] sm:$0xf]
    %v775 = vld [vmem:[%s1 + $0xee8] sm:$0xff]
    %v776 = vld [vmem:[%s1 + $0xef0] sm:$0xf]
    %v777 = vld [vmem:[%s1 + $0xef4] sm:$0xff]
    %v778 = vld [vmem:[%s1 + $0xefc] sm:$0xf]
    %v779 = vld [vmem:[%s1 + $0xf00] sm:$0xff]
    %v780 = vld [vmem:[%s1 + $0xf08] sm:$0xf]
    %v781 = vld [vmem:[%s1 + $0xf0c] sm:$0xff]
    %v782 = vld [vmem:[%s1 + $0xf14] sm:$0xf]
    %v783 = vld [vmem:[%s1 + $0xf18] sm:$0xff]
    %v784 = vld [vmem:[%s1 + $0xf20] sm:$0xf]
    %v785 = vld [vmem:[%s1 + $0xf24] sm:$0xff]
    %v786 = vld [vmem:[%s1 + $0xf2c] sm:$0xf]
    %v787 = vld [vmem:[%s1 + $0xf30] sm:$0xff]
    %v788 = vld [vmem:[%s1 + $0xf38] sm:$0xf]
    %v789 = vld [vmem:[%s1 + $0xf3c] sm:$0xff]
    %v790 = vld [vmem:[%s1 + $0xf44] sm:$0xf]
    %v791 = vld [vmem:[%s1 + $0xf48] sm:$0xff]
    %v792 = vld [vmem:[%s1 + $0xf50] sm:$0xf]
    %v793 = vld [vmem:[%s1 + $0xf54] sm:$0xff]
    %v794 = vld [vmem:[%s1 + $0xf5c] sm:$0xf]
    %v795 = vld [vmem:[%s1 + $0xf60] sm:$0xff]
    %v796 = vld [vmem:[%s1 + $0xf68] sm:$0xf]
    %v797 = vld [vmem:[%s1 + $0xf6c] sm:$0xff]
    %v798 = vld [vmem:[%s1 + $0xf74] sm:$0xf]
    %v799 = vld [vmem:[%s1 + $0xf78] sm:$0xff]
    %v800 = vld [vmem:[%s1 + $0xf80] sm:$0xf]
    %v801 = vld [vmem:[%s1 + $0xf84] sm:$0xff]
    %v802 = vld [vmem:[%s1 + $0xf8c] sm:$0xf]
    %v803 = vld [vmem:[%s1 + $0xf90] sm:$0xff]
    %v804 = vld [vmem:[%s1 + $0xf98] sm:$0xf]
    %v805 = vld [vmem:[%s1 + $0xf9c] sm:$0xff]
    %v806 = vld [vmem:[%s1 + $0xfa4] sm:$0xf]
    %v807 = vld [vmem:[%s1 + $0xfa8] sm:$0xff]
    %v808 = vld [vmem:[%s1 + $0xfb0] sm:$0xf]
    %v809 = vld [vmem:[%s1 + $0xfb4] sm:$0xff]
    %v810 = vld [vmem:[%s1 + $0xfbc] sm:$0xf]
    %v811 = vld [vmem:[%s1 + $0xfc0] sm:$0xff]
    %v812 = vld [vmem:[%s1 + $0xfc8] sm:$0xf]
    %v813 = vld [vmem:[%s1 + $0xfcc] sm:$0xff]
    %v814 = vld [vmem:[%s1 + $0xfd4] sm:$0xf]
    %v815 = vld [vmem:[%s1 + $0xfd8] sm:$0xff]
    %v816 = vld [vmem:[%s1 + $0xfe0] sm:$0xf]
    %v817 = vld [vmem:[%s1 + $0xfe4] sm:$0xff]
    %v818 = vld [vmem:[%s1 + $0xfec] sm:$0xf]
    %v819 = vld [vmem:[%s1 + $0xff0] sm:$0xff]
    %v820 = vld [vmem:[%s1 + $0xff8] sm:$0xf]
    %v821 = vld [vmem:[%s1 + $0xffc] sm:$0xff]
    %v822 = vld [vmem:[%s1 + $0x1004] sm:$0xf]
    %v823 = vld [vmem:[%s1 + $0x1008] sm:$0xff]
    %v824 = vld [vmem:[%s1 + $0x1010] sm:$0xf]
    %v825 = vld [vmem:[%s1 + $0x1014] sm:$0xff]
    %v826 = vld [vmem:[%s1 + $0x101c] sm:$0xf]
    %v827 = vld [vmem:[%s1 + $0x1020] sm:$0xff]
    %v828 = vld [vmem:[%s1 + $0x1028] sm:$0xf]
    %v829 = vld [vmem:[%s1 + $0x102c] sm:$0xff]
    %v830 = vld [vmem:[%s1 + $0x1034] sm:$0xf]
    %v831 = vld [vmem:[%s1 + $0x1038] sm:$0xff]
    %v832 = vld [vmem:[%s1 + $0x1040] sm:$0xf]
    %v833 = vld [vmem:[%s1 + $0x1044] sm:$0xff]
    %v834 = vld [vmem:[%s1 + $0x104c] sm:$0xf]
    %v835 = vld [vmem:[%s1 + $0x1050] sm:$0xff]
    %v836 = vld [vmem:[%s1 + $0x1058] sm:$0xf]
    %v837 = vld [vmem:[%s1 + $0x105c] sm:$0xff]
    %v838 = vld [vmem:[%s1 + $0x1064] sm:$0xf]
    %v839 = vld [vmem:[%s1 + $0x1068] sm:$0xff]
    %v840 = vld [vmem:[%s1 + $0x1070] sm:$0xf]
    %v841 = vld [vmem:[%s1 + $0x1074] sm:$0xff]
    %v842 = vld [vmem:[%s1 + $0x107c] sm:$0xf]
    %v843 = vld [vmem:[%s2] sm:$0x7]
    %v845 = vperm.slane %v843, 0
    %v846 = vperm.slane %v843, 1
    %v847 = vperm.slane %v843, 2
    %v939 = vunpack.c.l.b16 %v51
    %v940 = vunpack.c.h.b16 %v51
    %v941 = vunpack.c.l.b16 %v52
    %v942 = vunpack.c.h.b16 %v52
    %v943 = vunpack.c.l.b16 %v53
    %v944 = vunpack.c.h.b16 %v53
    %v945 = vunpack.c.l.b16 %v54
    %v946 = vunpack.c.h.b16 %v54
    %v947 = vunpack.c.l.b16 %v55
    %v948 = vunpack.c.h.b16 %v55
    %v949 = vunpack.c.l.b16 %v56
    %v950 = vunpack.c.h.b16 %v56
    %v951 = vunpack.c.l.b16 %v57
    %v952 = vunpack.c.h.b16 %v57
    %v953 = vunpack.c.l.b16 %v58
    %v954 = vunpack.c.h.b16 %v58
    %v955 = vunpack.c.l.b16 %v59
    %v956 = vunpack.c.h.b16 %v59
    %v957 = vunpack.c.l.b16 %v60
    %v958 = vunpack.c.h.b16 %v60
    %v959 = vunpack.c.l.b16 %v61
    %v960 = vunpack.c.h.b16 %v61
    %v961 = vunpack.c.l.b16 %v62
    %v962 = vunpack.c.h.b16 %v62
    %v963 = vunpack.c.l.b16 %v63
    %v964 = vunpack.c.h.b16 %v63
    %v965 = vunpack.c.l.b16 %v64
    %v966 = vunpack.c.h.b16 %v64
    %v967 = vunpack.c.l.b16 %v65
    %v968 = vunpack.c.h.b16 %v65
    %v969 = vunpack.c.l.b16 %v66
    %v970 = vunpack.c.h.b16 %v66
    %v971 = vunpack.c.l.b16 %v67
    %v972 = vunpack.c.h.b16 %v67
    %v973 = vunpack.c.l.b16 %v68
    %v974 = vunpack.c.h.b16 %v68
    %v975 = vunpack.c.l.b16 %v69
    %v976 = vunpack.c.h.b16 %v69
    %v977 = vunpack.c.l.b16 %v70
    %v978 = vunpack.c.h.b16 %v70
    %v979 = vunpack.c.l.b16 %v71
    %v980 = vunpack.c.h.b16 %v71
    %v981 = vunpack.c.l.b16 %v72
    %v982 = vunpack.c.h.b16 %v72
    %v983 = vunpack.c.l.b16 %v73
    %v984 = vunpack.c.h.b16 %v73
    %v985 = vunpack.c.l.b16 %v74
    %v986 = vunpack.c.h.b16 %v74
    %v987 = vunpack.c.l.b16 %v75
    %v988 = vunpack.c.h.b16 %v75
    %v989 = vunpack.c.l.b16 %v76
    %v990 = vunpack.c.h.b16 %v76
    %v991 = vunpack.c.l.b16 %v77
    %v992 = vunpack.c.h.b16 %v77
    %v993 = vunpack.c.l.b16 %v78
    %v994 = vunpack.c.h.b16 %v78
    %v995 = vunpack.c.l.b16 %v79
    %v996 = vunpack.c.h.b16 %v79
    %v997 = vunpack.c.l.b16 %v80
    %v998 = vunpack.c.h.b16 %v80
    %v999 = vunpack.c.l.b16 %v81
    %v1000 = vunpack.c.h.b16 %v81
    %v1001 = vunpack.c.l.b16 %v82
    %v1002 = vunpack.c.h.b16 %v82
    %v1003 = vunpack.c.l.b16 %v83
    %v1004 = vunpack.c.h.b16 %v83
    %v1005 = vunpack.c.l.b16 %v84
    %v1006 = vunpack.c.h.b16 %v84
    %v1007 = vunpack.c.l.b16 %v85
    %v1008 = vunpack.c.h.b16 %v85
    %v1009 = vunpack.c.l.b16 %v86
    %v1010 = vunpack.c.h.b16 %v86
    %v1011 = vunpack.c.l.b16 %v87
    %v1012 = vunpack.c.h.b16 %v87
    %v1013 = vunpack.c.l.b16 %v88
    %v1014 = vunpack.c.h.b16 %v88
    %v1015 = vunpack.c.l.b16 %v89
    %v1016 = vunpack.c.h.b16 %v89
    %v1017 = vunpack.c.l.b16 %v90
    %v1018 = vunpack.c.h.b16 %v90
    %v1019 = vunpack.c.l.b16 %v91
    %v1020 = vunpack.c.h.b16 %v91
    %v1021 = vunpack.c.l.b16 %v92
    %v1022 = vunpack.c.h.b16 %v92
    %v1023 = vunpack.c.l.b16 %v93
    %v1024 = vunpack.c.h.b16 %v93
    %v1025 = vunpack.c.l.b16 %v94
    %v1026 = vunpack.c.h.b16 %v94
    %v1027 = vunpack.c.l.b16 %v95
    %v1028 = vunpack.c.h.b16 %v95
    %v1029 = vunpack.c.l.b16 %v96
    %v1030 = vunpack.c.h.b16 %v96
    %v1031 = vunpack.c.l.b16 %v97
    %v1032 = vunpack.c.h.b16 %v97
    %v1033 = vunpack.c.l.b16 %v98
    %v1034 = vunpack.c.h.b16 %v98
    %v1035 = vunpack.c.l.b16 %v99
    %v1036 = vunpack.c.h.b16 %v99
    %v1037 = vunpack.c.l.b16 %v100
    %v1038 = vunpack.c.h.b16 %v100
    %v1039 = vunpack.c.l.b16 %v101
    %v1040 = vunpack.c.h.b16 %v101
    %v1041 = vunpack.c.l.b16 %v102
    %v1042 = vunpack.c.h.b16 %v102
    %v1043 = vunpack.c.l.b16 %v103
    %v1044 = vunpack.c.h.b16 %v103
    %v1045 = vunpack.c.l.b16 %v104
    %v1046 = vunpack.c.h.b16 %v104
    %v1047 = vunpack.c.l.b16 %v105
    %v1048 = vunpack.c.h.b16 %v105
    %v1049 = vunpack.c.l.b16 %v106
    %v1050 = vunpack.c.h.b16 %v106
    %v1051 = vunpack.c.l.b16 %v107
    %v1052 = vunpack.c.h.b16 %v107
    %v1053 = vunpack.c.l.b16 %v108
    %v1054 = vunpack.c.h.b16 %v108
    %v1055 = vunpack.c.l.b16 %v109
    %v1056 = vunpack.c.h.b16 %v109
    %v1057 = vunpack.c.l.b16 %v110
    %v1058 = vunpack.c.h.b16 %v110
    %v1059 = vunpack.c.l.b16 %v111
    %v1060 = vunpack.c.h.b16 %v111
    %v1061 = vunpack.c.l.b16 %v112
    %v1062 = vunpack.c.h.b16 %v112
    %v1063 = vunpack.c.l.b16 %v113
    %v1064 = vunpack.c.h.b16 %v113
    %v1065 = vunpack.c.l.b16 %v114
    %v1066 = vunpack.c.h.b16 %v114
    %v1067 = vunpack.c.l.b16 %v115
    %v1068 = vunpack.c.h.b16 %v115
    %v1069 = vunpack.c.l.b16 %v116
    %v1070 = vunpack.c.h.b16 %v116
    %v1071 = vunpack.c.l.b16 %v117
    %v1072 = vunpack.c.h.b16 %v117
    %v1073 = vunpack.c.l.b16 %v118
    %v1074 = vunpack.c.h.b16 %v118
    %v1075 = vunpack.c.l.b16 %v119
    %v1076 = vunpack.c.h.b16 %v119
    %v1077 = vunpack.c.l.b16 %v120
    %v1078 = vunpack.c.h.b16 %v120
    %v1079 = vunpack.c.l.b16 %v121
    %v1080 = vunpack.c.h.b16 %v121
    %v1081 = vunpack.c.l.b16 %v122
    %v1082 = vunpack.c.h.b16 %v122
    %v1083 = vunpack.c.l.b16 %v123
    %v1084 = vunpack.c.h.b16 %v123
    %v1085 = vunpack.c.l.b16 %v124
    %v1086 = vunpack.c.h.b16 %v124
    %v1087 = vunpack.c.l.b16 %v125
    %v1088 = vunpack.c.h.b16 %v125
    %v1089 = vunpack.c.l.b16 %v126
    %v1090 = vunpack.c.h.b16 %v126
    %v1091 = vunpack.c.l.b16 %v127
    %v1092 = vunpack.c.h.b16 %v127
    %v1093 = vunpack.c.l.b16 %v128
    %v1094 = vunpack.c.h.b16 %v128
    %v1095 = vunpack.c.l.b16 %v129
    %v1096 = vunpack.c.h.b16 %v129
    %v1097 = vunpack.c.l.b16 %v130
    %v1098 = vunpack.c.h.b16 %v130
    %v1099 = vunpack.c.l.b16 %v131
    %v1100 = vunpack.c.h.b16 %v131
    %v1101 = vunpack.c.l.b16 %v132
    %v1102 = vunpack.c.h.b16 %v132
    %v1103 = vunpack.c.l.b16 %v133
    %v1104 = vunpack.c.h.b16 %v133
    %v1105 = vunpack.c.l.b16 %v134
    %v1106 = vunpack.c.h.b16 %v134
    %v1107 = vunpack.c.l.b16 %v135
    %v1108 = vunpack.c.h.b16 %v135
    %v1109 = vunpack.c.l.b16 %v136
    %v1110 = vunpack.c.h.b16 %v136
    %v1111 = vunpack.c.l.b16 %v137
    %v1112 = vunpack.c.h.b16 %v137
    %v1113 = vunpack.c.l.b16 %v138
    %v1114 = vunpack.c.h.b16 %v138
    %v1115 = vpack.c.b16 %v961, %v939
    %v1116 = vpack.c.b16 %v962, %v940
    %v1117 = vpack.c.b16 %v963, %v941
    %v1118 = vpack.c.b16 %v964, %v942
    %v1119 = vpack.c.b16 %v965, %v943
    %v1120 = vpack.c.b16 %v966, %v944
    %v1121 = vpack.c.b16 %v967, %v945
    %v1122 = vpack.c.b16 %v968, %v946
    %v1123 = vpack.c.b16 %v969, %v947
    %v1124 = vpack.c.b16 %v970, %v948
    %v1125 = vpack.c.b16 %v971, %v949
    %v1126 = vpack.c.b16 %v972, %v950
    %v1127 = vpack.c.b16 %v973, %v951
    %v1128 = vpack.c.b16 %v974, %v952
    %v1129 = vpack.c.b16 %v975, %v953
    %v1130 = vpack.c.b16 %v976, %v954
    %v1131 = vpack.c.b16 %v977, %v955
    %v1132 = vpack.c.b16 %v978, %v956
    %v1133 = vpack.c.b16 %v979, %v957
    %v1134 = vpack.c.b16 %v980, %v958
    %v1135 = vpack.c.b16 %v981, %v959
    %v1136 = vpack.c.b16 %v982, %v960
    %v1137 = vpack.c.b16 %v1005, %v983
    %v1138 = vpack.c.b16 %v1006, %v984
    %v1139 = vpack.c.b16 %v1007, %v985
    %v1140 = vpack.c.b16 %v1008, %v986
    %v1141 = vpack.c.b16 %v1009, %v987
    %v1142 = vpack.c.b16 %v1010, %v988
    %v1143 = vpack.c.b16 %v1011, %v989
    %v1144 = vpack.c.b16 %v1012, %v990
    %v1145 = vpack.c.b16 %v1013, %v991
    %v1146 = vpack.c.b16 %v1014, %v992
    %v1147 = vpack.c.b16 %v1015, %v993
    %v1148 = vpack.c.b16 %v1016, %v994
    %v1149 = vpack.c.b16 %v1017, %v995
    %v1150 = vpack.c.b16 %v1018, %v996
    %v1151 = vpack.c.b16 %v1019, %v997
    %v1152 = vpack.c.b16 %v1020, %v998
    %v1153 = vpack.c.b16 %v1021, %v999
    %v1154 = vpack.c.b16 %v1022, %v1000
    %v1155 = vpack.c.b16 %v1023, %v1001
    %v1156 = vpack.c.b16 %v1024, %v1002
    %v1157 = vpack.c.b16 %v1025, %v1003
    %v1158 = vpack.c.b16 %v1026, %v1004
    %v1159 = vpack.c.b16 %v1049, %v1027
    %v1160 = vpack.c.b16 %v1050, %v1028
    %v1161 = vpack.c.b16 %v1051, %v1029
    %v1162 = vpack.c.b16 %v1052, %v1030
    %v1163 = vpack.c.b16 %v1053, %v1031
    %v1164 = vpack.c.b16 %v1054, %v1032
    %v1165 = vpack.c.b16 %v1055, %v1033
    %v1166 = vpack.c.b16 %v1056, %v1034
    %v1167 = vpack.c.b16 %v1057, %v1035
    %v1168 = vpack.c.b16 %v1058, %v1036
    %v1169 = vpack.c.b16 %v1059, %v1037
    %v1170 = vpack.c.b16 %v1060, %v1038
    %v1171 = vpack.c.b16 %v1061, %v1039
    %v1172 = vpack.c.b16 %v1062, %v1040
    %v1173 = vpack.c.b16 %v1063, %v1041
    %v1174 = vpack.c.b16 %v1064, %v1042
    %v1175 = vpack.c.b16 %v1065, %v1043
    %v1176 = vpack.c.b16 %v1066, %v1044
    %v1177 = vpack.c.b16 %v1067, %v1045
    %v1178 = vpack.c.b16 %v1068, %v1046
    %v1179 = vpack.c.b16 %v1069, %v1047
    %v1180 = vpack.c.b16 %v1070, %v1048
    %v1181 = vpack.c.b16 %v1093, %v1071
    %v1182 = vpack.c.b16 %v1094, %v1072
    %v1183 = vpack.c.b16 %v1095, %v1073
    %v1184 = vpack.c.b16 %v1096, %v1074
    %v1185 = vpack.c.b16 %v1097, %v1075
    %v1186 = vpack.c.b16 %v1098, %v1076
    %v1187 = vpack.c.b16 %v1099, %v1077
    %v1188 = vpack.c.b16 %v1100, %v1078
    %v1189 = vpack.c.b16 %v1101, %v1079
    %v1190 = vpack.c.b16 %v1102, %v1080
    %v1191 = vpack.c.b16 %v1103, %v1081
    %v1192 = vpack.c.b16 %v1104, %v1082
    %v1193 = vpack.c.b16 %v1105, %v1083
    %v1194 = vpack.c.b16 %v1106, %v1084
    %v1195 = vpack.c.b16 %v1107, %v1085
    %v1196 = vpack.c.b16 %v1108, %v1086
    %v1197 = vpack.c.b16 %v1109, %v1087
    %v1198 = vpack.c.b16 %v1110, %v1088
    %v1199 = vpack.c.b16 %v1111, %v1089
    %v1200 = vpack.c.b16 %v1112, %v1090
    %v1201 = vpack.c.b16 %v1113, %v1091
    %v1202 = vpack.c.b16 %v1114, %v1092
    %v1995 = vunpack.c.l.b16 %v139
    %v1996 = vunpack.c.h.b16 %v139
    %v1997 = vunpack.c.l.b16 %v140
    %v1998 = vunpack.c.l.b16 %v141
    %v1999 = vunpack.c.h.b16 %v141
    %v2000 = vunpack.c.l.b16 %v142
    %v2001 = vunpack.c.l.b16 %v143
    %v2002 = vunpack.c.h.b16 %v143
    %v2003 = vunpack.c.l.b16 %v144
    %v2004 = vunpack.c.l.b16 %v145
    %v2005 = vunpack.c.h.b16 %v145
    %v2006 = vunpack.c.l.b16 %v146
    %v2007 = vunpack.c.l.b16 %v147
    %v2008 = vunpack.c.h.b16 %v147
    %v2009 = vunpack.c.l.b16 %v148
    %v2010 = vunpack.c.l.b16 %v149
    %v2011 = vunpack.c.h.b16 %v149
    %v2012 = vunpack.c.l.b16 %v150
    %v2013 = vunpack.c.l.b16 %v151
    %v2014 = vunpack.c.h.b16 %v151
    %v2015 = vunpack.c.l.b16 %v152
    %v2016 = vunpack.c.l.b16 %v153
    %v2017 = vunpack.c.h.b16 %v153
    %v2018 = vunpack.c.l.b16 %v154
    %v2019 = vunpack.c.l.b16 %v155
    %v2020 = vunpack.c.h.b16 %v155
    %v2021 = vunpack.c.l.b16 %v156
    %v2022 = vunpack.c.l.b16 %v157
    %v2023 = vunpack.c.h.b16 %v157
    %v2024 = vunpack.c.l.b16 %v158
    %v2025 = vunpack.c.l.b16 %v159
    %v2026 = vunpack.c.h.b16 %v159
    %v2027 = vunpack.c.l.b16 %v160
    %v2028 = vunpack.c.l.b16 %v161
    %v2029 = vunpack.c.h.b16 %v161
    %v2030 = vunpack.c.l.b16 %v162
    %v2031 = vunpack.c.l.b16 %v163
    %v2032 = vunpack.c.h.b16 %v163
    %v2033 = vunpack.c.l.b16 %v164
    %v2034 = vunpack.c.l.b16 %v165
    %v2035 = vunpack.c.h.b16 %v165
    %v2036 = vunpack.c.l.b16 %v166
    %v2037 = vunpack.c.l.b16 %v167
    %v2038 = vunpack.c.h.b16 %v167
    %v2039 = vunpack.c.l.b16 %v168
    %v2040 = vunpack.c.l.b16 %v169
    %v2041 = vunpack.c.h.b16 %v169
    %v2042 = vunpack.c.l.b16 %v170
    %v2043 = vunpack.c.l.b16 %v171
    %v2044 = vunpack.c.h.b16 %v171
    %v2045 = vunpack.c.l.b16 %v172
    %v2046 = vunpack.c.l.b16 %v173
    %v2047 = vunpack.c.h.b16 %v173
    %v2048 = vunpack.c.l.b16 %v174
    %v2049 = vunpack.c.l.b16 %v175
    %v2050 = vunpack.c.h.b16 %v175
    %v2051 = vunpack.c.l.b16 %v176
    %v2052 = vunpack.c.l.b16 %v177
    %v2053 = vunpack.c.h.b16 %v177
    %v2054 = vunpack.c.l.b16 %v178
    %v2055 = vunpack.c.l.b16 %v179
    %v2056 = vunpack.c.h.b16 %v179
    %v2057 = vunpack.c.l.b16 %v180
    %v2058 = vunpack.c.l.b16 %v181
    %v2059 = vunpack.c.h.b16 %v181
    %v2060 = vunpack.c.l.b16 %v182
    %v2061 = vunpack.c.l.b16 %v183
    %v2062 = vunpack.c.h.b16 %v183
    %v2063 = vunpack.c.l.b16 %v184
    %v2064 = vunpack.c.l.b16 %v185
    %v2065 = vunpack.c.h.b16 %v185
    %v2066 = vunpack.c.l.b16 %v186
    %v2067 = vunpack.c.l.b16 %v187
    %v2068 = vunpack.c.h.b16 %v187
    %v2069 = vunpack.c.l.b16 %v188
    %v2070 = vunpack.c.l.b16 %v189
    %v2071 = vunpack.c.h.b16 %v189
    %v2072 = vunpack.c.l.b16 %v190
    %v2073 = vunpack.c.l.b16 %v191
    %v2074 = vunpack.c.h.b16 %v191
    %v2075 = vunpack.c.l.b16 %v192
    %v2076 = vunpack.c.l.b16 %v193
    %v2077 = vunpack.c.h.b16 %v193
    %v2078 = vunpack.c.l.b16 %v194
    %v2079 = vunpack.c.l.b16 %v195
    %v2080 = vunpack.c.h.b16 %v195
    %v2081 = vunpack.c.l.b16 %v196
    %v2082 = vunpack.c.l.b16 %v197
    %v2083 = vunpack.c.h.b16 %v197
    %v2084 = vunpack.c.l.b16 %v198
    %v2085 = vunpack.c.l.b16 %v199
    %v2086 = vunpack.c.h.b16 %v199
    %v2087 = vunpack.c.l.b16 %v200
    %v2088 = vunpack.c.l.b16 %v201
    %v2089 = vunpack.c.h.b16 %v201
    %v2090 = vunpack.c.l.b16 %v202
    %v2091 = vunpack.c.l.b16 %v203
    %v2092 = vunpack.c.h.b16 %v203
    %v2093 = vunpack.c.l.b16 %v204
    %v2094 = vunpack.c.l.b16 %v205
    %v2095 = vunpack.c.h.b16 %v205
    %v2096 = vunpack.c.l.b16 %v206
    %v2097 = vunpack.c.l.b16 %v207
    %v2098 = vunpack.c.h.b16 %v207
    %v2099 = vunpack.c.l.b16 %v208
    %v2100 = vunpack.c.l.b16 %v209
    %v2101 = vunpack.c.h.b16 %v209
    %v2102 = vunpack.c.l.b16 %v210
    %v2103 = vunpack.c.l.b16 %v211
    %v2104 = vunpack.c.h.b16 %v211
    %v2105 = vunpack.c.l.b16 %v212
    %v2106 = vunpack.c.l.b16 %v213
    %v2107 = vunpack.c.h.b16 %v213
    %v2108 = vunpack.c.l.b16 %v214
    %v2109 = vunpack.c.l.b16 %v215
    %v2110 = vunpack.c.h.b16 %v215
    %v2111 = vunpack.c.l.b16 %v216
    %v2112 = vunpack.c.l.b16 %v217
    %v2113 = vunpack.c.h.b16 %v217
    %v2114 = vunpack.c.l.b16 %v218
    %v2115 = vunpack.c.l.b16 %v219
    %v2116 = vunpack.c.h.b16 %v219
    %v2117 = vunpack.c.l.b16 %v220
    %v2118 = vunpack.c.l.b16 %v221
    %v2119 = vunpack.c.h.b16 %v221
    %v2120 = vunpack.c.l.b16 %v222
    %v2121 = vunpack.c.l.b16 %v223
    %v2122 = vunpack.c.h.b16 %v223
    %v2123 = vunpack.c.l.b16 %v224
    %v2124 = vunpack.c.l.b16 %v225
    %v2125 = vunpack.c.h.b16 %v225
    %v2126 = vunpack.c.l.b16 %v226
    %v2127 = vunpack.c.l.b16 %v227
    %v2128 = vunpack.c.h.b16 %v227
    %v2129 = vunpack.c.l.b16 %v228
    %v2130 = vunpack.c.l.b16 %v229
    %v2131 = vunpack.c.h.b16 %v229
    %v2132 = vunpack.c.l.b16 %v230
    %v2133 = vunpack.c.l.b16 %v231
    %v2134 = vunpack.c.h.b16 %v231
    %v2135 = vunpack.c.l.b16 %v232
    %v2136 = vunpack.c.l.b16 %v233
    %v2137 = vunpack.c.h.b16 %v233
    %v2138 = vunpack.c.l.b16 %v234
    %v2139 = vunpack.c.l.b16 %v235
    %v2140 = vunpack.c.h.b16 %v235
    %v2141 = vunpack.c.l.b16 %v236
    %v2142 = vunpack.c.l.b16 %v237
    %v2143 = vunpack.c.h.b16 %v237
    %v2144 = vunpack.c.l.b16 %v238
    %v2145 = vunpack.c.l.b16 %v239
    %v2146 = vunpack.c.h.b16 %v239
    %v2147 = vunpack.c.l.b16 %v240
    %v2148 = vunpack.c.l.b16 %v241
    %v2149 = vunpack.c.h.b16 %v241
    %v2150 = vunpack.c.l.b16 %v242
    %v2151 = vunpack.c.l.b16 %v243
    %v2152 = vunpack.c.h.b16 %v243
    %v2153 = vunpack.c.l.b16 %v244
    %v2154 = vunpack.c.l.b16 %v245
    %v2155 = vunpack.c.h.b16 %v245
    %v2156 = vunpack.c.l.b16 %v246
    %v2157 = vunpack.c.l.b16 %v247
    %v2158 = vunpack.c.h.b16 %v247
    %v2159 = vunpack.c.l.b16 %v248
    %v2160 = vunpack.c.l.b16 %v249
    %v2161 = vunpack.c.h.b16 %v249
    %v2162 = vunpack.c.l.b16 %v250
    %v2163 = vunpack.c.l.b16 %v251
    %v2164 = vunpack.c.h.b16 %v251
    %v2165 = vunpack.c.l.b16 %v252
    %v2166 = vunpack.c.l.b16 %v253
    %v2167 = vunpack.c.h.b16 %v253
    %v2168 = vunpack.c.l.b16 %v254
    %v2169 = vunpack.c.l.b16 %v255
    %v2170 = vunpack.c.h.b16 %v255
    %v2171 = vunpack.c.l.b16 %v256
    %v2172 = vunpack.c.l.b16 %v257
    %v2173 = vunpack.c.h.b16 %v257
    %v2174 = vunpack.c.l.b16 %v258
    %v2175 = vunpack.c.l.b16 %v259
    %v2176 = vunpack.c.h.b16 %v259
    %v2177 = vunpack.c.l.b16 %v260
    %v2178 = vunpack.c.l.b16 %v261
    %v2179 = vunpack.c.h.b16 %v261
    %v2180 = vunpack.c.l.b16 %v262
    %v2181 = vunpack.c.l.b16 %v263
    %v2182 = vunpack.c.h.b16 %v263
    %v2183 = vunpack.c.l.b16 %v264
    %v2184 = vunpack.c.l.b16 %v265
    %v2185 = vunpack.c.h.b16 %v265
    %v2186 = vunpack.c.l.b16 %v266
    %v2187 = vunpack.c.l.b16 %v267
    %v2188 = vunpack.c.h.b16 %v267
    %v2189 = vunpack.c.l.b16 %v268
    %v2190 = vunpack.c.l.b16 %v269
    %v2191 = vunpack.c.h.b16 %v269
    %v2192 = vunpack.c.l.b16 %v270
    %v2193 = vunpack.c.l.b16 %v271
    %v2194 = vunpack.c.h.b16 %v271
    %v2195 = vunpack.c.l.b16 %v272
    %v2196 = vunpack.c.l.b16 %v273
    %v2197 = vunpack.c.h.b16 %v273
    %v2198 = vunpack.c.l.b16 %v274
    %v2199 = vunpack.c.l.b16 %v275
    %v2200 = vunpack.c.h.b16 %v275
    %v2201 = vunpack.c.l.b16 %v276
    %v2202 = vunpack.c.l.b16 %v277
    %v2203 = vunpack.c.h.b16 %v277
    %v2204 = vunpack.c.l.b16 %v278
    %v2205 = vunpack.c.l.b16 %v279
    %v2206 = vunpack.c.h.b16 %v279
    %v2207 = vunpack.c.l.b16 %v280
    %v2208 = vunpack.c.l.b16 %v281
    %v2209 = vunpack.c.h.b16 %v281
    %v2210 = vunpack.c.l.b16 %v282
    %v2211 = vunpack.c.l.b16 %v283
    %v2212 = vunpack.c.h.b16 %v283
    %v2213 = vunpack.c.l.b16 %v284
    %v2214 = vunpack.c.l.b16 %v285
    %v2215 = vunpack.c.h.b16 %v285
    %v2216 = vunpack.c.l.b16 %v286
    %v2217 = vunpack.c.l.b16 %v287
    %v2218 = vunpack.c.h.b16 %v287
    %v2219 = vunpack.c.l.b16 %v288
    %v2220 = vunpack.c.l.b16 %v289
    %v2221 = vunpack.c.h.b16 %v289
    %v2222 = vunpack.c.l.b16 %v290
    %v2223 = vunpack.c.l.b16 %v291
    %v2224 = vunpack.c.h.b16 %v291
    %v2225 = vunpack.c.l.b16 %v292
    %v2226 = vunpack.c.l.b16 %v293
    %v2227 = vunpack.c.h.b16 %v293
    %v2228 = vunpack.c.l.b16 %v294
    %v2229 = vunpack.c.l.b16 %v295
    %v2230 = vunpack.c.h.b16 %v295
    %v2231 = vunpack.c.l.b16 %v296
    %v2232 = vunpack.c.l.b16 %v297
    %v2233 = vunpack.c.h.b16 %v297
    %v2234 = vunpack.c.l.b16 %v298
    %v2235 = vunpack.c.l.b16 %v299
    %v2236 = vunpack.c.h.b16 %v299
    %v2237 = vunpack.c.l.b16 %v300
    %v2238 = vunpack.c.l.b16 %v301
    %v2239 = vunpack.c.h.b16 %v301
    %v2240 = vunpack.c.l.b16 %v302
    %v2241 = vunpack.c.l.b16 %v303
    %v2242 = vunpack.c.h.b16 %v303
    %v2243 = vunpack.c.l.b16 %v304
    %v2244 = vunpack.c.l.b16 %v305
    %v2245 = vunpack.c.h.b16 %v305
    %v2246 = vunpack.c.l.b16 %v306
    %v2247 = vunpack.c.l.b16 %v307
    %v2248 = vunpack.c.h.b16 %v307
    %v2249 = vunpack.c.l.b16 %v308
    %v2250 = vunpack.c.l.b16 %v309
    %v2251 = vunpack.c.h.b16 %v309
    %v2252 = vunpack.c.l.b16 %v310
    %v2253 = vunpack.c.l.b16 %v311
    %v2254 = vunpack.c.h.b16 %v311
    %v2255 = vunpack.c.l.b16 %v312
    %v2256 = vunpack.c.l.b16 %v313
    %v2257 = vunpack.c.h.b16 %v313
    %v2258 = vunpack.c.l.b16 %v314
    %v2259 = vunpack.c.l.b16 %v315
    %v2260 = vunpack.c.h.b16 %v315
    %v2261 = vunpack.c.l.b16 %v316
    %v2262 = vunpack.c.l.b16 %v317
    %v2263 = vunpack.c.h.b16 %v317
    %v2264 = vunpack.c.l.b16 %v318
    %v2265 = vunpack.c.l.b16 %v319
    %v2266 = vunpack.c.h.b16 %v319
    %v2267 = vunpack.c.l.b16 %v320
    %v2268 = vunpack.c.l.b16 %v321
    %v2269 = vunpack.c.h.b16 %v321
    %v2270 = vunpack.c.l.b16 %v322
    %v2271 = vunpack.c.l.b16 %v323
    %v2272 = vunpack.c.h.b16 %v323
    %v2273 = vunpack.c.l.b16 %v324
    %v2274 = vunpack.c.l.b16 %v325
    %v2275 = vunpack.c.h.b16 %v325
    %v2276 = vunpack.c.l.b16 %v326
    %v2277 = vunpack.c.l.b16 %v327
    %v2278 = vunpack.c.h.b16 %v327
    %v2279 = vunpack.c.l.b16 %v328
    %v2280 = vunpack.c.l.b16 %v329
    %v2281 = vunpack.c.h.b16 %v329
    %v2282 = vunpack.c.l.b16 %v330
    %v2283 = vunpack.c.l.b16 %v331
    %v2284 = vunpack.c.h.b16 %v331
    %v2285 = vunpack.c.l.b16 %v332
    %v2286 = vunpack.c.l.b16 %v333
    %v2287 = vunpack.c.h.b16 %v333
    %v2288 = vunpack.c.l.b16 %v334
    %v2289 = vunpack.c.l.b16 %v335
    %v2290 = vunpack.c.h.b16 %v335
    %v2291 = vunpack.c.l.b16 %v336
    %v2292 = vunpack.c.l.b16 %v337
    %v2293 = vunpack.c.h.b16 %v337
    %v2294 = vunpack.c.l.b16 %v338
    %v2295 = vunpack.c.l.b16 %v339
    %v2296 = vunpack.c.h.b16 %v339
    %v2297 = vunpack.c.l.b16 %v340
    %v2298 = vunpack.c.l.b16 %v341
    %v2299 = vunpack.c.h.b16 %v341
    %v2300 = vunpack.c.l.b16 %v342
    %v2301 = vunpack.c.l.b16 %v343
    %v2302 = vunpack.c.h.b16 %v343
    %v2303 = vunpack.c.l.b16 %v344
    %v2304 = vunpack.c.l.b16 %v345
    %v2305 = vunpack.c.h.b16 %v345
    %v2306 = vunpack.c.l.b16 %v346
    %v2307 = vunpack.c.l.b16 %v347
    %v2308 = vunpack.c.h.b16 %v347
    %v2309 = vunpack.c.l.b16 %v348
    %v2310 = vunpack.c.l.b16 %v349
    %v2311 = vunpack.c.h.b16 %v349
    %v2312 = vunpack.c.l.b16 %v350
    %v2313 = vunpack.c.l.b16 %v351
    %v2314 = vunpack.c.h.b16 %v351
    %v2315 = vunpack.c.l.b16 %v352
    %v2316 = vunpack.c.l.b16 %v353
    %v2317 = vunpack.c.h.b16 %v353
    %v2318 = vunpack.c.l.b16 %v354
    %v2319 = vunpack.c.l.b16 %v355
    %v2320 = vunpack.c.h.b16 %v355
    %v2321 = vunpack.c.l.b16 %v356
    %v2322 = vunpack.c.l.b16 %v357
    %v2323 = vunpack.c.h.b16 %v357
    %v2324 = vunpack.c.l.b16 %v358
    %v2325 = vunpack.c.l.b16 %v359
    %v2326 = vunpack.c.h.b16 %v359
    %v2327 = vunpack.c.l.b16 %v360
    %v2328 = vunpack.c.l.b16 %v361
    %v2329 = vunpack.c.h.b16 %v361
    %v2330 = vunpack.c.l.b16 %v362
    %v2331 = vunpack.c.l.b16 %v363
    %v2332 = vunpack.c.h.b16 %v363
    %v2333 = vunpack.c.l.b16 %v364
    %v2334 = vunpack.c.l.b16 %v365
    %v2335 = vunpack.c.h.b16 %v365
    %v2336 = vunpack.c.l.b16 %v366
    %v2337 = vunpack.c.l.b16 %v367
    %v2338 = vunpack.c.h.b16 %v367
    %v2339 = vunpack.c.l.b16 %v368
    %v2340 = vunpack.c.l.b16 %v369
    %v2341 = vunpack.c.h.b16 %v369
    %v2342 = vunpack.c.l.b16 %v370
    %v2343 = vunpack.c.l.b16 %v371
    %v2344 = vunpack.c.h.b16 %v371
    %v2345 = vunpack.c.l.b16 %v372
    %v2346 = vunpack.c.l.b16 %v373
    %v2347 = vunpack.c.h.b16 %v373
    %v2348 = vunpack.c.l.b16 %v374
    %v2349 = vunpack.c.l.b16 %v375
    %v2350 = vunpack.c.h.b16 %v375
    %v2351 = vunpack.c.l.b16 %v376
    %v2352 = vunpack.c.l.b16 %v377
    %v2353 = vunpack.c.h.b16 %v377
    %v2354 = vunpack.c.l.b16 %v378
    %v2355 = vunpack.c.l.b16 %v379
    %v2356 = vunpack.c.h.b16 %v379
    %v2357 = vunpack.c.l.b16 %v380
    %v2358 = vunpack.c.l.b16 %v381
    %v2359 = vunpack.c.h.b16 %v381
    %v2360 = vunpack.c.l.b16 %v382
    %v2361 = vunpack.c.l.b16 %v383
    %v2362 = vunpack.c.h.b16 %v383
    %v2363 = vunpack.c.l.b16 %v384
    %v2364 = vunpack.c.l.b16 %v385
    %v2365 = vunpack.c.h.b16 %v385
    %v2366 = vunpack.c.l.b16 %v386
    %v2367 = vunpack.c.l.b16 %v387
    %v2368 = vunpack.c.h.b16 %v387
    %v2369 = vunpack.c.l.b16 %v388
    %v2370 = vunpack.c.l.b16 %v389
    %v2371 = vunpack.c.h.b16 %v389
    %v2372 = vunpack.c.l.b16 %v390
    %v2373 = vunpack.c.l.b16 %v391
    %v2374 = vunpack.c.h.b16 %v391
    %v2375 = vunpack.c.l.b16 %v392
    %v2376 = vunpack.c.l.b16 %v393
    %v2377 = vunpack.c.h.b16 %v393
    %v2378 = vunpack.c.l.b16 %v394
    %v2379 = vunpack.c.l.b16 %v395
    %v2380 = vunpack.c.h.b16 %v395
    %v2381 = vunpack.c.l.b16 %v396
    %v2382 = vunpack.c.l.b16 %v397
    %v2383 = vunpack.c.h.b16 %v397
    %v2384 = vunpack.c.l.b16 %v398
    %v2385 = vunpack.c.l.b16 %v399
    %v2386 = vunpack.c.h.b16 %v399
    %v2387 = vunpack.c.l.b16 %v400
    %v2388 = vunpack.c.l.b16 %v401
    %v2389 = vunpack.c.h.b16 %v401
    %v2390 = vunpack.c.l.b16 %v402
    %v2391 = vunpack.c.l.b16 %v403
    %v2392 = vunpack.c.h.b16 %v403
    %v2393 = vunpack.c.l.b16 %v404
    %v2394 = vunpack.c.l.b16 %v405
    %v2395 = vunpack.c.h.b16 %v405
    %v2396 = vunpack.c.l.b16 %v406
    %v2397 = vunpack.c.l.b16 %v407
    %v2398 = vunpack.c.h.b16 %v407
    %v2399 = vunpack.c.l.b16 %v408
    %v2400 = vunpack.c.l.b16 %v409
    %v2401 = vunpack.c.h.b16 %v409
    %v2402 = vunpack.c.l.b16 %v410
    %v2403 = vunpack.c.l.b16 %v411
    %v2404 = vunpack.c.h.b16 %v411
    %v2405 = vunpack.c.l.b16 %v412
    %v2406 = vunpack.c.l.b16 %v413
    %v2407 = vunpack.c.h.b16 %v413
    %v2408 = vunpack.c.l.b16 %v414
    %v2409 = vunpack.c.l.b16 %v415
    %v2410 = vunpack.c.h.b16 %v415
    %v2411 = vunpack.c.l.b16 %v416
    %v2412 = vunpack.c.l.b16 %v417
    %v2413 = vunpack.c.h.b16 %v417
    %v2414 = vunpack.c.l.b16 %v418
    %v2415 = vunpack.c.l.b16 %v419
    %v2416 = vunpack.c.h.b16 %v419
    %v2417 = vunpack.c.l.b16 %v420
    %v2418 = vunpack.c.l.b16 %v421
    %v2419 = vunpack.c.h.b16 %v421
    %v2420 = vunpack.c.l.b16 %v422
    %v2421 = vunpack.c.l.b16 %v423
    %v2422 = vunpack.c.h.b16 %v423
    %v2423 = vunpack.c.l.b16 %v424
    %v2424 = vunpack.c.l.b16 %v425
    %v2425 = vunpack.c.h.b16 %v425
    %v2426 = vunpack.c.l.b16 %v426
    %v2427 = vunpack.c.l.b16 %v427
    %v2428 = vunpack.c.h.b16 %v427
    %v2429 = vunpack.c.l.b16 %v428
    %v2430 = vunpack.c.l.b16 %v429
    %v2431 = vunpack.c.h.b16 %v429
    %v2432 = vunpack.c.l.b16 %v430
    %v2433 = vunpack.c.l.b16 %v431
    %v2434 = vunpack.c.h.b16 %v431
    %v2435 = vunpack.c.l.b16 %v432
    %v2436 = vunpack.c.l.b16 %v433
    %v2437 = vunpack.c.h.b16 %v433
    %v2438 = vunpack.c.l.b16 %v434
    %v2439 = vunpack.c.l.b16 %v435
    %v2440 = vunpack.c.h.b16 %v435
    %v2441 = vunpack.c.l.b16 %v436
    %v2442 = vunpack.c.l.b16 %v437
    %v2443 = vunpack.c.h.b16 %v437
    %v2444 = vunpack.c.l.b16 %v438
    %v2445 = vunpack.c.l.b16 %v439
    %v2446 = vunpack.c.h.b16 %v439
    %v2447 = vunpack.c.l.b16 %v440
    %v2448 = vunpack.c.l.b16 %v441
    %v2449 = vunpack.c.h.b16 %v441
    %v2450 = vunpack.c.l.b16 %v442
    %v2451 = vunpack.c.l.b16 %v443
    %v2452 = vunpack.c.h.b16 %v443
    %v2453 = vunpack.c.l.b16 %v444
    %v2454 = vunpack.c.l.b16 %v445
    %v2455 = vunpack.c.h.b16 %v445
    %v2456 = vunpack.c.l.b16 %v446
    %v2457 = vunpack.c.l.b16 %v447
    %v2458 = vunpack.c.h.b16 %v447
    %v2459 = vunpack.c.l.b16 %v448
    %v2460 = vunpack.c.l.b16 %v449
    %v2461 = vunpack.c.h.b16 %v449
    %v2462 = vunpack.c.l.b16 %v450
    %v2463 = vunpack.c.l.b16 %v451
    %v2464 = vunpack.c.h.b16 %v451
    %v2465 = vunpack.c.l.b16 %v452
    %v2466 = vunpack.c.l.b16 %v453
    %v2467 = vunpack.c.h.b16 %v453
    %v2468 = vunpack.c.l.b16 %v454
    %v2469 = vunpack.c.l.b16 %v455
    %v2470 = vunpack.c.h.b16 %v455
    %v2471 = vunpack.c.l.b16 %v456
    %v2472 = vunpack.c.l.b16 %v457
    %v2473 = vunpack.c.h.b16 %v457
    %v2474 = vunpack.c.l.b16 %v458
    %v2475 = vunpack.c.l.b16 %v459
    %v2476 = vunpack.c.h.b16 %v459
    %v2477 = vunpack.c.l.b16 %v460
    %v2478 = vunpack.c.l.b16 %v461
    %v2479 = vunpack.c.h.b16 %v461
    %v2480 = vunpack.c.l.b16 %v462
    %v2481 = vunpack.c.l.b16 %v463
    %v2482 = vunpack.c.h.b16 %v463
    %v2483 = vunpack.c.l.b16 %v464
    %v2484 = vunpack.c.l.b16 %v465
    %v2485 = vunpack.c.h.b16 %v465
    %v2486 = vunpack.c.l.b16 %v466
    %v2487 = vunpack.c.l.b16 %v467
    %v2488 = vunpack.c.h.b16 %v467
    %v2489 = vunpack.c.l.b16 %v468
    %v2490 = vunpack.c.l.b16 %v469
    %v2491 = vunpack.c.h.b16 %v469
    %v2492 = vunpack.c.l.b16 %v470
    %v2493 = vunpack.c.l.b16 %v471
    %v2494 = vunpack.c.h.b16 %v471
    %v2495 = vunpack.c.l.b16 %v472
    %v2496 = vunpack.c.l.b16 %v473
    %v2497 = vunpack.c.h.b16 %v473
    %v2498 = vunpack.c.l.b16 %v474
    %v2499 = vunpack.c.l.b16 %v475
    %v2500 = vunpack.c.h.b16 %v475
    %v2501 = vunpack.c.l.b16 %v476
    %v2502 = vunpack.c.l.b16 %v477
    %v2503 = vunpack.c.h.b16 %v477
    %v2504 = vunpack.c.l.b16 %v478
    %v2505 = vunpack.c.l.b16 %v479
    %v2506 = vunpack.c.h.b16 %v479
    %v2507 = vunpack.c.l.b16 %v480
    %v2508 = vunpack.c.l.b16 %v481
    %v2509 = vunpack.c.h.b16 %v481
    %v2510 = vunpack.c.l.b16 %v482
    %v2511 = vunpack.c.l.b16 %v483
    %v2512 = vunpack.c.h.b16 %v483
    %v2513 = vunpack.c.l.b16 %v484
    %v2514 = vunpack.c.l.b16 %v485
    %v2515 = vunpack.c.h.b16 %v485
    %v2516 = vunpack.c.l.b16 %v486
    %v2517 = vunpack.c.l.b16 %v487
    %v2518 = vunpack.c.h.b16 %v487
    %v2519 = vunpack.c.l.b16 %v488
    %v2520 = vunpack.c.l.b16 %v489
    %v2521 = vunpack.c.h.b16 %v489
    %v2522 = vunpack.c.l.b16 %v490
    %v2523 = vunpack.c.l.b16 %v491
    %v2524 = vunpack.c.h.b16 %v491
    %v2525 = vunpack.c.l.b16 %v492
    %v2526 = vunpack.c.l.b16 %v493
    %v2527 = vunpack.c.h.b16 %v493
    %v2528 = vunpack.c.l.b16 %v494
    %v2529 = vunpack.c.l.b16 %v495
    %v2530 = vunpack.c.h.b16 %v495
    %v2531 = vunpack.c.l.b16 %v496
    %v2532 = vunpack.c.l.b16 %v497
    %v2533 = vunpack.c.h.b16 %v497
    %v2534 = vunpack.c.l.b16 %v498
    %v2535 = vunpack.c.l.b16 %v499
    %v2536 = vunpack.c.h.b16 %v499
    %v2537 = vunpack.c.l.b16 %v500
    %v2538 = vunpack.c.l.b16 %v501
    %v2539 = vunpack.c.h.b16 %v501
    %v2540 = vunpack.c.l.b16 %v502
    %v2541 = vunpack.c.l.b16 %v503
    %v2542 = vunpack.c.h.b16 %v503
    %v2543 = vunpack.c.l.b16 %v504
    %v2544 = vunpack.c.l.b16 %v505
    %v2545 = vunpack.c.h.b16 %v505
    %v2546 = vunpack.c.l.b16 %v506
    %v2547 = vunpack.c.l.b16 %v507
    %v2548 = vunpack.c.h.b16 %v507
    %v2549 = vunpack.c.l.b16 %v508
    %v2550 = vunpack.c.l.b16 %v509
    %v2551 = vunpack.c.h.b16 %v509
    %v2552 = vunpack.c.l.b16 %v510
    %v2553 = vunpack.c.l.b16 %v511
    %v2554 = vunpack.c.h.b16 %v511
    %v2555 = vunpack.c.l.b16 %v512
    %v2556 = vunpack.c.l.b16 %v513
    %v2557 = vunpack.c.h.b16 %v513
    %v2558 = vunpack.c.l.b16 %v514
    %v2559 = vunpack.c.l.b16 %v515
    %v2560 = vunpack.c.h.b16 %v515
    %v2561 = vunpack.c.l.b16 %v516
    %v2562 = vunpack.c.l.b16 %v517
    %v2563 = vunpack.c.h.b16 %v517
    %v2564 = vunpack.c.l.b16 %v518
    %v2565 = vunpack.c.l.b16 %v519
    %v2566 = vunpack.c.h.b16 %v519
    %v2567 = vunpack.c.l.b16 %v520
    %v2568 = vunpack.c.l.b16 %v521
    %v2569 = vunpack.c.h.b16 %v521
    %v2570 = vunpack.c.l.b16 %v522
    %v2571 = vunpack.c.l.b16 %v523
    %v2572 = vunpack.c.h.b16 %v523
    %v2573 = vunpack.c.l.b16 %v524
    %v2574 = vunpack.c.l.b16 %v525
    %v2575 = vunpack.c.h.b16 %v525
    %v2576 = vunpack.c.l.b16 %v526
    %v2577 = vunpack.c.l.b16 %v527
    %v2578 = vunpack.c.h.b16 %v527
    %v2579 = vunpack.c.l.b16 %v528
    %v2580 = vunpack.c.l.b16 %v529
    %v2581 = vunpack.c.h.b16 %v529
    %v2582 = vunpack.c.l.b16 %v530
    %v2583 = vunpack.c.l.b16 %v531
    %v2584 = vunpack.c.h.b16 %v531
    %v2585 = vunpack.c.l.b16 %v532
    %v2586 = vunpack.c.l.b16 %v533
    %v2587 = vunpack.c.h.b16 %v533
    %v2588 = vunpack.c.l.b16 %v534
    %v2589 = vunpack.c.l.b16 %v535
    %v2590 = vunpack.c.h.b16 %v535
    %v2591 = vunpack.c.l.b16 %v536
    %v2592 = vunpack.c.l.b16 %v537
    %v2593 = vunpack.c.h.b16 %v537
    %v2594 = vunpack.c.l.b16 %v538
    %v2595 = vunpack.c.l.b16 %v539
    %v2596 = vunpack.c.h.b16 %v539
    %v2597 = vunpack.c.l.b16 %v540
    %v2598 = vunpack.c.l.b16 %v541
    %v2599 = vunpack.c.h.b16 %v541
    %v2600 = vunpack.c.l.b16 %v542
    %v2601 = vunpack.c.l.b16 %v543
    %v2602 = vunpack.c.h.b16 %v543
    %v2603 = vunpack.c.l.b16 %v544
    %v2604 = vunpack.c.l.b16 %v545
    %v2605 = vunpack.c.h.b16 %v545
    %v2606 = vunpack.c.l.b16 %v546
    %v2607 = vunpack.c.l.b16 %v547
    %v2608 = vunpack.c.h.b16 %v547
    %v2609 = vunpack.c.l.b16 %v548
    %v2610 = vunpack.c.l.b16 %v549
    %v2611 = vunpack.c.h.b16 %v549
    %v2612 = vunpack.c.l.b16 %v550
    %v2613 = vunpack.c.l.b16 %v551
    %v2614 = vunpack.c.h.b16 %v551
    %v2615 = vunpack.c.l.b16 %v552
    %v2616 = vunpack.c.l.b16 %v553
    %v2617 = vunpack.c.h.b16 %v553
    %v2618 = vunpack.c.l.b16 %v554
    %v2619 = vunpack.c.l.b16 %v555
    %v2620 = vunpack.c.h.b16 %v555
    %v2621 = vunpack.c.l.b16 %v556
    %v2622 = vunpack.c.l.b16 %v557
    %v2623 = vunpack.c.h.b16 %v557
    %v2624 = vunpack.c.l.b16 %v558
    %v2625 = vunpack.c.l.b16 %v559
    %v2626 = vunpack.c.h.b16 %v559
    %v2627 = vunpack.c.l.b16 %v560
    %v2628 = vunpack.c.l.b16 %v561
    %v2629 = vunpack.c.h.b16 %v561
    %v2630 = vunpack.c.l.b16 %v562
    %v2631 = vunpack.c.l.b16 %v563
    %v2632 = vunpack.c.h.b16 %v563
    %v2633 = vunpack.c.l.b16 %v564
    %v2634 = vunpack.c.l.b16 %v565
    %v2635 = vunpack.c.h.b16 %v565
    %v2636 = vunpack.c.l.b16 %v566
    %v2637 = vunpack.c.l.b16 %v567
    %v2638 = vunpack.c.h.b16 %v567
    %v2639 = vunpack.c.l.b16 %v568
    %v2640 = vunpack.c.l.b16 %v569
    %v2641 = vunpack.c.h.b16 %v569
    %v2642 = vunpack.c.l.b16 %v570
    %v2643 = vunpack.c.l.b16 %v571
    %v2644 = vunpack.c.h.b16 %v571
    %v2645 = vunpack.c.l.b16 %v572
    %v2646 = vunpack.c.l.b16 %v573
    %v2647 = vunpack.c.h.b16 %v573
    %v2648 = vunpack.c.l.b16 %v574
    %v2649 = vunpack.c.l.b16 %v575
    %v2650 = vunpack.c.h.b16 %v575
    %v2651 = vunpack.c.l.b16 %v576
    %v2652 = vunpack.c.l.b16 %v577
    %v2653 = vunpack.c.h.b16 %v577
    %v2654 = vunpack.c.l.b16 %v578
    %v2655 = vunpack.c.l.b16 %v579
    %v2656 = vunpack.c.h.b16 %v579
    %v2657 = vunpack.c.l.b16 %v580
    %v2658 = vunpack.c.l.b16 %v581
    %v2659 = vunpack.c.h.b16 %v581
    %v2660 = vunpack.c.l.b16 %v582
    %v2661 = vunpack.c.l.b16 %v583
    %v2662 = vunpack.c.h.b16 %v583
    %v2663 = vunpack.c.l.b16 %v584
    %v2664 = vunpack.c.l.b16 %v585
    %v2665 = vunpack.c.h.b16 %v585
    %v2666 = vunpack.c.l.b16 %v586
    %v2667 = vunpack.c.l.b16 %v587
    %v2668 = vunpack.c.h.b16 %v587
    %v2669 = vunpack.c.l.b16 %v588
    %v2670 = vunpack.c.l.b16 %v589
    %v2671 = vunpack.c.h.b16 %v589
    %v2672 = vunpack.c.l.b16 %v590
    %v2673 = vunpack.c.l.b16 %v591
    %v2674 = vunpack.c.h.b16 %v591
    %v2675 = vunpack.c.l.b16 %v592
    %v2676 = vunpack.c.l.b16 %v593
    %v2677 = vunpack.c.h.b16 %v593
    %v2678 = vunpack.c.l.b16 %v594
    %v2679 = vunpack.c.l.b16 %v595
    %v2680 = vunpack.c.h.b16 %v595
    %v2681 = vunpack.c.l.b16 %v596
    %v2682 = vunpack.c.l.b16 %v597
    %v2683 = vunpack.c.h.b16 %v597
    %v2684 = vunpack.c.l.b16 %v598
    %v2685 = vunpack.c.l.b16 %v599
    %v2686 = vunpack.c.h.b16 %v599
    %v2687 = vunpack.c.l.b16 %v600
    %v2688 = vunpack.c.l.b16 %v601
    %v2689 = vunpack.c.h.b16 %v601
    %v2690 = vunpack.c.l.b16 %v602
    %v2691 = vunpack.c.l.b16 %v603
    %v2692 = vunpack.c.h.b16 %v603
    %v2693 = vunpack.c.l.b16 %v604
    %v2694 = vunpack.c.l.b16 %v605
    %v2695 = vunpack.c.h.b16 %v605
    %v2696 = vunpack.c.l.b16 %v606
    %v2697 = vunpack.c.l.b16 %v607
    %v2698 = vunpack.c.h.b16 %v607
    %v2699 = vunpack.c.l.b16 %v608
    %v2700 = vunpack.c.l.b16 %v609
    %v2701 = vunpack.c.h.b16 %v609
    %v2702 = vunpack.c.l.b16 %v610
    %v2703 = vunpack.c.l.b16 %v611
    %v2704 = vunpack.c.h.b16 %v611
    %v2705 = vunpack.c.l.b16 %v612
    %v2706 = vunpack.c.l.b16 %v613
    %v2707 = vunpack.c.h.b16 %v613
    %v2708 = vunpack.c.l.b16 %v614
    %v2709 = vunpack.c.l.b16 %v615
    %v2710 = vunpack.c.h.b16 %v615
    %v2711 = vunpack.c.l.b16 %v616
    %v2712 = vunpack.c.l.b16 %v617
    %v2713 = vunpack.c.h.b16 %v617
    %v2714 = vunpack.c.l.b16 %v618
    %v2715 = vunpack.c.l.b16 %v619
    %v2716 = vunpack.c.h.b16 %v619
    %v2717 = vunpack.c.l.b16 %v620
    %v2718 = vunpack.c.l.b16 %v621
    %v2719 = vunpack.c.h.b16 %v621
    %v2720 = vunpack.c.l.b16 %v622
    %v2721 = vunpack.c.l.b16 %v623
    %v2722 = vunpack.c.h.b16 %v623
    %v2723 = vunpack.c.l.b16 %v624
    %v2724 = vunpack.c.l.b16 %v625
    %v2725 = vunpack.c.h.b16 %v625
    %v2726 = vunpack.c.l.b16 %v626
    %v2727 = vunpack.c.l.b16 %v627
    %v2728 = vunpack.c.h.b16 %v627
    %v2729 = vunpack.c.l.b16 %v628
    %v2730 = vunpack.c.l.b16 %v629
    %v2731 = vunpack.c.h.b16 %v629
    %v2732 = vunpack.c.l.b16 %v630
    %v2733 = vunpack.c.l.b16 %v631
    %v2734 = vunpack.c.h.b16 %v631
    %v2735 = vunpack.c.l.b16 %v632
    %v2736 = vunpack.c.l.b16 %v633
    %v2737 = vunpack.c.h.b16 %v633
    %v2738 = vunpack.c.l.b16 %v634
    %v2739 = vunpack.c.l.b16 %v635
    %v2740 = vunpack.c.h.b16 %v635
    %v2741 = vunpack.c.l.b16 %v636
    %v2742 = vunpack.c.l.b16 %v637
    %v2743 = vunpack.c.h.b16 %v637
    %v2744 = vunpack.c.l.b16 %v638
    %v2745 = vunpack.c.l.b16 %v639
    %v2746 = vunpack.c.h.b16 %v639
    %v2747 = vunpack.c.l.b16 %v640
    %v2748 = vunpack.c.l.b16 %v641
    %v2749 = vunpack.c.h.b16 %v641
    %v2750 = vunpack.c.l.b16 %v642
    %v2751 = vunpack.c.l.b16 %v643
    %v2752 = vunpack.c.h.b16 %v643
    %v2753 = vunpack.c.l.b16 %v644
    %v2754 = vunpack.c.l.b16 %v645
    %v2755 = vunpack.c.h.b16 %v645
    %v2756 = vunpack.c.l.b16 %v646
    %v2757 = vunpack.c.l.b16 %v647
    %v2758 = vunpack.c.h.b16 %v647
    %v2759 = vunpack.c.l.b16 %v648
    %v2760 = vunpack.c.l.b16 %v649
    %v2761 = vunpack.c.h.b16 %v649
    %v2762 = vunpack.c.l.b16 %v650
    %v2763 = vunpack.c.l.b16 %v651
    %v2764 = vunpack.c.h.b16 %v651
    %v2765 = vunpack.c.l.b16 %v652
    %v2766 = vunpack.c.l.b16 %v653
    %v2767 = vunpack.c.h.b16 %v653
    %v2768 = vunpack.c.l.b16 %v654
    %v2769 = vunpack.c.l.b16 %v655
    %v2770 = vunpack.c.h.b16 %v655
    %v2771 = vunpack.c.l.b16 %v656
    %v2772 = vunpack.c.l.b16 %v657
    %v2773 = vunpack.c.h.b16 %v657
    %v2774 = vunpack.c.l.b16 %v658
    %v2775 = vunpack.c.l.b16 %v659
    %v2776 = vunpack.c.h.b16 %v659
    %v2777 = vunpack.c.l.b16 %v660
    %v2778 = vunpack.c.l.b16 %v661
    %v2779 = vunpack.c.h.b16 %v661
    %v2780 = vunpack.c.l.b16 %v662
    %v2781 = vunpack.c.l.b16 %v663
    %v2782 = vunpack.c.h.b16 %v663
    %v2783 = vunpack.c.l.b16 %v664
    %v2784 = vunpack.c.l.b16 %v665
    %v2785 = vunpack.c.h.b16 %v665
    %v2786 = vunpack.c.l.b16 %v666
    %v2787 = vunpack.c.l.b16 %v667
    %v2788 = vunpack.c.h.b16 %v667
    %v2789 = vunpack.c.l.b16 %v668
    %v2790 = vunpack.c.l.b16 %v669
    %v2791 = vunpack.c.h.b16 %v669
    %v2792 = vunpack.c.l.b16 %v670
    %v2793 = vunpack.c.l.b16 %v671
    %v2794 = vunpack.c.h.b16 %v671
    %v2795 = vunpack.c.l.b16 %v672
    %v2796 = vunpack.c.l.b16 %v673
    %v2797 = vunpack.c.h.b16 %v673
    %v2798 = vunpack.c.l.b16 %v674
    %v2799 = vunpack.c.l.b16 %v675
    %v2800 = vunpack.c.h.b16 %v675
    %v2801 = vunpack.c.l.b16 %v676
    %v2802 = vunpack.c.l.b16 %v677
    %v2803 = vunpack.c.h.b16 %v677
    %v2804 = vunpack.c.l.b16 %v678
    %v2805 = vunpack.c.l.b16 %v679
    %v2806 = vunpack.c.h.b16 %v679
    %v2807 = vunpack.c.l.b16 %v680
    %v2808 = vunpack.c.l.b16 %v681
    %v2809 = vunpack.c.h.b16 %v681
    %v2810 = vunpack.c.l.b16 %v682
    %v2811 = vunpack.c.l.b16 %v683
    %v2812 = vunpack.c.h.b16 %v683
    %v2813 = vunpack.c.l.b16 %v684
    %v2814 = vunpack.c.l.b16 %v685
    %v2815 = vunpack.c.h.b16 %v685
    %v2816 = vunpack.c.l.b16 %v686
    %v2817 = vunpack.c.l.b16 %v687
    %v2818 = vunpack.c.h.b16 %v687
    %v2819 = vunpack.c.l.b16 %v688
    %v2820 = vunpack.c.l.b16 %v689
    %v2821 = vunpack.c.h.b16 %v689
    %v2822 = vunpack.c.l.b16 %v690
    %v2823 = vunpack.c.l.b16 %v691
    %v2824 = vunpack.c.h.b16 %v691
    %v2825 = vunpack.c.l.b16 %v692
    %v2826 = vunpack.c.l.b16 %v693
    %v2827 = vunpack.c.h.b16 %v693
    %v2828 = vunpack.c.l.b16 %v694
    %v2829 = vunpack.c.l.b16 %v695
    %v2830 = vunpack.c.h.b16 %v695
    %v2831 = vunpack.c.l.b16 %v696
    %v2832 = vunpack.c.l.b16 %v697
    %v2833 = vunpack.c.h.b16 %v697
    %v2834 = vunpack.c.l.b16 %v698
    %v2835 = vunpack.c.l.b16 %v699
    %v2836 = vunpack.c.h.b16 %v699
    %v2837 = vunpack.c.l.b16 %v700
    %v2838 = vunpack.c.l.b16 %v701
    %v2839 = vunpack.c.h.b16 %v701
    %v2840 = vunpack.c.l.b16 %v702
    %v2841 = vunpack.c.l.b16 %v703
    %v2842 = vunpack.c.h.b16 %v703
    %v2843 = vunpack.c.l.b16 %v704
    %v2844 = vunpack.c.l.b16 %v705
    %v2845 = vunpack.c.h.b16 %v705
    %v2846 = vunpack.c.l.b16 %v706
    %v2847 = vunpack.c.l.b16 %v707
    %v2848 = vunpack.c.h.b16 %v707
    %v2849 = vunpack.c.l.b16 %v708
    %v2850 = vunpack.c.l.b16 %v709
    %v2851 = vunpack.c.h.b16 %v709
    %v2852 = vunpack.c.l.b16 %v710
    %v2853 = vunpack.c.l.b16 %v711
    %v2854 = vunpack.c.h.b16 %v711
    %v2855 = vunpack.c.l.b16 %v712
    %v2856 = vunpack.c.l.b16 %v713
    %v2857 = vunpack.c.h.b16 %v713
    %v2858 = vunpack.c.l.b16 %v714
    %v2859 = vunpack.c.l.b16 %v715
    %v2860 = vunpack.c.h.b16 %v715
    %v2861 = vunpack.c.l.b16 %v716
    %v2862 = vunpack.c.l.b16 %v717
    %v2863 = vunpack.c.h.b16 %v717
    %v2864 = vunpack.c.l.b16 %v718
    %v2865 = vunpack.c.l.b16 %v719
    %v2866 = vunpack.c.h.b16 %v719
    %v2867 = vunpack.c.l.b16 %v720
    %v2868 = vunpack.c.l.b16 %v721
    %v2869 = vunpack.c.h.b16 %v721
    %v2870 = vunpack.c.l.b16 %v722
    %v2871 = vunpack.c.l.b16 %v723
    %v2872 = vunpack.c.h.b16 %v723
    %v2873 = vunpack.c.l.b16 %v724
    %v2874 = vunpack.c.l.b16 %v725
    %v2875 = vunpack.c.h.b16 %v725
    %v2876 = vunpack.c.l.b16 %v726
    %v2877 = vunpack.c.l.b16 %v727
    %v2878 = vunpack.c.h.b16 %v727
    %v2879 = vunpack.c.l.b16 %v728
    %v2880 = vunpack.c.l.b16 %v729
    %v2881 = vunpack.c.h.b16 %v729
    %v2882 = vunpack.c.l.b16 %v730
    %v2883 = vunpack.c.l.b16 %v731
    %v2884 = vunpack.c.h.b16 %v731
    %v2885 = vunpack.c.l.b16 %v732
    %v2886 = vunpack.c.l.b16 %v733
    %v2887 = vunpack.c.h.b16 %v733
    %v2888 = vunpack.c.l.b16 %v734
    %v2889 = vunpack.c.l.b16 %v735
    %v2890 = vunpack.c.h.b16 %v735
    %v2891 = vunpack.c.l.b16 %v736
    %v2892 = vunpack.c.l.b16 %v737
    %v2893 = vunpack.c.h.b16 %v737
    %v2894 = vunpack.c.l.b16 %v738
    %v2895 = vunpack.c.l.b16 %v739
    %v2896 = vunpack.c.h.b16 %v739
    %v2897 = vunpack.c.l.b16 %v740
    %v2898 = vunpack.c.l.b16 %v741
    %v2899 = vunpack.c.h.b16 %v741
    %v2900 = vunpack.c.l.b16 %v742
    %v2901 = vunpack.c.l.b16 %v743
    %v2902 = vunpack.c.h.b16 %v743
    %v2903 = vunpack.c.l.b16 %v744
    %v2904 = vunpack.c.l.b16 %v745
    %v2905 = vunpack.c.h.b16 %v745
    %v2906 = vunpack.c.l.b16 %v746
    %v2907 = vunpack.c.l.b16 %v747
    %v2908 = vunpack.c.h.b16 %v747
    %v2909 = vunpack.c.l.b16 %v748
    %v2910 = vunpack.c.l.b16 %v749
    %v2911 = vunpack.c.h.b16 %v749
    %v2912 = vunpack.c.l.b16 %v750
    %v2913 = vunpack.c.l.b16 %v751
    %v2914 = vunpack.c.h.b16 %v751
    %v2915 = vunpack.c.l.b16 %v752
    %v2916 = vunpack.c.l.b16 %v753
    %v2917 = vunpack.c.h.b16 %v753
    %v2918 = vunpack.c.l.b16 %v754
    %v2919 = vunpack.c.l.b16 %v755
    %v2920 = vunpack.c.h.b16 %v755
    %v2921 = vunpack.c.l.b16 %v756
    %v2922 = vunpack.c.l.b16 %v757
    %v2923 = vunpack.c.h.b16 %v757
    %v2924 = vunpack.c.l.b16 %v758
    %v2925 = vunpack.c.l.b16 %v759
    %v2926 = vunpack.c.h.b16 %v759
    %v2927 = vunpack.c.l.b16 %v760
    %v2928 = vunpack.c.l.b16 %v761
    %v2929 = vunpack.c.h.b16 %v761
    %v2930 = vunpack.c.l.b16 %v762
    %v2931 = vunpack.c.l.b16 %v763
    %v2932 = vunpack.c.h.b16 %v763
    %v2933 = vunpack.c.l.b16 %v764
    %v2934 = vunpack.c.l.b16 %v765
    %v2935 = vunpack.c.h.b16 %v765
    %v2936 = vunpack.c.l.b16 %v766
    %v2937 = vunpack.c.l.b16 %v767
    %v2938 = vunpack.c.h.b16 %v767
    %v2939 = vunpack.c.l.b16 %v768
    %v2940 = vunpack.c.l.b16 %v769
    %v2941 = vunpack.c.h.b16 %v769
    %v2942 = vunpack.c.l.b16 %v770
    %v2943 = vunpack.c.l.b16 %v771
    %v2944 = vunpack.c.h.b16 %v771
    %v2945 = vunpack.c.l.b16 %v772
    %v2946 = vunpack.c.l.b16 %v773
    %v2947 = vunpack.c.h.b16 %v773
    %v2948 = vunpack.c.l.b16 %v774
    %v2949 = vunpack.c.l.b16 %v775
    %v2950 = vunpack.c.h.b16 %v775
    %v2951 = vunpack.c.l.b16 %v776
    %v2952 = vunpack.c.l.b16 %v777
    %v2953 = vunpack.c.h.b16 %v777
    %v2954 = vunpack.c.l.b16 %v778
    %v2955 = vunpack.c.l.b16 %v779
    %v2956 = vunpack.c.h.b16 %v779
    %v2957 = vunpack.c.l.b16 %v780
    %v2958 = vunpack.c.l.b16 %v781
    %v2959 = vunpack.c.h.b16 %v781
    %v2960 = vunpack.c.l.b16 %v782
    %v2961 = vunpack.c.l.b16 %v783
    %v2962 = vunpack.c.h.b16 %v783
    %v2963 = vunpack.c.l.b16 %v784
    %v2964 = vunpack.c.l.b16 %v785
    %v2965 = vunpack.c.h.b16 %v785
    %v2966 = vunpack.c.l.b16 %v786
    %v2967 = vunpack.c.l.b16 %v787
    %v2968 = vunpack.c.h.b16 %v787
    %v2969 = vunpack.c.l.b16 %v788
    %v2970 = vunpack.c.l.b16 %v789
    %v2971 = vunpack.c.h.b16 %v789
    %v2972 = vunpack.c.l.b16 %v790
    %v2973 = vunpack.c.l.b16 %v791
    %v2974 = vunpack.c.h.b16 %v791
    %v2975 = vunpack.c.l.b16 %v792
    %v2976 = vunpack.c.l.b16 %v793
    %v2977 = vunpack.c.h.b16 %v793
    %v2978 = vunpack.c.l.b16 %v794
    %v2979 = vunpack.c.l.b16 %v795
    %v2980 = vunpack.c.h.b16 %v795
    %v2981 = vunpack.c.l.b16 %v796
    %v2982 = vunpack.c.l.b16 %v797
    %v2983 = vunpack.c.h.b16 %v797
    %v2984 = vunpack.c.l.b16 %v798
    %v2985 = vunpack.c.l.b16 %v799
    %v2986 = vunpack.c.h.b16 %v799
    %v2987 = vunpack.c.l.b16 %v800
    %v2988 = vunpack.c.l.b16 %v801
    %v2989 = vunpack.c.h.b16 %v801
    %v2990 = vunpack.c.l.b16 %v802
    %v2991 = vunpack.c.l.b16 %v803
    %v2992 = vunpack.c.h.b16 %v803
    %v2993 = vunpack.c.l.b16 %v804
    %v2994 = vunpack.c.l.b16 %v805
    %v2995 = vunpack.c.h.b16 %v805
    %v2996 = vunpack.c.l.b16 %v806
    %v2997 = vunpack.c.l.b16 %v807
    %v2998 = vunpack.c.h.b16 %v807
    %v2999 = vunpack.c.l.b16 %v808
    %v3000 = vunpack.c.l.b16 %v809
    %v3001 = vunpack.c.h.b16 %v809
    %v3002 = vunpack.c.l.b16 %v810
    %v3003 = vunpack.c.l.b16 %v811
    %v3004 = vunpack.c.h.b16 %v811
    %v3005 = vunpack.c.l.b16 %v812
    %v3006 = vunpack.c.l.b16 %v813
    %v3007 = vunpack.c.h.b16 %v813
    %v3008 = vunpack.c.l.b16 %v814
    %v3009 = vunpack.c.l.b16 %v815
    %v3010 = vunpack.c.h.b16 %v815
    %v3011 = vunpack.c.l.b16 %v816
    %v3012 = vunpack.c.l.b16 %v817
    %v3013 = vunpack.c.h.b16 %v817
    %v3014 = vunpack.c.l.b16 %v818
    %v3015 = vunpack.c.l.b16 %v819
    %v3016 = vunpack.c.h.b16 %v819
    %v3017 = vunpack.c.l.b16 %v820
    %v3018 = vunpack.c.l.b16 %v821
    %v3019 = vunpack.c.h.b16 %v821
    %v3020 = vunpack.c.l.b16 %v822
    %v3021 = vunpack.c.l.b16 %v823
    %v3022 = vunpack.c.h.b16 %v823
    %v3023 = vunpack.c.l.b16 %v824
    %v3024 = vunpack.c.l.b16 %v825
    %v3025 = vunpack.c.h.b16 %v825
    %v3026 = vunpack.c.l.b16 %v826
    %v3027 = vunpack.c.l.b16 %v827
    %v3028 = vunpack.c.h.b16 %v827
    %v3029 = vunpack.c.l.b16 %v828
    %v3030 = vunpack.c.l.b16 %v829
    %v3031 = vunpack.c.h.b16 %v829
    %v3032 = vunpack.c.l.b16 %v830
    %v3033 = vunpack.c.l.b16 %v831
    %v3034 = vunpack.c.h.b16 %v831
    %v3035 = vunpack.c.l.b16 %v832
    %v3036 = vunpack.c.l.b16 %v833
    %v3037 = vunpack.c.h.b16 %v833
    %v3038 = vunpack.c.l.b16 %v834
    %v3039 = vunpack.c.l.b16 %v835
    %v3040 = vunpack.c.h.b16 %v835
    %v3041 = vunpack.c.l.b16 %v836
    %v3042 = vunpack.c.l.b16 %v837
    %v3043 = vunpack.c.h.b16 %v837
    %v3044 = vunpack.c.l.b16 %v838
    %v3045 = vunpack.c.l.b16 %v839
    %v3046 = vunpack.c.h.b16 %v839
    %v3047 = vunpack.c.l.b16 %v840
    %v3048 = vunpack.c.l.b16 %v841
    %v3049 = vunpack.c.h.b16 %v841
    %v3050 = vunpack.c.l.b16 %v842
    %v3051 = vpack.c.b16 %v1998, %v1995
    %v3052 = vpack.c.b16 %v1999, %v1996
    %v3053 = vpack.c.b16 %v2000, %v1997
    %v3054 = vpack.c.b16 %v2004, %v2001
    %v3055 = vpack.c.b16 %v2005, %v2002
    %v3056 = vpack.c.b16 %v2006, %v2003
    %v3057 = vpack.c.b16 %v2010, %v2007
    %v3058 = vpack.c.b16 %v2011, %v2008
    %v3059 = vpack.c.b16 %v2012, %v2009
    %v3060 = vpack.c.b16 %v2016, %v2013
    %v3061 = vpack.c.b16 %v2017, %v2014
    %v3062 = vpack.c.b16 %v2018, %v2015
    %v3063 = vpack.c.b16 %v2022, %v2019
    %v3064 = vpack.c.b16 %v2023, %v2020
    %v3065 = vpack.c.b16 %v2024, %v2021
    %v3066 = vpack.c.b16 %v2028, %v2025
    %v3067 = vpack.c.b16 %v2029, %v2026
    %v3068 = vpack.c.b16 %v2030, %v2027
    %v3069 = vpack.c.b16 %v2034, %v2031
    %v3070 = vpack.c.b16 %v2035, %v2032
    %v3071 = vpack.c.b16 %v2036, %v2033
    %v3072 = vpack.c.b16 %v2040, %v2037
    %v3073 = vpack.c.b16 %v2041, %v2038
    %v3074 = vpack.c.b16 %v2042, %v2039
    %v3075 = vpack.c.b16 %v2046, %v2043
    %v3076 = vpack.c.b16 %v2047, %v2044
    %v3077 = vpack.c.b16 %v2048, %v2045
    %v3078 = vpack.c.b16 %v2052, %v2049
    %v3079 = vpack.c.b16 %v2053, %v2050
    %v3080 = vpack.c.b16 %v2054, %v2051
    %v3081 = vpack.c.b16 %v2058, %v2055
    %v3082 = vpack.c.b16 %v2059, %v2056
    %v3083 = vpack.c.b16 %v2060, %v2057
    %v3084 = vpack.c.b16 %v2064, %v2061
    %v3085 = vpack.c.b16 %v2065, %v2062
    %v3086 = vpack.c.b16 %v2066, %v2063
    %v3087 = vpack.c.b16 %v2070, %v2067
    %v3088 = vpack.c.b16 %v2071, %v2068
    %v3089 = vpack.c.b16 %v2072, %v2069
    %v3090 = vpack.c.b16 %v2076, %v2073
    %v3091 = vpack.c.b16 %v2077, %v2074
    %v3092 = vpack.c.b16 %v2078, %v2075
    %v3093 = vpack.c.b16 %v2082, %v2079
    %v3094 = vpack.c.b16 %v2083, %v2080
    %v3095 = vpack.c.b16 %v2084, %v2081
    %v3096 = vpack.c.b16 %v2088, %v2085
    %v3097 = vpack.c.b16 %v2089, %v2086
    %v3098 = vpack.c.b16 %v2090, %v2087
    %v3099 = vpack.c.b16 %v2094, %v2091
    %v3100 = vpack.c.b16 %v2095, %v2092
    %v3101 = vpack.c.b16 %v2096, %v2093
    %v3102 = vpack.c.b16 %v2100, %v2097
    %v3103 = vpack.c.b16 %v2101, %v2098
    %v3104 = vpack.c.b16 %v2102, %v2099
    %v3105 = vpack.c.b16 %v2106, %v2103
    %v3106 = vpack.c.b16 %v2107, %v2104
    %v3107 = vpack.c.b16 %v2108, %v2105
    %v3108 = vpack.c.b16 %v2112, %v2109
    %v3109 = vpack.c.b16 %v2113, %v2110
    %v3110 = vpack.c.b16 %v2114, %v2111
    %v3111 = vpack.c.b16 %v2118, %v2115
    %v3112 = vpack.c.b16 %v2119, %v2116
    %v3113 = vpack.c.b16 %v2120, %v2117
    %v3114 = vpack.c.b16 %v2124, %v2121
    %v3115 = vpack.c.b16 %v2125, %v2122
    %v3116 = vpack.c.b16 %v2126, %v2123
    %v3117 = vpack.c.b16 %v2130, %v2127
    %v3118 = vpack.c.b16 %v2131, %v2128
    %v3119 = vpack.c.b16 %v2132, %v2129
    %v3120 = vpack.c.b16 %v2136, %v2133
    %v3121 = vpack.c.b16 %v2137, %v2134
    %v3122 = vpack.c.b16 %v2138, %v2135
    %v3123 = vpack.c.b16 %v2142, %v2139
    %v3124 = vpack.c.b16 %v2143, %v2140
    %v3125 = vpack.c.b16 %v2144, %v2141
    %v3126 = vpack.c.b16 %v2148, %v2145
    %v3127 = vpack.c.b16 %v2149, %v2146
    %v3128 = vpack.c.b16 %v2150, %v2147
    %v3129 = vpack.c.b16 %v2154, %v2151
    %v3130 = vpack.c.b16 %v2155, %v2152
    %v3131 = vpack.c.b16 %v2156, %v2153
    %v3132 = vpack.c.b16 %v2160, %v2157
    %v3133 = vpack.c.b16 %v2161, %v2158
    %v3134 = vpack.c.b16 %v2162, %v2159
    %v3135 = vpack.c.b16 %v2166, %v2163
    %v3136 = vpack.c.b16 %v2167, %v2164
    %v3137 = vpack.c.b16 %v2168, %v2165
    %v3138 = vpack.c.b16 %v2172, %v2169
    %v3139 = vpack.c.b16 %v2173, %v2170
    %v3140 = vpack.c.b16 %v2174, %v2171
    %v3141 = vpack.c.b16 %v2178, %v2175
    %v3142 = vpack.c.b16 %v2179, %v2176
    %v3143 = vpack.c.b16 %v2180, %v2177
    %v3144 = vpack.c.b16 %v2184, %v2181
    %v3145 = vpack.c.b16 %v2185, %v2182
    %v3146 = vpack.c.b16 %v2186, %v2183
    %v3147 = vpack.c.b16 %v2190, %v2187
    %v3148 = vpack.c.b16 %v2191, %v2188
    %v3149 = vpack.c.b16 %v2192, %v2189
    %v3150 = vpack.c.b16 %v2196, %v2193
    %v3151 = vpack.c.b16 %v2197, %v2194
    %v3152 = vpack.c.b16 %v2198, %v2195
    %v3153 = vpack.c.b16 %v2202, %v2199
    %v3154 = vpack.c.b16 %v2203, %v2200
    %v3155 = vpack.c.b16 %v2204, %v2201
    %v3156 = vpack.c.b16 %v2208, %v2205
    %v3157 = vpack.c.b16 %v2209, %v2206
    %v3158 = vpack.c.b16 %v2210, %v2207
    %v3159 = vpack.c.b16 %v2214, %v2211
    %v3160 = vpack.c.b16 %v2215, %v2212
    %v3161 = vpack.c.b16 %v2216, %v2213
    %v3162 = vpack.c.b16 %v2220, %v2217
    %v3163 = vpack.c.b16 %v2221, %v2218
    %v3164 = vpack.c.b16 %v2222, %v2219
    %v3165 = vpack.c.b16 %v2226, %v2223
    %v3166 = vpack.c.b16 %v2227, %v2224
    %v3167 = vpack.c.b16 %v2228, %v2225
    %v3168 = vpack.c.b16 %v2232, %v2229
    %v3169 = vpack.c.b16 %v2233, %v2230
    %v3170 = vpack.c.b16 %v2234, %v2231
    %v3171 = vpack.c.b16 %v2238, %v2235
    %v3172 = vpack.c.b16 %v2239, %v2236
    %v3173 = vpack.c.b16 %v2240, %v2237
    %v3174 = vpack.c.b16 %v2244, %v2241
    %v3175 = vpack.c.b16 %v2245, %v2242
    %v3176 = vpack.c.b16 %v2246, %v2243
    %v3177 = vpack.c.b16 %v2250, %v2247
    %v3178 = vpack.c.b16 %v2251, %v2248
    %v3179 = vpack.c.b16 %v2252, %v2249
    %v3180 = vpack.c.b16 %v2256, %v2253
    %v3181 = vpack.c.b16 %v2257, %v2254
    %v3182 = vpack.c.b16 %v2258, %v2255
    %v3183 = vpack.c.b16 %v2262, %v2259
    %v3184 = vpack.c.b16 %v2263, %v2260
    %v3185 = vpack.c.b16 %v2264, %v2261
    %v3186 = vpack.c.b16 %v2268, %v2265
    %v3187 = vpack.c.b16 %v2269, %v2266
    %v3188 = vpack.c.b16 %v2270, %v2267
    %v3189 = vpack.c.b16 %v2274, %v2271
    %v3190 = vpack.c.b16 %v2275, %v2272
    %v3191 = vpack.c.b16 %v2276, %v2273
    %v3192 = vpack.c.b16 %v2280, %v2277
    %v3193 = vpack.c.b16 %v2281, %v2278
    %v3194 = vpack.c.b16 %v2282, %v2279
    %v3195 = vpack.c.b16 %v2286, %v2283
    %v3196 = vpack.c.b16 %v2287, %v2284
    %v3197 = vpack.c.b16 %v2288, %v2285
    %v3198 = vpack.c.b16 %v2292, %v2289
    %v3199 = vpack.c.b16 %v2293, %v2290
    %v3200 = vpack.c.b16 %v2294, %v2291
    %v3201 = vpack.c.b16 %v2298, %v2295
    %v3202 = vpack.c.b16 %v2299, %v2296
    %v3203 = vpack.c.b16 %v2300, %v2297
    %v3204 = vpack.c.b16 %v2304, %v2301
    %v3205 = vpack.c.b16 %v2305, %v2302
    %v3206 = vpack.c.b16 %v2306, %v2303
    %v3207 = vpack.c.b16 %v2310, %v2307
    %v3208 = vpack.c.b16 %v2311, %v2308
    %v3209 = vpack.c.b16 %v2312, %v2309
    %v3210 = vpack.c.b16 %v2316, %v2313
    %v3211 = vpack.c.b16 %v2317, %v2314
    %v3212 = vpack.c.b16 %v2318, %v2315
    %v3213 = vpack.c.b16 %v2322, %v2319
    %v3214 = vpack.c.b16 %v2323, %v2320
    %v3215 = vpack.c.b16 %v2324, %v2321
    %v3216 = vpack.c.b16 %v2328, %v2325
    %v3217 = vpack.c.b16 %v2329, %v2326
    %v3218 = vpack.c.b16 %v2330, %v2327
    %v3219 = vpack.c.b16 %v2334, %v2331
    %v3220 = vpack.c.b16 %v2335, %v2332
    %v3221 = vpack.c.b16 %v2336, %v2333
    %v3222 = vpack.c.b16 %v2340, %v2337
    %v3223 = vpack.c.b16 %v2341, %v2338
    %v3224 = vpack.c.b16 %v2342, %v2339
    %v3225 = vpack.c.b16 %v2346, %v2343
    %v3226 = vpack.c.b16 %v2347, %v2344
    %v3227 = vpack.c.b16 %v2348, %v2345
    %v3228 = vpack.c.b16 %v2352, %v2349
    %v3229 = vpack.c.b16 %v2353, %v2350
    %v3230 = vpack.c.b16 %v2354, %v2351
    %v3231 = vpack.c.b16 %v2358, %v2355
    %v3232 = vpack.c.b16 %v2359, %v2356
    %v3233 = vpack.c.b16 %v2360, %v2357
    %v3234 = vpack.c.b16 %v2364, %v2361
    %v3235 = vpack.c.b16 %v2365, %v2362
    %v3236 = vpack.c.b16 %v2366, %v2363
    %v3237 = vpack.c.b16 %v2370, %v2367
    %v3238 = vpack.c.b16 %v2371, %v2368
    %v3239 = vpack.c.b16 %v2372, %v2369
    %v3240 = vpack.c.b16 %v2376, %v2373
    %v3241 = vpack.c.b16 %v2377, %v2374
    %v3242 = vpack.c.b16 %v2378, %v2375
    %v3243 = vpack.c.b16 %v2382, %v2379
    %v3244 = vpack.c.b16 %v2383, %v2380
    %v3245 = vpack.c.b16 %v2384, %v2381
    %v3246 = vpack.c.b16 %v2388, %v2385
    %v3247 = vpack.c.b16 %v2389, %v2386
    %v3248 = vpack.c.b16 %v2390, %v2387
    %v3249 = vpack.c.b16 %v2394, %v2391
    %v3250 = vpack.c.b16 %v2395, %v2392
    %v3251 = vpack.c.b16 %v2396, %v2393
    %v3252 = vpack.c.b16 %v2400, %v2397
    %v3253 = vpack.c.b16 %v2401, %v2398
    %v3254 = vpack.c.b16 %v2402, %v2399
    %v3255 = vpack.c.b16 %v2406, %v2403
    %v3256 = vpack.c.b16 %v2407, %v2404
    %v3257 = vpack.c.b16 %v2408, %v2405
    %v3258 = vpack.c.b16 %v2412, %v2409
    %v3259 = vpack.c.b16 %v2413, %v2410
    %v3260 = vpack.c.b16 %v2414, %v2411
    %v3261 = vpack.c.b16 %v2418, %v2415
    %v3262 = vpack.c.b16 %v2419, %v2416
    %v3263 = vpack.c.b16 %v2420, %v2417
    %v3264 = vpack.c.b16 %v2424, %v2421
    %v3265 = vpack.c.b16 %v2425, %v2422
    %v3266 = vpack.c.b16 %v2426, %v2423
    %v3267 = vpack.c.b16 %v2430, %v2427
    %v3268 = vpack.c.b16 %v2431, %v2428
    %v3269 = vpack.c.b16 %v2432, %v2429
    %v3270 = vpack.c.b16 %v2436, %v2433
    %v3271 = vpack.c.b16 %v2437, %v2434
    %v3272 = vpack.c.b16 %v2438, %v2435
    %v3273 = vpack.c.b16 %v2442, %v2439
    %v3274 = vpack.c.b16 %v2443, %v2440
    %v3275 = vpack.c.b16 %v2444, %v2441
    %v3276 = vpack.c.b16 %v2448, %v2445
    %v3277 = vpack.c.b16 %v2449, %v2446
    %v3278 = vpack.c.b16 %v2450, %v2447
    %v3279 = vpack.c.b16 %v2454, %v2451
    %v3280 = vpack.c.b16 %v2455, %v2452
    %v3281 = vpack.c.b16 %v2456, %v2453
    %v3282 = vpack.c.b16 %v2460, %v2457
    %v3283 = vpack.c.b16 %v2461, %v2458
    %v3284 = vpack.c.b16 %v2462, %v2459
    %v3285 = vpack.c.b16 %v2466, %v2463
    %v3286 = vpack.c.b16 %v2467, %v2464
    %v3287 = vpack.c.b16 %v2468, %v2465
    %v3288 = vpack.c.b16 %v2472, %v2469
    %v3289 = vpack.c.b16 %v2473, %v2470
    %v3290 = vpack.c.b16 %v2474, %v2471
    %v3291 = vpack.c.b16 %v2478, %v2475
    %v3292 = vpack.c.b16 %v2479, %v2476
    %v3293 = vpack.c.b16 %v2480, %v2477
    %v3294 = vpack.c.b16 %v2484, %v2481
    %v3295 = vpack.c.b16 %v2485, %v2482
    %v3296 = vpack.c.b16 %v2486, %v2483
    %v3297 = vpack.c.b16 %v2490, %v2487
    %v3298 = vpack.c.b16 %v2491, %v2488
    %v3299 = vpack.c.b16 %v2492, %v2489
    %v3300 = vpack.c.b16 %v2496, %v2493
    %v3301 = vpack.c.b16 %v2497, %v2494
    %v3302 = vpack.c.b16 %v2498, %v2495
    %v3303 = vpack.c.b16 %v2502, %v2499
    %v3304 = vpack.c.b16 %v2503, %v2500
    %v3305 = vpack.c.b16 %v2504, %v2501
    %v3306 = vpack.c.b16 %v2508, %v2505
    %v3307 = vpack.c.b16 %v2509, %v2506
    %v3308 = vpack.c.b16 %v2510, %v2507
    %v3309 = vpack.c.b16 %v2514, %v2511
    %v3310 = vpack.c.b16 %v2515, %v2512
    %v3311 = vpack.c.b16 %v2516, %v2513
    %v3312 = vpack.c.b16 %v2520, %v2517
    %v3313 = vpack.c.b16 %v2521, %v2518
    %v3314 = vpack.c.b16 %v2522, %v2519
    %v3315 = vpack.c.b16 %v2526, %v2523
    %v3316 = vpack.c.b16 %v2527, %v2524
    %v3317 = vpack.c.b16 %v2528, %v2525
    %v3318 = vpack.c.b16 %v2532, %v2529
    %v3319 = vpack.c.b16 %v2533, %v2530
    %v3320 = vpack.c.b16 %v2534, %v2531
    %v3321 = vpack.c.b16 %v2538, %v2535
    %v3322 = vpack.c.b16 %v2539, %v2536
    %v3323 = vpack.c.b16 %v2540, %v2537
    %v3324 = vpack.c.b16 %v2544, %v2541
    %v3325 = vpack.c.b16 %v2545, %v2542
    %v3326 = vpack.c.b16 %v2546, %v2543
    %v3327 = vpack.c.b16 %v2550, %v2547
    %v3328 = vpack.c.b16 %v2551, %v2548
    %v3329 = vpack.c.b16 %v2552, %v2549
    %v3330 = vpack.c.b16 %v2556, %v2553
    %v3331 = vpack.c.b16 %v2557, %v2554
    %v3332 = vpack.c.b16 %v2558, %v2555
    %v3333 = vpack.c.b16 %v2562, %v2559
    %v3334 = vpack.c.b16 %v2563, %v2560
    %v3335 = vpack.c.b16 %v2564, %v2561
    %v3336 = vpack.c.b16 %v2568, %v2565
    %v3337 = vpack.c.b16 %v2569, %v2566
    %v3338 = vpack.c.b16 %v2570, %v2567
    %v3339 = vpack.c.b16 %v2574, %v2571
    %v3340 = vpack.c.b16 %v2575, %v2572
    %v3341 = vpack.c.b16 %v2576, %v2573
    %v3342 = vpack.c.b16 %v2580, %v2577
    %v3343 = vpack.c.b16 %v2581, %v2578
    %v3344 = vpack.c.b16 %v2582, %v2579
    %v3345 = vpack.c.b16 %v2586, %v2583
    %v3346 = vpack.c.b16 %v2587, %v2584
    %v3347 = vpack.c.b16 %v2588, %v2585
    %v3348 = vpack.c.b16 %v2592, %v2589
    %v3349 = vpack.c.b16 %v2593, %v2590
    %v3350 = vpack.c.b16 %v2594, %v2591
    %v3351 = vpack.c.b16 %v2598, %v2595
    %v3352 = vpack.c.b16 %v2599, %v2596
    %v3353 = vpack.c.b16 %v2600, %v2597
    %v3354 = vpack.c.b16 %v2604, %v2601
    %v3355 = vpack.c.b16 %v2605, %v2602
    %v3356 = vpack.c.b16 %v2606, %v2603
    %v3357 = vpack.c.b16 %v2610, %v2607
    %v3358 = vpack.c.b16 %v2611, %v2608
    %v3359 = vpack.c.b16 %v2612, %v2609
    %v3360 = vpack.c.b16 %v2616, %v2613
    %v3361 = vpack.c.b16 %v2617, %v2614
    %v3362 = vpack.c.b16 %v2618, %v2615
    %v3363 = vpack.c.b16 %v2622, %v2619
    %v3364 = vpack.c.b16 %v2623, %v2620
    %v3365 = vpack.c.b16 %v2624, %v2621
    %v3366 = vpack.c.b16 %v2628, %v2625
    %v3367 = vpack.c.b16 %v2629, %v2626
    %v3368 = vpack.c.b16 %v2630, %v2627
    %v3369 = vpack.c.b16 %v2634, %v2631
    %v3370 = vpack.c.b16 %v2635, %v2632
    %v3371 = vpack.c.b16 %v2636, %v2633
    %v3372 = vpack.c.b16 %v2640, %v2637
    %v3373 = vpack.c.b16 %v2641, %v2638
    %v3374 = vpack.c.b16 %v2642, %v2639
    %v3375 = vpack.c.b16 %v2646, %v2643
    %v3376 = vpack.c.b16 %v2647, %v2644
    %v3377 = vpack.c.b16 %v2648, %v2645
    %v3378 = vpack.c.b16 %v2652, %v2649
    %v3379 = vpack.c.b16 %v2653, %v2650
    %v3380 = vpack.c.b16 %v2654, %v2651
    %v3381 = vpack.c.b16 %v2658, %v2655
    %v3382 = vpack.c.b16 %v2659, %v2656
    %v3383 = vpack.c.b16 %v2660, %v2657
    %v3384 = vpack.c.b16 %v2664, %v2661
    %v3385 = vpack.c.b16 %v2665, %v2662
    %v3386 = vpack.c.b16 %v2666, %v2663
    %v3387 = vpack.c.b16 %v2670, %v2667
    %v3388 = vpack.c.b16 %v2671, %v2668
    %v3389 = vpack.c.b16 %v2672, %v2669
    %v3390 = vpack.c.b16 %v2676, %v2673
    %v3391 = vpack.c.b16 %v2677, %v2674
    %v3392 = vpack.c.b16 %v2678, %v2675
    %v3393 = vpack.c.b16 %v2682, %v2679
    %v3394 = vpack.c.b16 %v2683, %v2680
    %v3395 = vpack.c.b16 %v2684, %v2681
    %v3396 = vpack.c.b16 %v2688, %v2685
    %v3397 = vpack.c.b16 %v2689, %v2686
    %v3398 = vpack.c.b16 %v2690, %v2687
    %v3399 = vpack.c.b16 %v2694, %v2691
    %v3400 = vpack.c.b16 %v2695, %v2692
    %v3401 = vpack.c.b16 %v2696, %v2693
    %v3402 = vpack.c.b16 %v2700, %v2697
    %v3403 = vpack.c.b16 %v2701, %v2698
    %v3404 = vpack.c.b16 %v2702, %v2699
    %v3405 = vpack.c.b16 %v2706, %v2703
    %v3406 = vpack.c.b16 %v2707, %v2704
    %v3407 = vpack.c.b16 %v2708, %v2705
    %v3408 = vpack.c.b16 %v2712, %v2709
    %v3409 = vpack.c.b16 %v2713, %v2710
    %v3410 = vpack.c.b16 %v2714, %v2711
    %v3411 = vpack.c.b16 %v2718, %v2715
    %v3412 = vpack.c.b16 %v2719, %v2716
    %v3413 = vpack.c.b16 %v2720, %v2717
    %v3414 = vpack.c.b16 %v2724, %v2721
    %v3415 = vpack.c.b16 %v2725, %v2722
    %v3416 = vpack.c.b16 %v2726, %v2723
    %v3417 = vpack.c.b16 %v2730, %v2727
    %v3418 = vpack.c.b16 %v2731, %v2728
    %v3419 = vpack.c.b16 %v2732, %v2729
    %v3420 = vpack.c.b16 %v2736, %v2733
    %v3421 = vpack.c.b16 %v2737, %v2734
    %v3422 = vpack.c.b16 %v2738, %v2735
    %v3423 = vpack.c.b16 %v2742, %v2739
    %v3424 = vpack.c.b16 %v2743, %v2740
    %v3425 = vpack.c.b16 %v2744, %v2741
    %v3426 = vpack.c.b16 %v2748, %v2745
    %v3427 = vpack.c.b16 %v2749, %v2746
    %v3428 = vpack.c.b16 %v2750, %v2747
    %v3429 = vpack.c.b16 %v2754, %v2751
    %v3430 = vpack.c.b16 %v2755, %v2752
    %v3431 = vpack.c.b16 %v2756, %v2753
    %v3432 = vpack.c.b16 %v2760, %v2757
    %v3433 = vpack.c.b16 %v2761, %v2758
    %v3434 = vpack.c.b16 %v2762, %v2759
    %v3435 = vpack.c.b16 %v2766, %v2763
    %v3436 = vpack.c.b16 %v2767, %v2764
    %v3437 = vpack.c.b16 %v2768, %v2765
    %v3438 = vpack.c.b16 %v2772, %v2769
    %v3439 = vpack.c.b16 %v2773, %v2770
    %v3440 = vpack.c.b16 %v2774, %v2771
    %v3441 = vpack.c.b16 %v2778, %v2775
    %v3442 = vpack.c.b16 %v2779, %v2776
    %v3443 = vpack.c.b16 %v2780, %v2777
    %v3444 = vpack.c.b16 %v2784, %v2781
    %v3445 = vpack.c.b16 %v2785, %v2782
    %v3446 = vpack.c.b16 %v2786, %v2783
    %v3447 = vpack.c.b16 %v2790, %v2787
    %v3448 = vpack.c.b16 %v2791, %v2788
    %v3449 = vpack.c.b16 %v2792, %v2789
    %v3450 = vpack.c.b16 %v2796, %v2793
    %v3451 = vpack.c.b16 %v2797, %v2794
    %v3452 = vpack.c.b16 %v2798, %v2795
    %v3453 = vpack.c.b16 %v2802, %v2799
    %v3454 = vpack.c.b16 %v2803, %v2800
    %v3455 = vpack.c.b16 %v2804, %v2801
    %v3456 = vpack.c.b16 %v2808, %v2805
    %v3457 = vpack.c.b16 %v2809, %v2806
    %v3458 = vpack.c.b16 %v2810, %v2807
    %v3459 = vpack.c.b16 %v2814, %v2811
    %v3460 = vpack.c.b16 %v2815, %v2812
    %v3461 = vpack.c.b16 %v2816, %v2813
    %v3462 = vpack.c.b16 %v2820, %v2817
    %v3463 = vpack.c.b16 %v2821, %v2818
    %v3464 = vpack.c.b16 %v2822, %v2819
    %v3465 = vpack.c.b16 %v2826, %v2823
    %v3466 = vpack.c.b16 %v2827, %v2824
    %v3467 = vpack.c.b16 %v2828, %v2825
    %v3468 = vpack.c.b16 %v2832, %v2829
    %v3469 = vpack.c.b16 %v2833, %v2830
    %v3470 = vpack.c.b16 %v2834, %v2831
    %v3471 = vpack.c.b16 %v2838, %v2835
    %v3472 = vpack.c.b16 %v2839, %v2836
    %v3473 = vpack.c.b16 %v2840, %v2837
    %v3474 = vpack.c.b16 %v2844, %v2841
    %v3475 = vpack.c.b16 %v2845, %v2842
    %v3476 = vpack.c.b16 %v2846, %v2843
    %v3477 = vpack.c.b16 %v2850, %v2847
    %v3478 = vpack.c.b16 %v2851, %v2848
    %v3479 = vpack.c.b16 %v2852, %v2849
    %v3480 = vpack.c.b16 %v2856, %v2853
    %v3481 = vpack.c.b16 %v2857, %v2854
    %v3482 = vpack.c.b16 %v2858, %v2855
    %v3483 = vpack.c.b16 %v2862, %v2859
    %v3484 = vpack.c.b16 %v2863, %v2860
    %v3485 = vpack.c.b16 %v2864, %v2861
    %v3486 = vpack.c.b16 %v2868, %v2865
    %v3487 = vpack.c.b16 %v2869, %v2866
    %v3488 = vpack.c.b16 %v2870, %v2867
    %v3489 = vpack.c.b16 %v2874, %v2871
    %v3490 = vpack.c.b16 %v2875, %v2872
    %v3491 = vpack.c.b16 %v2876, %v2873
    %v3492 = vpack.c.b16 %v2880, %v2877
    %v3493 = vpack.c.b16 %v2881, %v2878
    %v3494 = vpack.c.b16 %v2882, %v2879
    %v3495 = vpack.c.b16 %v2886, %v2883
    %v3496 = vpack.c.b16 %v2887, %v2884
    %v3497 = vpack.c.b16 %v2888, %v2885
    %v3498 = vpack.c.b16 %v2892, %v2889
    %v3499 = vpack.c.b16 %v2893, %v2890
    %v3500 = vpack.c.b16 %v2894, %v2891
    %v3501 = vpack.c.b16 %v2898, %v2895
    %v3502 = vpack.c.b16 %v2899, %v2896
    %v3503 = vpack.c.b16 %v2900, %v2897
    %v3504 = vpack.c.b16 %v2904, %v2901
    %v3505 = vpack.c.b16 %v2905, %v2902
    %v3506 = vpack.c.b16 %v2906, %v2903
    %v3507 = vpack.c.b16 %v2910, %v2907
    %v3508 = vpack.c.b16 %v2911, %v2908
    %v3509 = vpack.c.b16 %v2912, %v2909
    %v3510 = vpack.c.b16 %v2916, %v2913
    %v3511 = vpack.c.b16 %v2917, %v2914
    %v3512 = vpack.c.b16 %v2918, %v2915
    %v3513 = vpack.c.b16 %v2922, %v2919
    %v3514 = vpack.c.b16 %v2923, %v2920
    %v3515 = vpack.c.b16 %v2924, %v2921
    %v3516 = vpack.c.b16 %v2928, %v2925
    %v3517 = vpack.c.b16 %v2929, %v2926
    %v3518 = vpack.c.b16 %v2930, %v2927
    %v3519 = vpack.c.b16 %v2934, %v2931
    %v3520 = vpack.c.b16 %v2935, %v2932
    %v3521 = vpack.c.b16 %v2936, %v2933
    %v3522 = vpack.c.b16 %v2940, %v2937
    %v3523 = vpack.c.b16 %v2941, %v2938
    %v3524 = vpack.c.b16 %v2942, %v2939
    %v3525 = vpack.c.b16 %v2946, %v2943
    %v3526 = vpack.c.b16 %v2947, %v2944
    %v3527 = vpack.c.b16 %v2948, %v2945
    %v3528 = vpack.c.b16 %v2952, %v2949
    %v3529 = vpack.c.b16 %v2953, %v2950
    %v3530 = vpack.c.b16 %v2954, %v2951
    %v3531 = vpack.c.b16 %v2958, %v2955
    %v3532 = vpack.c.b16 %v2959, %v2956
    %v3533 = vpack.c.b16 %v2960, %v2957
    %v3534 = vpack.c.b16 %v2964, %v2961
    %v3535 = vpack.c.b16 %v2965, %v2962
    %v3536 = vpack.c.b16 %v2966, %v2963
    %v3537 = vpack.c.b16 %v2970, %v2967
    %v3538 = vpack.c.b16 %v2971, %v2968
    %v3539 = vpack.c.b16 %v2972, %v2969
    %v3540 = vpack.c.b16 %v2976, %v2973
    %v3541 = vpack.c.b16 %v2977, %v2974
    %v3542 = vpack.c.b16 %v2978, %v2975
    %v3543 = vpack.c.b16 %v2982, %v2979
    %v3544 = vpack.c.b16 %v2983, %v2980
    %v3545 = vpack.c.b16 %v2984, %v2981
    %v3546 = vpack.c.b16 %v2988, %v2985
    %v3547 = vpack.c.b16 %v2989, %v2986
    %v3548 = vpack.c.b16 %v2990, %v2987
    %v3549 = vpack.c.b16 %v2994, %v2991
    %v3550 = vpack.c.b16 %v2995, %v2992
    %v3551 = vpack.c.b16 %v2996, %v2993
    %v3552 = vpack.c.b16 %v3000, %v2997
    %v3553 = vpack.c.b16 %v3001, %v2998
    %v3554 = vpack.c.b16 %v3002, %v2999
    %v3555 = vpack.c.b16 %v3006, %v3003
    %v3556 = vpack.c.b16 %v3007, %v3004
    %v3557 = vpack.c.b16 %v3008, %v3005
    %v3558 = vpack.c.b16 %v3012, %v3009
    %v3559 = vpack.c.b16 %v3013, %v3010
    %v3560 = vpack.c.b16 %v3014, %v3011
    %v3561 = vpack.c.b16 %v3018, %v3015
    %v3562 = vpack.c.b16 %v3019, %v3016
    %v3563 = vpack.c.b16 %v3020, %v3017
    %v3564 = vpack.c.b16 %v3024, %v3021
    %v3565 = vpack.c.b16 %v3025, %v3022
    %v3566 = vpack.c.b16 %v3026, %v3023
    %v3567 = vpack.c.b16 %v3030, %v3027
    %v3568 = vpack.c.b16 %v3031, %v3028
    %v3569 = vpack.c.b16 %v3032, %v3029
    %v3570 = vpack.c.b16 %v3036, %v3033
    %v3571 = vpack.c.b16 %v3037, %v3034
    %v3572 = vpack.c.b16 %v3038, %v3035
    %v3573 = vpack.c.b16 %v3042, %v3039
    %v3574 = vpack.c.b16 %v3043, %v3040
    %v3575 = vpack.c.b16 %v3044, %v3041
    %v3576 = vpack.c.b16 %v3048, %v3045
    %v3577 = vpack.c.b16 %v3049, %v3046
    %v3578 = vpack.c.b16 %v3050, %v3047
    %4107 = vmatpush.bf16.msra.mxu0 %v3072
    %4108 = vmatpush.bf16.msra.mxu0 %v3069
    %4109 = vmatpush.bf16.msra.mxu0 %v3066
    %4110 = vmatpush.bf16.msra.mxu0 %v3063
    %4111 = vmatpush.bf16.msra.mxu0 %v3060
    %4112 = vmatpush.bf16.msra.mxu0 %v3057
    %4113 = vmatpush.bf16.msra.mxu0 %v3054
    %4114 = vmatpush.bf16.msra.mxu0 %v3051
    %4115 = vmatmul.bf16.gmra.mxu0 %v1115
    %v4116 = vpop.f32.mrf.mxu0
    %v4117 = vadd.f32 %v845, %v4116
    %v4118 = vpop.f32.mrf.mxu0
    %v4119 = vadd.f32 %v845, %v4118
    %4120 = vmatmul.bf16.gmra.mxu0 %v1137
    %v4121 = vpop.f32.mrf.mxu0
    %v4122 = vadd.f32 %v845, %v4121
    %v4123 = vpop.f32.mrf.mxu0
    %v4124 = vadd.f32 %v845, %v4123
    %4125 = vmatmul.bf16.gmra.mxu0 %v1159
    %v4126 = vpop.f32.mrf.mxu0
    %v4127 = vadd.f32 %v845, %v4126
    %v4128 = vpop.f32.mrf.mxu0
    %v4129 = vadd.f32 %v845, %v4128
    %4130 = vmatmul.bf16.gmra.mxu0 %v1181
    %v4131 = vpop.f32.mrf.mxu0
    %v4132 = vadd.f32 %v845, %v4131
    %v4133 = vpop.f32.mrf.mxu0
    %v4134 = vadd.f32 %v845, %v4133
    %4135 = vdwg.mxu0
    %4136 = vmatpush.bf16.msra.mxu0 %v3096
    %4137 = vmatpush.bf16.msra.mxu0 %v3093
    %4138 = vmatpush.bf16.msra.mxu0 %v3090
    %4139 = vmatpush.bf16.msra.mxu0 %v3087
    %4140 = vmatpush.bf16.msra.mxu0 %v3084
    %4141 = vmatpush.bf16.msra.mxu0 %v3081
    %4142 = vmatpush.bf16.msra.mxu0 %v3078
    %4143 = vmatpush.bf16.msra.mxu0 %v3075
    %4144 = vmatmul.bf16.gmra.mxu0 %v1116
    %v4145 = vpop.f32.mrf.mxu0
    %v4146 = vadd.f32 %v4117, %v4145
    %v4147 = vpop.f32.mrf.mxu0
    %v4148 = vadd.f32 %v4119, %v4147
    %4149 = vmatmul.bf16.gmra.mxu0 %v1138
    %v4150 = vpop.f32.mrf.mxu0
    %v4151 = vadd.f32 %v4122, %v4150
    %v4152 = vpop.f32.mrf.mxu0
    %v4153 = vadd.f32 %v4124, %v4152
    %4154 = vmatmul.bf16.gmra.mxu0 %v1160
    %v4155 = vpop.f32.mrf.mxu0
    %v4156 = vadd.f32 %v4127, %v4155
    %v4157 = vpop.f32.mrf.mxu0
    %v4158 = vadd.f32 %v4129, %v4157
    %4159 = vmatmul.bf16.gmra.mxu0 %v1182
    %v4160 = vpop.f32.mrf.mxu0
    %v4161 = vadd.f32 %v4132, %v4160
    %v4162 = vpop.f32.mrf.mxu0
    %v4163 = vadd.f32 %v4134, %v4162
    %4164 = vdwg.mxu0
    %4165 = vmatpush.bf16.msra.mxu0 %v3120
    %4166 = vmatpush.bf16.msra.mxu0 %v3117
    %4167 = vmatpush.bf16.msra.mxu0 %v3114
    %4168 = vmatpush.bf16.msra.mxu0 %v3111
    %4169 = vmatpush.bf16.msra.mxu0 %v3108
    %4170 = vmatpush.bf16.msra.mxu0 %v3105
    %4171 = vmatpush.bf16.msra.mxu0 %v3102
    %4172 = vmatpush.bf16.msra.mxu0 %v3099
    %4173 = vmatmul.bf16.gmra.mxu0 %v1117
    %v4174 = vpop.f32.mrf.mxu0
    %v4175 = vadd.f32 %v4146, %v4174
    %v4176 = vpop.f32.mrf.mxu0
    %v4177 = vadd.f32 %v4148, %v4176
    %4178 = vmatmul.bf16.gmra.mxu0 %v1139
    %v4179 = vpop.f32.mrf.mxu0
    %v4180 = vadd.f32 %v4151, %v4179
    %v4181 = vpop.f32.mrf.mxu0
    %v4182 = vadd.f32 %v4153, %v4181
    %4183 = vmatmul.bf16.gmra.mxu0 %v1161
    %v4184 = vpop.f32.mrf.mxu0
    %v4185 = vadd.f32 %v4156, %v4184
    %v4186 = vpop.f32.mrf.mxu0
    %v4187 = vadd.f32 %v4158, %v4186
    %4188 = vmatmul.bf16.gmra.mxu0 %v1183
    %v4189 = vpop.f32.mrf.mxu0
    %v4190 = vadd.f32 %v4161, %v4189
    %v4191 = vpop.f32.mrf.mxu0
    %v4192 = vadd.f32 %v4163, %v4191
    %4193 = vdwg.mxu0
    %4194 = vmatpush.bf16.msra.mxu0 %v3144
    %4195 = vmatpush.bf16.msra.mxu0 %v3141
    %4196 = vmatpush.bf16.msra.mxu0 %v3138
    %4197 = vmatpush.bf16.msra.mxu0 %v3135
    %4198 = vmatpush.bf16.msra.mxu0 %v3132
    %4199 = vmatpush.bf16.msra.mxu0 %v3129
    %4200 = vmatpush.bf16.msra.mxu0 %v3126
    %4201 = vmatpush.bf16.msra.mxu0 %v3123
    %4202 = vmatmul.bf16.gmra.mxu0 %v1118
    %v4203 = vpop.f32.mrf.mxu0
    %v4204 = vadd.f32 %v4175, %v4203
    %v4205 = vpop.f32.mrf.mxu0
    %v4206 = vadd.f32 %v4177, %v4205
    %4207 = vmatmul.bf16.gmra.mxu0 %v1140
    %v4208 = vpop.f32.mrf.mxu0
    %v4209 = vadd.f32 %v4180, %v4208
    %v4210 = vpop.f32.mrf.mxu0
    %v4211 = vadd.f32 %v4182, %v4210
    %4212 = vmatmul.bf16.gmra.mxu0 %v1162
    %v4213 = vpop.f32.mrf.mxu0
    %v4214 = vadd.f32 %v4185, %v4213
    %v4215 = vpop.f32.mrf.mxu0
    %v4216 = vadd.f32 %v4187, %v4215
    %4217 = vmatmul.bf16.gmra.mxu0 %v1184
    %v4218 = vpop.f32.mrf.mxu0
    %v4219 = vadd.f32 %v4190, %v4218
    %v4220 = vpop.f32.mrf.mxu0
    %v4221 = vadd.f32 %v4192, %v4220
    %4222 = vdwg.mxu0
    %4223 = vmatpush.bf16.msra.mxu0 %v3168
    %4224 = vmatpush.bf16.msra.mxu0 %v3165
    %4225 = vmatpush.bf16.msra.mxu0 %v3162
    %4226 = vmatpush.bf16.msra.mxu0 %v3159
    %4227 = vmatpush.bf16.msra.mxu0 %v3156
    %4228 = vmatpush.bf16.msra.mxu0 %v3153
    %4229 = vmatpush.bf16.msra.mxu0 %v3150
    %4230 = vmatpush.bf16.msra.mxu0 %v3147
    %4231 = vmatmul.bf16.gmra.mxu0 %v1119
    %v4232 = vpop.f32.mrf.mxu0
    %v4233 = vadd.f32 %v4204, %v4232
    %v4234 = vpop.f32.mrf.mxu0
    %v4235 = vadd.f32 %v4206, %v4234
    %4236 = vmatmul.bf16.gmra.mxu0 %v1141
    %v4237 = vpop.f32.mrf.mxu0
    %v4238 = vadd.f32 %v4209, %v4237
    %v4239 = vpop.f32.mrf.mxu0
    %v4240 = vadd.f32 %v4211, %v4239
    %4241 = vmatmul.bf16.gmra.mxu0 %v1163
    %v4242 = vpop.f32.mrf.mxu0
    %v4243 = vadd.f32 %v4214, %v4242
    %v4244 = vpop.f32.mrf.mxu0
    %v4245 = vadd.f32 %v4216, %v4244
    %4246 = vmatmul.bf16.gmra.mxu0 %v1185
    %v4247 = vpop.f32.mrf.mxu0
    %v4248 = vadd.f32 %v4219, %v4247
    %v4249 = vpop.f32.mrf.mxu0
    %v4250 = vadd.f32 %v4221, %v4249
    %4251 = vdwg.mxu0
    %4252 = vmatpush.bf16.msra.mxu0 %v3192
    %4253 = vmatpush.bf16.msra.mxu0 %v3189
    %4254 = vmatpush.bf16.msra.mxu0 %v3186
    %4255 = vmatpush.bf16.msra.mxu0 %v3183
    %4256 = vmatpush.bf16.msra.mxu0 %v3180
    %4257 = vmatpush.bf16.msra.mxu0 %v3177
    %4258 = vmatpush.bf16.msra.mxu0 %v3174
    %4259 = vmatpush.bf16.msra.mxu0 %v3171
    %4260 = vmatmul.bf16.gmra.mxu0 %v1120
    %v4261 = vpop.f32.mrf.mxu0
    %v4262 = vadd.f32 %v4233, %v4261
    %v4263 = vpop.f32.mrf.mxu0
    %v4264 = vadd.f32 %v4235, %v4263
    %4265 = vmatmul.bf16.gmra.mxu0 %v1142
    %v4266 = vpop.f32.mrf.mxu0
    %v4267 = vadd.f32 %v4238, %v4266
    %v4268 = vpop.f32.mrf.mxu0
    %v4269 = vadd.f32 %v4240, %v4268
    %4270 = vmatmul.bf16.gmra.mxu0 %v1164
    %v4271 = vpop.f32.mrf.mxu0
    %v4272 = vadd.f32 %v4243, %v4271
    %v4273 = vpop.f32.mrf.mxu0
    %v4274 = vadd.f32 %v4245, %v4273
    %4275 = vmatmul.bf16.gmra.mxu0 %v1186
    %v4276 = vpop.f32.mrf.mxu0
    %v4277 = vadd.f32 %v4248, %v4276
    %v4278 = vpop.f32.mrf.mxu0
    %v4279 = vadd.f32 %v4250, %v4278
    %4280 = vdwg.mxu0
    %4281 = vmatpush.bf16.msra.mxu0 %v3216
    %4282 = vmatpush.bf16.msra.mxu0 %v3213
    %4283 = vmatpush.bf16.msra.mxu0 %v3210
    %4284 = vmatpush.bf16.msra.mxu0 %v3207
    %4285 = vmatpush.bf16.msra.mxu0 %v3204
    %4286 = vmatpush.bf16.msra.mxu0 %v3201
    %4287 = vmatpush.bf16.msra.mxu0 %v3198
    %4288 = vmatpush.bf16.msra.mxu0 %v3195
    %4289 = vmatmul.bf16.gmra.mxu0 %v1121
    %v4290 = vpop.f32.mrf.mxu0
    %v4291 = vadd.f32 %v4262, %v4290
    %v4292 = vpop.f32.mrf.mxu0
    %v4293 = vadd.f32 %v4264, %v4292
    %4294 = vmatmul.bf16.gmra.mxu0 %v1143
    %v4295 = vpop.f32.mrf.mxu0
    %v4296 = vadd.f32 %v4267, %v4295
    %v4297 = vpop.f32.mrf.mxu0
    %v4298 = vadd.f32 %v4269, %v4297
    %4299 = vmatmul.bf16.gmra.mxu0 %v1165
    %v4300 = vpop.f32.mrf.mxu0
    %v4301 = vadd.f32 %v4272, %v4300
    %v4302 = vpop.f32.mrf.mxu0
    %v4303 = vadd.f32 %v4274, %v4302
    %4304 = vmatmul.bf16.gmra.mxu0 %v1187
    %v4305 = vpop.f32.mrf.mxu0
    %v4306 = vadd.f32 %v4277, %v4305
    %v4307 = vpop.f32.mrf.mxu0
    %v4308 = vadd.f32 %v4279, %v4307
    %4309 = vdwg.mxu0
    %4310 = vmatpush.bf16.msra.mxu0 %v3240
    %4311 = vmatpush.bf16.msra.mxu0 %v3237
    %4312 = vmatpush.bf16.msra.mxu0 %v3234
    %4313 = vmatpush.bf16.msra.mxu0 %v3231
    %4314 = vmatpush.bf16.msra.mxu0 %v3228
    %4315 = vmatpush.bf16.msra.mxu0 %v3225
    %4316 = vmatpush.bf16.msra.mxu0 %v3222
    %4317 = vmatpush.bf16.msra.mxu0 %v3219
    %4318 = vmatmul.bf16.gmra.mxu0 %v1122
    %v4319 = vpop.f32.mrf.mxu0
    %v4320 = vadd.f32 %v4291, %v4319
    %v4321 = vpop.f32.mrf.mxu0
    %v4322 = vadd.f32 %v4293, %v4321
    %4323 = vmatmul.bf16.gmra.mxu0 %v1144
    %v4324 = vpop.f32.mrf.mxu0
    %v4325 = vadd.f32 %v4296, %v4324
    %v4326 = vpop.f32.mrf.mxu0
    %v4327 = vadd.f32 %v4298, %v4326
    %4328 = vmatmul.bf16.gmra.mxu0 %v1166
    %v4329 = vpop.f32.mrf.mxu0
    %v4330 = vadd.f32 %v4301, %v4329
    %v4331 = vpop.f32.mrf.mxu0
    %v4332 = vadd.f32 %v4303, %v4331
    %4333 = vmatmul.bf16.gmra.mxu0 %v1188
    %v4334 = vpop.f32.mrf.mxu0
    %v4335 = vadd.f32 %v4306, %v4334
    %v4336 = vpop.f32.mrf.mxu0
    %v4337 = vadd.f32 %v4308, %v4336
    %4338 = vdwg.mxu0
    %4339 = vmatpush.bf16.msra.mxu0 %v3264
    %4340 = vmatpush.bf16.msra.mxu0 %v3261
    %4341 = vmatpush.bf16.msra.mxu0 %v3258
    %4342 = vmatpush.bf16.msra.mxu0 %v3255
    %4343 = vmatpush.bf16.msra.mxu0 %v3252
    %4344 = vmatpush.bf16.msra.mxu0 %v3249
    %4345 = vmatpush.bf16.msra.mxu0 %v3246
    %4346 = vmatpush.bf16.msra.mxu0 %v3243
    %4347 = vmatmul.bf16.gmra.mxu0 %v1123
    %v4348 = vpop.f32.mrf.mxu0
    %v4349 = vadd.f32 %v4320, %v4348
    %v4350 = vpop.f32.mrf.mxu0
    %v4351 = vadd.f32 %v4322, %v4350
    %4352 = vmatmul.bf16.gmra.mxu0 %v1145
    %v4353 = vpop.f32.mrf.mxu0
    %v4354 = vadd.f32 %v4325, %v4353
    %v4355 = vpop.f32.mrf.mxu0
    %v4356 = vadd.f32 %v4327, %v4355
    %4357 = vmatmul.bf16.gmra.mxu0 %v1167
    %v4358 = vpop.f32.mrf.mxu0
    %v4359 = vadd.f32 %v4330, %v4358
    %v4360 = vpop.f32.mrf.mxu0
    %v4361 = vadd.f32 %v4332, %v4360
    %4362 = vmatmul.bf16.gmra.mxu0 %v1189
    %v4363 = vpop.f32.mrf.mxu0
    %v4364 = vadd.f32 %v4335, %v4363
    %v4365 = vpop.f32.mrf.mxu0
    %v4366 = vadd.f32 %v4337, %v4365
    %4367 = vdwg.mxu0
    %4368 = vmatpush.bf16.msra.mxu0 %v3288
    %4369 = vmatpush.bf16.msra.mxu0 %v3285
    %4370 = vmatpush.bf16.msra.mxu0 %v3282
    %4371 = vmatpush.bf16.msra.mxu0 %v3279
    %4372 = vmatpush.bf16.msra.mxu0 %v3276
    %4373 = vmatpush.bf16.msra.mxu0 %v3273
    %4374 = vmatpush.bf16.msra.mxu0 %v3270
    %4375 = vmatpush.bf16.msra.mxu0 %v3267
    %4376 = vmatmul.bf16.gmra.mxu0 %v1124
    %v4377 = vpop.f32.mrf.mxu0
    %v4378 = vadd.f32 %v4349, %v4377
    %v4379 = vpop.f32.mrf.mxu0
    %v4380 = vadd.f32 %v4351, %v4379
    %4381 = vmatmul.bf16.gmra.mxu0 %v1146
    %v4382 = vpop.f32.mrf.mxu0
    %v4383 = vadd.f32 %v4354, %v4382
    %v4384 = vpop.f32.mrf.mxu0
    %v4385 = vadd.f32 %v4356, %v4384
    %4386 = vmatmul.bf16.gmra.mxu0 %v1168
    %v4387 = vpop.f32.mrf.mxu0
    %v4388 = vadd.f32 %v4359, %v4387
    %v4389 = vpop.f32.mrf.mxu0
    %v4390 = vadd.f32 %v4361, %v4389
    %4391 = vmatmul.bf16.gmra.mxu0 %v1190
    %v4392 = vpop.f32.mrf.mxu0
    %v4393 = vadd.f32 %v4364, %v4392
    %v4394 = vpop.f32.mrf.mxu0
    %v4395 = vadd.f32 %v4366, %v4394
    %4396 = vdwg.mxu0
    %4397 = vmatpush.bf16.msra.mxu0 %v3312
    %4398 = vmatpush.bf16.msra.mxu0 %v3309
    %4399 = vmatpush.bf16.msra.mxu0 %v3306
    %4400 = vmatpush.bf16.msra.mxu0 %v3303
    %4401 = vmatpush.bf16.msra.mxu0 %v3300
    %4402 = vmatpush.bf16.msra.mxu0 %v3297
    %4403 = vmatpush.bf16.msra.mxu0 %v3294
    %4404 = vmatpush.bf16.msra.mxu0 %v3291
    %4405 = vmatmul.bf16.gmra.mxu0 %v1125
    %v4406 = vpop.f32.mrf.mxu0
    %v4407 = vadd.f32 %v4378, %v4406
    %v4408 = vpop.f32.mrf.mxu0
    %v4409 = vadd.f32 %v4380, %v4408
    %4410 = vmatmul.bf16.gmra.mxu0 %v1147
    %v4411 = vpop.f32.mrf.mxu0
    %v4412 = vadd.f32 %v4383, %v4411
    %v4413 = vpop.f32.mrf.mxu0
    %v4414 = vadd.f32 %v4385, %v4413
    %4415 = vmatmul.bf16.gmra.mxu0 %v1169
    %v4416 = vpop.f32.mrf.mxu0
    %v4417 = vadd.f32 %v4388, %v4416
    %v4418 = vpop.f32.mrf.mxu0
    %v4419 = vadd.f32 %v4390, %v4418
    %4420 = vmatmul.bf16.gmra.mxu0 %v1191
    %v4421 = vpop.f32.mrf.mxu0
    %v4422 = vadd.f32 %v4393, %v4421
    %v4423 = vpop.f32.mrf.mxu0
    %v4424 = vadd.f32 %v4395, %v4423
    %4425 = vdwg.mxu0
    %4426 = vmatpush.bf16.msra.mxu0 %v3336
    %4427 = vmatpush.bf16.msra.mxu0 %v3333
    %4428 = vmatpush.bf16.msra.mxu0 %v3330
    %4429 = vmatpush.bf16.msra.mxu0 %v3327
    %4430 = vmatpush.bf16.msra.mxu0 %v3324
    %4431 = vmatpush.bf16.msra.mxu0 %v3321
    %4432 = vmatpush.bf16.msra.mxu0 %v3318
    %4433 = vmatpush.bf16.msra.mxu0 %v3315
    %4434 = vmatmul.bf16.gmra.mxu0 %v1126
    %v4435 = vpop.f32.mrf.mxu0
    %v4436 = vadd.f32 %v4407, %v4435
    %v4437 = vpop.f32.mrf.mxu0
    %v4438 = vadd.f32 %v4409, %v4437
    %4439 = vmatmul.bf16.gmra.mxu0 %v1148
    %v4440 = vpop.f32.mrf.mxu0
    %v4441 = vadd.f32 %v4412, %v4440
    %v4442 = vpop.f32.mrf.mxu0
    %v4443 = vadd.f32 %v4414, %v4442
    %4444 = vmatmul.bf16.gmra.mxu0 %v1170
    %v4445 = vpop.f32.mrf.mxu0
    %v4446 = vadd.f32 %v4417, %v4445
    %v4447 = vpop.f32.mrf.mxu0
    %v4448 = vadd.f32 %v4419, %v4447
    %4449 = vmatmul.bf16.gmra.mxu0 %v1192
    %v4450 = vpop.f32.mrf.mxu0
    %v4451 = vadd.f32 %v4422, %v4450
    %v4452 = vpop.f32.mrf.mxu0
    %v4453 = vadd.f32 %v4424, %v4452
    %4454 = vdwg.mxu0
    %4455 = vmatpush.bf16.msra.mxu0 %v3360
    %4456 = vmatpush.bf16.msra.mxu0 %v3357
    %4457 = vmatpush.bf16.msra.mxu0 %v3354
    %4458 = vmatpush.bf16.msra.mxu0 %v3351
    %4459 = vmatpush.bf16.msra.mxu0 %v3348
    %4460 = vmatpush.bf16.msra.mxu0 %v3345
    %4461 = vmatpush.bf16.msra.mxu0 %v3342
    %4462 = vmatpush.bf16.msra.mxu0 %v3339
    %4463 = vmatmul.bf16.gmra.mxu0 %v1127
    %v4464 = vpop.f32.mrf.mxu0
    %v4465 = vadd.f32 %v4436, %v4464
    %v4466 = vpop.f32.mrf.mxu0
    %v4467 = vadd.f32 %v4438, %v4466
    %4468 = vmatmul.bf16.gmra.mxu0 %v1149
    %v4469 = vpop.f32.mrf.mxu0
    %v4470 = vadd.f32 %v4441, %v4469
    %v4471 = vpop.f32.mrf.mxu0
    %v4472 = vadd.f32 %v4443, %v4471
    %4473 = vmatmul.bf16.gmra.mxu0 %v1171
    %v4474 = vpop.f32.mrf.mxu0
    %v4475 = vadd.f32 %v4446, %v4474
    %v4476 = vpop.f32.mrf.mxu0
    %v4477 = vadd.f32 %v4448, %v4476
    %4478 = vmatmul.bf16.gmra.mxu0 %v1193
    %v4479 = vpop.f32.mrf.mxu0
    %v4480 = vadd.f32 %v4451, %v4479
    %v4481 = vpop.f32.mrf.mxu0
    %v4482 = vadd.f32 %v4453, %v4481
    %4483 = vdwg.mxu0
    %4484 = vmatpush.bf16.msra.mxu0 %v3384
    %4485 = vmatpush.bf16.msra.mxu0 %v3381
    %4486 = vmatpush.bf16.msra.mxu0 %v3378
    %4487 = vmatpush.bf16.msra.mxu0 %v3375
    %4488 = vmatpush.bf16.msra.mxu0 %v3372
    %4489 = vmatpush.bf16.msra.mxu0 %v3369
    %4490 = vmatpush.bf16.msra.mxu0 %v3366
    %4491 = vmatpush.bf16.msra.mxu0 %v3363
    %4492 = vmatmul.bf16.gmra.mxu0 %v1128
    %v4493 = vpop.f32.mrf.mxu0
    %v4494 = vadd.f32 %v4465, %v4493
    %v4495 = vpop.f32.mrf.mxu0
    %v4496 = vadd.f32 %v4467, %v4495
    %4497 = vmatmul.bf16.gmra.mxu0 %v1150
    %v4498 = vpop.f32.mrf.mxu0
    %v4499 = vadd.f32 %v4470, %v4498
    %v4500 = vpop.f32.mrf.mxu0
    %v4501 = vadd.f32 %v4472, %v4500
    %4502 = vmatmul.bf16.gmra.mxu0 %v1172
    %v4503 = vpop.f32.mrf.mxu0
    %v4504 = vadd.f32 %v4475, %v4503
    %v4505 = vpop.f32.mrf.mxu0
    %v4506 = vadd.f32 %v4477, %v4505
    %4507 = vmatmul.bf16.gmra.mxu0 %v1194
    %v4508 = vpop.f32.mrf.mxu0
    %v4509 = vadd.f32 %v4480, %v4508
    %v4510 = vpop.f32.mrf.mxu0
    %v4511 = vadd.f32 %v4482, %v4510
    %4512 = vdwg.mxu0
    %4513 = vmatpush.bf16.msra.mxu0 %v3408
    %4514 = vmatpush.bf16.msra.mxu0 %v3405
    %4515 = vmatpush.bf16.msra.mxu0 %v3402
    %4516 = vmatpush.bf16.msra.mxu0 %v3399
    %4517 = vmatpush.bf16.msra.mxu0 %v3396
    %4518 = vmatpush.bf16.msra.mxu0 %v3393
    %4519 = vmatpush.bf16.msra.mxu0 %v3390
    %4520 = vmatpush.bf16.msra.mxu0 %v3387
    %4521 = vmatmul.bf16.gmra.mxu0 %v1129
    %v4522 = vpop.f32.mrf.mxu0
    %v4523 = vadd.f32 %v4494, %v4522
    %v4524 = vpop.f32.mrf.mxu0
    %v4525 = vadd.f32 %v4496, %v4524
    %4526 = vmatmul.bf16.gmra.mxu0 %v1151
    %v4527 = vpop.f32.mrf.mxu0
    %v4528 = vadd.f32 %v4499, %v4527
    %v4529 = vpop.f32.mrf.mxu0
    %v4530 = vadd.f32 %v4501, %v4529
    %4531 = vmatmul.bf16.gmra.mxu0 %v1173
    %v4532 = vpop.f32.mrf.mxu0
    %v4533 = vadd.f32 %v4504, %v4532
    %v4534 = vpop.f32.mrf.mxu0
    %v4535 = vadd.f32 %v4506, %v4534
    %4536 = vmatmul.bf16.gmra.mxu0 %v1195
    %v4537 = vpop.f32.mrf.mxu0
    %v4538 = vadd.f32 %v4509, %v4537
    %v4539 = vpop.f32.mrf.mxu0
    %v4540 = vadd.f32 %v4511, %v4539
    %4541 = vdwg.mxu0
    %4542 = vmatpush.bf16.msra.mxu0 %v3432
    %4543 = vmatpush.bf16.msra.mxu0 %v3429
    %4544 = vmatpush.bf16.msra.mxu0 %v3426
    %4545 = vmatpush.bf16.msra.mxu0 %v3423
    %4546 = vmatpush.bf16.msra.mxu0 %v3420
    %4547 = vmatpush.bf16.msra.mxu0 %v3417
    %4548 = vmatpush.bf16.msra.mxu0 %v3414
    %4549 = vmatpush.bf16.msra.mxu0 %v3411
    %4550 = vmatmul.bf16.gmra.mxu0 %v1130
    %v4551 = vpop.f32.mrf.mxu0
    %v4552 = vadd.f32 %v4523, %v4551
    %v4553 = vpop.f32.mrf.mxu0
    %v4554 = vadd.f32 %v4525, %v4553
    %4555 = vmatmul.bf16.gmra.mxu0 %v1152
    %v4556 = vpop.f32.mrf.mxu0
    %v4557 = vadd.f32 %v4528, %v4556
    %v4558 = vpop.f32.mrf.mxu0
    %v4559 = vadd.f32 %v4530, %v4558
    %4560 = vmatmul.bf16.gmra.mxu0 %v1174
    %v4561 = vpop.f32.mrf.mxu0
    %v4562 = vadd.f32 %v4533, %v4561
    %v4563 = vpop.f32.mrf.mxu0
    %v4564 = vadd.f32 %v4535, %v4563
    %4565 = vmatmul.bf16.gmra.mxu0 %v1196
    %v4566 = vpop.f32.mrf.mxu0
    %v4567 = vadd.f32 %v4538, %v4566
    %v4568 = vpop.f32.mrf.mxu0
    %v4569 = vadd.f32 %v4540, %v4568
    %4570 = vdwg.mxu0
    %4571 = vmatpush.bf16.msra.mxu0 %v3456
    %4572 = vmatpush.bf16.msra.mxu0 %v3453
    %4573 = vmatpush.bf16.msra.mxu0 %v3450
    %4574 = vmatpush.bf16.msra.mxu0 %v3447
    %4575 = vmatpush.bf16.msra.mxu0 %v3444
    %4576 = vmatpush.bf16.msra.mxu0 %v3441
    %4577 = vmatpush.bf16.msra.mxu0 %v3438
    %4578 = vmatpush.bf16.msra.mxu0 %v3435
    %4579 = vmatmul.bf16.gmra.mxu0 %v1131
    %v4580 = vpop.f32.mrf.mxu0
    %v4581 = vadd.f32 %v4552, %v4580
    %v4582 = vpop.f32.mrf.mxu0
    %v4583 = vadd.f32 %v4554, %v4582
    %4584 = vmatmul.bf16.gmra.mxu0 %v1153
    %v4585 = vpop.f32.mrf.mxu0
    %v4586 = vadd.f32 %v4557, %v4585
    %v4587 = vpop.f32.mrf.mxu0
    %v4588 = vadd.f32 %v4559, %v4587
    %4589 = vmatmul.bf16.gmra.mxu0 %v1175
    %v4590 = vpop.f32.mrf.mxu0
    %v4591 = vadd.f32 %v4562, %v4590
    %v4592 = vpop.f32.mrf.mxu0
    %v4593 = vadd.f32 %v4564, %v4592
    %4594 = vmatmul.bf16.gmra.mxu0 %v1197
    %v4595 = vpop.f32.mrf.mxu0
    %v4596 = vadd.f32 %v4567, %v4595
    %v4597 = vpop.f32.mrf.mxu0
    %v4598 = vadd.f32 %v4569, %v4597
    %4599 = vdwg.mxu0
    %4600 = vmatpush.bf16.msra.mxu0 %v3480
    %4601 = vmatpush.bf16.msra.mxu0 %v3477
    %4602 = vmatpush.bf16.msra.mxu0 %v3474
    %4603 = vmatpush.bf16.msra.mxu0 %v3471
    %4604 = vmatpush.bf16.msra.mxu0 %v3468
    %4605 = vmatpush.bf16.msra.mxu0 %v3465
    %4606 = vmatpush.bf16.msra.mxu0 %v3462
    %4607 = vmatpush.bf16.msra.mxu0 %v3459
    %4608 = vmatmul.bf16.gmra.mxu0 %v1132
    %v4609 = vpop.f32.mrf.mxu0
    %v4610 = vadd.f32 %v4581, %v4609
    %v4611 = vpop.f32.mrf.mxu0
    %v4612 = vadd.f32 %v4583, %v4611
    %4613 = vmatmul.bf16.gmra.mxu0 %v1154
    %v4614 = vpop.f32.mrf.mxu0
    %v4615 = vadd.f32 %v4586, %v4614
    %v4616 = vpop.f32.mrf.mxu0
    %v4617 = vadd.f32 %v4588, %v4616
    %4618 = vmatmul.bf16.gmra.mxu0 %v1176
    %v4619 = vpop.f32.mrf.mxu0
    %v4620 = vadd.f32 %v4591, %v4619
    %v4621 = vpop.f32.mrf.mxu0
    %v4622 = vadd.f32 %v4593, %v4621
    %4623 = vmatmul.bf16.gmra.mxu0 %v1198
    %v4624 = vpop.f32.mrf.mxu0
    %v4625 = vadd.f32 %v4596, %v4624
    %v4626 = vpop.f32.mrf.mxu0
    %v4627 = vadd.f32 %v4598, %v4626
    %4628 = vdwg.mxu0
    %4629 = vmatpush.bf16.msra.mxu0 %v3504
    %4630 = vmatpush.bf16.msra.mxu0 %v3501
    %4631 = vmatpush.bf16.msra.mxu0 %v3498
    %4632 = vmatpush.bf16.msra.mxu0 %v3495
    %4633 = vmatpush.bf16.msra.mxu0 %v3492
    %4634 = vmatpush.bf16.msra.mxu0 %v3489
    %4635 = vmatpush.bf16.msra.mxu0 %v3486
    %4636 = vmatpush.bf16.msra.mxu0 %v3483
    %4637 = vmatmul.bf16.gmra.mxu0 %v1133
    %v4638 = vpop.f32.mrf.mxu0
    %v4639 = vadd.f32 %v4610, %v4638
    %v4640 = vpop.f32.mrf.mxu0
    %v4641 = vadd.f32 %v4612, %v4640
    %4642 = vmatmul.bf16.gmra.mxu0 %v1155
    %v4643 = vpop.f32.mrf.mxu0
    %v4644 = vadd.f32 %v4615, %v4643
    %v4645 = vpop.f32.mrf.mxu0
    %v4646 = vadd.f32 %v4617, %v4645
    %4647 = vmatmul.bf16.gmra.mxu0 %v1177
    %v4648 = vpop.f32.mrf.mxu0
    %v4649 = vadd.f32 %v4620, %v4648
    %v4650 = vpop.f32.mrf.mxu0
    %v4651 = vadd.f32 %v4622, %v4650
    %4652 = vmatmul.bf16.gmra.mxu0 %v1199
    %v4653 = vpop.f32.mrf.mxu0
    %v4654 = vadd.f32 %v4625, %v4653
    %v4655 = vpop.f32.mrf.mxu0
    %v4656 = vadd.f32 %v4627, %v4655
    %4657 = vdwg.mxu0
    %4658 = vmatpush.bf16.msra.mxu0 %v3528
    %4659 = vmatpush.bf16.msra.mxu0 %v3525
    %4660 = vmatpush.bf16.msra.mxu0 %v3522
    %4661 = vmatpush.bf16.msra.mxu0 %v3519
    %4662 = vmatpush.bf16.msra.mxu0 %v3516
    %4663 = vmatpush.bf16.msra.mxu0 %v3513
    %4664 = vmatpush.bf16.msra.mxu0 %v3510
    %4665 = vmatpush.bf16.msra.mxu0 %v3507
    %4666 = vmatmul.bf16.gmra.mxu0 %v1134
    %v4667 = vpop.f32.mrf.mxu0
    %v4668 = vadd.f32 %v4639, %v4667
    %v4669 = vpop.f32.mrf.mxu0
    %v4670 = vadd.f32 %v4641, %v4669
    %4671 = vmatmul.bf16.gmra.mxu0 %v1156
    %v4672 = vpop.f32.mrf.mxu0
    %v4673 = vadd.f32 %v4644, %v4672
    %v4674 = vpop.f32.mrf.mxu0
    %v4675 = vadd.f32 %v4646, %v4674
    %4676 = vmatmul.bf16.gmra.mxu0 %v1178
    %v4677 = vpop.f32.mrf.mxu0
    %v4678 = vadd.f32 %v4649, %v4677
    %v4679 = vpop.f32.mrf.mxu0
    %v4680 = vadd.f32 %v4651, %v4679
    %4681 = vmatmul.bf16.gmra.mxu0 %v1200
    %v4682 = vpop.f32.mrf.mxu0
    %v4683 = vadd.f32 %v4654, %v4682
    %v4684 = vpop.f32.mrf.mxu0
    %v4685 = vadd.f32 %v4656, %v4684
    %4686 = vdwg.mxu0
    %4687 = vmatpush.bf16.msra.mxu0 %v3552
    %4688 = vmatpush.bf16.msra.mxu0 %v3549
    %4689 = vmatpush.bf16.msra.mxu0 %v3546
    %4690 = vmatpush.bf16.msra.mxu0 %v3543
    %4691 = vmatpush.bf16.msra.mxu0 %v3540
    %4692 = vmatpush.bf16.msra.mxu0 %v3537
    %4693 = vmatpush.bf16.msra.mxu0 %v3534
    %4694 = vmatpush.bf16.msra.mxu0 %v3531
    %4695 = vmatmul.bf16.gmra.mxu0 %v1135
    %v4696 = vpop.f32.mrf.mxu0
    %v4697 = vadd.f32 %v4668, %v4696
    %v4698 = vpop.f32.mrf.mxu0
    %v4699 = vadd.f32 %v4670, %v4698
    %4700 = vmatmul.bf16.gmra.mxu0 %v1157
    %v4701 = vpop.f32.mrf.mxu0
    %v4702 = vadd.f32 %v4673, %v4701
    %v4703 = vpop.f32.mrf.mxu0
    %v4704 = vadd.f32 %v4675, %v4703
    %4705 = vmatmul.bf16.gmra.mxu0 %v1179
    %v4706 = vpop.f32.mrf.mxu0
    %v4707 = vadd.f32 %v4678, %v4706
    %v4708 = vpop.f32.mrf.mxu0
    %v4709 = vadd.f32 %v4680, %v4708
    %4710 = vmatmul.bf16.gmra.mxu0 %v1201
    %v4711 = vpop.f32.mrf.mxu0
    %v4712 = vadd.f32 %v4683, %v4711
    %v4713 = vpop.f32.mrf.mxu0
    %v4714 = vadd.f32 %v4685, %v4713
    %4715 = vdwg.mxu0
    %4716 = vmatpush.bf16.msra.mxu0 %v3576
    %4717 = vmatpush.bf16.msra.mxu0 %v3573
    %4718 = vmatpush.bf16.msra.mxu0 %v3570
    %4719 = vmatpush.bf16.msra.mxu0 %v3567
    %4720 = vmatpush.bf16.msra.mxu0 %v3564
    %4721 = vmatpush.bf16.msra.mxu0 %v3561
    %4722 = vmatpush.bf16.msra.mxu0 %v3558
    %4723 = vmatpush.bf16.msra.mxu0 %v3555
    %4724 = vmatmul.bf16.gmra.mxu0 %v1136
    %v4725 = vpop.f32.mrf.mxu0
    %v4726 = vadd.f32 %v4697, %v4725
    %v4727 = vpop.f32.mrf.mxu0
    %v4728 = vadd.f32 %v4699, %v4727
    %4729 = vmatmul.bf16.gmra.mxu0 %v1158
    %v4730 = vpop.f32.mrf.mxu0
    %v4731 = vadd.f32 %v4702, %v4730
    %v4732 = vpop.f32.mrf.mxu0
    %v4733 = vadd.f32 %v4704, %v4732
    %4734 = vmatmul.bf16.gmra.mxu0 %v1180
    %v4735 = vpop.f32.mrf.mxu0
    %v4736 = vadd.f32 %v4707, %v4735
    %v4737 = vpop.f32.mrf.mxu0
    %v4738 = vadd.f32 %v4709, %v4737
    %4739 = vmatmul.bf16.gmra.mxu0 %v1202
    %v4740 = vpop.f32.mrf.mxu0
    %v4741 = vadd.f32 %v4712, %v4740
    %v4742 = vpop.f32.mrf.mxu0
    %v4743 = vadd.f32 %v4714, %v4742
    %4744 = vdwg.mxu0
    %4745 = vmatpush.bf16.msra.mxu0 %v3073
    %4746 = vmatpush.bf16.msra.mxu0 %v3070
    %4747 = vmatpush.bf16.msra.mxu0 %v3067
    %4748 = vmatpush.bf16.msra.mxu0 %v3064
    %4749 = vmatpush.bf16.msra.mxu0 %v3061
    %4750 = vmatpush.bf16.msra.mxu0 %v3058
    %4751 = vmatpush.bf16.msra.mxu0 %v3055
    %4752 = vmatpush.bf16.msra.mxu0 %v3052
    %4753 = vmatmul.bf16.gmra.mxu0 %v1115
    %v4754 = vpop.f32.mrf.mxu0
    %v4755 = vadd.f32 %v846, %v4754
    %v4756 = vpop.f32.mrf.mxu0
    %v4757 = vadd.f32 %v846, %v4756
    %4758 = vmatmul.bf16.gmra.mxu0 %v1137
    %v4759 = vpop.f32.mrf.mxu0
    %v4760 = vadd.f32 %v846, %v4759
    %v4761 = vpop.f32.mrf.mxu0
    %v4762 = vadd.f32 %v846, %v4761
    %4763 = vmatmul.bf16.gmra.mxu0 %v1159
    %v4764 = vpop.f32.mrf.mxu0
    %v4765 = vadd.f32 %v846, %v4764
    %v4766 = vpop.f32.mrf.mxu0
    %v4767 = vadd.f32 %v846, %v4766
    %4768 = vmatmul.bf16.gmra.mxu0 %v1181
    %v4769 = vpop.f32.mrf.mxu0
    %v4770 = vadd.f32 %v846, %v4769
    %v4771 = vpop.f32.mrf.mxu0
    %v4772 = vadd.f32 %v846, %v4771
    %4773 = vdwg.mxu0
    %4774 = vmatpush.bf16.msra.mxu0 %v3097
    %4775 = vmatpush.bf16.msra.mxu0 %v3094
    %4776 = vmatpush.bf16.msra.mxu0 %v3091
    %4777 = vmatpush.bf16.msra.mxu0 %v3088
    %4778 = vmatpush.bf16.msra.mxu0 %v3085
    %4779 = vmatpush.bf16.msra.mxu0 %v3082
    %4780 = vmatpush.bf16.msra.mxu0 %v3079
    %4781 = vmatpush.bf16.msra.mxu0 %v3076
    %4782 = vmatmul.bf16.gmra.mxu0 %v1116
    %v4783 = vpop.f32.mrf.mxu0
    %v4784 = vadd.f32 %v4755, %v4783
    %v4785 = vpop.f32.mrf.mxu0
    %v4786 = vadd.f32 %v4757, %v4785
    %4787 = vmatmul.bf16.gmra.mxu0 %v1138
    %v4788 = vpop.f32.mrf.mxu0
    %v4789 = vadd.f32 %v4760, %v4788
    %v4790 = vpop.f32.mrf.mxu0
    %v4791 = vadd.f32 %v4762, %v4790
    %4792 = vmatmul.bf16.gmra.mxu0 %v1160
    %v4793 = vpop.f32.mrf.mxu0
    %v4794 = vadd.f32 %v4765, %v4793
    %v4795 = vpop.f32.mrf.mxu0
    %v4796 = vadd.f32 %v4767, %v4795
    %4797 = vmatmul.bf16.gmra.mxu0 %v1182
    %v4798 = vpop.f32.mrf.mxu0
    %v4799 = vadd.f32 %v4770, %v4798
    %v4800 = vpop.f32.mrf.mxu0
    %v4801 = vadd.f32 %v4772, %v4800
    %4802 = vdwg.mxu0
    %4803 = vmatpush.bf16.msra.mxu0 %v3121
    %4804 = vmatpush.bf16.msra.mxu0 %v3118
    %4805 = vmatpush.bf16.msra.mxu0 %v3115
    %4806 = vmatpush.bf16.msra.mxu0 %v3112
    %4807 = vmatpush.bf16.msra.mxu0 %v3109
    %4808 = vmatpush.bf16.msra.mxu0 %v3106
    %4809 = vmatpush.bf16.msra.mxu0 %v3103
    %4810 = vmatpush.bf16.msra.mxu0 %v3100
    %4811 = vmatmul.bf16.gmra.mxu0 %v1117
    %v4812 = vpop.f32.mrf.mxu0
    %v4813 = vadd.f32 %v4784, %v4812
    %v4814 = vpop.f32.mrf.mxu0
    %v4815 = vadd.f32 %v4786, %v4814
    %4816 = vmatmul.bf16.gmra.mxu0 %v1139
    %v4817 = vpop.f32.mrf.mxu0
    %v4818 = vadd.f32 %v4789, %v4817
    %v4819 = vpop.f32.mrf.mxu0
    %v4820 = vadd.f32 %v4791, %v4819
    %4821 = vmatmul.bf16.gmra.mxu0 %v1161
    %v4822 = vpop.f32.mrf.mxu0
    %v4823 = vadd.f32 %v4794, %v4822
    %v4824 = vpop.f32.mrf.mxu0
    %v4825 = vadd.f32 %v4796, %v4824
    %4826 = vmatmul.bf16.gmra.mxu0 %v1183
    %v4827 = vpop.f32.mrf.mxu0
    %v4828 = vadd.f32 %v4799, %v4827
    %v4829 = vpop.f32.mrf.mxu0
    %v4830 = vadd.f32 %v4801, %v4829
    %4831 = vdwg.mxu0
    %4832 = vmatpush.bf16.msra.mxu0 %v3145
    %4833 = vmatpush.bf16.msra.mxu0 %v3142
    %4834 = vmatpush.bf16.msra.mxu0 %v3139
    %4835 = vmatpush.bf16.msra.mxu0 %v3136
    %4836 = vmatpush.bf16.msra.mxu0 %v3133
    %4837 = vmatpush.bf16.msra.mxu0 %v3130
    %4838 = vmatpush.bf16.msra.mxu0 %v3127
    %4839 = vmatpush.bf16.msra.mxu0 %v3124
    %4840 = vmatmul.bf16.gmra.mxu0 %v1118
    %v4841 = vpop.f32.mrf.mxu0
    %v4842 = vadd.f32 %v4813, %v4841
    %v4843 = vpop.f32.mrf.mxu0
    %v4844 = vadd.f32 %v4815, %v4843
    %4845 = vmatmul.bf16.gmra.mxu0 %v1140
    %v4846 = vpop.f32.mrf.mxu0
    %v4847 = vadd.f32 %v4818, %v4846
    %v4848 = vpop.f32.mrf.mxu0
    %v4849 = vadd.f32 %v4820, %v4848
    %4850 = vmatmul.bf16.gmra.mxu0 %v1162
    %v4851 = vpop.f32.mrf.mxu0
    %v4852 = vadd.f32 %v4823, %v4851
    %v4853 = vpop.f32.mrf.mxu0
    %v4854 = vadd.f32 %v4825, %v4853
    %4855 = vmatmul.bf16.gmra.mxu0 %v1184
    %v4856 = vpop.f32.mrf.mxu0
    %v4857 = vadd.f32 %v4828, %v4856
    %v4858 = vpop.f32.mrf.mxu0
    %v4859 = vadd.f32 %v4830, %v4858
    %4860 = vdwg.mxu0
    %4861 = vmatpush.bf16.msra.mxu0 %v3169
    %4862 = vmatpush.bf16.msra.mxu0 %v3166
    %4863 = vmatpush.bf16.msra.mxu0 %v3163
    %4864 = vmatpush.bf16.msra.mxu0 %v3160
    %4865 = vmatpush.bf16.msra.mxu0 %v3157
    %4866 = vmatpush.bf16.msra.mxu0 %v3154
    %4867 = vmatpush.bf16.msra.mxu0 %v3151
    %4868 = vmatpush.bf16.msra.mxu0 %v3148
    %4869 = vmatmul.bf16.gmra.mxu0 %v1119
    %v4870 = vpop.f32.mrf.mxu0
    %v4871 = vadd.f32 %v4842, %v4870
    %v4872 = vpop.f32.mrf.mxu0
    %v4873 = vadd.f32 %v4844, %v4872
    %4874 = vmatmul.bf16.gmra.mxu0 %v1141
    %v4875 = vpop.f32.mrf.mxu0
    %v4876 = vadd.f32 %v4847, %v4875
    %v4877 = vpop.f32.mrf.mxu0
    %v4878 = vadd.f32 %v4849, %v4877
    %4879 = vmatmul.bf16.gmra.mxu0 %v1163
    %v4880 = vpop.f32.mrf.mxu0
    %v4881 = vadd.f32 %v4852, %v4880
    %v4882 = vpop.f32.mrf.mxu0
    %v4883 = vadd.f32 %v4854, %v4882
    %4884 = vmatmul.bf16.gmra.mxu0 %v1185
    %v4885 = vpop.f32.mrf.mxu0
    %v4886 = vadd.f32 %v4857, %v4885
    %v4887 = vpop.f32.mrf.mxu0
    %v4888 = vadd.f32 %v4859, %v4887
    %4889 = vdwg.mxu0
    %4890 = vmatpush.bf16.msra.mxu0 %v3193
    %4891 = vmatpush.bf16.msra.mxu0 %v3190
    %4892 = vmatpush.bf16.msra.mxu0 %v3187
    %4893 = vmatpush.bf16.msra.mxu0 %v3184
    %4894 = vmatpush.bf16.msra.mxu0 %v3181
    %4895 = vmatpush.bf16.msra.mxu0 %v3178
    %4896 = vmatpush.bf16.msra.mxu0 %v3175
    %4897 = vmatpush.bf16.msra.mxu0 %v3172
    %4898 = vmatmul.bf16.gmra.mxu0 %v1120
    %v4899 = vpop.f32.mrf.mxu0
    %v4900 = vadd.f32 %v4871, %v4899
    %v4901 = vpop.f32.mrf.mxu0
    %v4902 = vadd.f32 %v4873, %v4901
    %4903 = vmatmul.bf16.gmra.mxu0 %v1142
    %v4904 = vpop.f32.mrf.mxu0
    %v4905 = vadd.f32 %v4876, %v4904
    %v4906 = vpop.f32.mrf.mxu0
    %v4907 = vadd.f32 %v4878, %v4906
    %4908 = vmatmul.bf16.gmra.mxu0 %v1164
    %v4909 = vpop.f32.mrf.mxu0
    %v4910 = vadd.f32 %v4881, %v4909
    %v4911 = vpop.f32.mrf.mxu0
    %v4912 = vadd.f32 %v4883, %v4911
    %4913 = vmatmul.bf16.gmra.mxu0 %v1186
    %v4914 = vpop.f32.mrf.mxu0
    %v4915 = vadd.f32 %v4886, %v4914
    %v4916 = vpop.f32.mrf.mxu0
    %v4917 = vadd.f32 %v4888, %v4916
    %4918 = vdwg.mxu0
    %4919 = vmatpush.bf16.msra.mxu0 %v3217
    %4920 = vmatpush.bf16.msra.mxu0 %v3214
    %4921 = vmatpush.bf16.msra.mxu0 %v3211
    %4922 = vmatpush.bf16.msra.mxu0 %v3208
    %4923 = vmatpush.bf16.msra.mxu0 %v3205
    %4924 = vmatpush.bf16.msra.mxu0 %v3202
    %4925 = vmatpush.bf16.msra.mxu0 %v3199
    %4926 = vmatpush.bf16.msra.mxu0 %v3196
    %4927 = vmatmul.bf16.gmra.mxu0 %v1121
    %v4928 = vpop.f32.mrf.mxu0
    %v4929 = vadd.f32 %v4900, %v4928
    %v4930 = vpop.f32.mrf.mxu0
    %v4931 = vadd.f32 %v4902, %v4930
    %4932 = vmatmul.bf16.gmra.mxu0 %v1143
    %v4933 = vpop.f32.mrf.mxu0
    %v4934 = vadd.f32 %v4905, %v4933
    %v4935 = vpop.f32.mrf.mxu0
    %v4936 = vadd.f32 %v4907, %v4935
    %4937 = vmatmul.bf16.gmra.mxu0 %v1165
    %v4938 = vpop.f32.mrf.mxu0
    %v4939 = vadd.f32 %v4910, %v4938
    %v4940 = vpop.f32.mrf.mxu0
    %v4941 = vadd.f32 %v4912, %v4940
    %4942 = vmatmul.bf16.gmra.mxu0 %v1187
    %v4943 = vpop.f32.mrf.mxu0
    %v4944 = vadd.f32 %v4915, %v4943
    %v4945 = vpop.f32.mrf.mxu0
    %v4946 = vadd.f32 %v4917, %v4945
    %4947 = vdwg.mxu0
    %4948 = vmatpush.bf16.msra.mxu0 %v3241
    %4949 = vmatpush.bf16.msra.mxu0 %v3238
    %4950 = vmatpush.bf16.msra.mxu0 %v3235
    %4951 = vmatpush.bf16.msra.mxu0 %v3232
    %4952 = vmatpush.bf16.msra.mxu0 %v3229
    %4953 = vmatpush.bf16.msra.mxu0 %v3226
    %4954 = vmatpush.bf16.msra.mxu0 %v3223
    %4955 = vmatpush.bf16.msra.mxu0 %v3220
    %4956 = vmatmul.bf16.gmra.mxu0 %v1122
    %v4957 = vpop.f32.mrf.mxu0
    %v4958 = vadd.f32 %v4929, %v4957
    %v4959 = vpop.f32.mrf.mxu0
    %v4960 = vadd.f32 %v4931, %v4959
    %4961 = vmatmul.bf16.gmra.mxu0 %v1144
    %v4962 = vpop.f32.mrf.mxu0
    %v4963 = vadd.f32 %v4934, %v4962
    %v4964 = vpop.f32.mrf.mxu0
    %v4965 = vadd.f32 %v4936, %v4964
    %4966 = vmatmul.bf16.gmra.mxu0 %v1166
    %v4967 = vpop.f32.mrf.mxu0
    %v4968 = vadd.f32 %v4939, %v4967
    %v4969 = vpop.f32.mrf.mxu0
    %v4970 = vadd.f32 %v4941, %v4969
    %4971 = vmatmul.bf16.gmra.mxu0 %v1188
    %v4972 = vpop.f32.mrf.mxu0
    %v4973 = vadd.f32 %v4944, %v4972
    %v4974 = vpop.f32.mrf.mxu0
    %v4975 = vadd.f32 %v4946, %v4974
    %4976 = vdwg.mxu0
    %4977 = vmatpush.bf16.msra.mxu0 %v3265
    %4978 = vmatpush.bf16.msra.mxu0 %v3262
    %4979 = vmatpush.bf16.msra.mxu0 %v3259
    %4980 = vmatpush.bf16.msra.mxu0 %v3256
    %4981 = vmatpush.bf16.msra.mxu0 %v3253
    %4982 = vmatpush.bf16.msra.mxu0 %v3250
    %4983 = vmatpush.bf16.msra.mxu0 %v3247
    %4984 = vmatpush.bf16.msra.mxu0 %v3244
    %4985 = vmatmul.bf16.gmra.mxu0 %v1123
    %v4986 = vpop.f32.mrf.mxu0
    %v4987 = vadd.f32 %v4958, %v4986
    %v4988 = vpop.f32.mrf.mxu0
    %v4989 = vadd.f32 %v4960, %v4988
    %4990 = vmatmul.bf16.gmra.mxu0 %v1145
    %v4991 = vpop.f32.mrf.mxu0
    %v4992 = vadd.f32 %v4963, %v4991
    %v4993 = vpop.f32.mrf.mxu0
    %v4994 = vadd.f32 %v4965, %v4993
    %4995 = vmatmul.bf16.gmra.mxu0 %v1167
    %v4996 = vpop.f32.mrf.mxu0
    %v4997 = vadd.f32 %v4968, %v4996
    %v4998 = vpop.f32.mrf.mxu0
    %v4999 = vadd.f32 %v4970, %v4998
    %5000 = vmatmul.bf16.gmra.mxu0 %v1189
    %v5001 = vpop.f32.mrf.mxu0
    %v5002 = vadd.f32 %v4973, %v5001
    %v5003 = vpop.f32.mrf.mxu0
    %v5004 = vadd.f32 %v4975, %v5003
    %5005 = vdwg.mxu0
    %5006 = vmatpush.bf16.msra.mxu0 %v3289
    %5007 = vmatpush.bf16.msra.mxu0 %v3286
    %5008 = vmatpush.bf16.msra.mxu0 %v3283
    %5009 = vmatpush.bf16.msra.mxu0 %v3280
    %5010 = vmatpush.bf16.msra.mxu0 %v3277
    %5011 = vmatpush.bf16.msra.mxu0 %v3274
    %5012 = vmatpush.bf16.msra.mxu0 %v3271
    %5013 = vmatpush.bf16.msra.mxu0 %v3268
    %5014 = vmatmul.bf16.gmra.mxu0 %v1124
    %v5015 = vpop.f32.mrf.mxu0
    %v5016 = vadd.f32 %v4987, %v5015
    %v5017 = vpop.f32.mrf.mxu0
    %v5018 = vadd.f32 %v4989, %v5017
    %5019 = vmatmul.bf16.gmra.mxu0 %v1146
    %v5020 = vpop.f32.mrf.mxu0
    %v5021 = vadd.f32 %v4992, %v5020
    %v5022 = vpop.f32.mrf.mxu0
    %v5023 = vadd.f32 %v4994, %v5022
    %5024 = vmatmul.bf16.gmra.mxu0 %v1168
    %v5025 = vpop.f32.mrf.mxu0
    %v5026 = vadd.f32 %v4997, %v5025
    %v5027 = vpop.f32.mrf.mxu0
    %v5028 = vadd.f32 %v4999, %v5027
    %5029 = vmatmul.bf16.gmra.mxu0 %v1190
    %v5030 = vpop.f32.mrf.mxu0
    %v5031 = vadd.f32 %v5002, %v5030
    %v5032 = vpop.f32.mrf.mxu0
    %v5033 = vadd.f32 %v5004, %v5032
    %5034 = vdwg.mxu0
    %5035 = vmatpush.bf16.msra.mxu0 %v3313
    %5036 = vmatpush.bf16.msra.mxu0 %v3310
    %5037 = vmatpush.bf16.msra.mxu0 %v3307
    %5038 = vmatpush.bf16.msra.mxu0 %v3304
    %5039 = vmatpush.bf16.msra.mxu0 %v3301
    %5040 = vmatpush.bf16.msra.mxu0 %v3298
    %5041 = vmatpush.bf16.msra.mxu0 %v3295
    %5042 = vmatpush.bf16.msra.mxu0 %v3292
    %5043 = vmatmul.bf16.gmra.mxu0 %v1125
    %v5044 = vpop.f32.mrf.mxu0
    %v5045 = vadd.f32 %v5016, %v5044
    %v5046 = vpop.f32.mrf.mxu0
    %v5047 = vadd.f32 %v5018, %v5046
    %5048 = vmatmul.bf16.gmra.mxu0 %v1147
    %v5049 = vpop.f32.mrf.mxu0
    %v5050 = vadd.f32 %v5021, %v5049
    %v5051 = vpop.f32.mrf.mxu0
    %v5052 = vadd.f32 %v5023, %v5051
    %5053 = vmatmul.bf16.gmra.mxu0 %v1169
    %v5054 = vpop.f32.mrf.mxu0
    %v5055 = vadd.f32 %v5026, %v5054
    %v5056 = vpop.f32.mrf.mxu0
    %v5057 = vadd.f32 %v5028, %v5056
    %5058 = vmatmul.bf16.gmra.mxu0 %v1191
    %v5059 = vpop.f32.mrf.mxu0
    %v5060 = vadd.f32 %v5031, %v5059
    %v5061 = vpop.f32.mrf.mxu0
    %v5062 = vadd.f32 %v5033, %v5061
    %5063 = vdwg.mxu0
    %5064 = vmatpush.bf16.msra.mxu0 %v3337
    %5065 = vmatpush.bf16.msra.mxu0 %v3334
    %5066 = vmatpush.bf16.msra.mxu0 %v3331
    %5067 = vmatpush.bf16.msra.mxu0 %v3328
    %5068 = vmatpush.bf16.msra.mxu0 %v3325
    %5069 = vmatpush.bf16.msra.mxu0 %v3322
    %5070 = vmatpush.bf16.msra.mxu0 %v3319
    %5071 = vmatpush.bf16.msra.mxu0 %v3316
    %5072 = vmatmul.bf16.gmra.mxu0 %v1126
    %v5073 = vpop.f32.mrf.mxu0
    %v5074 = vadd.f32 %v5045, %v5073
    %v5075 = vpop.f32.mrf.mxu0
    %v5076 = vadd.f32 %v5047, %v5075
    %5077 = vmatmul.bf16.gmra.mxu0 %v1148
    %v5078 = vpop.f32.mrf.mxu0
    %v5079 = vadd.f32 %v5050, %v5078
    %v5080 = vpop.f32.mrf.mxu0
    %v5081 = vadd.f32 %v5052, %v5080
    %5082 = vmatmul.bf16.gmra.mxu0 %v1170
    %v5083 = vpop.f32.mrf.mxu0
    %v5084 = vadd.f32 %v5055, %v5083
    %v5085 = vpop.f32.mrf.mxu0
    %v5086 = vadd.f32 %v5057, %v5085
    %5087 = vmatmul.bf16.gmra.mxu0 %v1192
    %v5088 = vpop.f32.mrf.mxu0
    %v5089 = vadd.f32 %v5060, %v5088
    %v5090 = vpop.f32.mrf.mxu0
    %v5091 = vadd.f32 %v5062, %v5090
    %5092 = vdwg.mxu0
    %5093 = vmatpush.bf16.msra.mxu0 %v3361
    %5094 = vmatpush.bf16.msra.mxu0 %v3358
    %5095 = vmatpush.bf16.msra.mxu0 %v3355
    %5096 = vmatpush.bf16.msra.mxu0 %v3352
    %5097 = vmatpush.bf16.msra.mxu0 %v3349
    %5098 = vmatpush.bf16.msra.mxu0 %v3346
    %5099 = vmatpush.bf16.msra.mxu0 %v3343
    %5100 = vmatpush.bf16.msra.mxu0 %v3340
    %5101 = vmatmul.bf16.gmra.mxu0 %v1127
    %v5102 = vpop.f32.mrf.mxu0
    %v5103 = vadd.f32 %v5074, %v5102
    %v5104 = vpop.f32.mrf.mxu0
    %v5105 = vadd.f32 %v5076, %v5104
    %5106 = vmatmul.bf16.gmra.mxu0 %v1149
    %v5107 = vpop.f32.mrf.mxu0
    %v5108 = vadd.f32 %v5079, %v5107
    %v5109 = vpop.f32.mrf.mxu0
    %v5110 = vadd.f32 %v5081, %v5109
    %5111 = vmatmul.bf16.gmra.mxu0 %v1171
    %v5112 = vpop.f32.mrf.mxu0
    %v5113 = vadd.f32 %v5084, %v5112
    %v5114 = vpop.f32.mrf.mxu0
    %v5115 = vadd.f32 %v5086, %v5114
    %5116 = vmatmul.bf16.gmra.mxu0 %v1193
    %v5117 = vpop.f32.mrf.mxu0
    %v5118 = vadd.f32 %v5089, %v5117
    %v5119 = vpop.f32.mrf.mxu0
    %v5120 = vadd.f32 %v5091, %v5119
    %5121 = vdwg.mxu0
    %5122 = vmatpush.bf16.msra.mxu0 %v3385
    %5123 = vmatpush.bf16.msra.mxu0 %v3382
    %5124 = vmatpush.bf16.msra.mxu0 %v3379
    %5125 = vmatpush.bf16.msra.mxu0 %v3376
    %5126 = vmatpush.bf16.msra.mxu0 %v3373
    %5127 = vmatpush.bf16.msra.mxu0 %v3370
    %5128 = vmatpush.bf16.msra.mxu0 %v3367
    %5129 = vmatpush.bf16.msra.mxu0 %v3364
    %5130 = vmatmul.bf16.gmra.mxu0 %v1128
    %v5131 = vpop.f32.mrf.mxu0
    %v5132 = vadd.f32 %v5103, %v5131
    %v5133 = vpop.f32.mrf.mxu0
    %v5134 = vadd.f32 %v5105, %v5133
    %5135 = vmatmul.bf16.gmra.mxu0 %v1150
    %v5136 = vpop.f32.mrf.mxu0
    %v5137 = vadd.f32 %v5108, %v5136
    %v5138 = vpop.f32.mrf.mxu0
    %v5139 = vadd.f32 %v5110, %v5138
    %5140 = vmatmul.bf16.gmra.mxu0 %v1172
    %v5141 = vpop.f32.mrf.mxu0
    %v5142 = vadd.f32 %v5113, %v5141
    %v5143 = vpop.f32.mrf.mxu0
    %v5144 = vadd.f32 %v5115, %v5143
    %5145 = vmatmul.bf16.gmra.mxu0 %v1194
    %v5146 = vpop.f32.mrf.mxu0
    %v5147 = vadd.f32 %v5118, %v5146
    %v5148 = vpop.f32.mrf.mxu0
    %v5149 = vadd.f32 %v5120, %v5148
    %5150 = vdwg.mxu0
    %5151 = vmatpush.bf16.msra.mxu0 %v3409
    %5152 = vmatpush.bf16.msra.mxu0 %v3406
    %5153 = vmatpush.bf16.msra.mxu0 %v3403
    %5154 = vmatpush.bf16.msra.mxu0 %v3400
    %5155 = vmatpush.bf16.msra.mxu0 %v3397
    %5156 = vmatpush.bf16.msra.mxu0 %v3394
    %5157 = vmatpush.bf16.msra.mxu0 %v3391
    %5158 = vmatpush.bf16.msra.mxu0 %v3388
    %5159 = vmatmul.bf16.gmra.mxu0 %v1129
    %v5160 = vpop.f32.mrf.mxu0
    %v5161 = vadd.f32 %v5132, %v5160
    %v5162 = vpop.f32.mrf.mxu0
    %v5163 = vadd.f32 %v5134, %v5162
    %5164 = vmatmul.bf16.gmra.mxu0 %v1151
    %v5165 = vpop.f32.mrf.mxu0
    %v5166 = vadd.f32 %v5137, %v5165
    %v5167 = vpop.f32.mrf.mxu0
    %v5168 = vadd.f32 %v5139, %v5167
    %5169 = vmatmul.bf16.gmra.mxu0 %v1173
    %v5170 = vpop.f32.mrf.mxu0
    %v5171 = vadd.f32 %v5142, %v5170
    %v5172 = vpop.f32.mrf.mxu0
    %v5173 = vadd.f32 %v5144, %v5172
    %5174 = vmatmul.bf16.gmra.mxu0 %v1195
    %v5175 = vpop.f32.mrf.mxu0
    %v5176 = vadd.f32 %v5147, %v5175
    %v5177 = vpop.f32.mrf.mxu0
    %v5178 = vadd.f32 %v5149, %v5177
    %5179 = vdwg.mxu0
    %5180 = vmatpush.bf16.msra.mxu0 %v3433
    %5181 = vmatpush.bf16.msra.mxu0 %v3430
    %5182 = vmatpush.bf16.msra.mxu0 %v3427
    %5183 = vmatpush.bf16.msra.mxu0 %v3424
    %5184 = vmatpush.bf16.msra.mxu0 %v3421
    %5185 = vmatpush.bf16.msra.mxu0 %v3418
    %5186 = vmatpush.bf16.msra.mxu0 %v3415
    %5187 = vmatpush.bf16.msra.mxu0 %v3412
    %5188 = vmatmul.bf16.gmra.mxu0 %v1130
    %v5189 = vpop.f32.mrf.mxu0
    %v5190 = vadd.f32 %v5161, %v5189
    %v5191 = vpop.f32.mrf.mxu0
    %v5192 = vadd.f32 %v5163, %v5191
    %5193 = vmatmul.bf16.gmra.mxu0 %v1152
    %v5194 = vpop.f32.mrf.mxu0
    %v5195 = vadd.f32 %v5166, %v5194
    %v5196 = vpop.f32.mrf.mxu0
    %v5197 = vadd.f32 %v5168, %v5196
    %5198 = vmatmul.bf16.gmra.mxu0 %v1174
    %v5199 = vpop.f32.mrf.mxu0
    %v5200 = vadd.f32 %v5171, %v5199
    %v5201 = vpop.f32.mrf.mxu0
    %v5202 = vadd.f32 %v5173, %v5201
    %5203 = vmatmul.bf16.gmra.mxu0 %v1196
    %v5204 = vpop.f32.mrf.mxu0
    %v5205 = vadd.f32 %v5176, %v5204
    %v5206 = vpop.f32.mrf.mxu0
    %v5207 = vadd.f32 %v5178, %v5206
    %5208 = vdwg.mxu0
    %5209 = vmatpush.bf16.msra.mxu0 %v3457
    %5210 = vmatpush.bf16.msra.mxu0 %v3454
    %5211 = vmatpush.bf16.msra.mxu0 %v3451
    %5212 = vmatpush.bf16.msra.mxu0 %v3448
    %5213 = vmatpush.bf16.msra.mxu0 %v3445
    %5214 = vmatpush.bf16.msra.mxu0 %v3442
    %5215 = vmatpush.bf16.msra.mxu0 %v3439
    %5216 = vmatpush.bf16.msra.mxu0 %v3436
    %5217 = vmatmul.bf16.gmra.mxu0 %v1131
    %v5218 = vpop.f32.mrf.mxu0
    %v5219 = vadd.f32 %v5190, %v5218
    %v5220 = vpop.f32.mrf.mxu0
    %v5221 = vadd.f32 %v5192, %v5220
    %5222 = vmatmul.bf16.gmra.mxu0 %v1153
    %v5223 = vpop.f32.mrf.mxu0
    %v5224 = vadd.f32 %v5195, %v5223
    %v5225 = vpop.f32.mrf.mxu0
    %v5226 = vadd.f32 %v5197, %v5225
    %5227 = vmatmul.bf16.gmra.mxu0 %v1175
    %v5228 = vpop.f32.mrf.mxu0
    %v5229 = vadd.f32 %v5200, %v5228
    %v5230 = vpop.f32.mrf.mxu0
    %v5231 = vadd.f32 %v5202, %v5230
    %5232 = vmatmul.bf16.gmra.mxu0 %v1197
    %v5233 = vpop.f32.mrf.mxu0
    %v5234 = vadd.f32 %v5205, %v5233
    %v5235 = vpop.f32.mrf.mxu0
    %v5236 = vadd.f32 %v5207, %v5235
    %5237 = vdwg.mxu0
    %5238 = vmatpush.bf16.msra.mxu0 %v3481
    %5239 = vmatpush.bf16.msra.mxu0 %v3478
    %5240 = vmatpush.bf16.msra.mxu0 %v3475
    %5241 = vmatpush.bf16.msra.mxu0 %v3472
    %5242 = vmatpush.bf16.msra.mxu0 %v3469
    %5243 = vmatpush.bf16.msra.mxu0 %v3466
    %5244 = vmatpush.bf16.msra.mxu0 %v3463
    %5245 = vmatpush.bf16.msra.mxu0 %v3460
    %5246 = vmatmul.bf16.gmra.mxu0 %v1132
    %v5247 = vpop.f32.mrf.mxu0
    %v5248 = vadd.f32 %v5219, %v5247
    %v5249 = vpop.f32.mrf.mxu0
    %v5250 = vadd.f32 %v5221, %v5249
    %5251 = vmatmul.bf16.gmra.mxu0 %v1154
    %v5252 = vpop.f32.mrf.mxu0
    %v5253 = vadd.f32 %v5224, %v5252
    %v5254 = vpop.f32.mrf.mxu0
    %v5255 = vadd.f32 %v5226, %v5254
    %5256 = vmatmul.bf16.gmra.mxu0 %v1176
    %v5257 = vpop.f32.mrf.mxu0
    %v5258 = vadd.f32 %v5229, %v5257
    %v5259 = vpop.f32.mrf.mxu0
    %v5260 = vadd.f32 %v5231, %v5259
    %5261 = vmatmul.bf16.gmra.mxu0 %v1198
    %v5262 = vpop.f32.mrf.mxu0
    %v5263 = vadd.f32 %v5234, %v5262
    %v5264 = vpop.f32.mrf.mxu0
    %v5265 = vadd.f32 %v5236, %v5264
    %5266 = vdwg.mxu0
    %5267 = vmatpush.bf16.msra.mxu0 %v3505
    %5268 = vmatpush.bf16.msra.mxu0 %v3502
    %5269 = vmatpush.bf16.msra.mxu0 %v3499
    %5270 = vmatpush.bf16.msra.mxu0 %v3496
    %5271 = vmatpush.bf16.msra.mxu0 %v3493
    %5272 = vmatpush.bf16.msra.mxu0 %v3490
    %5273 = vmatpush.bf16.msra.mxu0 %v3487
    %5274 = vmatpush.bf16.msra.mxu0 %v3484
    %5275 = vmatmul.bf16.gmra.mxu0 %v1133
    %v5276 = vpop.f32.mrf.mxu0
    %v5277 = vadd.f32 %v5248, %v5276
    %v5278 = vpop.f32.mrf.mxu0
    %v5279 = vadd.f32 %v5250, %v5278
    %5280 = vmatmul.bf16.gmra.mxu0 %v1155
    %v5281 = vpop.f32.mrf.mxu0
    %v5282 = vadd.f32 %v5253, %v5281
    %v5283 = vpop.f32.mrf.mxu0
    %v5284 = vadd.f32 %v5255, %v5283
    %5285 = vmatmul.bf16.gmra.mxu0 %v1177
    %v5286 = vpop.f32.mrf.mxu0
    %v5287 = vadd.f32 %v5258, %v5286
    %v5288 = vpop.f32.mrf.mxu0
    %v5289 = vadd.f32 %v5260, %v5288
    %5290 = vmatmul.bf16.gmra.mxu0 %v1199
    %v5291 = vpop.f32.mrf.mxu0
    %v5292 = vadd.f32 %v5263, %v5291
    %v5293 = vpop.f32.mrf.mxu0
    %v5294 = vadd.f32 %v5265, %v5293
    %5295 = vdwg.mxu0
    %5296 = vmatpush.bf16.msra.mxu0 %v3529
    %5297 = vmatpush.bf16.msra.mxu0 %v3526
    %5298 = vmatpush.bf16.msra.mxu0 %v3523
    %5299 = vmatpush.bf16.msra.mxu0 %v3520
    %5300 = vmatpush.bf16.msra.mxu0 %v3517
    %5301 = vmatpush.bf16.msra.mxu0 %v3514
    %5302 = vmatpush.bf16.msra.mxu0 %v3511
    %5303 = vmatpush.bf16.msra.mxu0 %v3508
    %5304 = vmatmul.bf16.gmra.mxu0 %v1134
    %v5305 = vpop.f32.mrf.mxu0
    %v5306 = vadd.f32 %v5277, %v5305
    %v5307 = vpop.f32.mrf.mxu0
    %v5308 = vadd.f32 %v5279, %v5307
    %5309 = vmatmul.bf16.gmra.mxu0 %v1156
    %v5310 = vpop.f32.mrf.mxu0
    %v5311 = vadd.f32 %v5282, %v5310
    %v5312 = vpop.f32.mrf.mxu0
    %v5313 = vadd.f32 %v5284, %v5312
    %5314 = vmatmul.bf16.gmra.mxu0 %v1178
    %v5315 = vpop.f32.mrf.mxu0
    %v5316 = vadd.f32 %v5287, %v5315
    %v5317 = vpop.f32.mrf.mxu0
    %v5318 = vadd.f32 %v5289, %v5317
    %5319 = vmatmul.bf16.gmra.mxu0 %v1200
    %v5320 = vpop.f32.mrf.mxu0
    %v5321 = vadd.f32 %v5292, %v5320
    %v5322 = vpop.f32.mrf.mxu0
    %v5323 = vadd.f32 %v5294, %v5322
    %5324 = vdwg.mxu0
    %5325 = vmatpush.bf16.msra.mxu0 %v3553
    %5326 = vmatpush.bf16.msra.mxu0 %v3550
    %5327 = vmatpush.bf16.msra.mxu0 %v3547
    %5328 = vmatpush.bf16.msra.mxu0 %v3544
    %5329 = vmatpush.bf16.msra.mxu0 %v3541
    %5330 = vmatpush.bf16.msra.mxu0 %v3538
    %5331 = vmatpush.bf16.msra.mxu0 %v3535
    %5332 = vmatpush.bf16.msra.mxu0 %v3532
    %5333 = vmatmul.bf16.gmra.mxu0 %v1135
    %v5334 = vpop.f32.mrf.mxu0
    %v5335 = vadd.f32 %v5306, %v5334
    %v5336 = vpop.f32.mrf.mxu0
    %v5337 = vadd.f32 %v5308, %v5336
    %5338 = vmatmul.bf16.gmra.mxu0 %v1157
    %v5339 = vpop.f32.mrf.mxu0
    %v5340 = vadd.f32 %v5311, %v5339
    %v5341 = vpop.f32.mrf.mxu0
    %v5342 = vadd.f32 %v5313, %v5341
    %5343 = vmatmul.bf16.gmra.mxu0 %v1179
    %v5344 = vpop.f32.mrf.mxu0
    %v5345 = vadd.f32 %v5316, %v5344
    %v5346 = vpop.f32.mrf.mxu0
    %v5347 = vadd.f32 %v5318, %v5346
    %5348 = vmatmul.bf16.gmra.mxu0 %v1201
    %v5349 = vpop.f32.mrf.mxu0
    %v5350 = vadd.f32 %v5321, %v5349
    %v5351 = vpop.f32.mrf.mxu0
    %v5352 = vadd.f32 %v5323, %v5351
    %5353 = vdwg.mxu0
    %5354 = vmatpush.bf16.msra.mxu0 %v3577
    %5355 = vmatpush.bf16.msra.mxu0 %v3574
    %5356 = vmatpush.bf16.msra.mxu0 %v3571
    %5357 = vmatpush.bf16.msra.mxu0 %v3568
    %5358 = vmatpush.bf16.msra.mxu0 %v3565
    %5359 = vmatpush.bf16.msra.mxu0 %v3562
    %5360 = vmatpush.bf16.msra.mxu0 %v3559
    %5361 = vmatpush.bf16.msra.mxu0 %v3556
    %5362 = vmatmul.bf16.gmra.mxu0 %v1136
    %v5363 = vpop.f32.mrf.mxu0
    %v5364 = vadd.f32 %v5335, %v5363
    %v5365 = vpop.f32.mrf.mxu0
    %v5366 = vadd.f32 %v5337, %v5365
    %5367 = vmatmul.bf16.gmra.mxu0 %v1158
    %v5368 = vpop.f32.mrf.mxu0
    %v5369 = vadd.f32 %v5340, %v5368
    %v5370 = vpop.f32.mrf.mxu0
    %v5371 = vadd.f32 %v5342, %v5370
    %5372 = vmatmul.bf16.gmra.mxu0 %v1180
    %v5373 = vpop.f32.mrf.mxu0
    %v5374 = vadd.f32 %v5345, %v5373
    %v5375 = vpop.f32.mrf.mxu0
    %v5376 = vadd.f32 %v5347, %v5375
    %5377 = vmatmul.bf16.gmra.mxu0 %v1202
    %v5378 = vpop.f32.mrf.mxu0
    %v5379 = vadd.f32 %v5350, %v5378
    %v5380 = vpop.f32.mrf.mxu0
    %v5381 = vadd.f32 %v5352, %v5380
    %5382 = vdwg.mxu0
    %5383 = vmatpush.bf16.msra.mxu0 %v3074
    %5384 = vmatpush.bf16.msra.mxu0 %v3071
    %5385 = vmatpush.bf16.msra.mxu0 %v3068
    %5386 = vmatpush.bf16.msra.mxu0 %v3065
    %5387 = vmatpush.bf16.msra.mxu0 %v3062
    %5388 = vmatpush.bf16.msra.mxu0 %v3059
    %5389 = vmatpush.bf16.msra.mxu0 %v3056
    %5390 = vmatpush.bf16.msra.mxu0 %v3053
    %5391 = vmatmul.bf16.gmra.mxu0 %v1115
    %v5392 = vpop.f32.mrf.mxu0
    %v5393 = vadd.f32 %v847, %v5392
    %v5394 = vpop.f32.mrf.mxu0
    %v5395 = vadd.f32 %v847, %v5394
    %5396 = vmatmul.bf16.gmra.mxu0 %v1137
    %v5397 = vpop.f32.mrf.mxu0
    %v5398 = vadd.f32 %v847, %v5397
    %v5399 = vpop.f32.mrf.mxu0
    %v5400 = vadd.f32 %v847, %v5399
    %5401 = vmatmul.bf16.gmra.mxu0 %v1159
    %v5402 = vpop.f32.mrf.mxu0
    %v5403 = vadd.f32 %v847, %v5402
    %v5404 = vpop.f32.mrf.mxu0
    %v5405 = vadd.f32 %v847, %v5404
    %5406 = vmatmul.bf16.gmra.mxu0 %v1181
    %v5407 = vpop.f32.mrf.mxu0
    %v5408 = vadd.f32 %v847, %v5407
    %v5409 = vpop.f32.mrf.mxu0
    %v5410 = vadd.f32 %v847, %v5409
    %5411 = vdwg.mxu0
    %5412 = vmatpush.bf16.msra.mxu0 %v3098
    %5413 = vmatpush.bf16.msra.mxu0 %v3095
    %5414 = vmatpush.bf16.msra.mxu0 %v3092
    %5415 = vmatpush.bf16.msra.mxu0 %v3089
    %5416 = vmatpush.bf16.msra.mxu0 %v3086
    %5417 = vmatpush.bf16.msra.mxu0 %v3083
    %5418 = vmatpush.bf16.msra.mxu0 %v3080
    %5419 = vmatpush.bf16.msra.mxu0 %v3077
    %5420 = vmatmul.bf16.gmra.mxu0 %v1116
    %v5421 = vpop.f32.mrf.mxu0
    %v5422 = vadd.f32 %v5393, %v5421
    %v5423 = vpop.f32.mrf.mxu0
    %v5424 = vadd.f32 %v5395, %v5423
    %5425 = vmatmul.bf16.gmra.mxu0 %v1138
    %v5426 = vpop.f32.mrf.mxu0
    %v5427 = vadd.f32 %v5398, %v5426
    %v5428 = vpop.f32.mrf.mxu0
    %v5429 = vadd.f32 %v5400, %v5428
    %5430 = vmatmul.bf16.gmra.mxu0 %v1160
    %v5431 = vpop.f32.mrf.mxu0
    %v5432 = vadd.f32 %v5403, %v5431
    %v5433 = vpop.f32.mrf.mxu0
    %v5434 = vadd.f32 %v5405, %v5433
    %5435 = vmatmul.bf16.gmra.mxu0 %v1182
    %v5436 = vpop.f32.mrf.mxu0
    %v5437 = vadd.f32 %v5408, %v5436
    %v5438 = vpop.f32.mrf.mxu0
    %v5439 = vadd.f32 %v5410, %v5438
    %5440 = vdwg.mxu0
    %5441 = vmatpush.bf16.msra.mxu0 %v3122
    %5442 = vmatpush.bf16.msra.mxu0 %v3119
    %5443 = vmatpush.bf16.msra.mxu0 %v3116
    %5444 = vmatpush.bf16.msra.mxu0 %v3113
    %5445 = vmatpush.bf16.msra.mxu0 %v3110
    %5446 = vmatpush.bf16.msra.mxu0 %v3107
    %5447 = vmatpush.bf16.msra.mxu0 %v3104
    %5448 = vmatpush.bf16.msra.mxu0 %v3101
    %5449 = vmatmul.bf16.gmra.mxu0 %v1117
    %v5450 = vpop.f32.mrf.mxu0
    %v5451 = vadd.f32 %v5422, %v5450
    %v5452 = vpop.f32.mrf.mxu0
    %v5453 = vadd.f32 %v5424, %v5452
    %5454 = vmatmul.bf16.gmra.mxu0 %v1139
    %v5455 = vpop.f32.mrf.mxu0
    %v5456 = vadd.f32 %v5427, %v5455
    %v5457 = vpop.f32.mrf.mxu0
    %v5458 = vadd.f32 %v5429, %v5457
    %5459 = vmatmul.bf16.gmra.mxu0 %v1161
    %v5460 = vpop.f32.mrf.mxu0
    %v5461 = vadd.f32 %v5432, %v5460
    %v5462 = vpop.f32.mrf.mxu0
    %v5463 = vadd.f32 %v5434, %v5462
    %5464 = vmatmul.bf16.gmra.mxu0 %v1183
    %v5465 = vpop.f32.mrf.mxu0
    %v5466 = vadd.f32 %v5437, %v5465
    %v5467 = vpop.f32.mrf.mxu0
    %v5468 = vadd.f32 %v5439, %v5467
    %5469 = vdwg.mxu0
    %5470 = vmatpush.bf16.msra.mxu0 %v3146
    %5471 = vmatpush.bf16.msra.mxu0 %v3143
    %5472 = vmatpush.bf16.msra.mxu0 %v3140
    %5473 = vmatpush.bf16.msra.mxu0 %v3137
    %5474 = vmatpush.bf16.msra.mxu0 %v3134
    %5475 = vmatpush.bf16.msra.mxu0 %v3131
    %5476 = vmatpush.bf16.msra.mxu0 %v3128
    %5477 = vmatpush.bf16.msra.mxu0 %v3125
    %5478 = vmatmul.bf16.gmra.mxu0 %v1118
    %v5479 = vpop.f32.mrf.mxu0
    %v5480 = vadd.f32 %v5451, %v5479
    %v5481 = vpop.f32.mrf.mxu0
    %v5482 = vadd.f32 %v5453, %v5481
    %5483 = vmatmul.bf16.gmra.mxu0 %v1140
    %v5484 = vpop.f32.mrf.mxu0
    %v5485 = vadd.f32 %v5456, %v5484
    %v5486 = vpop.f32.mrf.mxu0
    %v5487 = vadd.f32 %v5458, %v5486
    %5488 = vmatmul.bf16.gmra.mxu0 %v1162
    %v5489 = vpop.f32.mrf.mxu0
    %v5490 = vadd.f32 %v5461, %v5489
    %v5491 = vpop.f32.mrf.mxu0
    %v5492 = vadd.f32 %v5463, %v5491
    %5493 = vmatmul.bf16.gmra.mxu0 %v1184
    %v5494 = vpop.f32.mrf.mxu0
    %v5495 = vadd.f32 %v5466, %v5494
    %v5496 = vpop.f32.mrf.mxu0
    %v5497 = vadd.f32 %v5468, %v5496
    %5498 = vdwg.mxu0
    %5499 = vmatpush.bf16.msra.mxu0 %v3170
    %5500 = vmatpush.bf16.msra.mxu0 %v3167
    %5501 = vmatpush.bf16.msra.mxu0 %v3164
    %5502 = vmatpush.bf16.msra.mxu0 %v3161
    %5503 = vmatpush.bf16.msra.mxu0 %v3158
    %5504 = vmatpush.bf16.msra.mxu0 %v3155
    %5505 = vmatpush.bf16.msra.mxu0 %v3152
    %5506 = vmatpush.bf16.msra.mxu0 %v3149
    %5507 = vmatmul.bf16.gmra.mxu0 %v1119
    %v5508 = vpop.f32.mrf.mxu0
    %v5509 = vadd.f32 %v5480, %v5508
    %v5510 = vpop.f32.mrf.mxu0
    %v5511 = vadd.f32 %v5482, %v5510
    %5512 = vmatmul.bf16.gmra.mxu0 %v1141
    %v5513 = vpop.f32.mrf.mxu0
    %v5514 = vadd.f32 %v5485, %v5513
    %v5515 = vpop.f32.mrf.mxu0
    %v5516 = vadd.f32 %v5487, %v5515
    %5517 = vmatmul.bf16.gmra.mxu0 %v1163
    %v5518 = vpop.f32.mrf.mxu0
    %v5519 = vadd.f32 %v5490, %v5518
    %v5520 = vpop.f32.mrf.mxu0
    %v5521 = vadd.f32 %v5492, %v5520
    %5522 = vmatmul.bf16.gmra.mxu0 %v1185
    %v5523 = vpop.f32.mrf.mxu0
    %v5524 = vadd.f32 %v5495, %v5523
    %v5525 = vpop.f32.mrf.mxu0
    %v5526 = vadd.f32 %v5497, %v5525
    %5527 = vdwg.mxu0
    %5528 = vmatpush.bf16.msra.mxu0 %v3194
    %5529 = vmatpush.bf16.msra.mxu0 %v3191
    %5530 = vmatpush.bf16.msra.mxu0 %v3188
    %5531 = vmatpush.bf16.msra.mxu0 %v3185
    %5532 = vmatpush.bf16.msra.mxu0 %v3182
    %5533 = vmatpush.bf16.msra.mxu0 %v3179
    %5534 = vmatpush.bf16.msra.mxu0 %v3176
    %5535 = vmatpush.bf16.msra.mxu0 %v3173
    %5536 = vmatmul.bf16.gmra.mxu0 %v1120
    %v5537 = vpop.f32.mrf.mxu0
    %v5538 = vadd.f32 %v5509, %v5537
    %v5539 = vpop.f32.mrf.mxu0
    %v5540 = vadd.f32 %v5511, %v5539
    %5541 = vmatmul.bf16.gmra.mxu0 %v1142
    %v5542 = vpop.f32.mrf.mxu0
    %v5543 = vadd.f32 %v5514, %v5542
    %v5544 = vpop.f32.mrf.mxu0
    %v5545 = vadd.f32 %v5516, %v5544
    %5546 = vmatmul.bf16.gmra.mxu0 %v1164
    %v5547 = vpop.f32.mrf.mxu0
    %v5548 = vadd.f32 %v5519, %v5547
    %v5549 = vpop.f32.mrf.mxu0
    %v5550 = vadd.f32 %v5521, %v5549
    %5551 = vmatmul.bf16.gmra.mxu0 %v1186
    %v5552 = vpop.f32.mrf.mxu0
    %v5553 = vadd.f32 %v5524, %v5552
    %v5554 = vpop.f32.mrf.mxu0
    %v5555 = vadd.f32 %v5526, %v5554
    %5556 = vdwg.mxu0
    %5557 = vmatpush.bf16.msra.mxu0 %v3218
    %5558 = vmatpush.bf16.msra.mxu0 %v3215
    %5559 = vmatpush.bf16.msra.mxu0 %v3212
    %5560 = vmatpush.bf16.msra.mxu0 %v3209
    %5561 = vmatpush.bf16.msra.mxu0 %v3206
    %5562 = vmatpush.bf16.msra.mxu0 %v3203
    %5563 = vmatpush.bf16.msra.mxu0 %v3200
    %5564 = vmatpush.bf16.msra.mxu0 %v3197
    %5565 = vmatmul.bf16.gmra.mxu0 %v1121
    %v5566 = vpop.f32.mrf.mxu0
    %v5567 = vadd.f32 %v5538, %v5566
    %v5568 = vpop.f32.mrf.mxu0
    %v5569 = vadd.f32 %v5540, %v5568
    %5570 = vmatmul.bf16.gmra.mxu0 %v1143
    %v5571 = vpop.f32.mrf.mxu0
    %v5572 = vadd.f32 %v5543, %v5571
    %v5573 = vpop.f32.mrf.mxu0
    %v5574 = vadd.f32 %v5545, %v5573
    %5575 = vmatmul.bf16.gmra.mxu0 %v1165
    %v5576 = vpop.f32.mrf.mxu0
    %v5577 = vadd.f32 %v5548, %v5576
    %v5578 = vpop.f32.mrf.mxu0
    %v5579 = vadd.f32 %v5550, %v5578
    %5580 = vmatmul.bf16.gmra.mxu0 %v1187
    %v5581 = vpop.f32.mrf.mxu0
    %v5582 = vadd.f32 %v5553, %v5581
    %v5583 = vpop.f32.mrf.mxu0
    %v5584 = vadd.f32 %v5555, %v5583
    %5585 = vdwg.mxu0
    %5586 = vmatpush.bf16.msra.mxu0 %v3242
    %5587 = vmatpush.bf16.msra.mxu0 %v3239
    %5588 = vmatpush.bf16.msra.mxu0 %v3236
    %5589 = vmatpush.bf16.msra.mxu0 %v3233
    %5590 = vmatpush.bf16.msra.mxu0 %v3230
    %5591 = vmatpush.bf16.msra.mxu0 %v3227
    %5592 = vmatpush.bf16.msra.mxu0 %v3224
    %5593 = vmatpush.bf16.msra.mxu0 %v3221
    %5594 = vmatmul.bf16.gmra.mxu0 %v1122
    %v5595 = vpop.f32.mrf.mxu0
    %v5596 = vadd.f32 %v5567, %v5595
    %v5597 = vpop.f32.mrf.mxu0
    %v5598 = vadd.f32 %v5569, %v5597
    %5599 = vmatmul.bf16.gmra.mxu0 %v1144
    %v5600 = vpop.f32.mrf.mxu0
    %v5601 = vadd.f32 %v5572, %v5600
    %v5602 = vpop.f32.mrf.mxu0
    %v5603 = vadd.f32 %v5574, %v5602
    %5604 = vmatmul.bf16.gmra.mxu0 %v1166
    %v5605 = vpop.f32.mrf.mxu0
    %v5606 = vadd.f32 %v5577, %v5605
    %v5607 = vpop.f32.mrf.mxu0
    %v5608 = vadd.f32 %v5579, %v5607
    %5609 = vmatmul.bf16.gmra.mxu0 %v1188
    %v5610 = vpop.f32.mrf.mxu0
    %v5611 = vadd.f32 %v5582, %v5610
    %v5612 = vpop.f32.mrf.mxu0
    %v5613 = vadd.f32 %v5584, %v5612
    %5614 = vdwg.mxu0
    %5615 = vmatpush.bf16.msra.mxu0 %v3266
    %5616 = vmatpush.bf16.msra.mxu0 %v3263
    %5617 = vmatpush.bf16.msra.mxu0 %v3260
    %5618 = vmatpush.bf16.msra.mxu0 %v3257
    %5619 = vmatpush.bf16.msra.mxu0 %v3254
    %5620 = vmatpush.bf16.msra.mxu0 %v3251
    %5621 = vmatpush.bf16.msra.mxu0 %v3248
    %5622 = vmatpush.bf16.msra.mxu0 %v3245
    %5623 = vmatmul.bf16.gmra.mxu0 %v1123
    %v5624 = vpop.f32.mrf.mxu0
    %v5625 = vadd.f32 %v5596, %v5624
    %v5626 = vpop.f32.mrf.mxu0
    %v5627 = vadd.f32 %v5598, %v5626
    %5628 = vmatmul.bf16.gmra.mxu0 %v1145
    %v5629 = vpop.f32.mrf.mxu0
    %v5630 = vadd.f32 %v5601, %v5629
    %v5631 = vpop.f32.mrf.mxu0
    %v5632 = vadd.f32 %v5603, %v5631
    %5633 = vmatmul.bf16.gmra.mxu0 %v1167
    %v5634 = vpop.f32.mrf.mxu0
    %v5635 = vadd.f32 %v5606, %v5634
    %v5636 = vpop.f32.mrf.mxu0
    %v5637 = vadd.f32 %v5608, %v5636
    %5638 = vmatmul.bf16.gmra.mxu0 %v1189
    %v5639 = vpop.f32.mrf.mxu0
    %v5640 = vadd.f32 %v5611, %v5639
    %v5641 = vpop.f32.mrf.mxu0
    %v5642 = vadd.f32 %v5613, %v5641
    %5643 = vdwg.mxu0
    %5644 = vmatpush.bf16.msra.mxu0 %v3290
    %5645 = vmatpush.bf16.msra.mxu0 %v3287
    %5646 = vmatpush.bf16.msra.mxu0 %v3284
    %5647 = vmatpush.bf16.msra.mxu0 %v3281
    %5648 = vmatpush.bf16.msra.mxu0 %v3278
    %5649 = vmatpush.bf16.msra.mxu0 %v3275
    %5650 = vmatpush.bf16.msra.mxu0 %v3272
    %5651 = vmatpush.bf16.msra.mxu0 %v3269
    %5652 = vmatmul.bf16.gmra.mxu0 %v1124
    %v5653 = vpop.f32.mrf.mxu0
    %v5654 = vadd.f32 %v5625, %v5653
    %v5655 = vpop.f32.mrf.mxu0
    %v5656 = vadd.f32 %v5627, %v5655
    %5657 = vmatmul.bf16.gmra.mxu0 %v1146
    %v5658 = vpop.f32.mrf.mxu0
    %v5659 = vadd.f32 %v5630, %v5658
    %v5660 = vpop.f32.mrf.mxu0
    %v5661 = vadd.f32 %v5632, %v5660
    %5662 = vmatmul.bf16.gmra.mxu0 %v1168
    %v5663 = vpop.f32.mrf.mxu0
    %v5664 = vadd.f32 %v5635, %v5663
    %v5665 = vpop.f32.mrf.mxu0
    %v5666 = vadd.f32 %v5637, %v5665
    %5667 = vmatmul.bf16.gmra.mxu0 %v1190
    %v5668 = vpop.f32.mrf.mxu0
    %v5669 = vadd.f32 %v5640, %v5668
    %v5670 = vpop.f32.mrf.mxu0
    %v5671 = vadd.f32 %v5642, %v5670
    %5672 = vdwg.mxu0
    %5673 = vmatpush.bf16.msra.mxu0 %v3314
    %5674 = vmatpush.bf16.msra.mxu0 %v3311
    %5675 = vmatpush.bf16.msra.mxu0 %v3308
    %5676 = vmatpush.bf16.msra.mxu0 %v3305
    %5677 = vmatpush.bf16.msra.mxu0 %v3302
    %5678 = vmatpush.bf16.msra.mxu0 %v3299
    %5679 = vmatpush.bf16.msra.mxu0 %v3296
    %5680 = vmatpush.bf16.msra.mxu0 %v3293
    %5681 = vmatmul.bf16.gmra.mxu0 %v1125
    %v5682 = vpop.f32.mrf.mxu0
    %v5683 = vadd.f32 %v5654, %v5682
    %v5684 = vpop.f32.mrf.mxu0
    %v5685 = vadd.f32 %v5656, %v5684
    %5686 = vmatmul.bf16.gmra.mxu0 %v1147
    %v5687 = vpop.f32.mrf.mxu0
    %v5688 = vadd.f32 %v5659, %v5687
    %v5689 = vpop.f32.mrf.mxu0
    %v5690 = vadd.f32 %v5661, %v5689
    %5691 = vmatmul.bf16.gmra.mxu0 %v1169
    %v5692 = vpop.f32.mrf.mxu0
    %v5693 = vadd.f32 %v5664, %v5692
    %v5694 = vpop.f32.mrf.mxu0
    %v5695 = vadd.f32 %v5666, %v5694
    %5696 = vmatmul.bf16.gmra.mxu0 %v1191
    %v5697 = vpop.f32.mrf.mxu0
    %v5698 = vadd.f32 %v5669, %v5697
    %v5699 = vpop.f32.mrf.mxu0
    %v5700 = vadd.f32 %v5671, %v5699
    %5701 = vdwg.mxu0
    %5702 = vmatpush.bf16.msra.mxu0 %v3338
    %5703 = vmatpush.bf16.msra.mxu0 %v3335
    %5704 = vmatpush.bf16.msra.mxu0 %v3332
    %5705 = vmatpush.bf16.msra.mxu0 %v3329
    %5706 = vmatpush.bf16.msra.mxu0 %v3326
    %5707 = vmatpush.bf16.msra.mxu0 %v3323
    %5708 = vmatpush.bf16.msra.mxu0 %v3320
    %5709 = vmatpush.bf16.msra.mxu0 %v3317
    %5710 = vmatmul.bf16.gmra.mxu0 %v1126
    %v5711 = vpop.f32.mrf.mxu0
    %v5712 = vadd.f32 %v5683, %v5711
    %v5713 = vpop.f32.mrf.mxu0
    %v5714 = vadd.f32 %v5685, %v5713
    %5715 = vmatmul.bf16.gmra.mxu0 %v1148
    %v5716 = vpop.f32.mrf.mxu0
    %v5717 = vadd.f32 %v5688, %v5716
    %v5718 = vpop.f32.mrf.mxu0
    %v5719 = vadd.f32 %v5690, %v5718
    %5720 = vmatmul.bf16.gmra.mxu0 %v1170
    %v5721 = vpop.f32.mrf.mxu0
    %v5722 = vadd.f32 %v5693, %v5721
    %v5723 = vpop.f32.mrf.mxu0
    %v5724 = vadd.f32 %v5695, %v5723
    %5725 = vmatmul.bf16.gmra.mxu0 %v1192
    %v5726 = vpop.f32.mrf.mxu0
    %v5727 = vadd.f32 %v5698, %v5726
    %v5728 = vpop.f32.mrf.mxu0
    %v5729 = vadd.f32 %v5700, %v5728
    %5730 = vdwg.mxu0
    %5731 = vmatpush.bf16.msra.mxu0 %v3362
    %5732 = vmatpush.bf16.msra.mxu0 %v3359
    %5733 = vmatpush.bf16.msra.mxu0 %v3356
    %5734 = vmatpush.bf16.msra.mxu0 %v3353
    %5735 = vmatpush.bf16.msra.mxu0 %v3350
    %5736 = vmatpush.bf16.msra.mxu0 %v3347
    %5737 = vmatpush.bf16.msra.mxu0 %v3344
    %5738 = vmatpush.bf16.msra.mxu0 %v3341
    %5739 = vmatmul.bf16.gmra.mxu0 %v1127
    %v5740 = vpop.f32.mrf.mxu0
    %v5741 = vadd.f32 %v5712, %v5740
    %v5742 = vpop.f32.mrf.mxu0
    %v5743 = vadd.f32 %v5714, %v5742
    %5744 = vmatmul.bf16.gmra.mxu0 %v1149
    %v5745 = vpop.f32.mrf.mxu0
    %v5746 = vadd.f32 %v5717, %v5745
    %v5747 = vpop.f32.mrf.mxu0
    %v5748 = vadd.f32 %v5719, %v5747
    %5749 = vmatmul.bf16.gmra.mxu0 %v1171
    %v5750 = vpop.f32.mrf.mxu0
    %v5751 = vadd.f32 %v5722, %v5750
    %v5752 = vpop.f32.mrf.mxu0
    %v5753 = vadd.f32 %v5724, %v5752
    %5754 = vmatmul.bf16.gmra.mxu0 %v1193
    %v5755 = vpop.f32.mrf.mxu0
    %v5756 = vadd.f32 %v5727, %v5755
    %v5757 = vpop.f32.mrf.mxu0
    %v5758 = vadd.f32 %v5729, %v5757
    %5759 = vdwg.mxu0
    %5760 = vmatpush.bf16.msra.mxu0 %v3386
    %5761 = vmatpush.bf16.msra.mxu0 %v3383
    %5762 = vmatpush.bf16.msra.mxu0 %v3380
    %5763 = vmatpush.bf16.msra.mxu0 %v3377
    %5764 = vmatpush.bf16.msra.mxu0 %v3374
    %5765 = vmatpush.bf16.msra.mxu0 %v3371
    %5766 = vmatpush.bf16.msra.mxu0 %v3368
    %5767 = vmatpush.bf16.msra.mxu0 %v3365
    %5768 = vmatmul.bf16.gmra.mxu0 %v1128
    %v5769 = vpop.f32.mrf.mxu0
    %v5770 = vadd.f32 %v5741, %v5769
    %v5771 = vpop.f32.mrf.mxu0
    %v5772 = vadd.f32 %v5743, %v5771
    %5773 = vmatmul.bf16.gmra.mxu0 %v1150
    %v5774 = vpop.f32.mrf.mxu0
    %v5775 = vadd.f32 %v5746, %v5774
    %v5776 = vpop.f32.mrf.mxu0
    %v5777 = vadd.f32 %v5748, %v5776
    %5778 = vmatmul.bf16.gmra.mxu0 %v1172
    %v5779 = vpop.f32.mrf.mxu0
    %v5780 = vadd.f32 %v5751, %v5779
    %v5781 = vpop.f32.mrf.mxu0
    %v5782 = vadd.f32 %v5753, %v5781
    %5783 = vmatmul.bf16.gmra.mxu0 %v1194
    %v5784 = vpop.f32.mrf.mxu0
    %v5785 = vadd.f32 %v5756, %v5784
    %v5786 = vpop.f32.mrf.mxu0
    %v5787 = vadd.f32 %v5758, %v5786
    %5788 = vdwg.mxu0
    %5789 = vmatpush.bf16.msra.mxu0 %v3410
    %5790 = vmatpush.bf16.msra.mxu0 %v3407
    %5791 = vmatpush.bf16.msra.mxu0 %v3404
    %5792 = vmatpush.bf16.msra.mxu0 %v3401
    %5793 = vmatpush.bf16.msra.mxu0 %v3398
    %5794 = vmatpush.bf16.msra.mxu0 %v3395
    %5795 = vmatpush.bf16.msra.mxu0 %v3392
    %5796 = vmatpush.bf16.msra.mxu0 %v3389
    %5797 = vmatmul.bf16.gmra.mxu0 %v1129
    %v5798 = vpop.f32.mrf.mxu0
    %v5799 = vadd.f32 %v5770, %v5798
    %v5800 = vpop.f32.mrf.mxu0
    %v5801 = vadd.f32 %v5772, %v5800
    %5802 = vmatmul.bf16.gmra.mxu0 %v1151
    %v5803 = vpop.f32.mrf.mxu0
    %v5804 = vadd.f32 %v5775, %v5803
    %v5805 = vpop.f32.mrf.mxu0
    %v5806 = vadd.f32 %v5777, %v5805
    %5807 = vmatmul.bf16.gmra.mxu0 %v1173
    %v5808 = vpop.f32.mrf.mxu0
    %v5809 = vadd.f32 %v5780, %v5808
    %v5810 = vpop.f32.mrf.mxu0
    %v5811 = vadd.f32 %v5782, %v5810
    %5812 = vmatmul.bf16.gmra.mxu0 %v1195
    %v5813 = vpop.f32.mrf.mxu0
    %v5814 = vadd.f32 %v5785, %v5813
    %v5815 = vpop.f32.mrf.mxu0
    %v5816 = vadd.f32 %v5787, %v5815
    %5817 = vdwg.mxu0
    %5818 = vmatpush.bf16.msra.mxu0 %v3434
    %5819 = vmatpush.bf16.msra.mxu0 %v3431
    %5820 = vmatpush.bf16.msra.mxu0 %v3428
    %5821 = vmatpush.bf16.msra.mxu0 %v3425
    %5822 = vmatpush.bf16.msra.mxu0 %v3422
    %5823 = vmatpush.bf16.msra.mxu0 %v3419
    %5824 = vmatpush.bf16.msra.mxu0 %v3416
    %5825 = vmatpush.bf16.msra.mxu0 %v3413
    %5826 = vmatmul.bf16.gmra.mxu0 %v1130
    %v5827 = vpop.f32.mrf.mxu0
    %v5828 = vadd.f32 %v5799, %v5827
    %v5829 = vpop.f32.mrf.mxu0
    %v5830 = vadd.f32 %v5801, %v5829
    %5831 = vmatmul.bf16.gmra.mxu0 %v1152
    %v5832 = vpop.f32.mrf.mxu0
    %v5833 = vadd.f32 %v5804, %v5832
    %v5834 = vpop.f32.mrf.mxu0
    %v5835 = vadd.f32 %v5806, %v5834
    %5836 = vmatmul.bf16.gmra.mxu0 %v1174
    %v5837 = vpop.f32.mrf.mxu0
    %v5838 = vadd.f32 %v5809, %v5837
    %v5839 = vpop.f32.mrf.mxu0
    %v5840 = vadd.f32 %v5811, %v5839
    %5841 = vmatmul.bf16.gmra.mxu0 %v1196
    %v5842 = vpop.f32.mrf.mxu0
    %v5843 = vadd.f32 %v5814, %v5842
    %v5844 = vpop.f32.mrf.mxu0
    %v5845 = vadd.f32 %v5816, %v5844
    %5846 = vdwg.mxu0
    %5847 = vmatpush.bf16.msra.mxu0 %v3458
    %5848 = vmatpush.bf16.msra.mxu0 %v3455
    %5849 = vmatpush.bf16.msra.mxu0 %v3452
    %5850 = vmatpush.bf16.msra.mxu0 %v3449
    %5851 = vmatpush.bf16.msra.mxu0 %v3446
    %5852 = vmatpush.bf16.msra.mxu0 %v3443
    %5853 = vmatpush.bf16.msra.mxu0 %v3440
    %5854 = vmatpush.bf16.msra.mxu0 %v3437
    %5855 = vmatmul.bf16.gmra.mxu0 %v1131
    %v5856 = vpop.f32.mrf.mxu0
    %v5857 = vadd.f32 %v5828, %v5856
    %v5858 = vpop.f32.mrf.mxu0
    %v5859 = vadd.f32 %v5830, %v5858
    %5860 = vmatmul.bf16.gmra.mxu0 %v1153
    %v5861 = vpop.f32.mrf.mxu0
    %v5862 = vadd.f32 %v5833, %v5861
    %v5863 = vpop.f32.mrf.mxu0
    %v5864 = vadd.f32 %v5835, %v5863
    %5865 = vmatmul.bf16.gmra.mxu0 %v1175
    %v5866 = vpop.f32.mrf.mxu0
    %v5867 = vadd.f32 %v5838, %v5866
    %v5868 = vpop.f32.mrf.mxu0
    %v5869 = vadd.f32 %v5840, %v5868
    %5870 = vmatmul.bf16.gmra.mxu0 %v1197
    %v5871 = vpop.f32.mrf.mxu0
    %v5872 = vadd.f32 %v5843, %v5871
    %v5873 = vpop.f32.mrf.mxu0
    %v5874 = vadd.f32 %v5845, %v5873
    %5875 = vdwg.mxu0
    %5876 = vmatpush.bf16.msra.mxu0 %v3482
    %5877 = vmatpush.bf16.msra.mxu0 %v3479
    %5878 = vmatpush.bf16.msra.mxu0 %v3476
    %5879 = vmatpush.bf16.msra.mxu0 %v3473
    %5880 = vmatpush.bf16.msra.mxu0 %v3470
    %5881 = vmatpush.bf16.msra.mxu0 %v3467
    %5882 = vmatpush.bf16.msra.mxu0 %v3464
    %5883 = vmatpush.bf16.msra.mxu0 %v3461
    %5884 = vmatmul.bf16.gmra.mxu0 %v1132
    %v5885 = vpop.f32.mrf.mxu0
    %v5886 = vadd.f32 %v5857, %v5885
    %v5887 = vpop.f32.mrf.mxu0
    %v5888 = vadd.f32 %v5859, %v5887
    %5889 = vmatmul.bf16.gmra.mxu0 %v1154
    %v5890 = vpop.f32.mrf.mxu0
    %v5891 = vadd.f32 %v5862, %v5890
    %v5892 = vpop.f32.mrf.mxu0
    %v5893 = vadd.f32 %v5864, %v5892
    %5894 = vmatmul.bf16.gmra.mxu0 %v1176
    %v5895 = vpop.f32.mrf.mxu0
    %v5896 = vadd.f32 %v5867, %v5895
    %v5897 = vpop.f32.mrf.mxu0
    %v5898 = vadd.f32 %v5869, %v5897
    %5899 = vmatmul.bf16.gmra.mxu0 %v1198
    %v5900 = vpop.f32.mrf.mxu0
    %v5901 = vadd.f32 %v5872, %v5900
    %v5902 = vpop.f32.mrf.mxu0
    %v5903 = vadd.f32 %v5874, %v5902
    %5904 = vdwg.mxu0
    %5905 = vmatpush.bf16.msra.mxu0 %v3506
    %5906 = vmatpush.bf16.msra.mxu0 %v3503
    %5907 = vmatpush.bf16.msra.mxu0 %v3500
    %5908 = vmatpush.bf16.msra.mxu0 %v3497
    %5909 = vmatpush.bf16.msra.mxu0 %v3494
    %5910 = vmatpush.bf16.msra.mxu0 %v3491
    %5911 = vmatpush.bf16.msra.mxu0 %v3488
    %5912 = vmatpush.bf16.msra.mxu0 %v3485
    %5913 = vmatmul.bf16.gmra.mxu0 %v1133
    %v5914 = vpop.f32.mrf.mxu0
    %v5915 = vadd.f32 %v5886, %v5914
    %v5916 = vpop.f32.mrf.mxu0
    %v5917 = vadd.f32 %v5888, %v5916
    %5918 = vmatmul.bf16.gmra.mxu0 %v1155
    %v5919 = vpop.f32.mrf.mxu0
    %v5920 = vadd.f32 %v5891, %v5919
    %v5921 = vpop.f32.mrf.mxu0
    %v5922 = vadd.f32 %v5893, %v5921
    %5923 = vmatmul.bf16.gmra.mxu0 %v1177
    %v5924 = vpop.f32.mrf.mxu0
    %v5925 = vadd.f32 %v5896, %v5924
    %v5926 = vpop.f32.mrf.mxu0
    %v5927 = vadd.f32 %v5898, %v5926
    %5928 = vmatmul.bf16.gmra.mxu0 %v1199
    %v5929 = vpop.f32.mrf.mxu0
    %v5930 = vadd.f32 %v5901, %v5929
    %v5931 = vpop.f32.mrf.mxu0
    %v5932 = vadd.f32 %v5903, %v5931
    %5933 = vdwg.mxu0
    %5934 = vmatpush.bf16.msra.mxu0 %v3530
    %5935 = vmatpush.bf16.msra.mxu0 %v3527
    %5936 = vmatpush.bf16.msra.mxu0 %v3524
    %5937 = vmatpush.bf16.msra.mxu0 %v3521
    %5938 = vmatpush.bf16.msra.mxu0 %v3518
    %5939 = vmatpush.bf16.msra.mxu0 %v3515
    %5940 = vmatpush.bf16.msra.mxu0 %v3512
    %5941 = vmatpush.bf16.msra.mxu0 %v3509
    %5942 = vmatmul.bf16.gmra.mxu0 %v1134
    %v5943 = vpop.f32.mrf.mxu0
    %v5944 = vadd.f32 %v5915, %v5943
    %v5945 = vpop.f32.mrf.mxu0
    %v5946 = vadd.f32 %v5917, %v5945
    %5947 = vmatmul.bf16.gmra.mxu0 %v1156
    %v5948 = vpop.f32.mrf.mxu0
    %v5949 = vadd.f32 %v5920, %v5948
    %v5950 = vpop.f32.mrf.mxu0
    %v5951 = vadd.f32 %v5922, %v5950
    %5952 = vmatmul.bf16.gmra.mxu0 %v1178
    %v5953 = vpop.f32.mrf.mxu0
    %v5954 = vadd.f32 %v5925, %v5953
    %v5955 = vpop.f32.mrf.mxu0
    %v5956 = vadd.f32 %v5927, %v5955
    %5957 = vmatmul.bf16.gmra.mxu0 %v1200
    %v5958 = vpop.f32.mrf.mxu0
    %v5959 = vadd.f32 %v5930, %v5958
    %v5960 = vpop.f32.mrf.mxu0
    %v5961 = vadd.f32 %v5932, %v5960
    %5962 = vdwg.mxu0
    %5963 = vmatpush.bf16.msra.mxu0 %v3554
    %5964 = vmatpush.bf16.msra.mxu0 %v3551
    %5965 = vmatpush.bf16.msra.mxu0 %v3548
    %5966 = vmatpush.bf16.msra.mxu0 %v3545
    %5967 = vmatpush.bf16.msra.mxu0 %v3542
    %5968 = vmatpush.bf16.msra.mxu0 %v3539
    %5969 = vmatpush.bf16.msra.mxu0 %v3536
    %5970 = vmatpush.bf16.msra.mxu0 %v3533
    %5971 = vmatmul.bf16.gmra.mxu0 %v1135
    %v5972 = vpop.f32.mrf.mxu0
    %v5973 = vadd.f32 %v5944, %v5972
    %v5974 = vpop.f32.mrf.mxu0
    %v5975 = vadd.f32 %v5946, %v5974
    %5976 = vmatmul.bf16.gmra.mxu0 %v1157
    %v5977 = vpop.f32.mrf.mxu0
    %v5978 = vadd.f32 %v5949, %v5977
    %v5979 = vpop.f32.mrf.mxu0
    %v5980 = vadd.f32 %v5951, %v5979
    %5981 = vmatmul.bf16.gmra.mxu0 %v1179
    %v5982 = vpop.f32.mrf.mxu0
    %v5983 = vadd.f32 %v5954, %v5982
    %v5984 = vpop.f32.mrf.mxu0
    %v5985 = vadd.f32 %v5956, %v5984
    %5986 = vmatmul.bf16.gmra.mxu0 %v1201
    %v5987 = vpop.f32.mrf.mxu0
    %v5988 = vadd.f32 %v5959, %v5987
    %v5989 = vpop.f32.mrf.mxu0
    %v5990 = vadd.f32 %v5961, %v5989
    %5991 = vdwg.mxu0
    %5992 = vmatpush.bf16.msra.mxu0 %v3578
    %5993 = vmatpush.bf16.msra.mxu0 %v3575
    %5994 = vmatpush.bf16.msra.mxu0 %v3572
    %5995 = vmatpush.bf16.msra.mxu0 %v3569
    %5996 = vmatpush.bf16.msra.mxu0 %v3566
    %5997 = vmatpush.bf16.msra.mxu0 %v3563
    %5998 = vmatpush.bf16.msra.mxu0 %v3560
    %5999 = vmatpush.bf16.msra.mxu0 %v3557
    %6000 = vmatmul.bf16.gmra.mxu0 %v1136
    %v6001 = vpop.f32.mrf.mxu0
    %v6002 = vadd.f32 %v5973, %v6001
    %v6003 = vpop.f32.mrf.mxu0
    %v6004 = vadd.f32 %v5975, %v6003
    %6005 = vmatmul.bf16.gmra.mxu0 %v1158
    %v6006 = vpop.f32.mrf.mxu0
    %v6007 = vadd.f32 %v5978, %v6006
    %v6008 = vpop.f32.mrf.mxu0
    %v6009 = vadd.f32 %v5980, %v6008
    %6010 = vmatmul.bf16.gmra.mxu0 %v1180
    %v6011 = vpop.f32.mrf.mxu0
    %v6012 = vadd.f32 %v5983, %v6011
    %v6013 = vpop.f32.mrf.mxu0
    %v6014 = vadd.f32 %v5985, %v6013
    %6015 = vmatmul.bf16.gmra.mxu0 %v1202
    %v6016 = vpop.f32.mrf.mxu0
    %v6017 = vadd.f32 %v5988, %v6016
    %v6018 = vpop.f32.mrf.mxu0
    %v6019 = vadd.f32 %v5990, %v6018
    %6020 = vdwg.mxu0
    %v6021 = vmax.f32 %v4726, 0.0
    %v6022 = vmax.f32 %v5364, 0.0
    %v6023 = vmax.f32 %v6002, 0.0
    %v6024 = vmax.f32 %v4728, 0.0
    %v6025 = vmax.f32 %v5366, 0.0
    %v6026 = vmax.f32 %v6004, 0.0
    %v6027 = vmax.f32 %v4731, 0.0
    %v6028 = vmax.f32 %v5369, 0.0
    %v6029 = vmax.f32 %v6007, 0.0
    %v6030 = vmax.f32 %v4733, 0.0
    %v6031 = vmax.f32 %v5371, 0.0
    %v6032 = vmax.f32 %v6009, 0.0
    %v6033 = vmax.f32 %v4736, 0.0
    %v6034 = vmax.f32 %v5374, 0.0
    %v6035 = vmax.f32 %v6012, 0.0
    %v6036 = vmax.f32 %v4738, 0.0
    %v6037 = vmax.f32 %v5376, 0.0
    %v6038 = vmax.f32 %v6014, 0.0
    %v6039 = vmax.f32 %v4741, 0.0
    %v6040 = vmax.f32 %v5379, 0.0
    %v6041 = vmax.f32 %v6017, 0.0
    %v6042 = vmax.f32 %v4743, 0.0
    %v6043 = vmax.f32 %v5381, 0.0
    %v6044 = vmax.f32 %v6019, 0.0
    %v6045 = vmax.f32 %v6021, %v6022
    %v6046 = vmax.f32 %v6024, %v6025
    %v6047 = vmax.f32 %v6027, %v6028
    %v6048 = vmax.f32 %v6030, %v6031
    %v6049 = vmax.f32 %v6033, %v6034
    %v6050 = vmax.f32 %v6036, %v6037
    %v6051 = vmax.f32 %v6039, %v6040
    %v6052 = vmax.f32 %v6042, %v6043
    %v6053 = vmax.f32 %v6045, %v6023
    %v6054 = vmax.f32 %v6046, %v6026
    %v6055 = vmax.f32 %v6047, %v6029
    %v6056 = vmax.f32 %v6048, %v6032
    %v6057 = vmax.f32 %v6049, %v6035
    %v6058 = vmax.f32 %v6050, %v6038
    %v6059 = vmax.f32 %v6051, %v6041
    %v6060 = vmax.f32 %v6052, %v6044
    %vm6069 = vcmask 1046528
    %v6070 = vrot.slane %v6053, 1
    %v6071 = vrot.slane %v6054, 1
    %v6072 = vsel %vm6069, %v6070, %v6071
    %v6073 = vrot.slane %v6055, 1
    %v6074 = vrot.slane %v6056, 1
    %v6075 = vsel %vm6069, %v6073, %v6074
    %v6076 = vrot.slane %v6057, 1
    %v6077 = vrot.slane %v6058, 1
    %v6078 = vsel %vm6069, %v6076, %v6077
    %v6079 = vrot.slane %v6059, 1
    %v6080 = vrot.slane %v6060, 1
    %v6081 = vsel %vm6069, %v6079, %v6080
    %v6090 = vmax.f32 %v6053, %v6072
    %v6091 = vmax.f32 %v6054, %v6071
    %v6092 = vmax.f32 %v6055, %v6075
    %v6093 = vmax.f32 %v6056, %v6074
    %v6094 = vmax.f32 %v6057, %v6078
    %v6095 = vmax.f32 %v6058, %v6077
    %v6096 = vmax.f32 %v6059, %v6081
    %v6097 = vmax.f32 %v6060, %v6080
    %vm6098 = vcmask 1045504
    %v6099 = vrot.slane %v6053, 2
    %v6100 = vrot.slane %v6054, 2
    %v6101 = vsel %vm6098, %v6099, %v6100
    %v6102 = vrot.slane %v6055, 2
    %v6103 = vrot.slane %v6056, 2
    %v6104 = vsel %vm6098, %v6102, %v6103
    %v6105 = vrot.slane %v6057, 2
    %v6106 = vrot.slane %v6058, 2
    %v6107 = vsel %vm6098, %v6105, %v6106
    %v6108 = vrot.slane %v6059, 2
    %v6109 = vrot.slane %v6060, 2
    %v6110 = vsel %vm6098, %v6108, %v6109
    %v6119 = vmax.f32 %v6090, %v6101
    %v6120 = vmax.f32 %v6091, %v6100
    %v6121 = vmax.f32 %v6092, %v6104
    %v6122 = vmax.f32 %v6093, %v6103
    %v6123 = vmax.f32 %v6094, %v6107
    %v6124 = vmax.f32 %v6095, %v6106
    %v6125 = vmax.f32 %v6096, %v6110
    %v6126 = vmax.f32 %v6097, %v6109
    %v6131 = vrot.slane %v6121, 7
    %vm6132 = vcmask 1041409
    %v6133 = vsel %vm6132, %v6131, %v6119
    %v6134 = vrot.slane %v6123, 6
    %vm6135 = vcmask 1042434
    %v6136 = vsel %vm6135, %v6134, %v6133
    %v6137 = vrot.slane %v6125, 5
    %vm6138 = vcmask 1043459
    %v6139 = vsel %vm6138, %v6137, %v6136
    %v6141 = vrot.slane %v6119, 2
    %v6142 = vrot.slane %v6121, 1
    %v6143 = vsel %vm6132, %v6142, %v6141
    %v6144 = vsel %vm6135, %v6123, %v6143
    %v6145 = vrot.slane %v6125, 7
    %v6146 = vsel %vm6138, %v6145, %v6144
    %v6148 = vrot.slane %v6119, 4
    %v6149 = vrot.slane %v6121, 3
    %v6150 = vsel %vm6132, %v6149, %v6148
    %v6151 = vrot.slane %v6123, 2
    %v6152 = vsel %vm6135, %v6151, %v6150
    %v6153 = vrot.slane %v6125, 1
    %v6154 = vsel %vm6138, %v6153, %v6152
    %v6156 = vrot.slane %v6119, 6
    %v6157 = vrot.slane %v6121, 5
    %v6158 = vsel %vm6132, %v6157, %v6156
    %v6159 = vrot.slane %v6123, 4
    %v6160 = vsel %vm6135, %v6159, %v6158
    %v6161 = vrot.slane %v6125, 3
    %v6162 = vsel %vm6138, %v6161, %v6160
    %v6168 = vrot.slane %v6122, 7
    %v6169 = vsel %vm6132, %v6168, %v6120
    %v6170 = vrot.slane %v6124, 6
    %v6171 = vsel %vm6135, %v6170, %v6169
    %v6172 = vrot.slane %v6126, 5
    %v6173 = vsel %vm6138, %v6172, %v6171
    %v6175 = vpack.c.bf16 %v6139, %v6139
    %v6176 = vpack.c.bf16 %v6146, %v6146
    %v6177 = vpack.c.bf16 %v6154, %v6154
    %v6178 = vpack.c.bf16 %v6162, %v6162
    %v6179 = vpack.c.bf16 %v6173, %v6173
    %v6180 = vld [vmem:[%s3] sm:$0xff]
    %v6181 = vld [vmem:[%s3 + $0x8] sm:$0xff]
    %v6182 = vld [vmem:[%s3 + $0x10] sm:$0xff]
    %v6183 = vld [vmem:[%s3 + $0x18] sm:$0xff]
    %v6184 = vld [vmem:[%s3 + $0x20] sm:$0xff]
    %v6185 = vld [vmem:[%s3 + $0x28] sm:$0xff]
    %v6186 = vld [vmem:[%s3 + $0x30] sm:$0xff]
    %v6187 = vld [vmem:[%s3 + $0x38] sm:$0xff]
    %v6188 = vld [vmem:[%s3 + $0x40] sm:$0xff]
    %v6189 = vld [vmem:[%s3 + $0x48] sm:$0xff]
    %v6190 = vld [vmem:[%s3 + $0x50] sm:$0xff]
    %v6191 = vld [vmem:[%s3 + $0x58] sm:$0xff]
    %v6192 = vld [vmem:[%s3 + $0x60] sm:$0xff]
    %v6193 = vld [vmem:[%s3 + $0x68] sm:$0xff]
    %v6194 = vld [vmem:[%s3 + $0x70] sm:$0xff]
    %v6195 = vld [vmem:[%s3 + $0x78] sm:$0xff]
    %v6196 = vld [vmem:[%s3 + $0x80] sm:$0xff]
    %v6197 = vld [vmem:[%s3 + $0x88] sm:$0xff]
    %v6198 = vld [vmem:[%s3 + $0x90] sm:$0xff]
    %v6199 = vld [vmem:[%s3 + $0x98] sm:$0xff]
    %v6200 = vld [vmem:[%s3 + $0xa0] sm:$0xff]
    %v6201 = vld [vmem:[%s3 + $0xa8] sm:$0xff]
    %v6202 = vld [vmem:[%s3 + $0xb0] sm:$0xff]
    %v6203 = vld [vmem:[%s3 + $0xb8] sm:$0xff]
    %v6204 = vld [vmem:[%s3 + $0xc0] sm:$0xff]
    %v6205 = vld [vmem:[%s3 + $0xc8] sm:$0xff]
    %v6206 = vld [vmem:[%s3 + $0xd0] sm:$0xff]
    %v6207 = vld [vmem:[%s3 + $0xd8] sm:$0xff]
    %v6208 = vld [vmem:[%s3 + $0xe0] sm:$0xff]
    %v6209 = vld [vmem:[%s3 + $0xe8] sm:$0xff]
    %v6210 = vld [vmem:[%s3 + $0xf0] sm:$0xff]
    %v6211 = vld [vmem:[%s3 + $0xf8] sm:$0xff]
    %v6212 = vld [vmem:[%s3 + $0x100] sm:$0xff]
    %v6213 = vld [vmem:[%s3 + $0x108] sm:$0xff]
    %v6214 = vld [vmem:[%s3 + $0x110] sm:$0xff]
    %v6215 = vld [vmem:[%s3 + $0x118] sm:$0xff]
    %v6216 = vld [vmem:[%s3 + $0x120] sm:$0xff]
    %v6217 = vld [vmem:[%s3 + $0x128] sm:$0xff]
    %v6218 = vld [vmem:[%s3 + $0x130] sm:$0xff]
    %v6219 = vld [vmem:[%s3 + $0x138] sm:$0xff]
    %v6220 = vld [vmem:[%s3 + $0x140] sm:$0xff]
    %v6221 = vld [vmem:[%s3 + $0x148] sm:$0xff]
    %v6222 = vld [vmem:[%s3 + $0x150] sm:$0xff]
    %v6223 = vld [vmem:[%s3 + $0x158] sm:$0xff]
    %v6224 = vld [vmem:[%s3 + $0x160] sm:$0xff]
    %v6225 = vld [vmem:[%s3 + $0x168] sm:$0xff]
    %v6226 = vld [vmem:[%s3 + $0x170] sm:$0xff]
    %v6227 = vld [vmem:[%s3 + $0x178] sm:$0xff]
    %v6228 = vld [vmem:[%s3 + $0x180] sm:$0xff]
    %v6229 = vld [vmem:[%s3 + $0x188] sm:$0xff]
    %v6230 = vld [vmem:[%s3 + $0x190] sm:$0xff]
    %v6231 = vld [vmem:[%s3 + $0x198] sm:$0xff]
    %v6232 = vld [vmem:[%s3 + $0x1a0] sm:$0xff]
    %v6233 = vld [vmem:[%s3 + $0x1a8] sm:$0xff]
    %v6234 = vld [vmem:[%s3 + $0x1b0] sm:$0xff]
    %v6235 = vld [vmem:[%s3 + $0x1b8] sm:$0xff]
    %v6236 = vld [vmem:[%s3 + $0x1c0] sm:$0xff]
    %v6237 = vld [vmem:[%s3 + $0x1c8] sm:$0xff]
    %v6238 = vld [vmem:[%s3 + $0x1d0] sm:$0xff]
    %v6239 = vld [vmem:[%s3 + $0x1d8] sm:$0xff]
    %v6240 = vld [vmem:[%s3 + $0x1e0] sm:$0xff]
    %v6241 = vld [vmem:[%s3 + $0x1e8] sm:$0xff]
    %v6242 = vld [vmem:[%s3 + $0x1f0] sm:$0xff]
    %v6243 = vld [vmem:[%s3 + $0x1f8] sm:$0xff]
    %v6244 = vld [vmem:[%s3 + $0x200] sm:$0xff]
    %v6245 = vld [vmem:[%s3 + $0x208] sm:$0xff]
    %v6246 = vld [vmem:[%s3 + $0x210] sm:$0xff]
    %v6247 = vld [vmem:[%s3 + $0x218] sm:$0xff]
    %v6248 = vld [vmem:[%s3 + $0x220] sm:$0xff]
    %v6249 = vld [vmem:[%s3 + $0x228] sm:$0xff]
    %v6250 = vld [vmem:[%s3 + $0x230] sm:$0xff]
    %v6251 = vld [vmem:[%s3 + $0x238] sm:$0xff]
    %v6252 = vld [vmem:[%s3 + $0x240] sm:$0xff]
    %v6253 = vld [vmem:[%s3 + $0x248] sm:$0xff]
    %v6254 = vld [vmem:[%s3 + $0x250] sm:$0xff]
    %v6255 = vld [vmem:[%s3 + $0x258] sm:$0xff]
    %v6256 = vld [vmem:[%s3 + $0x260] sm:$0xff]
    %v6257 = vld [vmem:[%s3 + $0x268] sm:$0xff]
    %v6258 = vld [vmem:[%s3 + $0x270] sm:$0xff]
    %v6259 = vld [vmem:[%s3 + $0x278] sm:$0xff]
    %v6260 = vld [vmem:[%s3 + $0x280] sm:$0xff]
    %v6261 = vld [vmem:[%s3 + $0x288] sm:$0xff]
    %v6262 = vld [vmem:[%s3 + $0x290] sm:$0xff]
    %v6263 = vld [vmem:[%s3 + $0x298] sm:$0xff]
    %v6264 = vld [vmem:[%s3 + $0x2a0] sm:$0xff]
    %v6265 = vld [vmem:[%s3 + $0x2a8] sm:$0xff]
    %v6266 = vld [vmem:[%s3 + $0x2b0] sm:$0xff]
    %v6267 = vld [vmem:[%s3 + $0x2b8] sm:$0xff]
    %v6268 = vld [vmem:[%s3 + $0x2c0] sm:$0xff]
    %v6269 = vld [vmem:[%s3 + $0x2c8] sm:$0xff]
    %v6270 = vld [vmem:[%s3 + $0x2d0] sm:$0xff]
    %v6271 = vld [vmem:[%s3 + $0x2d8] sm:$0xff]
    %v6272 = vld [vmem:[%s3 + $0x2e0] sm:$0xff]
    %v6273 = vld [vmem:[%s3 + $0x2e8] sm:$0xff]
    %v6274 = vld [vmem:[%s3 + $0x2f0] sm:$0xff]
    %v6275 = vld [vmem:[%s3 + $0x2f8] sm:$0xff]
    %v6276 = vld [vmem:[%s3 + $0x300] sm:$0xff]
    %v6277 = vld [vmem:[%s3 + $0x308] sm:$0xff]
    %v6278 = vld [vmem:[%s3 + $0x310] sm:$0xff]
    %v6279 = vld [vmem:[%s3 + $0x318] sm:$0xff]
    %v6280 = vld [vmem:[%s3 + $0x320] sm:$0xff]
    %v6281 = vld [vmem:[%s3 + $0x328] sm:$0xff]
    %v6282 = vld [vmem:[%s3 + $0x330] sm:$0xff]
    %v6283 = vld [vmem:[%s3 + $0x338] sm:$0xff]
    %v6284 = vld [vmem:[%s3 + $0x340] sm:$0xff]
    %v6285 = vld [vmem:[%s3 + $0x348] sm:$0xff]
    %v6286 = vld [vmem:[%s3 + $0x350] sm:$0xff]
    %v6287 = vld [vmem:[%s3 + $0x358] sm:$0xff]
    %v6288 = vld [vmem:[%s3 + $0x360] sm:$0xff]
    %v6289 = vld [vmem:[%s3 + $0x368] sm:$0xff]
    %v6290 = vld [vmem:[%s3 + $0x370] sm:$0xff]
    %v6291 = vld [vmem:[%s3 + $0x378] sm:$0xff]
    %v6292 = vld [vmem:[%s3 + $0x380] sm:$0xff]
    %v6293 = vld [vmem:[%s3 + $0x388] sm:$0xff]
    %v6294 = vld [vmem:[%s3 + $0x390] sm:$0xff]
    %v6295 = vld [vmem:[%s3 + $0x398] sm:$0xff]
    %v6296 = vld [vmem:[%s3 + $0x3a0] sm:$0xff]
    %v6297 = vld [vmem:[%s3 + $0x3a8] sm:$0xff]
    %v6298 = vld [vmem:[%s3 + $0x3b0] sm:$0xff]
    %v6299 = vld [vmem:[%s3 + $0x3b8] sm:$0xff]
    %v6300 = vld [vmem:[%s3 + $0x3c0] sm:$0xff]
    %v6301 = vld [vmem:[%s3 + $0x3c8] sm:$0xff]
    %v6302 = vld [vmem:[%s3 + $0x3d0] sm:$0xff]
    %v6303 = vld [vmem:[%s3 + $0x3d8] sm:$0xff]
    %v6304 = vld [vmem:[%s3 + $0x3e0] sm:$0xff]
    %v6305 = vld [vmem:[%s3 + $0x3e8] sm:$0xff]
    %v6306 = vld [vmem:[%s3 + $0x3f0] sm:$0xff]
    %v6307 = vld [vmem:[%s3 + $0x3f8] sm:$0xff]
    %v6308 = vld [vmem:[%s3 + $0x400] sm:$0xff]
    %v6309 = vld [vmem:[%s3 + $0x408] sm:$0xff]
    %v6310 = vld [vmem:[%s3 + $0x410] sm:$0xff]
    %v6311 = vld [vmem:[%s3 + $0x418] sm:$0xff]
    %v6312 = vld [vmem:[%s3 + $0x420] sm:$0xff]
    %v6313 = vld [vmem:[%s3 + $0x428] sm:$0xff]
    %v6314 = vld [vmem:[%s3 + $0x430] sm:$0xff]
    %v6315 = vld [vmem:[%s3 + $0x438] sm:$0xff]
    %v6316 = vld [vmem:[%s3 + $0x440] sm:$0xff]
    %v6317 = vld [vmem:[%s3 + $0x448] sm:$0xff]
    %v6318 = vld [vmem:[%s3 + $0x450] sm:$0xff]
    %v6319 = vld [vmem:[%s3 + $0x458] sm:$0xff]
    %v6320 = vld [vmem:[%s3 + $0x460] sm:$0xff]
    %v6321 = vld [vmem:[%s3 + $0x468] sm:$0xff]
    %v6322 = vld [vmem:[%s3 + $0x470] sm:$0xff]
    %v6323 = vld [vmem:[%s3 + $0x478] sm:$0xff]
    %v6324 = vld [vmem:[%s3 + $0x480] sm:$0xff]
    %v6325 = vld [vmem:[%s3 + $0x488] sm:$0xff]
    %v6326 = vld [vmem:[%s3 + $0x490] sm:$0xff]
    %v6327 = vld [vmem:[%s3 + $0x498] sm:$0xff]
    %v6328 = vld [vmem:[%s3 + $0x4a0] sm:$0xff]
    %v6329 = vld [vmem:[%s3 + $0x4a8] sm:$0xff]
    %v6330 = vld [vmem:[%s3 + $0x4b0] sm:$0xff]
    %v6331 = vld [vmem:[%s3 + $0x4b8] sm:$0xff]
    %v6332 = vld [vmem:[%s3 + $0x4c0] sm:$0xff]
    %v6333 = vld [vmem:[%s3 + $0x4c8] sm:$0xff]
    %v6334 = vld [vmem:[%s3 + $0x4d0] sm:$0xff]
    %v6335 = vld [vmem:[%s3 + $0x4d8] sm:$0xff]
    %v6336 = vld [vmem:[%s3 + $0x4e0] sm:$0xff]
    %v6337 = vld [vmem:[%s3 + $0x4e8] sm:$0xff]
    %v6338 = vld [vmem:[%s3 + $0x4f0] sm:$0xff]
    %v6339 = vld [vmem:[%s3 + $0x4f8] sm:$0xff]
    %v6340 = vld [vmem:[%s3 + $0x500] sm:$0xff]
    %v6341 = vld [vmem:[%s3 + $0x508] sm:$0xff]
    %v6342 = vld [vmem:[%s3 + $0x510] sm:$0xff]
    %v6343 = vld [vmem:[%s3 + $0x518] sm:$0xff]
    %v6344 = vld [vmem:[%s3 + $0x520] sm:$0xff]
    %v6345 = vld [vmem:[%s3 + $0x528] sm:$0xff]
    %v6346 = vld [vmem:[%s3 + $0x530] sm:$0xff]
    %v6347 = vld [vmem:[%s3 + $0x538] sm:$0xff]
    %v6348 = vld [vmem:[%s3 + $0x540] sm:$0xff]
    %v6349 = vld [vmem:[%s3 + $0x548] sm:$0xff]
    %v6350 = vld [vmem:[%s3 + $0x550] sm:$0xff]
    %v6351 = vld [vmem:[%s3 + $0x558] sm:$0xff]
    %v6352 = vld [vmem:[%s3 + $0x560] sm:$0xff]
    %v6353 = vld [vmem:[%s3 + $0x568] sm:$0xff]
    %v6354 = vld [vmem:[%s3 + $0x570] sm:$0xff]
    %v6355 = vld [vmem:[%s3 + $0x578] sm:$0xff]
    %v6356 = vld [vmem:[%s3 + $0x580] sm:$0xff]
    %v6357 = vld [vmem:[%s3 + $0x588] sm:$0xff]
    %v6358 = vld [vmem:[%s3 + $0x590] sm:$0xff]
    %v6359 = vld [vmem:[%s3 + $0x598] sm:$0xff]
    %v6360 = vld [vmem:[%s3 + $0x5a0] sm:$0xff]
    %v6361 = vld [vmem:[%s3 + $0x5a8] sm:$0xff]
    %v6362 = vld [vmem:[%s3 + $0x5b0] sm:$0xff]
    %v6363 = vld [vmem:[%s3 + $0x5b8] sm:$0xff]
    %v6364 = vld [vmem:[%s3 + $0x5c0] sm:$0xff]
    %v6365 = vld [vmem:[%s3 + $0x5c8] sm:$0xff]
    %v6366 = vld [vmem:[%s3 + $0x5d0] sm:$0xff]
    %v6367 = vld [vmem:[%s3 + $0x5d8] sm:$0xff]
    %v6368 = vld [vmem:[%s3 + $0x5e0] sm:$0xff]
    %v6369 = vld [vmem:[%s3 + $0x5e8] sm:$0xff]
    %v6370 = vld [vmem:[%s3 + $0x5f0] sm:$0xff]
    %v6371 = vld [vmem:[%s3 + $0x5f8] sm:$0xff]
    %v6372 = vld [vmem:[%s3 + $0x600] sm:$0xff]
    %v6373 = vld [vmem:[%s3 + $0x608] sm:$0xff]
    %v6374 = vld [vmem:[%s3 + $0x610] sm:$0xff]
    %v6375 = vld [vmem:[%s3 + $0x618] sm:$0xff]
    %v6376 = vld [vmem:[%s3 + $0x620] sm:$0xff]
    %v6377 = vld [vmem:[%s3 + $0x628] sm:$0xff]
    %v6378 = vld [vmem:[%s3 + $0x630] sm:$0xff]
    %v6379 = vld [vmem:[%s3 + $0x638] sm:$0xff]
    %v6380 = vld [vmem:[%s3 + $0x640] sm:$0xff]
    %v6381 = vld [vmem:[%s3 + $0x648] sm:$0xff]
    %v6382 = vld [vmem:[%s3 + $0x650] sm:$0xff]
    %v6383 = vld [vmem:[%s3 + $0x658] sm:$0xff]
    %v6384 = vld [vmem:[%s3 + $0x660] sm:$0xff]
    %v6385 = vld [vmem:[%s3 + $0x668] sm:$0xff]
    %v6386 = vld [vmem:[%s3 + $0x670] sm:$0xff]
    %v6387 = vld [vmem:[%s3 + $0x678] sm:$0xff]
    %v6388 = vld [vmem:[%s3 + $0x680] sm:$0xff]
    %v6389 = vld [vmem:[%s3 + $0x688] sm:$0xff]
    %v6390 = vld [vmem:[%s3 + $0x690] sm:$0xff]
    %v6391 = vld [vmem:[%s3 + $0x698] sm:$0xff]
    %v6392 = vld [vmem:[%s3 + $0x6a0] sm:$0xff]
    %v6393 = vld [vmem:[%s3 + $0x6a8] sm:$0xff]
    %v6394 = vld [vmem:[%s3 + $0x6b0] sm:$0xff]
    %v6395 = vld [vmem:[%s3 + $0x6b8] sm:$0xff]
    %v6396 = vld [vmem:[%s3 + $0x6c0] sm:$0xff]
    %v6397 = vld [vmem:[%s3 + $0x6c8] sm:$0xff]
    %v6398 = vld [vmem:[%s3 + $0x6d0] sm:$0xff]
    %v6399 = vld [vmem:[%s3 + $0x6d8] sm:$0xff]
    %v6400 = vld [vmem:[%s3 + $0x6e0] sm:$0xff]
    %v6401 = vld [vmem:[%s3 + $0x6e8] sm:$0xff]
    %v6402 = vld [vmem:[%s3 + $0x6f0] sm:$0xff]
    %v6403 = vld [vmem:[%s3 + $0x6f8] sm:$0xff]
    %v6404 = vld [vmem:[%s3 + $0x700] sm:$0xff]
    %v6405 = vld [vmem:[%s3 + $0x708] sm:$0xff]
    %v6406 = vld [vmem:[%s3 + $0x710] sm:$0xff]
    %v6407 = vld [vmem:[%s3 + $0x718] sm:$0xff]
    %v6408 = vld [vmem:[%s3 + $0x720] sm:$0xff]
    %v6409 = vld [vmem:[%s3 + $0x728] sm:$0xff]
    %v6410 = vld [vmem:[%s3 + $0x730] sm:$0xff]
    %v6411 = vld [vmem:[%s3 + $0x738] sm:$0xff]
    %v6412 = vld [vmem:[%s3 + $0x740] sm:$0xff]
    %v6413 = vld [vmem:[%s3 + $0x748] sm:$0xff]
    %v6414 = vld [vmem:[%s3 + $0x750] sm:$0xff]
    %v6415 = vld [vmem:[%s3 + $0x758] sm:$0xff]
    %v6416 = vld [vmem:[%s3 + $0x760] sm:$0xff]
    %v6417 = vld [vmem:[%s3 + $0x768] sm:$0xff]
    %v6418 = vld [vmem:[%s3 + $0x770] sm:$0xff]
    %v6419 = vld [vmem:[%s3 + $0x778] sm:$0xff]
    %v6420 = vld [vmem:[%s3 + $0x780] sm:$0xff]
    %v6421 = vld [vmem:[%s3 + $0x788] sm:$0xff]
    %v6422 = vld [vmem:[%s3 + $0x790] sm:$0xff]
    %v6423 = vld [vmem:[%s3 + $0x798] sm:$0xff]
    %v6424 = vld [vmem:[%s3 + $0x7a0] sm:$0xff]
    %v6425 = vld [vmem:[%s3 + $0x7a8] sm:$0xff]
    %v6426 = vld [vmem:[%s3 + $0x7b0] sm:$0xff]
    %v6427 = vld [vmem:[%s3 + $0x7b8] sm:$0xff]
    %v6428 = vld [vmem:[%s3 + $0x7c0] sm:$0xff]
    %v6429 = vld [vmem:[%s3 + $0x7c8] sm:$0xff]
    %v6430 = vld [vmem:[%s3 + $0x7d0] sm:$0xff]
    %v6431 = vld [vmem:[%s3 + $0x7d8] sm:$0xff]
    %v6432 = vld [vmem:[%s3 + $0x7e0] sm:$0xff]
    %v6433 = vld [vmem:[%s3 + $0x7e8] sm:$0xff]
    %v6434 = vld [vmem:[%s3 + $0x7f0] sm:$0xff]
    %v6435 = vld [vmem:[%s3 + $0x7f8] sm:$0xff]
    %v6436 = vld [vmem:[%s3 + $0x800] sm:$0xff]
    %v6437 = vld [vmem:[%s3 + $0x808] sm:$0xff]
    %v6438 = vld [vmem:[%s3 + $0x810] sm:$0xff]
    %v6439 = vld [vmem:[%s3 + $0x818] sm:$0xff]
    %v6440 = vld [vmem:[%s3 + $0x820] sm:$0xff]
    %v6441 = vld [vmem:[%s3 + $0x828] sm:$0xff]
    %v6442 = vld [vmem:[%s3 + $0x830] sm:$0xff]
    %v6443 = vld [vmem:[%s3 + $0x838] sm:$0xff]
    %v6444 = vld [vmem:[%s3 + $0x840] sm:$0xff]
    %v6445 = vld [vmem:[%s3 + $0x848] sm:$0xff]
    %v6446 = vld [vmem:[%s3 + $0x850] sm:$0xff]
    %v6447 = vld [vmem:[%s3 + $0x858] sm:$0xff]
    %v6448 = vld [vmem:[%s3 + $0x860] sm:$0xff]
    %v6449 = vld [vmem:[%s3 + $0x868] sm:$0xff]
    %v6450 = vld [vmem:[%s3 + $0x870] sm:$0xff]
    %v6451 = vld [vmem:[%s3 + $0x878] sm:$0xff]
    %v6452 = vld [vmem:[%s3 + $0x880] sm:$0xff]
    %v6453 = vld [vmem:[%s3 + $0x888] sm:$0xff]
    %v6454 = vld [vmem:[%s3 + $0x890] sm:$0xff]
    %v6455 = vld [vmem:[%s3 + $0x898] sm:$0xff]
    %v6456 = vld [vmem:[%s3 + $0x8a0] sm:$0xff]
    %v6457 = vld [vmem:[%s3 + $0x8a8] sm:$0xff]
    %v6458 = vld [vmem:[%s3 + $0x8b0] sm:$0xff]
    %v6459 = vld [vmem:[%s3 + $0x8b8] sm:$0xff]
    %v6460 = vld [vmem:[%s3 + $0x8c0] sm:$0xff]
    %v6461 = vld [vmem:[%s3 + $0x8c8] sm:$0xff]
    %v6462 = vld [vmem:[%s3 + $0x8d0] sm:$0xff]
    %v6463 = vld [vmem:[%s3 + $0x8d8] sm:$0xff]
    %v6464 = vld [vmem:[%s3 + $0x8e0] sm:$0xff]
    %v6465 = vld [vmem:[%s3 + $0x8e8] sm:$0xff]
    %v6466 = vld [vmem:[%s3 + $0x8f0] sm:$0xff]
    %v6467 = vld [vmem:[%s3 + $0x8f8] sm:$0xff]
    %v6468 = vld [vmem:[%s3 + $0x900] sm:$0xff]
    %v6469 = vld [vmem:[%s3 + $0x908] sm:$0xff]
    %v6470 = vld [vmem:[%s3 + $0x910] sm:$0xff]
    %v6471 = vld [vmem:[%s3 + $0x918] sm:$0xff]
    %v6472 = vld [vmem:[%s3 + $0x920] sm:$0xff]
    %v6473 = vld [vmem:[%s3 + $0x928] sm:$0xff]
    %v6474 = vld [vmem:[%s3 + $0x930] sm:$0xff]
    %v6475 = vld [vmem:[%s3 + $0x938] sm:$0xff]
    %v6476 = vld [vmem:[%s3 + $0x940] sm:$0xff]
    %v6477 = vld [vmem:[%s3 + $0x948] sm:$0xff]
    %v6478 = vld [vmem:[%s3 + $0x950] sm:$0xff]
    %v6479 = vld [vmem:[%s3 + $0x958] sm:$0xff]
    %v6480 = vld [vmem:[%s3 + $0x960] sm:$0xff]
    %v6481 = vld [vmem:[%s3 + $0x968] sm:$0xff]
    %v6482 = vld [vmem:[%s3 + $0x970] sm:$0xff]
    %v6483 = vld [vmem:[%s3 + $0x978] sm:$0xff]
    %v6484 = vld [vmem:[%s3 + $0x980] sm:$0xff]
    %v6485 = vld [vmem:[%s3 + $0x988] sm:$0xff]
    %v6486 = vld [vmem:[%s3 + $0x990] sm:$0xff]
    %v6487 = vld [vmem:[%s3 + $0x998] sm:$0xff]
    %v6488 = vld [vmem:[%s3 + $0x9a0] sm:$0xff]
    %v6489 = vld [vmem:[%s3 + $0x9a8] sm:$0xff]
    %v6490 = vld [vmem:[%s3 + $0x9b0] sm:$0xff]
    %v6491 = vld [vmem:[%s3 + $0x9b8] sm:$0xff]
    %v6492 = vld [vmem:[%s3 + $0x9c0] sm:$0xff]
    %v6493 = vld [vmem:[%s3 + $0x9c8] sm:$0xff]
    %v6494 = vld [vmem:[%s3 + $0x9d0] sm:$0xff]
    %v6495 = vld [vmem:[%s3 + $0x9d8] sm:$0xff]
    %v6496 = vld [vmem:[%s3 + $0x9e0] sm:$0xff]
    %v6497 = vld [vmem:[%s3 + $0x9e8] sm:$0xff]
    %v6498 = vld [vmem:[%s3 + $0x9f0] sm:$0xff]
    %v6499 = vld [vmem:[%s3 + $0x9f8] sm:$0xff]
    %v6500 = vld [vmem:[%s4] sm:$0xff]
    %v6502 = vperm.slane %v6500, 0
    %v6503 = vperm.slane %v6500, 1
    %v6504 = vperm.slane %v6500, 2
    %v6505 = vperm.slane %v6500, 3
    %v6506 = vperm.slane %v6500, 4
    %v6507 = vperm.slane %v6500, 5
    %v6508 = vperm.slane %v6500, 6
    %v6509 = vperm.slane %v6500, 7
    %v6838 = vunpack.c.l.b16 %v6180
    %v6839 = vunpack.c.h.b16 %v6180
    %v6840 = vunpack.c.l.b16 %v6181
    %v6841 = vunpack.c.h.b16 %v6181
    %v6842 = vunpack.c.l.b16 %v6182
    %v6843 = vunpack.c.h.b16 %v6182
    %v6844 = vunpack.c.l.b16 %v6183
    %v6845 = vunpack.c.h.b16 %v6183
    %v6846 = vunpack.c.l.b16 %v6184
    %v6847 = vunpack.c.h.b16 %v6184
    %v6848 = vunpack.c.l.b16 %v6185
    %v6849 = vunpack.c.h.b16 %v6185
    %v6850 = vunpack.c.l.b16 %v6186
    %v6851 = vunpack.c.h.b16 %v6186
    %v6852 = vunpack.c.l.b16 %v6187
    %v6853 = vunpack.c.h.b16 %v6187
    %v6854 = vunpack.c.l.b16 %v6188
    %v6855 = vunpack.c.h.b16 %v6188
    %v6856 = vunpack.c.l.b16 %v6189
    %v6857 = vunpack.c.h.b16 %v6189
    %v6858 = vunpack.c.l.b16 %v6190
    %v6859 = vunpack.c.h.b16 %v6190
    %v6860 = vunpack.c.l.b16 %v6191
    %v6861 = vunpack.c.h.b16 %v6191
    %v6862 = vunpack.c.l.b16 %v6192
    %v6863 = vunpack.c.h.b16 %v6192
    %v6864 = vunpack.c.l.b16 %v6193
    %v6865 = vunpack.c.h.b16 %v6193
    %v6866 = vunpack.c.l.b16 %v6194
    %v6867 = vunpack.c.h.b16 %v6194
    %v6868 = vunpack.c.l.b16 %v6195
    %v6869 = vunpack.c.h.b16 %v6195
    %v6870 = vunpack.c.l.b16 %v6196
    %v6871 = vunpack.c.h.b16 %v6196
    %v6872 = vunpack.c.l.b16 %v6197
    %v6873 = vunpack.c.h.b16 %v6197
    %v6874 = vunpack.c.l.b16 %v6198
    %v6875 = vunpack.c.h.b16 %v6198
    %v6876 = vunpack.c.l.b16 %v6199
    %v6877 = vunpack.c.h.b16 %v6199
    %v6878 = vunpack.c.l.b16 %v6200
    %v6879 = vunpack.c.h.b16 %v6200
    %v6880 = vunpack.c.l.b16 %v6201
    %v6881 = vunpack.c.h.b16 %v6201
    %v6882 = vunpack.c.l.b16 %v6202
    %v6883 = vunpack.c.h.b16 %v6202
    %v6884 = vunpack.c.l.b16 %v6203
    %v6885 = vunpack.c.h.b16 %v6203
    %v6886 = vunpack.c.l.b16 %v6204
    %v6887 = vunpack.c.h.b16 %v6204
    %v6888 = vunpack.c.l.b16 %v6205
    %v6889 = vunpack.c.h.b16 %v6205
    %v6890 = vunpack.c.l.b16 %v6206
    %v6891 = vunpack.c.h.b16 %v6206
    %v6892 = vunpack.c.l.b16 %v6207
    %v6893 = vunpack.c.h.b16 %v6207
    %v6894 = vunpack.c.l.b16 %v6208
    %v6895 = vunpack.c.h.b16 %v6208
    %v6896 = vunpack.c.l.b16 %v6209
    %v6897 = vunpack.c.h.b16 %v6209
    %v6898 = vunpack.c.l.b16 %v6210
    %v6899 = vunpack.c.h.b16 %v6210
    %v6900 = vunpack.c.l.b16 %v6211
    %v6901 = vunpack.c.h.b16 %v6211
    %v6902 = vunpack.c.l.b16 %v6212
    %v6903 = vunpack.c.h.b16 %v6212
    %v6904 = vunpack.c.l.b16 %v6213
    %v6905 = vunpack.c.h.b16 %v6213
    %v6906 = vunpack.c.l.b16 %v6214
    %v6907 = vunpack.c.h.b16 %v6214
    %v6908 = vunpack.c.l.b16 %v6215
    %v6909 = vunpack.c.h.b16 %v6215
    %v6910 = vunpack.c.l.b16 %v6216
    %v6911 = vunpack.c.h.b16 %v6216
    %v6912 = vunpack.c.l.b16 %v6217
    %v6913 = vunpack.c.h.b16 %v6217
    %v6914 = vunpack.c.l.b16 %v6218
    %v6915 = vunpack.c.h.b16 %v6218
    %v6916 = vunpack.c.l.b16 %v6219
    %v6917 = vunpack.c.h.b16 %v6219
    %v6918 = vunpack.c.l.b16 %v6220
    %v6919 = vunpack.c.h.b16 %v6220
    %v6920 = vunpack.c.l.b16 %v6221
    %v6921 = vunpack.c.h.b16 %v6221
    %v6922 = vunpack.c.l.b16 %v6222
    %v6923 = vunpack.c.h.b16 %v6222
    %v6924 = vunpack.c.l.b16 %v6223
    %v6925 = vunpack.c.h.b16 %v6223
    %v6926 = vunpack.c.l.b16 %v6224
    %v6927 = vunpack.c.h.b16 %v6224
    %v6928 = vunpack.c.l.b16 %v6225
    %v6929 = vunpack.c.h.b16 %v6225
    %v6930 = vunpack.c.l.b16 %v6226
    %v6931 = vunpack.c.h.b16 %v6226
    %v6932 = vunpack.c.l.b16 %v6227
    %v6933 = vunpack.c.h.b16 %v6227
    %v6934 = vunpack.c.l.b16 %v6228
    %v6935 = vunpack.c.h.b16 %v6228
    %v6936 = vunpack.c.l.b16 %v6229
    %v6937 = vunpack.c.h.b16 %v6229
    %v6938 = vunpack.c.l.b16 %v6230
    %v6939 = vunpack.c.h.b16 %v6230
    %v6940 = vunpack.c.l.b16 %v6231
    %v6941 = vunpack.c.h.b16 %v6231
    %v6942 = vunpack.c.l.b16 %v6232
    %v6943 = vunpack.c.h.b16 %v6232
    %v6944 = vunpack.c.l.b16 %v6233
    %v6945 = vunpack.c.h.b16 %v6233
    %v6946 = vunpack.c.l.b16 %v6234
    %v6947 = vunpack.c.h.b16 %v6234
    %v6948 = vunpack.c.l.b16 %v6235
    %v6949 = vunpack.c.h.b16 %v6235
    %v6950 = vunpack.c.l.b16 %v6236
    %v6951 = vunpack.c.h.b16 %v6236
    %v6952 = vunpack.c.l.b16 %v6237
    %v6953 = vunpack.c.h.b16 %v6237
    %v6954 = vunpack.c.l.b16 %v6238
    %v6955 = vunpack.c.h.b16 %v6238
    %v6956 = vunpack.c.l.b16 %v6239
    %v6957 = vunpack.c.h.b16 %v6239
    %v6958 = vunpack.c.l.b16 %v6240
    %v6959 = vunpack.c.h.b16 %v6240
    %v6960 = vunpack.c.l.b16 %v6241
    %v6961 = vunpack.c.h.b16 %v6241
    %v6962 = vunpack.c.l.b16 %v6242
    %v6963 = vunpack.c.h.b16 %v6242
    %v6964 = vunpack.c.l.b16 %v6243
    %v6965 = vunpack.c.h.b16 %v6243
    %v6966 = vunpack.c.l.b16 %v6244
    %v6967 = vunpack.c.h.b16 %v6244
    %v6968 = vunpack.c.l.b16 %v6245
    %v6969 = vunpack.c.h.b16 %v6245
    %v6970 = vunpack.c.l.b16 %v6246
    %v6971 = vunpack.c.h.b16 %v6246
    %v6972 = vunpack.c.l.b16 %v6247
    %v6973 = vunpack.c.h.b16 %v6247
    %v6974 = vunpack.c.l.b16 %v6248
    %v6975 = vunpack.c.h.b16 %v6248
    %v6976 = vunpack.c.l.b16 %v6249
    %v6977 = vunpack.c.h.b16 %v6249
    %v6978 = vunpack.c.l.b16 %v6250
    %v6979 = vunpack.c.h.b16 %v6250
    %v6980 = vunpack.c.l.b16 %v6251
    %v6981 = vunpack.c.h.b16 %v6251
    %v6982 = vunpack.c.l.b16 %v6252
    %v6983 = vunpack.c.h.b16 %v6252
    %v6984 = vunpack.c.l.b16 %v6253
    %v6985 = vunpack.c.h.b16 %v6253
    %v6986 = vunpack.c.l.b16 %v6254
    %v6987 = vunpack.c.h.b16 %v6254
    %v6988 = vunpack.c.l.b16 %v6255
    %v6989 = vunpack.c.h.b16 %v6255
    %v6990 = vunpack.c.l.b16 %v6256
    %v6991 = vunpack.c.h.b16 %v6256
    %v6992 = vunpack.c.l.b16 %v6257
    %v6993 = vunpack.c.h.b16 %v6257
    %v6994 = vunpack.c.l.b16 %v6258
    %v6995 = vunpack.c.h.b16 %v6258
    %v6996 = vunpack.c.l.b16 %v6259
    %v6997 = vunpack.c.h.b16 %v6259
    %v6998 = vunpack.c.l.b16 %v6260
    %v6999 = vunpack.c.h.b16 %v6260
    %v7000 = vunpack.c.l.b16 %v6261
    %v7001 = vunpack.c.h.b16 %v6261
    %v7002 = vunpack.c.l.b16 %v6262
    %v7003 = vunpack.c.h.b16 %v6262
    %v7004 = vunpack.c.l.b16 %v6263
    %v7005 = vunpack.c.h.b16 %v6263
    %v7006 = vunpack.c.l.b16 %v6264
    %v7007 = vunpack.c.h.b16 %v6264
    %v7008 = vunpack.c.l.b16 %v6265
    %v7009 = vunpack.c.h.b16 %v6265
    %v7010 = vunpack.c.l.b16 %v6266
    %v7011 = vunpack.c.h.b16 %v6266
    %v7012 = vunpack.c.l.b16 %v6267
    %v7013 = vunpack.c.h.b16 %v6267
    %v7014 = vunpack.c.l.b16 %v6268
    %v7015 = vunpack.c.h.b16 %v6268
    %v7016 = vunpack.c.l.b16 %v6269
    %v7017 = vunpack.c.h.b16 %v6269
    %v7018 = vunpack.c.l.b16 %v6270
    %v7019 = vunpack.c.h.b16 %v6270
    %v7020 = vunpack.c.l.b16 %v6271
    %v7021 = vunpack.c.h.b16 %v6271
    %v7022 = vunpack.c.l.b16 %v6272
    %v7023 = vunpack.c.h.b16 %v6272
    %v7024 = vunpack.c.l.b16 %v6273
    %v7025 = vunpack.c.h.b16 %v6273
    %v7026 = vunpack.c.l.b16 %v6274
    %v7027 = vunpack.c.h.b16 %v6274
    %v7028 = vunpack.c.l.b16 %v6275
    %v7029 = vunpack.c.h.b16 %v6275
    %v7030 = vunpack.c.l.b16 %v6276
    %v7031 = vunpack.c.h.b16 %v6276
    %v7032 = vunpack.c.l.b16 %v6277
    %v7033 = vunpack.c.h.b16 %v6277
    %v7034 = vunpack.c.l.b16 %v6278
    %v7035 = vunpack.c.h.b16 %v6278
    %v7036 = vunpack.c.l.b16 %v6279
    %v7037 = vunpack.c.h.b16 %v6279
    %v7038 = vunpack.c.l.b16 %v6280
    %v7039 = vunpack.c.h.b16 %v6280
    %v7040 = vunpack.c.l.b16 %v6281
    %v7041 = vunpack.c.h.b16 %v6281
    %v7042 = vunpack.c.l.b16 %v6282
    %v7043 = vunpack.c.h.b16 %v6282
    %v7044 = vunpack.c.l.b16 %v6283
    %v7045 = vunpack.c.h.b16 %v6283
    %v7046 = vunpack.c.l.b16 %v6284
    %v7047 = vunpack.c.h.b16 %v6284
    %v7048 = vunpack.c.l.b16 %v6285
    %v7049 = vunpack.c.h.b16 %v6285
    %v7050 = vunpack.c.l.b16 %v6286
    %v7051 = vunpack.c.h.b16 %v6286
    %v7052 = vunpack.c.l.b16 %v6287
    %v7053 = vunpack.c.h.b16 %v6287
    %v7054 = vunpack.c.l.b16 %v6288
    %v7055 = vunpack.c.h.b16 %v6288
    %v7056 = vunpack.c.l.b16 %v6289
    %v7057 = vunpack.c.h.b16 %v6289
    %v7058 = vunpack.c.l.b16 %v6290
    %v7059 = vunpack.c.h.b16 %v6290
    %v7060 = vunpack.c.l.b16 %v6291
    %v7061 = vunpack.c.h.b16 %v6291
    %v7062 = vunpack.c.l.b16 %v6292
    %v7063 = vunpack.c.h.b16 %v6292
    %v7064 = vunpack.c.l.b16 %v6293
    %v7065 = vunpack.c.h.b16 %v6293
    %v7066 = vunpack.c.l.b16 %v6294
    %v7067 = vunpack.c.h.b16 %v6294
    %v7068 = vunpack.c.l.b16 %v6295
    %v7069 = vunpack.c.h.b16 %v6295
    %v7070 = vunpack.c.l.b16 %v6296
    %v7071 = vunpack.c.h.b16 %v6296
    %v7072 = vunpack.c.l.b16 %v6297
    %v7073 = vunpack.c.h.b16 %v6297
    %v7074 = vunpack.c.l.b16 %v6298
    %v7075 = vunpack.c.h.b16 %v6298
    %v7076 = vunpack.c.l.b16 %v6299
    %v7077 = vunpack.c.h.b16 %v6299
    %v7078 = vunpack.c.l.b16 %v6300
    %v7079 = vunpack.c.h.b16 %v6300
    %v7080 = vunpack.c.l.b16 %v6301
    %v7081 = vunpack.c.h.b16 %v6301
    %v7082 = vunpack.c.l.b16 %v6302
    %v7083 = vunpack.c.h.b16 %v6302
    %v7084 = vunpack.c.l.b16 %v6303
    %v7085 = vunpack.c.h.b16 %v6303
    %v7086 = vunpack.c.l.b16 %v6304
    %v7087 = vunpack.c.h.b16 %v6304
    %v7088 = vunpack.c.l.b16 %v6305
    %v7089 = vunpack.c.h.b16 %v6305
    %v7090 = vunpack.c.l.b16 %v6306
    %v7091 = vunpack.c.h.b16 %v6306
    %v7092 = vunpack.c.l.b16 %v6307
    %v7093 = vunpack.c.h.b16 %v6307
    %v7094 = vunpack.c.l.b16 %v6308
    %v7095 = vunpack.c.h.b16 %v6308
    %v7096 = vunpack.c.l.b16 %v6309
    %v7097 = vunpack.c.h.b16 %v6309
    %v7098 = vunpack.c.l.b16 %v6310
    %v7099 = vunpack.c.h.b16 %v6310
    %v7100 = vunpack.c.l.b16 %v6311
    %v7101 = vunpack.c.h.b16 %v6311
    %v7102 = vunpack.c.l.b16 %v6312
    %v7103 = vunpack.c.h.b16 %v6312
    %v7104 = vunpack.c.l.b16 %v6313
    %v7105 = vunpack.c.h.b16 %v6313
    %v7106 = vunpack.c.l.b16 %v6314
    %v7107 = vunpack.c.h.b16 %v6314
    %v7108 = vunpack.c.l.b16 %v6315
    %v7109 = vunpack.c.h.b16 %v6315
    %v7110 = vunpack.c.l.b16 %v6316
    %v7111 = vunpack.c.h.b16 %v6316
    %v7112 = vunpack.c.l.b16 %v6317
    %v7113 = vunpack.c.h.b16 %v6317
    %v7114 = vunpack.c.l.b16 %v6318
    %v7115 = vunpack.c.h.b16 %v6318
    %v7116 = vunpack.c.l.b16 %v6319
    %v7117 = vunpack.c.h.b16 %v6319
    %v7118 = vunpack.c.l.b16 %v6320
    %v7119 = vunpack.c.h.b16 %v6320
    %v7120 = vunpack.c.l.b16 %v6321
    %v7121 = vunpack.c.h.b16 %v6321
    %v7122 = vunpack.c.l.b16 %v6322
    %v7123 = vunpack.c.h.b16 %v6322
    %v7124 = vunpack.c.l.b16 %v6323
    %v7125 = vunpack.c.h.b16 %v6323
    %v7126 = vunpack.c.l.b16 %v6324
    %v7127 = vunpack.c.h.b16 %v6324
    %v7128 = vunpack.c.l.b16 %v6325
    %v7129 = vunpack.c.h.b16 %v6325
    %v7130 = vunpack.c.l.b16 %v6326
    %v7131 = vunpack.c.h.b16 %v6326
    %v7132 = vunpack.c.l.b16 %v6327
    %v7133 = vunpack.c.h.b16 %v6327
    %v7134 = vunpack.c.l.b16 %v6328
    %v7135 = vunpack.c.h.b16 %v6328
    %v7136 = vunpack.c.l.b16 %v6329
    %v7137 = vunpack.c.h.b16 %v6329
    %v7138 = vunpack.c.l.b16 %v6330
    %v7139 = vunpack.c.h.b16 %v6330
    %v7140 = vunpack.c.l.b16 %v6331
    %v7141 = vunpack.c.h.b16 %v6331
    %v7142 = vunpack.c.l.b16 %v6332
    %v7143 = vunpack.c.h.b16 %v6332
    %v7144 = vunpack.c.l.b16 %v6333
    %v7145 = vunpack.c.h.b16 %v6333
    %v7146 = vunpack.c.l.b16 %v6334
    %v7147 = vunpack.c.h.b16 %v6334
    %v7148 = vunpack.c.l.b16 %v6335
    %v7149 = vunpack.c.h.b16 %v6335
    %v7150 = vunpack.c.l.b16 %v6336
    %v7151 = vunpack.c.h.b16 %v6336
    %v7152 = vunpack.c.l.b16 %v6337
    %v7153 = vunpack.c.h.b16 %v6337
    %v7154 = vunpack.c.l.b16 %v6338
    %v7155 = vunpack.c.h.b16 %v6338
    %v7156 = vunpack.c.l.b16 %v6339
    %v7157 = vunpack.c.h.b16 %v6339
    %v7158 = vunpack.c.l.b16 %v6340
    %v7159 = vunpack.c.h.b16 %v6340
    %v7160 = vunpack.c.l.b16 %v6341
    %v7161 = vunpack.c.h.b16 %v6341
    %v7162 = vunpack.c.l.b16 %v6342
    %v7163 = vunpack.c.h.b16 %v6342
    %v7164 = vunpack.c.l.b16 %v6343
    %v7165 = vunpack.c.h.b16 %v6343
    %v7166 = vunpack.c.l.b16 %v6344
    %v7167 = vunpack.c.h.b16 %v6344
    %v7168 = vunpack.c.l.b16 %v6345
    %v7169 = vunpack.c.h.b16 %v6345
    %v7170 = vunpack.c.l.b16 %v6346
    %v7171 = vunpack.c.h.b16 %v6346
    %v7172 = vunpack.c.l.b16 %v6347
    %v7173 = vunpack.c.h.b16 %v6347
    %v7174 = vunpack.c.l.b16 %v6348
    %v7175 = vunpack.c.h.b16 %v6348
    %v7176 = vunpack.c.l.b16 %v6349
    %v7177 = vunpack.c.h.b16 %v6349
    %v7178 = vunpack.c.l.b16 %v6350
    %v7179 = vunpack.c.h.b16 %v6350
    %v7180 = vunpack.c.l.b16 %v6351
    %v7181 = vunpack.c.h.b16 %v6351
    %v7182 = vunpack.c.l.b16 %v6352
    %v7183 = vunpack.c.h.b16 %v6352
    %v7184 = vunpack.c.l.b16 %v6353
    %v7185 = vunpack.c.h.b16 %v6353
    %v7186 = vunpack.c.l.b16 %v6354
    %v7187 = vunpack.c.h.b16 %v6354
    %v7188 = vunpack.c.l.b16 %v6355
    %v7189 = vunpack.c.h.b16 %v6355
    %v7190 = vunpack.c.l.b16 %v6356
    %v7191 = vunpack.c.h.b16 %v6356
    %v7192 = vunpack.c.l.b16 %v6357
    %v7193 = vunpack.c.h.b16 %v6357
    %v7194 = vunpack.c.l.b16 %v6358
    %v7195 = vunpack.c.h.b16 %v6358
    %v7196 = vunpack.c.l.b16 %v6359
    %v7197 = vunpack.c.h.b16 %v6359
    %v7198 = vunpack.c.l.b16 %v6360
    %v7199 = vunpack.c.h.b16 %v6360
    %v7200 = vunpack.c.l.b16 %v6361
    %v7201 = vunpack.c.h.b16 %v6361
    %v7202 = vunpack.c.l.b16 %v6362
    %v7203 = vunpack.c.h.b16 %v6362
    %v7204 = vunpack.c.l.b16 %v6363
    %v7205 = vunpack.c.h.b16 %v6363
    %v7206 = vunpack.c.l.b16 %v6364
    %v7207 = vunpack.c.h.b16 %v6364
    %v7208 = vunpack.c.l.b16 %v6365
    %v7209 = vunpack.c.h.b16 %v6365
    %v7210 = vunpack.c.l.b16 %v6366
    %v7211 = vunpack.c.h.b16 %v6366
    %v7212 = vunpack.c.l.b16 %v6367
    %v7213 = vunpack.c.h.b16 %v6367
    %v7214 = vunpack.c.l.b16 %v6368
    %v7215 = vunpack.c.h.b16 %v6368
    %v7216 = vunpack.c.l.b16 %v6369
    %v7217 = vunpack.c.h.b16 %v6369
    %v7218 = vunpack.c.l.b16 %v6370
    %v7219 = vunpack.c.h.b16 %v6370
    %v7220 = vunpack.c.l.b16 %v6371
    %v7221 = vunpack.c.h.b16 %v6371
    %v7222 = vunpack.c.l.b16 %v6372
    %v7223 = vunpack.c.h.b16 %v6372
    %v7224 = vunpack.c.l.b16 %v6373
    %v7225 = vunpack.c.h.b16 %v6373
    %v7226 = vunpack.c.l.b16 %v6374
    %v7227 = vunpack.c.h.b16 %v6374
    %v7228 = vunpack.c.l.b16 %v6375
    %v7229 = vunpack.c.h.b16 %v6375
    %v7230 = vunpack.c.l.b16 %v6376
    %v7231 = vunpack.c.h.b16 %v6376
    %v7232 = vunpack.c.l.b16 %v6377
    %v7233 = vunpack.c.h.b16 %v6377
    %v7234 = vunpack.c.l.b16 %v6378
    %v7235 = vunpack.c.h.b16 %v6378
    %v7236 = vunpack.c.l.b16 %v6379
    %v7237 = vunpack.c.h.b16 %v6379
    %v7238 = vunpack.c.l.b16 %v6380
    %v7239 = vunpack.c.h.b16 %v6380
    %v7240 = vunpack.c.l.b16 %v6381
    %v7241 = vunpack.c.h.b16 %v6381
    %v7242 = vunpack.c.l.b16 %v6382
    %v7243 = vunpack.c.h.b16 %v6382
    %v7244 = vunpack.c.l.b16 %v6383
    %v7245 = vunpack.c.h.b16 %v6383
    %v7246 = vunpack.c.l.b16 %v6384
    %v7247 = vunpack.c.h.b16 %v6384
    %v7248 = vunpack.c.l.b16 %v6385
    %v7249 = vunpack.c.h.b16 %v6385
    %v7250 = vunpack.c.l.b16 %v6386
    %v7251 = vunpack.c.h.b16 %v6386
    %v7252 = vunpack.c.l.b16 %v6387
    %v7253 = vunpack.c.h.b16 %v6387
    %v7254 = vunpack.c.l.b16 %v6388
    %v7255 = vunpack.c.h.b16 %v6388
    %v7256 = vunpack.c.l.b16 %v6389
    %v7257 = vunpack.c.h.b16 %v6389
    %v7258 = vunpack.c.l.b16 %v6390
    %v7259 = vunpack.c.h.b16 %v6390
    %v7260 = vunpack.c.l.b16 %v6391
    %v7261 = vunpack.c.h.b16 %v6391
    %v7262 = vunpack.c.l.b16 %v6392
    %v7263 = vunpack.c.h.b16 %v6392
    %v7264 = vunpack.c.l.b16 %v6393
    %v7265 = vunpack.c.h.b16 %v6393
    %v7266 = vunpack.c.l.b16 %v6394
    %v7267 = vunpack.c.h.b16 %v6394
    %v7268 = vunpack.c.l.b16 %v6395
    %v7269 = vunpack.c.h.b16 %v6395
    %v7270 = vunpack.c.l.b16 %v6396
    %v7271 = vunpack.c.h.b16 %v6396
    %v7272 = vunpack.c.l.b16 %v6397
    %v7273 = vunpack.c.h.b16 %v6397
    %v7274 = vunpack.c.l.b16 %v6398
    %v7275 = vunpack.c.h.b16 %v6398
    %v7276 = vunpack.c.l.b16 %v6399
    %v7277 = vunpack.c.h.b16 %v6399
    %v7278 = vunpack.c.l.b16 %v6400
    %v7279 = vunpack.c.h.b16 %v6400
    %v7280 = vunpack.c.l.b16 %v6401
    %v7281 = vunpack.c.h.b16 %v6401
    %v7282 = vunpack.c.l.b16 %v6402
    %v7283 = vunpack.c.h.b16 %v6402
    %v7284 = vunpack.c.l.b16 %v6403
    %v7285 = vunpack.c.h.b16 %v6403
    %v7286 = vunpack.c.l.b16 %v6404
    %v7287 = vunpack.c.h.b16 %v6404
    %v7288 = vunpack.c.l.b16 %v6405
    %v7289 = vunpack.c.h.b16 %v6405
    %v7290 = vunpack.c.l.b16 %v6406
    %v7291 = vunpack.c.h.b16 %v6406
    %v7292 = vunpack.c.l.b16 %v6407
    %v7293 = vunpack.c.h.b16 %v6407
    %v7294 = vunpack.c.l.b16 %v6408
    %v7295 = vunpack.c.h.b16 %v6408
    %v7296 = vunpack.c.l.b16 %v6409
    %v7297 = vunpack.c.h.b16 %v6409
    %v7298 = vunpack.c.l.b16 %v6410
    %v7299 = vunpack.c.h.b16 %v6410
    %v7300 = vunpack.c.l.b16 %v6411
    %v7301 = vunpack.c.h.b16 %v6411
    %v7302 = vunpack.c.l.b16 %v6412
    %v7303 = vunpack.c.h.b16 %v6412
    %v7304 = vunpack.c.l.b16 %v6413
    %v7305 = vunpack.c.h.b16 %v6413
    %v7306 = vunpack.c.l.b16 %v6414
    %v7307 = vunpack.c.h.b16 %v6414
    %v7308 = vunpack.c.l.b16 %v6415
    %v7309 = vunpack.c.h.b16 %v6415
    %v7310 = vunpack.c.l.b16 %v6416
    %v7311 = vunpack.c.h.b16 %v6416
    %v7312 = vunpack.c.l.b16 %v6417
    %v7313 = vunpack.c.h.b16 %v6417
    %v7314 = vunpack.c.l.b16 %v6418
    %v7315 = vunpack.c.h.b16 %v6418
    %v7316 = vunpack.c.l.b16 %v6419
    %v7317 = vunpack.c.h.b16 %v6419
    %v7318 = vunpack.c.l.b16 %v6420
    %v7319 = vunpack.c.h.b16 %v6420
    %v7320 = vunpack.c.l.b16 %v6421
    %v7321 = vunpack.c.h.b16 %v6421
    %v7322 = vunpack.c.l.b16 %v6422
    %v7323 = vunpack.c.h.b16 %v6422
    %v7324 = vunpack.c.l.b16 %v6423
    %v7325 = vunpack.c.h.b16 %v6423
    %v7326 = vunpack.c.l.b16 %v6424
    %v7327 = vunpack.c.h.b16 %v6424
    %v7328 = vunpack.c.l.b16 %v6425
    %v7329 = vunpack.c.h.b16 %v6425
    %v7330 = vunpack.c.l.b16 %v6426
    %v7331 = vunpack.c.h.b16 %v6426
    %v7332 = vunpack.c.l.b16 %v6427
    %v7333 = vunpack.c.h.b16 %v6427
    %v7334 = vunpack.c.l.b16 %v6428
    %v7335 = vunpack.c.h.b16 %v6428
    %v7336 = vunpack.c.l.b16 %v6429
    %v7337 = vunpack.c.h.b16 %v6429
    %v7338 = vunpack.c.l.b16 %v6430
    %v7339 = vunpack.c.h.b16 %v6430
    %v7340 = vunpack.c.l.b16 %v6431
    %v7341 = vunpack.c.h.b16 %v6431
    %v7342 = vunpack.c.l.b16 %v6432
    %v7343 = vunpack.c.h.b16 %v6432
    %v7344 = vunpack.c.l.b16 %v6433
    %v7345 = vunpack.c.h.b16 %v6433
    %v7346 = vunpack.c.l.b16 %v6434
    %v7347 = vunpack.c.h.b16 %v6434
    %v7348 = vunpack.c.l.b16 %v6435
    %v7349 = vunpack.c.h.b16 %v6435
    %v7350 = vunpack.c.l.b16 %v6436
    %v7351 = vunpack.c.h.b16 %v6436
    %v7352 = vunpack.c.l.b16 %v6437
    %v7353 = vunpack.c.h.b16 %v6437
    %v7354 = vunpack.c.l.b16 %v6438
    %v7355 = vunpack.c.h.b16 %v6438
    %v7356 = vunpack.c.l.b16 %v6439
    %v7357 = vunpack.c.h.b16 %v6439
    %v7358 = vunpack.c.l.b16 %v6440
    %v7359 = vunpack.c.h.b16 %v6440
    %v7360 = vunpack.c.l.b16 %v6441
    %v7361 = vunpack.c.h.b16 %v6441
    %v7362 = vunpack.c.l.b16 %v6442
    %v7363 = vunpack.c.h.b16 %v6442
    %v7364 = vunpack.c.l.b16 %v6443
    %v7365 = vunpack.c.h.b16 %v6443
    %v7366 = vunpack.c.l.b16 %v6444
    %v7367 = vunpack.c.h.b16 %v6444
    %v7368 = vunpack.c.l.b16 %v6445
    %v7369 = vunpack.c.h.b16 %v6445
    %v7370 = vunpack.c.l.b16 %v6446
    %v7371 = vunpack.c.h.b16 %v6446
    %v7372 = vunpack.c.l.b16 %v6447
    %v7373 = vunpack.c.h.b16 %v6447
    %v7374 = vunpack.c.l.b16 %v6448
    %v7375 = vunpack.c.h.b16 %v6448
    %v7376 = vunpack.c.l.b16 %v6449
    %v7377 = vunpack.c.h.b16 %v6449
    %v7378 = vunpack.c.l.b16 %v6450
    %v7379 = vunpack.c.h.b16 %v6450
    %v7380 = vunpack.c.l.b16 %v6451
    %v7381 = vunpack.c.h.b16 %v6451
    %v7382 = vunpack.c.l.b16 %v6452
    %v7383 = vunpack.c.h.b16 %v6452
    %v7384 = vunpack.c.l.b16 %v6453
    %v7385 = vunpack.c.h.b16 %v6453
    %v7386 = vunpack.c.l.b16 %v6454
    %v7387 = vunpack.c.h.b16 %v6454
    %v7388 = vunpack.c.l.b16 %v6455
    %v7389 = vunpack.c.h.b16 %v6455
    %v7390 = vunpack.c.l.b16 %v6456
    %v7391 = vunpack.c.h.b16 %v6456
    %v7392 = vunpack.c.l.b16 %v6457
    %v7393 = vunpack.c.h.b16 %v6457
    %v7394 = vunpack.c.l.b16 %v6458
    %v7395 = vunpack.c.h.b16 %v6458
    %v7396 = vunpack.c.l.b16 %v6459
    %v7397 = vunpack.c.h.b16 %v6459
    %v7398 = vunpack.c.l.b16 %v6460
    %v7399 = vunpack.c.h.b16 %v6460
    %v7400 = vunpack.c.l.b16 %v6461
    %v7401 = vunpack.c.h.b16 %v6461
    %v7402 = vunpack.c.l.b16 %v6462
    %v7403 = vunpack.c.h.b16 %v6462
    %v7404 = vunpack.c.l.b16 %v6463
    %v7405 = vunpack.c.h.b16 %v6463
    %v7406 = vunpack.c.l.b16 %v6464
    %v7407 = vunpack.c.h.b16 %v6464
    %v7408 = vunpack.c.l.b16 %v6465
    %v7409 = vunpack.c.h.b16 %v6465
    %v7410 = vunpack.c.l.b16 %v6466
    %v7411 = vunpack.c.h.b16 %v6466
    %v7412 = vunpack.c.l.b16 %v6467
    %v7413 = vunpack.c.h.b16 %v6467
    %v7414 = vunpack.c.l.b16 %v6468
    %v7415 = vunpack.c.h.b16 %v6468
    %v7416 = vunpack.c.l.b16 %v6469
    %v7417 = vunpack.c.h.b16 %v6469
    %v7418 = vunpack.c.l.b16 %v6470
    %v7419 = vunpack.c.h.b16 %v6470
    %v7420 = vunpack.c.l.b16 %v6471
    %v7421 = vunpack.c.h.b16 %v6471
    %v7422 = vunpack.c.l.b16 %v6472
    %v7423 = vunpack.c.h.b16 %v6472
    %v7424 = vunpack.c.l.b16 %v6473
    %v7425 = vunpack.c.h.b16 %v6473
    %v7426 = vunpack.c.l.b16 %v6474
    %v7427 = vunpack.c.h.b16 %v6474
    %v7428 = vunpack.c.l.b16 %v6475
    %v7429 = vunpack.c.h.b16 %v6475
    %v7430 = vunpack.c.l.b16 %v6476
    %v7431 = vunpack.c.h.b16 %v6476
    %v7432 = vunpack.c.l.b16 %v6477
    %v7433 = vunpack.c.h.b16 %v6477
    %v7434 = vunpack.c.l.b16 %v6478
    %v7435 = vunpack.c.h.b16 %v6478
    %v7436 = vunpack.c.l.b16 %v6479
    %v7437 = vunpack.c.h.b16 %v6479
    %v7438 = vunpack.c.l.b16 %v6480
    %v7439 = vunpack.c.h.b16 %v6480
    %v7440 = vunpack.c.l.b16 %v6481
    %v7441 = vunpack.c.h.b16 %v6481
    %v7442 = vunpack.c.l.b16 %v6482
    %v7443 = vunpack.c.h.b16 %v6482
    %v7444 = vunpack.c.l.b16 %v6483
    %v7445 = vunpack.c.h.b16 %v6483
    %v7446 = vunpack.c.l.b16 %v6484
    %v7447 = vunpack.c.h.b16 %v6484
    %v7448 = vunpack.c.l.b16 %v6485
    %v7449 = vunpack.c.h.b16 %v6485
    %v7450 = vunpack.c.l.b16 %v6486
    %v7451 = vunpack.c.h.b16 %v6486
    %v7452 = vunpack.c.l.b16 %v6487
    %v7453 = vunpack.c.h.b16 %v6487
    %v7454 = vunpack.c.l.b16 %v6488
    %v7455 = vunpack.c.h.b16 %v6488
    %v7456 = vunpack.c.l.b16 %v6489
    %v7457 = vunpack.c.h.b16 %v6489
    %v7458 = vunpack.c.l.b16 %v6490
    %v7459 = vunpack.c.h.b16 %v6490
    %v7460 = vunpack.c.l.b16 %v6491
    %v7461 = vunpack.c.h.b16 %v6491
    %v7462 = vunpack.c.l.b16 %v6492
    %v7463 = vunpack.c.h.b16 %v6492
    %v7464 = vunpack.c.l.b16 %v6493
    %v7465 = vunpack.c.h.b16 %v6493
    %v7466 = vunpack.c.l.b16 %v6494
    %v7467 = vunpack.c.h.b16 %v6494
    %v7468 = vunpack.c.l.b16 %v6495
    %v7469 = vunpack.c.h.b16 %v6495
    %v7470 = vunpack.c.l.b16 %v6496
    %v7471 = vunpack.c.h.b16 %v6496
    %v7472 = vunpack.c.l.b16 %v6497
    %v7473 = vunpack.c.h.b16 %v6497
    %v7474 = vunpack.c.l.b16 %v6498
    %v7475 = vunpack.c.h.b16 %v6498
    %v7476 = vunpack.c.l.b16 %v6499
    %v7477 = vunpack.c.h.b16 %v6499
    %v7478 = vpack.c.b16 %v6846, %v6838
    %v7479 = vpack.c.b16 %v6847, %v6839
    %v7480 = vpack.c.b16 %v6848, %v6840
    %v7481 = vpack.c.b16 %v6849, %v6841
    %v7482 = vpack.c.b16 %v6850, %v6842
    %v7483 = vpack.c.b16 %v6851, %v6843
    %v7484 = vpack.c.b16 %v6852, %v6844
    %v7485 = vpack.c.b16 %v6853, %v6845
    %v7486 = vpack.c.b16 %v6862, %v6854
    %v7487 = vpack.c.b16 %v6863, %v6855
    %v7488 = vpack.c.b16 %v6864, %v6856
    %v7489 = vpack.c.b16 %v6865, %v6857
    %v7490 = vpack.c.b16 %v6866, %v6858
    %v7491 = vpack.c.b16 %v6867, %v6859
    %v7492 = vpack.c.b16 %v6868, %v6860
    %v7493 = vpack.c.b16 %v6869, %v6861
    %v7494 = vpack.c.b16 %v6878, %v6870
    %v7495 = vpack.c.b16 %v6879, %v6871
    %v7496 = vpack.c.b16 %v6880, %v6872
    %v7497 = vpack.c.b16 %v6881, %v6873
    %v7498 = vpack.c.b16 %v6882, %v6874
    %v7499 = vpack.c.b16 %v6883, %v6875
    %v7500 = vpack.c.b16 %v6884, %v6876
    %v7501 = vpack.c.b16 %v6885, %v6877
    %v7502 = vpack.c.b16 %v6894, %v6886
    %v7503 = vpack.c.b16 %v6895, %v6887
    %v7504 = vpack.c.b16 %v6896, %v6888
    %v7505 = vpack.c.b16 %v6897, %v6889
    %v7506 = vpack.c.b16 %v6898, %v6890
    %v7507 = vpack.c.b16 %v6899, %v6891
    %v7508 = vpack.c.b16 %v6900, %v6892
    %v7509 = vpack.c.b16 %v6901, %v6893
    %v7510 = vpack.c.b16 %v6910, %v6902
    %v7511 = vpack.c.b16 %v6911, %v6903
    %v7512 = vpack.c.b16 %v6912, %v6904
    %v7513 = vpack.c.b16 %v6913, %v6905
    %v7514 = vpack.c.b16 %v6914, %v6906
    %v7515 = vpack.c.b16 %v6915, %v6907
    %v7516 = vpack.c.b16 %v6916, %v6908
    %v7517 = vpack.c.b16 %v6917, %v6909
    %v7518 = vpack.c.b16 %v6926, %v6918
    %v7519 = vpack.c.b16 %v6927, %v6919
    %v7520 = vpack.c.b16 %v6928, %v6920
    %v7521 = vpack.c.b16 %v6929, %v6921
    %v7522 = vpack.c.b16 %v6930, %v6922
    %v7523 = vpack.c.b16 %v6931, %v6923
    %v7524 = vpack.c.b16 %v6932, %v6924
    %v7525 = vpack.c.b16 %v6933, %v6925
    %v7526 = vpack.c.b16 %v6942, %v6934
    %v7527 = vpack.c.b16 %v6943, %v6935
    %v7528 = vpack.c.b16 %v6944, %v6936
    %v7529 = vpack.c.b16 %v6945, %v6937
    %v7530 = vpack.c.b16 %v6946, %v6938
    %v7531 = vpack.c.b16 %v6947, %v6939
    %v7532 = vpack.c.b16 %v6948, %v6940
    %v7533 = vpack.c.b16 %v6949, %v6941
    %v7534 = vpack.c.b16 %v6958, %v6950
    %v7535 = vpack.c.b16 %v6959, %v6951
    %v7536 = vpack.c.b16 %v6960, %v6952
    %v7537 = vpack.c.b16 %v6961, %v6953
    %v7538 = vpack.c.b16 %v6962, %v6954
    %v7539 = vpack.c.b16 %v6963, %v6955
    %v7540 = vpack.c.b16 %v6964, %v6956
    %v7541 = vpack.c.b16 %v6965, %v6957
    %v7542 = vpack.c.b16 %v6974, %v6966
    %v7543 = vpack.c.b16 %v6975, %v6967
    %v7544 = vpack.c.b16 %v6976, %v6968
    %v7545 = vpack.c.b16 %v6977, %v6969
    %v7546 = vpack.c.b16 %v6978, %v6970
    %v7547 = vpack.c.b16 %v6979, %v6971
    %v7548 = vpack.c.b16 %v6980, %v6972
    %v7549 = vpack.c.b16 %v6981, %v6973
    %v7550 = vpack.c.b16 %v6990, %v6982
    %v7551 = vpack.c.b16 %v6991, %v6983
    %v7552 = vpack.c.b16 %v6992, %v6984
    %v7553 = vpack.c.b16 %v6993, %v6985
    %v7554 = vpack.c.b16 %v6994, %v6986
    %v7555 = vpack.c.b16 %v6995, %v6987
    %v7556 = vpack.c.b16 %v6996, %v6988
    %v7557 = vpack.c.b16 %v6997, %v6989
    %v7558 = vpack.c.b16 %v7006, %v6998
    %v7559 = vpack.c.b16 %v7007, %v6999
    %v7560 = vpack.c.b16 %v7008, %v7000
    %v7561 = vpack.c.b16 %v7009, %v7001
    %v7562 = vpack.c.b16 %v7010, %v7002
    %v7563 = vpack.c.b16 %v7011, %v7003
    %v7564 = vpack.c.b16 %v7012, %v7004
    %v7565 = vpack.c.b16 %v7013, %v7005
    %v7566 = vpack.c.b16 %v7022, %v7014
    %v7567 = vpack.c.b16 %v7023, %v7015
    %v7568 = vpack.c.b16 %v7024, %v7016
    %v7569 = vpack.c.b16 %v7025, %v7017
    %v7570 = vpack.c.b16 %v7026, %v7018
    %v7571 = vpack.c.b16 %v7027, %v7019
    %v7572 = vpack.c.b16 %v7028, %v7020
    %v7573 = vpack.c.b16 %v7029, %v7021
    %v7574 = vpack.c.b16 %v7038, %v7030
    %v7575 = vpack.c.b16 %v7039, %v7031
    %v7576 = vpack.c.b16 %v7040, %v7032
    %v7577 = vpack.c.b16 %v7041, %v7033
    %v7578 = vpack.c.b16 %v7042, %v7034
    %v7579 = vpack.c.b16 %v7043, %v7035
    %v7580 = vpack.c.b16 %v7044, %v7036
    %v7581 = vpack.c.b16 %v7045, %v7037
    %v7582 = vpack.c.b16 %v7054, %v7046
    %v7583 = vpack.c.b16 %v7055, %v7047
    %v7584 = vpack.c.b16 %v7056, %v7048
    %v7585 = vpack.c.b16 %v7057, %v7049
    %v7586 = vpack.c.b16 %v7058, %v7050
    %v7587 = vpack.c.b16 %v7059, %v7051
    %v7588 = vpack.c.b16 %v7060, %v7052
    %v7589 = vpack.c.b16 %v7061, %v7053
    %v7590 = vpack.c.b16 %v7070, %v7062
    %v7591 = vpack.c.b16 %v7071, %v7063
    %v7592 = vpack.c.b16 %v7072, %v7064
    %v7593 = vpack.c.b16 %v7073, %v7065
    %v7594 = vpack.c.b16 %v7074, %v7066
    %v7595 = vpack.c.b16 %v7075, %v7067
    %v7596 = vpack.c.b16 %v7076, %v7068
    %v7597 = vpack.c.b16 %v7077, %v7069
    %v7598 = vpack.c.b16 %v7086, %v7078
    %v7599 = vpack.c.b16 %v7087, %v7079
    %v7600 = vpack.c.b16 %v7088, %v7080
    %v7601 = vpack.c.b16 %v7089, %v7081
    %v7602 = vpack.c.b16 %v7090, %v7082
    %v7603 = vpack.c.b16 %v7091, %v7083
    %v7604 = vpack.c.b16 %v7092, %v7084
    %v7605 = vpack.c.b16 %v7093, %v7085
    %v7606 = vpack.c.b16 %v7102, %v7094
    %v7607 = vpack.c.b16 %v7103, %v7095
    %v7608 = vpack.c.b16 %v7104, %v7096
    %v7609 = vpack.c.b16 %v7105, %v7097
    %v7610 = vpack.c.b16 %v7106, %v7098
    %v7611 = vpack.c.b16 %v7107, %v7099
    %v7612 = vpack.c.b16 %v7108, %v7100
    %v7613 = vpack.c.b16 %v7109, %v7101
    %v7614 = vpack.c.b16 %v7118, %v7110
    %v7615 = vpack.c.b16 %v7119, %v7111
    %v7616 = vpack.c.b16 %v7120, %v7112
    %v7617 = vpack.c.b16 %v7121, %v7113
    %v7618 = vpack.c.b16 %v7122, %v7114
    %v7619 = vpack.c.b16 %v7123, %v7115
    %v7620 = vpack.c.b16 %v7124, %v7116
    %v7621 = vpack.c.b16 %v7125, %v7117
    %v7622 = vpack.c.b16 %v7134, %v7126
    %v7623 = vpack.c.b16 %v7135, %v7127
    %v7624 = vpack.c.b16 %v7136, %v7128
    %v7625 = vpack.c.b16 %v7137, %v7129
    %v7626 = vpack.c.b16 %v7138, %v7130
    %v7627 = vpack.c.b16 %v7139, %v7131
    %v7628 = vpack.c.b16 %v7140, %v7132
    %v7629 = vpack.c.b16 %v7141, %v7133
    %v7630 = vpack.c.b16 %v7150, %v7142
    %v7631 = vpack.c.b16 %v7151, %v7143
    %v7632 = vpack.c.b16 %v7152, %v7144
    %v7633 = vpack.c.b16 %v7153, %v7145
    %v7634 = vpack.c.b16 %v7154, %v7146
    %v7635 = vpack.c.b16 %v7155, %v7147
    %v7636 = vpack.c.b16 %v7156, %v7148
    %v7637 = vpack.c.b16 %v7157, %v7149
    %v7638 = vpack.c.b16 %v7166, %v7158
    %v7639 = vpack.c.b16 %v7167, %v7159
    %v7640 = vpack.c.b16 %v7168, %v7160
    %v7641 = vpack.c.b16 %v7169, %v7161
    %v7642 = vpack.c.b16 %v7170, %v7162
    %v7643 = vpack.c.b16 %v7171, %v7163
    %v7644 = vpack.c.b16 %v7172, %v7164
    %v7645 = vpack.c.b16 %v7173, %v7165
    %v7646 = vpack.c.b16 %v7182, %v7174
    %v7647 = vpack.c.b16 %v7183, %v7175
    %v7648 = vpack.c.b16 %v7184, %v7176
    %v7649 = vpack.c.b16 %v7185, %v7177
    %v7650 = vpack.c.b16 %v7186, %v7178
    %v7651 = vpack.c.b16 %v7187, %v7179
    %v7652 = vpack.c.b16 %v7188, %v7180
    %v7653 = vpack.c.b16 %v7189, %v7181
    %v7654 = vpack.c.b16 %v7198, %v7190
    %v7655 = vpack.c.b16 %v7199, %v7191
    %v7656 = vpack.c.b16 %v7200, %v7192
    %v7657 = vpack.c.b16 %v7201, %v7193
    %v7658 = vpack.c.b16 %v7202, %v7194
    %v7659 = vpack.c.b16 %v7203, %v7195
    %v7660 = vpack.c.b16 %v7204, %v7196
    %v7661 = vpack.c.b16 %v7205, %v7197
    %v7662 = vpack.c.b16 %v7214, %v7206
    %v7663 = vpack.c.b16 %v7215, %v7207
    %v7664 = vpack.c.b16 %v7216, %v7208
    %v7665 = vpack.c.b16 %v7217, %v7209
    %v7666 = vpack.c.b16 %v7218, %v7210
    %v7667 = vpack.c.b16 %v7219, %v7211
    %v7668 = vpack.c.b16 %v7220, %v7212
    %v7669 = vpack.c.b16 %v7221, %v7213
    %v7670 = vpack.c.b16 %v7230, %v7222
    %v7671 = vpack.c.b16 %v7231, %v7223
    %v7672 = vpack.c.b16 %v7232, %v7224
    %v7673 = vpack.c.b16 %v7233, %v7225
    %v7674 = vpack.c.b16 %v7234, %v7226
    %v7675 = vpack.c.b16 %v7235, %v7227
    %v7676 = vpack.c.b16 %v7236, %v7228
    %v7677 = vpack.c.b16 %v7237, %v7229
    %v7678 = vpack.c.b16 %v7246, %v7238
    %v7679 = vpack.c.b16 %v7247, %v7239
    %v7680 = vpack.c.b16 %v7248, %v7240
    %v7681 = vpack.c.b16 %v7249, %v7241
    %v7682 = vpack.c.b16 %v7250, %v7242
    %v7683 = vpack.c.b16 %v7251, %v7243
    %v7684 = vpack.c.b16 %v7252, %v7244
    %v7685 = vpack.c.b16 %v7253, %v7245
    %v7686 = vpack.c.b16 %v7262, %v7254
    %v7687 = vpack.c.b16 %v7263, %v7255
    %v7688 = vpack.c.b16 %v7264, %v7256
    %v7689 = vpack.c.b16 %v7265, %v7257
    %v7690 = vpack.c.b16 %v7266, %v7258
    %v7691 = vpack.c.b16 %v7267, %v7259
    %v7692 = vpack.c.b16 %v7268, %v7260
    %v7693 = vpack.c.b16 %v7269, %v7261
    %v7694 = vpack.c.b16 %v7278, %v7270
    %v7695 = vpack.c.b16 %v7279, %v7271
    %v7696 = vpack.c.b16 %v7280, %v7272
    %v7697 = vpack.c.b16 %v7281, %v7273
    %v7698 = vpack.c.b16 %v7282, %v7274
    %v7699 = vpack.c.b16 %v7283, %v7275
    %v7700 = vpack.c.b16 %v7284, %v7276
    %v7701 = vpack.c.b16 %v7285, %v7277
    %v7702 = vpack.c.b16 %v7294, %v7286
    %v7703 = vpack.c.b16 %v7295, %v7287
    %v7704 = vpack.c.b16 %v7296, %v7288
    %v7705 = vpack.c.b16 %v7297, %v7289
    %v7706 = vpack.c.b16 %v7298, %v7290
    %v7707 = vpack.c.b16 %v7299, %v7291
    %v7708 = vpack.c.b16 %v7300, %v7292
    %v7709 = vpack.c.b16 %v7301, %v7293
    %v7710 = vpack.c.b16 %v7310, %v7302
    %v7711 = vpack.c.b16 %v7311, %v7303
    %v7712 = vpack.c.b16 %v7312, %v7304
    %v7713 = vpack.c.b16 %v7313, %v7305
    %v7714 = vpack.c.b16 %v7314, %v7306
    %v7715 = vpack.c.b16 %v7315, %v7307
    %v7716 = vpack.c.b16 %v7316, %v7308
    %v7717 = vpack.c.b16 %v7317, %v7309
    %v7718 = vpack.c.b16 %v7326, %v7318
    %v7719 = vpack.c.b16 %v7327, %v7319
    %v7720 = vpack.c.b16 %v7328, %v7320
    %v7721 = vpack.c.b16 %v7329, %v7321
    %v7722 = vpack.c.b16 %v7330, %v7322
    %v7723 = vpack.c.b16 %v7331, %v7323
    %v7724 = vpack.c.b16 %v7332, %v7324
    %v7725 = vpack.c.b16 %v7333, %v7325
    %v7726 = vpack.c.b16 %v7342, %v7334
    %v7727 = vpack.c.b16 %v7343, %v7335
    %v7728 = vpack.c.b16 %v7344, %v7336
    %v7729 = vpack.c.b16 %v7345, %v7337
    %v7730 = vpack.c.b16 %v7346, %v7338
    %v7731 = vpack.c.b16 %v7347, %v7339
    %v7732 = vpack.c.b16 %v7348, %v7340
    %v7733 = vpack.c.b16 %v7349, %v7341
    %v7734 = vpack.c.b16 %v7358, %v7350
    %v7735 = vpack.c.b16 %v7359, %v7351
    %v7736 = vpack.c.b16 %v7360, %v7352
    %v7737 = vpack.c.b16 %v7361, %v7353
    %v7738 = vpack.c.b16 %v7362, %v7354
    %v7739 = vpack.c.b16 %v7363, %v7355
    %v7740 = vpack.c.b16 %v7364, %v7356
    %v7741 = vpack.c.b16 %v7365, %v7357
    %v7742 = vpack.c.b16 %v7374, %v7366
    %v7743 = vpack.c.b16 %v7375, %v7367
    %v7744 = vpack.c.b16 %v7376, %v7368
    %v7745 = vpack.c.b16 %v7377, %v7369
    %v7746 = vpack.c.b16 %v7378, %v7370
    %v7747 = vpack.c.b16 %v7379, %v7371
    %v7748 = vpack.c.b16 %v7380, %v7372
    %v7749 = vpack.c.b16 %v7381, %v7373
    %v7750 = vpack.c.b16 %v7390, %v7382
    %v7751 = vpack.c.b16 %v7391, %v7383
    %v7752 = vpack.c.b16 %v7392, %v7384
    %v7753 = vpack.c.b16 %v7393, %v7385
    %v7754 = vpack.c.b16 %v7394, %v7386
    %v7755 = vpack.c.b16 %v7395, %v7387
    %v7756 = vpack.c.b16 %v7396, %v7388
    %v7757 = vpack.c.b16 %v7397, %v7389
    %v7758 = vpack.c.b16 %v7406, %v7398
    %v7759 = vpack.c.b16 %v7407, %v7399
    %v7760 = vpack.c.b16 %v7408, %v7400
    %v7761 = vpack.c.b16 %v7409, %v7401
    %v7762 = vpack.c.b16 %v7410, %v7402
    %v7763 = vpack.c.b16 %v7411, %v7403
    %v7764 = vpack.c.b16 %v7412, %v7404
    %v7765 = vpack.c.b16 %v7413, %v7405
    %v7766 = vpack.c.b16 %v7422, %v7414
    %v7767 = vpack.c.b16 %v7423, %v7415
    %v7768 = vpack.c.b16 %v7424, %v7416
    %v7769 = vpack.c.b16 %v7425, %v7417
    %v7770 = vpack.c.b16 %v7426, %v7418
    %v7771 = vpack.c.b16 %v7427, %v7419
    %v7772 = vpack.c.b16 %v7428, %v7420
    %v7773 = vpack.c.b16 %v7429, %v7421
    %v7774 = vpack.c.b16 %v7438, %v7430
    %v7775 = vpack.c.b16 %v7439, %v7431
    %v7776 = vpack.c.b16 %v7440, %v7432
    %v7777 = vpack.c.b16 %v7441, %v7433
    %v7778 = vpack.c.b16 %v7442, %v7434
    %v7779 = vpack.c.b16 %v7443, %v7435
    %v7780 = vpack.c.b16 %v7444, %v7436
    %v7781 = vpack.c.b16 %v7445, %v7437
    %v7782 = vpack.c.b16 %v7454, %v7446
    %v7783 = vpack.c.b16 %v7455, %v7447
    %v7784 = vpack.c.b16 %v7456, %v7448
    %v7785 = vpack.c.b16 %v7457, %v7449
    %v7786 = vpack.c.b16 %v7458, %v7450
    %v7787 = vpack.c.b16 %v7459, %v7451
    %v7788 = vpack.c.b16 %v7460, %v7452
    %v7789 = vpack.c.b16 %v7461, %v7453
    %v7790 = vpack.c.b16 %v7470, %v7462
    %v7791 = vpack.c.b16 %v7471, %v7463
    %v7792 = vpack.c.b16 %v7472, %v7464
    %v7793 = vpack.c.b16 %v7473, %v7465
    %v7794 = vpack.c.b16 %v7474, %v7466
    %v7795 = vpack.c.b16 %v7475, %v7467
    %v7796 = vpack.c.b16 %v7476, %v7468
    %v7797 = vpack.c.b16 %v7477, %v7469
    %8118 = vmatpush.bf16.msra.mxu0 %v7534
    %8119 = vmatpush.bf16.msra.mxu0 %v7526
    %8120 = vmatpush.bf16.msra.mxu0 %v7518
    %8121 = vmatpush.bf16.msra.mxu0 %v7510
    %8122 = vmatpush.bf16.msra.mxu0 %v7502
    %8123 = vmatpush.bf16.msra.mxu0 %v7494
    %8124 = vmatpush.bf16.msra.mxu0 %v7486
    %8125 = vmatpush.bf16.msra.mxu0 %v7478
    %8126 = vmatmul.bf16.gmra.mxu0 %v6175
    %v8127 = vpop.f32.mrf.mxu0
    %v8128 = vadd.f32 %v6502, %v8127
    %v8129 = vpop.f32.mrf.mxu0
    %8130 = vdwg.mxu0
    %8131 = vmatpush.bf16.msra.mxu0 %v7598
    %8132 = vmatpush.bf16.msra.mxu0 %v7590
    %8133 = vmatpush.bf16.msra.mxu0 %v7582
    %8134 = vmatpush.bf16.msra.mxu0 %v7574
    %8135 = vmatpush.bf16.msra.mxu0 %v7566
    %8136 = vmatpush.bf16.msra.mxu0 %v7558
    %8137 = vmatpush.bf16.msra.mxu0 %v7550
    %8138 = vmatpush.bf16.msra.mxu0 %v7542
    %8139 = vmatmul.bf16.gmra.mxu0 %v6176
    %v8140 = vpop.f32.mrf.mxu0
    %v8141 = vadd.f32 %v8128, %v8140
    %v8142 = vpop.f32.mrf.mxu0
    %8143 = vdwg.mxu0
    %8144 = vmatpush.bf16.msra.mxu0 %v7662
    %8145 = vmatpush.bf16.msra.mxu0 %v7654
    %8146 = vmatpush.bf16.msra.mxu0 %v7646
    %8147 = vmatpush.bf16.msra.mxu0 %v7638
    %8148 = vmatpush.bf16.msra.mxu0 %v7630
    %8149 = vmatpush.bf16.msra.mxu0 %v7622
    %8150 = vmatpush.bf16.msra.mxu0 %v7614
    %8151 = vmatpush.bf16.msra.mxu0 %v7606
    %8152 = vmatmul.bf16.gmra.mxu0 %v6177
    %v8153 = vpop.f32.mrf.mxu0
    %v8154 = vadd.f32 %v8141, %v8153
    %v8155 = vpop.f32.mrf.mxu0
    %8156 = vdwg.mxu0
    %8157 = vmatpush.bf16.msra.mxu0 %v7726
    %8158 = vmatpush.bf16.msra.mxu0 %v7718
    %8159 = vmatpush.bf16.msra.mxu0 %v7710
    %8160 = vmatpush.bf16.msra.mxu0 %v7702
    %8161 = vmatpush.bf16.msra.mxu0 %v7694
    %8162 = vmatpush.bf16.msra.mxu0 %v7686
    %8163 = vmatpush.bf16.msra.mxu0 %v7678
    %8164 = vmatpush.bf16.msra.mxu0 %v7670
    %8165 = vmatmul.bf16.gmra.mxu0 %v6178
    %v8166 = vpop.f32.mrf.mxu0
    %v8167 = vadd.f32 %v8154, %v8166
    %v8168 = vpop.f32.mrf.mxu0
    %8169 = vdwg.mxu0
    %8170 = vmatpush.bf16.msra.mxu0 %v7790
    %8171 = vmatpush.bf16.msra.mxu0 %v7782
    %8172 = vmatpush.bf16.msra.mxu0 %v7774
    %8173 = vmatpush.bf16.msra.mxu0 %v7766
    %8174 = vmatpush.bf16.msra.mxu0 %v7758
    %8175 = vmatpush.bf16.msra.mxu0 %v7750
    %8176 = vmatpush.bf16.msra.mxu0 %v7742
    %8177 = vmatpush.bf16.msra.mxu0 %v7734
    %8178 = vmatmul.bf16.gmra.mxu0 %v6179
    %v8179 = vpop.f32.mrf.mxu0
    %v8180 = vadd.f32 %v8167, %v8179
    %v8181 = vpop.f32.mrf.mxu0
    %8182 = vdwg.mxu0
    %8183 = vmatpush.bf16.msra.mxu0 %v7535
    %8184 = vmatpush.bf16.msra.mxu0 %v7527
    %8185 = vmatpush.bf16.msra.mxu0 %v7519
    %8186 = vmatpush.bf16.msra.mxu0 %v7511
    %8187 = vmatpush.bf16.msra.mxu0 %v7503
    %8188 = vmatpush.bf16.msra.mxu0 %v7495
    %8189 = vmatpush.bf16.msra.mxu0 %v7487
    %8190 = vmatpush.bf16.msra.mxu0 %v7479
    %8191 = vmatmul.bf16.gmra.mxu0 %v6175
    %v8192 = vpop.f32.mrf.mxu0
    %v8193 = vadd.f32 %v6503, %v8192
    %v8194 = vpop.f32.mrf.mxu0
    %8195 = vdwg.mxu0
    %8196 = vmatpush.bf16.msra.mxu0 %v7599
    %8197 = vmatpush.bf16.msra.mxu0 %v7591
    %8198 = vmatpush.bf16.msra.mxu0 %v7583
    %8199 = vmatpush.bf16.msra.mxu0 %v7575
    %8200 = vmatpush.bf16.msra.mxu0 %v7567
    %8201 = vmatpush.bf16.msra.mxu0 %v7559
    %8202 = vmatpush.bf16.msra.mxu0 %v7551
    %8203 = vmatpush.bf16.msra.mxu0 %v7543
    %8204 = vmatmul.bf16.gmra.mxu0 %v6176
    %v8205 = vpop.f32.mrf.mxu0
    %v8206 = vadd.f32 %v8193, %v8205
    %v8207 = vpop.f32.mrf.mxu0
    %8208 = vdwg.mxu0
    %8209 = vmatpush.bf16.msra.mxu0 %v7663
    %8210 = vmatpush.bf16.msra.mxu0 %v7655
    %8211 = vmatpush.bf16.msra.mxu0 %v7647
    %8212 = vmatpush.bf16.msra.mxu0 %v7639
    %8213 = vmatpush.bf16.msra.mxu0 %v7631
    %8214 = vmatpush.bf16.msra.mxu0 %v7623
    %8215 = vmatpush.bf16.msra.mxu0 %v7615
    %8216 = vmatpush.bf16.msra.mxu0 %v7607
    %8217 = vmatmul.bf16.gmra.mxu0 %v6177
    %v8218 = vpop.f32.mrf.mxu0
    %v8219 = vadd.f32 %v8206, %v8218
    %v8220 = vpop.f32.mrf.mxu0
    %8221 = vdwg.mxu0
    %8222 = vmatpush.bf16.msra.mxu0 %v7727
    %8223 = vmatpush.bf16.msra.mxu0 %v7719
    %8224 = vmatpush.bf16.msra.mxu0 %v7711
    %8225 = vmatpush.bf16.msra.mxu0 %v7703
    %8226 = vmatpush.bf16.msra.mxu0 %v7695
    %8227 = vmatpush.bf16.msra.mxu0 %v7687
    %8228 = vmatpush.bf16.msra.mxu0 %v7679
    %8229 = vmatpush.bf16.msra.mxu0 %v7671
    %8230 = vmatmul.bf16.gmra.mxu0 %v6178
    %v8231 = vpop.f32.mrf.mxu0
    %v8232 = vadd.f32 %v8219, %v8231
    %v8233 = vpop.f32.mrf.mxu0
    %8234 = vdwg.mxu0
    %8235 = vmatpush.bf16.msra.mxu0 %v7791
    %8236 = vmatpush.bf16.msra.mxu0 %v7783
    %8237 = vmatpush.bf16.msra.mxu0 %v7775
    %8238 = vmatpush.bf16.msra.mxu0 %v7767
    %8239 = vmatpush.bf16.msra.mxu0 %v7759
    %8240 = vmatpush.bf16.msra.mxu0 %v7751
    %8241 = vmatpush.bf16.msra.mxu0 %v7743
    %8242 = vmatpush.bf16.msra.mxu0 %v7735
    %8243 = vmatmul.bf16.gmra.mxu0 %v6179
    %v8244 = vpop.f32.mrf.mxu0
    %v8245 = vadd.f32 %v8232, %v8244
    %v8246 = vpop.f32.mrf.mxu0
    %8247 = vdwg.mxu0
    %8248 = vmatpush.bf16.msra.mxu0 %v7536
    %8249 = vmatpush.bf16.msra.mxu0 %v7528
    %8250 = vmatpush.bf16.msra.mxu0 %v7520
    %8251 = vmatpush.bf16.msra.mxu0 %v7512
    %8252 = vmatpush.bf16.msra.mxu0 %v7504
    %8253 = vmatpush.bf16.msra.mxu0 %v7496
    %8254 = vmatpush.bf16.msra.mxu0 %v7488
    %8255 = vmatpush.bf16.msra.mxu0 %v7480
    %8256 = vmatmul.bf16.gmra.mxu0 %v6175
    %v8257 = vpop.f32.mrf.mxu0
    %v8258 = vadd.f32 %v6504, %v8257
    %v8259 = vpop.f32.mrf.mxu0
    %8260 = vdwg.mxu0
    %8261 = vmatpush.bf16.msra.mxu0 %v7600
    %8262 = vmatpush.bf16.msra.mxu0 %v7592
    %8263 = vmatpush.bf16.msra.mxu0 %v7584
    %8264 = vmatpush.bf16.msra.mxu0 %v7576
    %8265 = vmatpush.bf16.msra.mxu0 %v7568
    %8266 = vmatpush.bf16.msra.mxu0 %v7560
    %8267 = vmatpush.bf16.msra.mxu0 %v7552
    %8268 = vmatpush.bf16.msra.mxu0 %v7544
    %8269 = vmatmul.bf16.gmra.mxu0 %v6176
    %v8270 = vpop.f32.mrf.mxu0
    %v8271 = vadd.f32 %v8258, %v8270
    %v8272 = vpop.f32.mrf.mxu0
    %8273 = vdwg.mxu0
    %8274 = vmatpush.bf16.msra.mxu0 %v7664
    %8275 = vmatpush.bf16.msra.mxu0 %v7656
    %8276 = vmatpush.bf16.msra.mxu0 %v7648
    %8277 = vmatpush.bf16.msra.mxu0 %v7640
    %8278 = vmatpush.bf16.msra.mxu0 %v7632
    %8279 = vmatpush.bf16.msra.mxu0 %v7624
    %8280 = vmatpush.bf16.msra.mxu0 %v7616
    %8281 = vmatpush.bf16.msra.mxu0 %v7608
    %8282 = vmatmul.bf16.gmra.mxu0 %v6177
    %v8283 = vpop.f32.mrf.mxu0
    %v8284 = vadd.f32 %v8271, %v8283
    %v8285 = vpop.f32.mrf.mxu0
    %8286 = vdwg.mxu0
    %8287 = vmatpush.bf16.msra.mxu0 %v7728
    %8288 = vmatpush.bf16.msra.mxu0 %v7720
    %8289 = vmatpush.bf16.msra.mxu0 %v7712
    %8290 = vmatpush.bf16.msra.mxu0 %v7704
    %8291 = vmatpush.bf16.msra.mxu0 %v7696
    %8292 = vmatpush.bf16.msra.mxu0 %v7688
    %8293 = vmatpush.bf16.msra.mxu0 %v7680
    %8294 = vmatpush.bf16.msra.mxu0 %v7672
    %8295 = vmatmul.bf16.gmra.mxu0 %v6178
    %v8296 = vpop.f32.mrf.mxu0
    %v8297 = vadd.f32 %v8284, %v8296
    %v8298 = vpop.f32.mrf.mxu0
    %8299 = vdwg.mxu0
    %8300 = vmatpush.bf16.msra.mxu0 %v7792
    %8301 = vmatpush.bf16.msra.mxu0 %v7784
    %8302 = vmatpush.bf16.msra.mxu0 %v7776
    %8303 = vmatpush.bf16.msra.mxu0 %v7768
    %8304 = vmatpush.bf16.msra.mxu0 %v7760
    %8305 = vmatpush.bf16.msra.mxu0 %v7752
    %8306 = vmatpush.bf16.msra.mxu0 %v7744
    %8307 = vmatpush.bf16.msra.mxu0 %v7736
    %8308 = vmatmul.bf16.gmra.mxu0 %v6179
    %v8309 = vpop.f32.mrf.mxu0
    %v8310 = vadd.f32 %v8297, %v8309
    %v8311 = vpop.f32.mrf.mxu0
    %8312 = vdwg.mxu0
    %8313 = vmatpush.bf16.msra.mxu0 %v7537
    %8314 = vmatpush.bf16.msra.mxu0 %v7529
    %8315 = vmatpush.bf16.msra.mxu0 %v7521
    %8316 = vmatpush.bf16.msra.mxu0 %v7513
    %8317 = vmatpush.bf16.msra.mxu0 %v7505
    %8318 = vmatpush.bf16.msra.mxu0 %v7497
    %8319 = vmatpush.bf16.msra.mxu0 %v7489
    %8320 = vmatpush.bf16.msra.mxu0 %v7481
    %8321 = vmatmul.bf16.gmra.mxu0 %v6175
    %v8322 = vpop.f32.mrf.mxu0
    %v8323 = vadd.f32 %v6505, %v8322
    %v8324 = vpop.f32.mrf.mxu0
    %8325 = vdwg.mxu0
    %8326 = vmatpush.bf16.msra.mxu0 %v7601
    %8327 = vmatpush.bf16.msra.mxu0 %v7593
    %8328 = vmatpush.bf16.msra.mxu0 %v7585
    %8329 = vmatpush.bf16.msra.mxu0 %v7577
    %8330 = vmatpush.bf16.msra.mxu0 %v7569
    %8331 = vmatpush.bf16.msra.mxu0 %v7561
    %8332 = vmatpush.bf16.msra.mxu0 %v7553
    %8333 = vmatpush.bf16.msra.mxu0 %v7545
    %8334 = vmatmul.bf16.gmra.mxu0 %v6176
    %v8335 = vpop.f32.mrf.mxu0
    %v8336 = vadd.f32 %v8323, %v8335
    %v8337 = vpop.f32.mrf.mxu0
    %8338 = vdwg.mxu0
    %8339 = vmatpush.bf16.msra.mxu0 %v7665
    %8340 = vmatpush.bf16.msra.mxu0 %v7657
    %8341 = vmatpush.bf16.msra.mxu0 %v7649
    %8342 = vmatpush.bf16.msra.mxu0 %v7641
    %8343 = vmatpush.bf16.msra.mxu0 %v7633
    %8344 = vmatpush.bf16.msra.mxu0 %v7625
    %8345 = vmatpush.bf16.msra.mxu0 %v7617
    %8346 = vmatpush.bf16.msra.mxu0 %v7609
    %8347 = vmatmul.bf16.gmra.mxu0 %v6177
    %v8348 = vpop.f32.mrf.mxu0
    %v8349 = vadd.f32 %v8336, %v8348
    %v8350 = vpop.f32.mrf.mxu0
    %8351 = vdwg.mxu0
    %8352 = vmatpush.bf16.msra.mxu0 %v7729
    %8353 = vmatpush.bf16.msra.mxu0 %v7721
    %8354 = vmatpush.bf16.msra.mxu0 %v7713
    %8355 = vmatpush.bf16.msra.mxu0 %v7705
    %8356 = vmatpush.bf16.msra.mxu0 %v7697
    %8357 = vmatpush.bf16.msra.mxu0 %v7689
    %8358 = vmatpush.bf16.msra.mxu0 %v7681
    %8359 = vmatpush.bf16.msra.mxu0 %v7673
    %8360 = vmatmul.bf16.gmra.mxu0 %v6178
    %v8361 = vpop.f32.mrf.mxu0
    %v8362 = vadd.f32 %v8349, %v8361
    %v8363 = vpop.f32.mrf.mxu0
    %8364 = vdwg.mxu0
    %8365 = vmatpush.bf16.msra.mxu0 %v7793
    %8366 = vmatpush.bf16.msra.mxu0 %v7785
    %8367 = vmatpush.bf16.msra.mxu0 %v7777
    %8368 = vmatpush.bf16.msra.mxu0 %v7769
    %8369 = vmatpush.bf16.msra.mxu0 %v7761
    %8370 = vmatpush.bf16.msra.mxu0 %v7753
    %8371 = vmatpush.bf16.msra.mxu0 %v7745
    %8372 = vmatpush.bf16.msra.mxu0 %v7737
    %8373 = vmatmul.bf16.gmra.mxu0 %v6179
    %v8374 = vpop.f32.mrf.mxu0
    %v8375 = vadd.f32 %v8362, %v8374
    %v8376 = vpop.f32.mrf.mxu0
    %8377 = vdwg.mxu0
    %8378 = vmatpush.bf16.msra.mxu0 %v7538
    %8379 = vmatpush.bf16.msra.mxu0 %v7530
    %8380 = vmatpush.bf16.msra.mxu0 %v7522
    %8381 = vmatpush.bf16.msra.mxu0 %v7514
    %8382 = vmatpush.bf16.msra.mxu0 %v7506
    %8383 = vmatpush.bf16.msra.mxu0 %v7498
    %8384 = vmatpush.bf16.msra.mxu0 %v7490
    %8385 = vmatpush.bf16.msra.mxu0 %v7482
    %8386 = vmatmul.bf16.gmra.mxu0 %v6175
    %v8387 = vpop.f32.mrf.mxu0
    %v8388 = vadd.f32 %v6506, %v8387
    %v8389 = vpop.f32.mrf.mxu0
    %8390 = vdwg.mxu0
    %8391 = vmatpush.bf16.msra.mxu0 %v7602
    %8392 = vmatpush.bf16.msra.mxu0 %v7594
    %8393 = vmatpush.bf16.msra.mxu0 %v7586
    %8394 = vmatpush.bf16.msra.mxu0 %v7578
    %8395 = vmatpush.bf16.msra.mxu0 %v7570
    %8396 = vmatpush.bf16.msra.mxu0 %v7562
    %8397 = vmatpush.bf16.msra.mxu0 %v7554
    %8398 = vmatpush.bf16.msra.mxu0 %v7546
    %8399 = vmatmul.bf16.gmra.mxu0 %v6176
    %v8400 = vpop.f32.mrf.mxu0
    %v8401 = vadd.f32 %v8388, %v8400
    %v8402 = vpop.f32.mrf.mxu0
    %8403 = vdwg.mxu0
    %8404 = vmatpush.bf16.msra.mxu0 %v7666
    %8405 = vmatpush.bf16.msra.mxu0 %v7658
    %8406 = vmatpush.bf16.msra.mxu0 %v7650
    %8407 = vmatpush.bf16.msra.mxu0 %v7642
    %8408 = vmatpush.bf16.msra.mxu0 %v7634
    %8409 = vmatpush.bf16.msra.mxu0 %v7626
    %8410 = vmatpush.bf16.msra.mxu0 %v7618
    %8411 = vmatpush.bf16.msra.mxu0 %v7610
    %8412 = vmatmul.bf16.gmra.mxu0 %v6177
    %v8413 = vpop.f32.mrf.mxu0
    %v8414 = vadd.f32 %v8401, %v8413
    %v8415 = vpop.f32.mrf.mxu0
    %8416 = vdwg.mxu0
    %8417 = vmatpush.bf16.msra.mxu0 %v7730
    %8418 = vmatpush.bf16.msra.mxu0 %v7722
    %8419 = vmatpush.bf16.msra.mxu0 %v7714
    %8420 = vmatpush.bf16.msra.mxu0 %v7706
    %8421 = vmatpush.bf16.msra.mxu0 %v7698
    %8422 = vmatpush.bf16.msra.mxu0 %v7690
    %8423 = vmatpush.bf16.msra.mxu0 %v7682
    %8424 = vmatpush.bf16.msra.mxu0 %v7674
    %8425 = vmatmul.bf16.gmra.mxu0 %v6178
    %v8426 = vpop.f32.mrf.mxu0
    %v8427 = vadd.f32 %v8414, %v8426
    %v8428 = vpop.f32.mrf.mxu0
    %8429 = vdwg.mxu0
    %8430 = vmatpush.bf16.msra.mxu0 %v7794
    %8431 = vmatpush.bf16.msra.mxu0 %v7786
    %8432 = vmatpush.bf16.msra.mxu0 %v7778
    %8433 = vmatpush.bf16.msra.mxu0 %v7770
    %8434 = vmatpush.bf16.msra.mxu0 %v7762
    %8435 = vmatpush.bf16.msra.mxu0 %v7754
    %8436 = vmatpush.bf16.msra.mxu0 %v7746
    %8437 = vmatpush.bf16.msra.mxu0 %v7738
    %8438 = vmatmul.bf16.gmra.mxu0 %v6179
    %v8439 = vpop.f32.mrf.mxu0
    %v8440 = vadd.f32 %v8427, %v8439
    %v8441 = vpop.f32.mrf.mxu0
    %8442 = vdwg.mxu0
    %8443 = vmatpush.bf16.msra.mxu0 %v7539
    %8444 = vmatpush.bf16.msra.mxu0 %v7531
    %8445 = vmatpush.bf16.msra.mxu0 %v7523
    %8446 = vmatpush.bf16.msra.mxu0 %v7515
    %8447 = vmatpush.bf16.msra.mxu0 %v7507
    %8448 = vmatpush.bf16.msra.mxu0 %v7499
    %8449 = vmatpush.bf16.msra.mxu0 %v7491
    %8450 = vmatpush.bf16.msra.mxu0 %v7483
    %8451 = vmatmul.bf16.gmra.mxu0 %v6175
    %v8452 = vpop.f32.mrf.mxu0
    %v8453 = vadd.f32 %v6507, %v8452
    %v8454 = vpop.f32.mrf.mxu0
    %8455 = vdwg.mxu0
    %8456 = vmatpush.bf16.msra.mxu0 %v7603
    %8457 = vmatpush.bf16.msra.mxu0 %v7595
    %8458 = vmatpush.bf16.msra.mxu0 %v7587
    %8459 = vmatpush.bf16.msra.mxu0 %v7579
    %8460 = vmatpush.bf16.msra.mxu0 %v7571
    %8461 = vmatpush.bf16.msra.mxu0 %v7563
    %8462 = vmatpush.bf16.msra.mxu0 %v7555
    %8463 = vmatpush.bf16.msra.mxu0 %v7547
    %8464 = vmatmul.bf16.gmra.mxu0 %v6176
    %v8465 = vpop.f32.mrf.mxu0
    %v8466 = vadd.f32 %v8453, %v8465
    %v8467 = vpop.f32.mrf.mxu0
    %8468 = vdwg.mxu0
    %8469 = vmatpush.bf16.msra.mxu0 %v7667
    %8470 = vmatpush.bf16.msra.mxu0 %v7659
    %8471 = vmatpush.bf16.msra.mxu0 %v7651
    %8472 = vmatpush.bf16.msra.mxu0 %v7643
    %8473 = vmatpush.bf16.msra.mxu0 %v7635
    %8474 = vmatpush.bf16.msra.mxu0 %v7627
    %8475 = vmatpush.bf16.msra.mxu0 %v7619
    %8476 = vmatpush.bf16.msra.mxu0 %v7611
    %8477 = vmatmul.bf16.gmra.mxu0 %v6177
    %v8478 = vpop.f32.mrf.mxu0
    %v8479 = vadd.f32 %v8466, %v8478
    %v8480 = vpop.f32.mrf.mxu0
    %8481 = vdwg.mxu0
    %8482 = vmatpush.bf16.msra.mxu0 %v7731
    %8483 = vmatpush.bf16.msra.mxu0 %v7723
    %8484 = vmatpush.bf16.msra.mxu0 %v7715
    %8485 = vmatpush.bf16.msra.mxu0 %v7707
    %8486 = vmatpush.bf16.msra.mxu0 %v7699
    %8487 = vmatpush.bf16.msra.mxu0 %v7691
    %8488 = vmatpush.bf16.msra.mxu0 %v7683
    %8489 = vmatpush.bf16.msra.mxu0 %v7675
    %8490 = vmatmul.bf16.gmra.mxu0 %v6178
    %v8491 = vpop.f32.mrf.mxu0
    %v8492 = vadd.f32 %v8479, %v8491
    %v8493 = vpop.f32.mrf.mxu0
    %8494 = vdwg.mxu0
    %8495 = vmatpush.bf16.msra.mxu0 %v7795
    %8496 = vmatpush.bf16.msra.mxu0 %v7787
    %8497 = vmatpush.bf16.msra.mxu0 %v7779
    %8498 = vmatpush.bf16.msra.mxu0 %v7771
    %8499 = vmatpush.bf16.msra.mxu0 %v7763
    %8500 = vmatpush.bf16.msra.mxu0 %v7755
    %8501 = vmatpush.bf16.msra.mxu0 %v7747
    %8502 = vmatpush.bf16.msra.mxu0 %v7739
    %8503 = vmatmul.bf16.gmra.mxu0 %v6179
    %v8504 = vpop.f32.mrf.mxu0
    %v8505 = vadd.f32 %v8492, %v8504
    %v8506 = vpop.f32.mrf.mxu0
    %8507 = vdwg.mxu0
    %8508 = vmatpush.bf16.msra.mxu0 %v7540
    %8509 = vmatpush.bf16.msra.mxu0 %v7532
    %8510 = vmatpush.bf16.msra.mxu0 %v7524
    %8511 = vmatpush.bf16.msra.mxu0 %v7516
    %8512 = vmatpush.bf16.msra.mxu0 %v7508
    %8513 = vmatpush.bf16.msra.mxu0 %v7500
    %8514 = vmatpush.bf16.msra.mxu0 %v7492
    %8515 = vmatpush.bf16.msra.mxu0 %v7484
    %8516 = vmatmul.bf16.gmra.mxu0 %v6175
    %v8517 = vpop.f32.mrf.mxu0
    %v8518 = vadd.f32 %v6508, %v8517
    %v8519 = vpop.f32.mrf.mxu0
    %8520 = vdwg.mxu0
    %8521 = vmatpush.bf16.msra.mxu0 %v7604
    %8522 = vmatpush.bf16.msra.mxu0 %v7596
    %8523 = vmatpush.bf16.msra.mxu0 %v7588
    %8524 = vmatpush.bf16.msra.mxu0 %v7580
    %8525 = vmatpush.bf16.msra.mxu0 %v7572
    %8526 = vmatpush.bf16.msra.mxu0 %v7564
    %8527 = vmatpush.bf16.msra.mxu0 %v7556
    %8528 = vmatpush.bf16.msra.mxu0 %v7548
    %8529 = vmatmul.bf16.gmra.mxu0 %v6176
    %v8530 = vpop.f32.mrf.mxu0
    %v8531 = vadd.f32 %v8518, %v8530
    %v8532 = vpop.f32.mrf.mxu0
    %8533 = vdwg.mxu0
    %8534 = vmatpush.bf16.msra.mxu0 %v7668
    %8535 = vmatpush.bf16.msra.mxu0 %v7660
    %8536 = vmatpush.bf16.msra.mxu0 %v7652
    %8537 = vmatpush.bf16.msra.mxu0 %v7644
    %8538 = vmatpush.bf16.msra.mxu0 %v7636
    %8539 = vmatpush.bf16.msra.mxu0 %v7628
    %8540 = vmatpush.bf16.msra.mxu0 %v7620
    %8541 = vmatpush.bf16.msra.mxu0 %v7612
    %8542 = vmatmul.bf16.gmra.mxu0 %v6177
    %v8543 = vpop.f32.mrf.mxu0
    %v8544 = vadd.f32 %v8531, %v8543
    %v8545 = vpop.f32.mrf.mxu0
    %8546 = vdwg.mxu0
    %8547 = vmatpush.bf16.msra.mxu0 %v7732
    %8548 = vmatpush.bf16.msra.mxu0 %v7724
    %8549 = vmatpush.bf16.msra.mxu0 %v7716
    %8550 = vmatpush.bf16.msra.mxu0 %v7708
    %8551 = vmatpush.bf16.msra.mxu0 %v7700
    %8552 = vmatpush.bf16.msra.mxu0 %v7692
    %8553 = vmatpush.bf16.msra.mxu0 %v7684
    %8554 = vmatpush.bf16.msra.mxu0 %v7676
    %8555 = vmatmul.bf16.gmra.mxu0 %v6178
    %v8556 = vpop.f32.mrf.mxu0
    %v8557 = vadd.f32 %v8544, %v8556
    %v8558 = vpop.f32.mrf.mxu0
    %8559 = vdwg.mxu0
    %8560 = vmatpush.bf16.msra.mxu0 %v7796
    %8561 = vmatpush.bf16.msra.mxu0 %v7788
    %8562 = vmatpush.bf16.msra.mxu0 %v7780
    %8563 = vmatpush.bf16.msra.mxu0 %v7772
    %8564 = vmatpush.bf16.msra.mxu0 %v7764
    %8565 = vmatpush.bf16.msra.mxu0 %v7756
    %8566 = vmatpush.bf16.msra.mxu0 %v7748
    %8567 = vmatpush.bf16.msra.mxu0 %v7740
    %8568 = vmatmul.bf16.gmra.mxu0 %v6179
    %v8569 = vpop.f32.mrf.mxu0
    %v8570 = vadd.f32 %v8557, %v8569
    %v8571 = vpop.f32.mrf.mxu0
    %8572 = vdwg.mxu0
    %8573 = vmatpush.bf16.msra.mxu0 %v7541
    %8574 = vmatpush.bf16.msra.mxu0 %v7533
    %8575 = vmatpush.bf16.msra.mxu0 %v7525
    %8576 = vmatpush.bf16.msra.mxu0 %v7517
    %8577 = vmatpush.bf16.msra.mxu0 %v7509
    %8578 = vmatpush.bf16.msra.mxu0 %v7501
    %8579 = vmatpush.bf16.msra.mxu0 %v7493
    %8580 = vmatpush.bf16.msra.mxu0 %v7485
    %8581 = vmatmul.bf16.gmra.mxu0 %v6175
    %v8582 = vpop.f32.mrf.mxu0
    %v8583 = vadd.f32 %v6509, %v8582
    %v8584 = vpop.f32.mrf.mxu0
    %8585 = vdwg.mxu0
    %8586 = vmatpush.bf16.msra.mxu0 %v7605
    %8587 = vmatpush.bf16.msra.mxu0 %v7597
    %8588 = vmatpush.bf16.msra.mxu0 %v7589
    %8589 = vmatpush.bf16.msra.mxu0 %v7581
    %8590 = vmatpush.bf16.msra.mxu0 %v7573
    %8591 = vmatpush.bf16.msra.mxu0 %v7565
    %8592 = vmatpush.bf16.msra.mxu0 %v7557
    %8593 = vmatpush.bf16.msra.mxu0 %v7549
    %8594 = vmatmul.bf16.gmra.mxu0 %v6176
    %v8595 = vpop.f32.mrf.mxu0
    %v8596 = vadd.f32 %v8583, %v8595
    %v8597 = vpop.f32.mrf.mxu0
    %8598 = vdwg.mxu0
    %8599 = vmatpush.bf16.msra.mxu0 %v7669
    %8600 = vmatpush.bf16.msra.mxu0 %v7661
    %8601 = vmatpush.bf16.msra.mxu0 %v7653
    %8602 = vmatpush.bf16.msra.mxu0 %v7645
    %8603 = vmatpush.bf16.msra.mxu0 %v7637
    %8604 = vmatpush.bf16.msra.mxu0 %v7629
    %8605 = vmatpush.bf16.msra.mxu0 %v7621
    %8606 = vmatpush.bf16.msra.mxu0 %v7613
    %8607 = vmatmul.bf16.gmra.mxu0 %v6177
    %v8608 = vpop.f32.mrf.mxu0
    %v8609 = vadd.f32 %v8596, %v8608
    %v8610 = vpop.f32.mrf.mxu0
    %8611 = vdwg.mxu0
    %8612 = vmatpush.bf16.msra.mxu0 %v7733
    %8613 = vmatpush.bf16.msra.mxu0 %v7725
    %8614 = vmatpush.bf16.msra.mxu0 %v7717
    %8615 = vmatpush.bf16.msra.mxu0 %v7709
    %8616 = vmatpush.bf16.msra.mxu0 %v7701
    %8617 = vmatpush.bf16.msra.mxu0 %v7693
    %8618 = vmatpush.bf16.msra.mxu0 %v7685
    %8619 = vmatpush.bf16.msra.mxu0 %v7677
    %8620 = vmatmul.bf16.gmra.mxu0 %v6178
    %v8621 = vpop.f32.mrf.mxu0
    %v8622 = vadd.f32 %v8609, %v8621
    %v8623 = vpop.f32.mrf.mxu0
    %8624 = vdwg.mxu0
    %8625 = vmatpush.bf16.msra.mxu0 %v7797
    %8626 = vmatpush.bf16.msra.mxu0 %v7789
    %8627 = vmatpush.bf16.msra.mxu0 %v7781
    %8628 = vmatpush.bf16.msra.mxu0 %v7773
    %8629 = vmatpush.bf16.msra.mxu0 %v7765
    %8630 = vmatpush.bf16.msra.mxu0 %v7757
    %8631 = vmatpush.bf16.msra.mxu0 %v7749
    %8632 = vmatpush.bf16.msra.mxu0 %v7741
    %8633 = vmatmul.bf16.gmra.mxu0 %v6179
    %v8634 = vpop.f32.mrf.mxu0
    %v8635 = vadd.f32 %v8622, %v8634
    %v8636 = vpop.f32.mrf.mxu0
    %8637 = vdwg.mxu0
    %v8638 = vmax.f32 %v8180, 0.0
    %v8639 = vmax.f32 %v8245, 0.0
    %v8640 = vmax.f32 %v8310, 0.0
    %v8641 = vmax.f32 %v8375, 0.0
    %v8642 = vmax.f32 %v8440, 0.0
    %v8643 = vmax.f32 %v8505, 0.0
    %v8644 = vmax.f32 %v8570, 0.0
    %v8645 = vmax.f32 %v8635, 0.0
    %v8646 = vmax.f32 %v8638, %v8640
    %v8647 = vmax.f32 %v8639, %v8641
    %v8648 = vmax.f32 %v8642, %v8644
    %v8649 = vmax.f32 %v8643, %v8645
    %v8650 = vmax.f32 %v8646, %v8648
    %v8651 = vmax.f32 %v8647, %v8649
    %v8652 = vpack.c.bf16 %v8650, %v8650
    %v8653 = vpack.c.bf16 %v8651, %v8651
    %v8654 = vld [vmem:[%s5] sm:$0xf]
    %v8655 = vld [vmem:[%s5 + $0x4] sm:$0xf]
    %v8656 = vld [vmem:[%s5 + $0x8] sm:$0xf]
    %v8657 = vld [vmem:[%s5 + $0xc] sm:$0xf]
    %v8658 = vld [vmem:[%s5 + $0x10] sm:$0xf]
    %v8659 = vld [vmem:[%s5 + $0x14] sm:$0xf]
    %v8660 = vld [vmem:[%s5 + $0x18] sm:$0xf]
    %v8661 = vld [vmem:[%s5 + $0x1c] sm:$0xf]
    %v8662 = vld [vmem:[%s5 + $0x20] sm:$0xf]
    %v8663 = vld [vmem:[%s5 + $0x24] sm:$0xf]
    %v8664 = vld [vmem:[%s5 + $0x28] sm:$0xf]
    %v8665 = vld [vmem:[%s5 + $0x2c] sm:$0xf]
    %v8666 = vld [vmem:[%s5 + $0x30] sm:$0xf]
    %v8667 = vld [vmem:[%s5 + $0x34] sm:$0xf]
    %v8668 = vld [vmem:[%s5 + $0x38] sm:$0xf]
    %v8669 = vld [vmem:[%s5 + $0x3c] sm:$0xf]
    %v8670 = vld [vmem:[%s5 + $0x40] sm:$0xf]
    %v8671 = vld [vmem:[%s5 + $0x44] sm:$0xf]
    %v8672 = vld [vmem:[%s5 + $0x48] sm:$0xf]
    %v8673 = vld [vmem:[%s5 + $0x4c] sm:$0xf]
    %v8674 = vld [vmem:[%s5 + $0x50] sm:$0xf]
    %v8675 = vld [vmem:[%s5 + $0x54] sm:$0xf]
    %v8676 = vld [vmem:[%s5 + $0x58] sm:$0xf]
    %v8677 = vld [vmem:[%s5 + $0x5c] sm:$0xf]
    %v8678 = vld [vmem:[%s5 + $0x60] sm:$0xf]
    %v8679 = vld [vmem:[%s5 + $0x64] sm:$0xf]
    %v8680 = vld [vmem:[%s5 + $0x68] sm:$0xf]
    %v8681 = vld [vmem:[%s5 + $0x6c] sm:$0xf]
    %v8682 = vld [vmem:[%s5 + $0x70] sm:$0xf]
    %v8683 = vld [vmem:[%s5 + $0x74] sm:$0xf]
    %v8684 = vld [vmem:[%s5 + $0x78] sm:$0xf]
    %v8685 = vld [vmem:[%s5 + $0x7c] sm:$0xf]
    %v8686 = vld [vmem:[%s6] sm:$0x1]
    %v8688 = vperm.slane %v8686, 0
    %v8722 = vunpack.c.l.b16 %v8654
    %v8723 = vunpack.c.l.b16 %v8655
    %v8724 = vunpack.c.l.b16 %v8656
    %v8725 = vunpack.c.l.b16 %v8657
    %v8726 = vunpack.c.l.b16 %v8658
    %v8727 = vunpack.c.l.b16 %v8659
    %v8728 = vunpack.c.l.b16 %v8660
    %v8729 = vunpack.c.l.b16 %v8661
    %v8730 = vunpack.c.l.b16 %v8662
    %v8731 = vunpack.c.l.b16 %v8663
    %v8732 = vunpack.c.l.b16 %v8664
    %v8733 = vunpack.c.l.b16 %v8665
    %v8734 = vunpack.c.l.b16 %v8666
    %v8735 = vunpack.c.l.b16 %v8667
    %v8736 = vunpack.c.l.b16 %v8668
    %v8737 = vunpack.c.l.b16 %v8669
    %v8738 = vunpack.c.l.b16 %v8670
    %v8739 = vunpack.c.l.b16 %v8671
    %v8740 = vunpack.c.l.b16 %v8672
    %v8741 = vunpack.c.l.b16 %v8673
    %v8742 = vunpack.c.l.b16 %v8674
    %v8743 = vunpack.c.l.b16 %v8675
    %v8744 = vunpack.c.l.b16 %v8676
    %v8745 = vunpack.c.l.b16 %v8677
    %v8746 = vunpack.c.l.b16 %v8678
    %v8747 = vunpack.c.l.b16 %v8679
    %v8748 = vunpack.c.l.b16 %v8680
    %v8749 = vunpack.c.l.b16 %v8681
    %v8750 = vunpack.c.l.b16 %v8682
    %v8751 = vunpack.c.l.b16 %v8683
    %v8752 = vunpack.c.l.b16 %v8684
    %v8753 = vunpack.c.l.b16 %v8685
    %v8754 = vpack.c.b16 %v8723, %v8722
    %v8755 = vpack.c.b16 %v8725, %v8724
    %v8756 = vpack.c.b16 %v8727, %v8726
    %v8757 = vpack.c.b16 %v8729, %v8728
    %v8758 = vpack.c.b16 %v8731, %v8730
    %v8759 = vpack.c.b16 %v8733, %v8732
    %v8760 = vpack.c.b16 %v8735, %v8734
    %v8761 = vpack.c.b16 %v8737, %v8736
    %v8762 = vpack.c.b16 %v8739, %v8738
    %v8763 = vpack.c.b16 %v8741, %v8740
    %v8764 = vpack.c.b16 %v8743, %v8742
    %v8765 = vpack.c.b16 %v8745, %v8744
    %v8766 = vpack.c.b16 %v8747, %v8746
    %v8767 = vpack.c.b16 %v8749, %v8748
    %v8768 = vpack.c.b16 %v8751, %v8750
    %v8769 = vpack.c.b16 %v8753, %v8752
    %8786 = vmatpush.bf16.msra.mxu0 %v8761
    %8787 = vmatpush.bf16.msra.mxu0 %v8760
    %8788 = vmatpush.bf16.msra.mxu0 %v8759
    %8789 = vmatpush.bf16.msra.mxu0 %v8758
    %8790 = vmatpush.bf16.msra.mxu0 %v8757
    %8791 = vmatpush.bf16.msra.mxu0 %v8756
    %8792 = vmatpush.bf16.msra.mxu0 %v8755
    %8793 = vmatpush.bf16.msra.mxu0 %v8754
    %8794 = vmatmul.bf16.gmra.mxu0 %v8652
    %v8795 = vpop.f32.mrf.mxu0
    %v8796 = vadd.f32 %v8688, %v8795
    %v8797 = vpop.f32.mrf.mxu0
    %8798 = vdwg.mxu0
    %8799 = vmatpush.bf16.msra.mxu0 %v8769
    %8800 = vmatpush.bf16.msra.mxu0 %v8768
    %8801 = vmatpush.bf16.msra.mxu0 %v8767
    %8802 = vmatpush.bf16.msra.mxu0 %v8766
    %8803 = vmatpush.bf16.msra.mxu0 %v8765
    %8804 = vmatpush.bf16.msra.mxu0 %v8764
    %8805 = vmatpush.bf16.msra.mxu0 %v8763
    %8806 = vmatpush.bf16.msra.mxu0 %v8762
    %8807 = vmatmul.bf16.gmra.mxu0 %v8653
    %v8808 = vpop.f32.mrf.mxu0
    %v8809 = vadd.f32 %v8796, %v8808
    %v8810 = vpop.f32.mrf.mxu0
    %8811 = vdwg.mxu0
    %v8812 = vld [vmem:[%s7] sm:$0x1]
    %v8813 = vld [vmem:[%s8] sm:$0x1]
    %vm8814 = vcmask 1043456
    %v8815 = vsel %vm8814, %v8809, 0.0
    %v8816 = vrot.slane %v8815, 4
    %v8817 = vadd.f32 %v8815, %v8816
    %v8818 = vrot.slane %v8817, 2
    %v8819 = vadd.f32 %v8817, %v8818
    %v8820 = vrot.slane %v8819, 1
    %v8821 = vadd.f32 %v8819, %v8820
    %v8822 = vrcp.pop 4.0
    %v8823 = vmul.f32 4.0, %v8822
    %v8824 = vsub.f32 1.0, %v8823
    %v8825 = vmul.f32 %v8822, %v8824
    %v8826 = vadd.f32 %v8822, %v8825
    %vm8827 = vweird.f32 %v8822
    %v8828 = vsel %vm8827, %v8822, %v8826
    %v8829 = vmul.f32 %v8821, %v8828
    %v8830 = vsub.f32 %v8809, %v8829
    %v8831 = vmul.f32 %v8830, %v8830
    %v8832 = vsel %vm8814, %v8831, 0.0
    %v8833 = vrot.slane %v8832, 4
    %v8834 = vadd.f32 %v8832, %v8833
    %v8835 = vrot.slane %v8834, 2
    %v8836 = vadd.f32 %v8834, %v8835
    %v8837 = vrot.slane %v8836, 1
    %v8838 = vadd.f32 %v8836, %v8837
    %v8839 = vmul.f32 %v8838, %v8828
    %v8840 = vadd.f32 %v8839, 1e-05
    %v8841 = vrsqrt.pop %v8840
    %v8842 = vmul.f32 %v8841, %v8840
    %v8843 = vmul.f32 %v8842, %v8841
    %v8844 = vmul.f32 0.5, %v8843
    %v8845 = vsub.f32 1.5, %v8844
    %v8846 = vmul.f32 %v8841, %v8845
    %vm8847 = vweird.f32 %v8840
    %vm8848 = vweird.f32 %v8841
    %vm8849 = vmor %vm8847, %vm8848
    %v8850 = vsel %vm8849, %v8841, %v8846
    %v8851 = vmul.f32 %v8830, %v8850
    %v8853 = vperm.slane %v8812, 0
    %v8855 = vmul.f32 %v8853, %v8851
    %v8857 = vperm.slane %v8813, 0
    %v8859 = vadd.f32 %v8855, %v8857
    %v8860 = vmax.f32 %v8859, 0.0
    %v8861 = vpack.c.bf16 %v8860, %v8860
    %v8862 = vld [vmem:[%s9] sm:$0xf]
    %v8863 = vld [vmem:[%s9 + $0x4] sm:$0xf]
    %v8864 = vld [vmem:[%s9 + $0x8] sm:$0xf]
    %v8865 = vld [vmem:[%s9 + $0xc] sm:$0xf]
    %v8866 = vld [vmem:[%s9 + $0x10] sm:$0xf]
    %v8867 = vld [vmem:[%s9 + $0x14] sm:$0xf]
    %v8868 = vld [vmem:[%s9 + $0x18] sm:$0xf]
    %v8869 = vld [vmem:[%s9 + $0x1c] sm:$0xf]
    %v8870 = vld [vmem:[%s9 + $0x20] sm:$0xf]
    %v8871 = vld [vmem:[%s9 + $0x24] sm:$0xf]
    %v8872 = vld [vmem:[%s9 + $0x28] sm:$0xf]
    %v8873 = vld [vmem:[%s9 + $0x2c] sm:$0xf]
    %v8874 = vld [vmem:[%s9 + $0x30] sm:$0xf]
    %v8875 = vld [vmem:[%s9 + $0x34] sm:$0xf]
    %v8876 = vld [vmem:[%s9 + $0x38] sm:$0xf]
    %v8877 = vld [vmem:[%s9 + $0x3c] sm:$0xf]
    %v8878 = vld [vmem:[%s10] sm:$0x1]
    %v8880 = vperm.slane %v8878, 0
    %v8898 = vunpack.c.l.b16 %v8862
    %v8899 = vunpack.c.l.b16 %v8863
    %v8900 = vunpack.c.l.b16 %v8864
    %v8901 = vunpack.c.l.b16 %v8865
    %v8902 = vunpack.c.l.b16 %v8866
    %v8903 = vunpack.c.l.b16 %v8867
    %v8904 = vunpack.c.l.b16 %v8868
    %v8905 = vunpack.c.l.b16 %v8869
    %v8906 = vunpack.c.l.b16 %v8870
    %v8907 = vunpack.c.l.b16 %v8871
    %v8908 = vunpack.c.l.b16 %v8872
    %v8909 = vunpack.c.l.b16 %v8873
    %v8910 = vunpack.c.l.b16 %v8874
    %v8911 = vunpack.c.l.b16 %v8875
    %v8912 = vunpack.c.l.b16 %v8876
    %v8913 = vunpack.c.l.b16 %v8877
    %v8914 = vpack.c.b16 %v8899, %v8898
    %v8915 = vpack.c.b16 %v8901, %v8900
    %v8916 = vpack.c.b16 %v8903, %v8902
    %v8917 = vpack.c.b16 %v8905, %v8904
    %v8918 = vpack.c.b16 %v8907, %v8906
    %v8919 = vpack.c.b16 %v8909, %v8908
    %v8920 = vpack.c.b16 %v8911, %v8910
    %v8921 = vpack.c.b16 %v8913, %v8912
    %8930 = vmatpush.bf16.msra.mxu0 %v8921
    %8931 = vmatpush.bf16.msra.mxu0 %v8920
    %8932 = vmatpush.bf16.msra.mxu0 %v8919
    %8933 = vmatpush.bf16.msra.mxu0 %v8918
    %8934 = vmatpush.bf16.msra.mxu0 %v8917
    %8935 = vmatpush.bf16.msra.mxu0 %v8916
    %8936 = vmatpush.bf16.msra.mxu0 %v8915
    %8937 = vmatpush.bf16.msra.mxu0 %v8914
    %8938 = vmatmul.bf16.gmra.mxu0 %v8861
    %v8939 = vpop.f32.mrf.mxu0
    %v8940 = vadd.f32 %v8880, %v8939
    %v8941 = vpop.f32.mrf.mxu0
    %8942 = vdwg.mxu0
    %v8943 = vld [vmem:[%s11] sm:$0x1]
    %v8944 = vld [vmem:[%s12] sm:$0x1]
    %v8945 = vsel %vm8814, %v8940, 0.0
    %v8946 = vrot.slane %v8945, 4
    %v8947 = vadd.f32 %v8945, %v8946
    %v8948 = vrot.slane %v8947, 2
    %v8949 = vadd.f32 %v8947, %v8948
    %v8950 = vrot.slane %v8949, 1
    %v8951 = vadd.f32 %v8949, %v8950
    %v8952 = vmul.f32 %v8951, %v8828
    %v8953 = vsub.f32 %v8940, %v8952
    %v8954 = vmul.f32 %v8953, %v8953
    %v8955 = vsel %vm8814, %v8954, 0.0
    %v8956 = vrot.slane %v8955, 4
    %v8957 = vadd.f32 %v8955, %v8956
    %v8958 = vrot.slane %v8957, 2
    %v8959 = vadd.f32 %v8957, %v8958
    %v8960 = vrot.slane %v8959, 1
    %v8961 = vadd.f32 %v8959, %v8960
    %v8962 = vmul.f32 %v8961, %v8828
    %v8963 = vadd.f32 %v8962, 1e-05
    %v8964 = vrsqrt.pop %v8963
    %v8965 = vmul.f32 %v8964, %v8963
    %v8966 = vmul.f32 %v8965, %v8964
    %v8967 = vmul.f32 0.5, %v8966
    %v8968 = vsub.f32 1.5, %v8967
    %v8969 = vmul.f32 %v8964, %v8968
    %vm8970 = vweird.f32 %v8963
    %vm8971 = vweird.f32 %v8964
    %vm8972 = vmor %vm8970, %vm8971
    %v8973 = vsel %vm8972, %v8964, %v8969
    %v8974 = vmul.f32 %v8953, %v8973
    %v8976 = vperm.slane %v8943, 0
    %v8978 = vmul.f32 %v8976, %v8974
    %v8980 = vperm.slane %v8944, 0
    %v8982 = vadd.f32 %v8978, %v8980
    %v8983 = vmax.f32 %v8982, 0.0
    %v8984 = vpack.c.bf16 %v8983, %v8983
    %v8985 = vld [vmem:[%s13] sm:$0xf]
    %v8986 = vld [vmem:[%s13 + $0x4] sm:$0xf]
    %v8987 = vld [vmem:[%s13 + $0x8] sm:$0xf]
    %v8988 = vld [vmem:[%s13 + $0xc] sm:$0xf]
    %v8989 = vld [vmem:[%s13 + $0x10] sm:$0xf]
    %v8990 = vld [vmem:[%s13 + $0x14] sm:$0xf]
    %v8991 = vld [vmem:[%s13 + $0x18] sm:$0xf]
    %v8992 = vld [vmem:[%s13 + $0x1c] sm:$0xf]
    %v8993 = vld [vmem:[%s13 + $0x20] sm:$0xf]
    %v8994 = vld [vmem:[%s13 + $0x24] sm:$0xf]
    %v8995 = vld [vmem:[%s13 + $0x28] sm:$0xf]
    %v8996 = vld [vmem:[%s13 + $0x2c] sm:$0xf]
    %v8997 = vld [vmem:[%s13 + $0x30] sm:$0xf]
    %v8998 = vld [vmem:[%s13 + $0x34] sm:$0xf]
    %v8999 = vld [vmem:[%s13 + $0x38] sm:$0xf]
    %v9000 = vld [vmem:[%s13 + $0x3c] sm:$0xf]
    %v9001 = vld [vmem:[%s14] sm:$0x1]
    %v9003 = vperm.slane %v9001, 0
    %v9021 = vunpack.c.l.b16 %v8985
    %v9022 = vunpack.c.l.b16 %v8986
    %v9023 = vunpack.c.l.b16 %v8987
    %v9024 = vunpack.c.l.b16 %v8988
    %v9025 = vunpack.c.l.b16 %v8989
    %v9026 = vunpack.c.l.b16 %v8990
    %v9027 = vunpack.c.l.b16 %v8991
    %v9028 = vunpack.c.l.b16 %v8992
    %v9029 = vunpack.c.l.b16 %v8993
    %v9030 = vunpack.c.l.b16 %v8994
    %v9031 = vunpack.c.l.b16 %v8995
    %v9032 = vunpack.c.l.b16 %v8996
    %v9033 = vunpack.c.l.b16 %v8997
    %v9034 = vunpack.c.l.b16 %v8998
    %v9035 = vunpack.c.l.b16 %v8999
    %v9036 = vunpack.c.l.b16 %v9000
    %v9037 = vpack.c.b16 %v9022, %v9021
    %v9038 = vpack.c.b16 %v9024, %v9023
    %v9039 = vpack.c.b16 %v9026, %v9025
    %v9040 = vpack.c.b16 %v9028, %v9027
    %v9041 = vpack.c.b16 %v9030, %v9029
    %v9042 = vpack.c.b16 %v9032, %v9031
    %v9043 = vpack.c.b16 %v9034, %v9033
    %v9044 = vpack.c.b16 %v9036, %v9035
    %9053 = vmatpush.bf16.msra.mxu0 %v9044
    %9054 = vmatpush.bf16.msra.mxu0 %v9043
    %9055 = vmatpush.bf16.msra.mxu0 %v9042
    %9056 = vmatpush.bf16.msra.mxu0 %v9041
    %9057 = vmatpush.bf16.msra.mxu0 %v9040
    %9058 = vmatpush.bf16.msra.mxu0 %v9039
    %9059 = vmatpush.bf16.msra.mxu0 %v9038
    %9060 = vmatpush.bf16.msra.mxu0 %v9037
    %9061 = vmatmul.bf16.gmra.mxu0 %v8984
    %v9062 = vpop.f32.mrf.mxu0
    %v9063 = vadd.f32 %v9003, %v9062
    %v9064 = vpop.f32.mrf.mxu0
    %9065 = vdwg.mxu0
    %v9066 = vsub.f32 0.0, %v9063
    %v9067 = vmul.f32 %v9066, 1.442695
    %v9068 = vpow.pop %v9067
    %v9069 = vadd.f32 %v9068, 1.0
    %v9070 = vrcp.pop %v9069
    %v9071 = vmul.f32 %v9069, %v9070
    %v9072 = vsub.f32 1.0, %v9071
    %v9073 = vmul.f32 %v9070, %v9072
    %v9074 = vadd.f32 %v9070, %v9073
    %vm9075 = vweird.f32 %v9069
    %vm9076 = vweird.f32 %v9070
    %vm9077 = vmor %vm9075, %vm9076
    %v9078 = vsel %vm9077, %v9070, %v9074
    %v9079 = vand.u32 2147483647, %v9069
    %vm9080 = vcmp.eq.f32.partialorder %v9079, 8.507059e+37
    %v9081 = vand.u32 %v9069, 2147483648
    %v9082 = vor.u32 1.1754944e-38, %v9081
    %v9083 = vsel %vm9080, %v9082, %v9078
    %v9084 = vmul.f32 1.0, %v9083
    %9085 = vst [vmem:[#allocation2] sm:$0xf] %v9084
    // Predicated region
    $region62: #{classification_forward.1} parent=1 // pred_check
      _
    $region63: #{classification_forward.1} parent=1 // pred_check_branch
      %9087 = sbr.rel (0) target = $region65
    $region64: #{classification_forward.1} parent=1 // pred_region
      %9089 = vsyncadd [#allocation3], 0
      %s9091 = sshll.u32 [#allocation2], 4
      %s9092 = int_to_ptr.vmem [resolvable:$true] %s9091
      %s9093 = sshll.u32 %s15, 4
      %s9094 = int_to_ptr.hbm [resolvable:$true] %s9093
      %9096 = dma.vmem_to_hbm [thread:$0]  %s9092, 64, %s9094, [#allocation3]
    $region65: #{classification_forward.1} parent=1 // pred_fallthru
      _
    // Predicated region
    $region66: #{classification_forward.1} parent=1 // pred_check
      _
    $region67: #{classification_forward.1} parent=1 // pred_check_branch
      %9098 = sbr.rel (0) target = $region69
    $region68: #{classification_forward.1} parent=1 // pred_region
      %9100 = dma.done [#allocation3], 64
    $region69: #{classification_forward.1} parent=1 // pred_fallthru
      _
    %9101 = vsyncpa [#allocation3], 1

</llo_original>
